<compile_context>
chip_gen: v7x
topology: tpu7x:2x2x1
jax: 0.10.0
libtpu: 0.0.40
codegen_flags: <defaults>
</compile_context>

<pallas_src>
import functools

import jax
import jax.numpy as jnp
from jax.experimental import pallas as pl
from jax.experimental.pallas import tpu as pltpu


# ---------------------------------------------------------------------------
# In-kernel helpers
# ---------------------------------------------------------------------------
def _zero_border(ref):
    """Zero only the 1-px padding border of a (Hp, Wp, C) scratch ref.

    The interior is fully overwritten every grid step, so re-zeroing the full
    buffer is unnecessary; zeroing just the border every step keeps the kernel
    correct even when the batch grid axis is sharded across cores."""
    Hp, Wp, C = ref.shape
    zrow = jnp.zeros((1, Wp, C), ref.dtype)
    zcol = jnp.zeros((Hp, 1, C), ref.dtype)
    ref[0:1, :, :] = zrow
    ref[Hp - 1:Hp, :, :] = zrow
    ref[:, 0:1, :] = zcol
    ref[:, Wp - 1:Wp, :] = zcol


def _conv3x3_im2col(pad_ref, w_flat_bf16, H, W):
    """3x3 'same' conv from an already zero-padded (H+2, W+2, Cin) scratch ref.

    Single im2col matmul: (H*W, 9*Cin) x (9*Cin, Cout), bf16 operands, f32
    accumulation. Returns (H*W, Cout) f32."""
    Cin = pad_ref.shape[-1]
    cols = []
    for di in range(3):
        for dj in range(3):
            cols.append(pad_ref[di:di + H, dj:dj + W, :].reshape(H * W, Cin))
    patches = jnp.concatenate(cols, axis=-1).astype(jnp.bfloat16)   # (H*W, 9*Cin)
    return jnp.dot(patches, w_flat_bf16, preferred_element_type=jnp.float32)


# ---------------------------------------------------------------------------
# Pallas kernels
# ---------------------------------------------------------------------------
def inception_kernel(x_ref, wall_ref, w1b_ref, w2b_ref, w2c_ref, wc_ref,
                     out_ref, stats_ref,
                     pad_mid, pad_3mid, pad_cat):
    """One batch element per grid step: all four branches + final 3x3 conv
    (pre-BatchNorm), fully in VMEM. Also emits per-image BN partial stats."""
    H, W, Cin = x_ref.shape
    mid = pad_mid.shape[-1]
    Cout = out_ref.shape[-1]
    HW = H * W

    _zero_border(pad_mid)
    _zero_border(pad_3mid)
    _zero_border(pad_cat)

    x_bf = x_ref[...].reshape(HW, Cin).astype(jnp.bfloat16)

    # ---- fused 1x1 convs of all four branches: one MXU pass ----------------
    # wall = [w0 | w1a | w2a | w3] -> (Cin, 4*mid)
    t_all = jnp.dot(x_bf, wall_ref[...], preferred_element_type=jnp.float32)

    # ---- branch 0: 1x1 only -> straight into the concat buffer -------------
    pad_cat[1:H + 1, 1:W + 1, 0:mid] = t_all[:, 0:mid].reshape(H, W, mid)

    # ---- branch 1: 1x1 -> ReLU -> 3x3 ---------------------------------------
    t1 = jnp.maximum(t_all[:, mid:2 * mid], 0.0)
    pad_mid[1:H + 1, 1:W + 1, :] = t1.reshape(H, W, mid)
    b1 = _conv3x3_im2col(pad_mid, w1b_ref[...], H, W)                # (HW, mid)
    pad_cat[1:H + 1, 1:W + 1, mid:2 * mid] = b1.reshape(H, W, mid)

    # ---- branch 2: 1x1 -> ReLU -> 3x3 -> ReLU -> 3x3 ------------------------
    t2 = jnp.maximum(t_all[:, 2 * mid:3 * mid], 0.0)
    pad_mid[1:H + 1, 1:W + 1, :] = t2.reshape(H, W, mid)
    t2b = jnp.maximum(_conv3x3_im2col(pad_mid, w2b_ref[...], H, W), 0.0)
    pad_3mid[1:H + 1, 1:W + 1, :] = t2b.reshape(H, W, 3 * mid)
    b2 = _conv3x3_im2col(pad_3mid, w2c_ref[...], H, W)               # (HW, 3*mid)
    pad_cat[1:H + 1, 1:W + 1, 2 * mid:5 * mid] = b2.reshape(H, W, 3 * mid)

    # ---- branch 3: 1x1 (already in t_all, by linearity) -> 3x3 avg-pool -----
    # AvgPool(3, pad=1, count_include_pad=True) commutes with the bias-free
    # 1x1 conv, so the pool runs over mid channels instead of Cin.
    t3 = t_all[:, 3 * mid:4 * mid]
    pad_mid[1:H + 1, 1:W + 1, :] = t3.reshape(H, W, mid)
    pooled = jnp.zeros((HW, mid), jnp.float32)
    for di in range(3):
        for dj in range(3):
            pooled = pooled + pad_mid[di:di + H, dj:dj + W, :].reshape(HW, mid)
    b3 = pooled * (1.0 / 9.0)
    pad_cat[1:H + 1, 1:W + 1, 5 * mid:6 * mid] = b3.reshape(H, W, mid)

    # ---- final 3x3 conv (pre-BN) --------------------------------------------
    # TODO(synk): for stride != 1, fold the stride into this im2col (strided
    # patch slices) instead of dense-compute-then-subsample in the wrapper.
    y = _conv3x3_im2col(pad_cat, wc_ref[...], H, W)                  # (HW, Cout) f32
    out_ref[...] = y.reshape(H, W, Cout)

    # ---- per-image BN partial statistics (avoids re-reading conv_out) -------
    stats_ref[0:1, :] = jnp.sum(y, axis=0, keepdims=True)
    stats_ref[1:2, :] = jnp.sum(y * y, axis=0, keepdims=True)


def bn_relu_kernel(y_ref, scale_ref, shift_ref, o_ref):
    """Fused affine BatchNorm (precomputed scale/shift) + ReLU on a lane-dense
    (H, W*Cout) slab; scale/shift are pre-tiled to (1, W*Cout)."""
    o_ref[...] = jnp.maximum(y_ref[...] * scale_ref[...] + shift_ref[...], 0.0)


# ---------------------------------------------------------------------------
# Wrapper
# ---------------------------------------------------------------------------
def inception_forward(x_nchw, params, *, stride=1, eps=1e-5):
    x = jnp.transpose(x_nchw, (0, 2, 3, 1)).astype(jnp.float32)  # NCHW -> NHWC
    N, H, W, Cin = x.shape
    mid = Cin // 2
    Cout = params["wc"].shape[-1]
    bf16 = jnp.bfloat16

    # Fuse the four branch 1x1 weights; flatten all 3x3 weights for im2col.
    wall = jnp.concatenate(
        [params["w0"], params["w1a"], params["w2a"], params["w3"]],
        axis=1).astype(bf16)                                         # (Cin, 4*mid)
    w1b = params["w1b"].reshape(9 * mid, mid).astype(bf16)
    w2b = params["w2b"].reshape(9 * mid, 3 * mid).astype(bf16)
    w2c = params["w2c"].reshape(9 * 3 * mid, 3 * mid).astype(bf16)
    wc = params["wc"].reshape(9 * 6 * mid, Cout).astype(bf16)

    # Explicit VMEM budget: scratch + double-buffered blocks, with headroom.
    scratch_bytes = 4 * (H + 2) * (W + 2) * (10 * mid)
    io_bytes = 4 * (H * W * (Cin + Cout) + 2 * Cout)
    w_bytes = 2 * (Cin * 4 * mid + 9 * mid * mid + 27 * mid * mid
                   + 81 * mid * mid + 54 * mid * Cout)
    vmem_limit = int(min(max(4 * (scratch_bytes + 2 * (io_bytes + w_bytes)),
                             32 * 2 ** 20), 100 * 2 ** 20))

    # TODO(synk): for large (production) resolutions / v7x's 64 MiB VMEM, tile
    # the spatial dims with a halo instead of one full image per grid step.
    conv_out, stats = pl.pallas_call(
        inception_kernel,
        out_shape=(jax.ShapeDtypeStruct((N, H, W, Cout), jnp.float32),
                   jax.ShapeDtypeStruct((N, 2, Cout), jnp.float32)),
        grid=(N,),
        in_specs=[
            pl.BlockSpec((None, H, W, Cin), lambda n: (n, 0, 0, 0)),
            pl.BlockSpec((Cin, 4 * mid), lambda n: (0, 0)),
            pl.BlockSpec((9 * mid, mid), lambda n: (0, 0)),
            pl.BlockSpec((9 * mid, 3 * mid), lambda n: (0, 0)),
            pl.BlockSpec((9 * 3 * mid, 3 * mid), lambda n: (0, 0)),
            pl.BlockSpec((9 * 6 * mid, Cout), lambda n: (0, 0)),
        ],
        out_specs=(
            pl.BlockSpec((None, H, W, Cout), lambda n: (n, 0, 0, 0)),
            pl.BlockSpec((None, 2, Cout), lambda n: (n, 0, 0)),
        ),
        scratch_shapes=[
            pltpu.VMEM((H + 2, W + 2, mid), jnp.float32),
            pltpu.VMEM((H + 2, W + 2, 3 * mid), jnp.float32),
            pltpu.VMEM((H + 2, W + 2, 6 * mid), jnp.float32),
        ],
        compiler_params=pltpu.CompilerParams(
            dimension_semantics=("parallel",),
            vmem_limit_bytes=vmem_limit),
    )(x, wall, w1b, w2b, w2c, wc)

    # BatchNorm2d, PyTorch training mode: batch statistics over (N, H, W),
    # biased variance, gamma=1, beta=0 (PyTorch init).
    if stride != 1:
        # Strided "same" 3x3 conv == dense conv output subsampled at stride.
        conv_out = conv_out[:, ::stride, ::stride, :]
        mean = jnp.mean(conv_out, axis=(0, 1, 2))
        var = jnp.mean(jnp.square(conv_out - mean), axis=(0, 1, 2))
    else:
        count = float(N * H * W)
        ssum = jnp.sum(stats[:, 0, :], axis=0)
        ssq = jnp.sum(stats[:, 1, :], axis=0)
        mean = ssum / count
        var = jnp.maximum(ssq / count - mean * mean, 0.0)

    Ns, Hs, Ws, _ = conv_out.shape
    scale = 1.0 / jnp.sqrt(var + eps)
    shift = -mean * scale

    # Lane-dense layout (last dim = Ws*Cout) for the memory-bound BN+ReLU pass;
    # the wrapper-side reshapes are free (contiguous dims collapse/expand).
    y2 = conv_out.reshape(Ns, Hs, Ws * Cout)
    scale_row = jnp.tile(scale, Ws).reshape(1, Ws * Cout).astype(jnp.float32)
    shift_row = jnp.tile(shift, Ws).reshape(1, Ws * Cout).astype(jnp.float32)

    out = pl.pallas_call(
        bn_relu_kernel,
        out_shape=jax.ShapeDtypeStruct((Ns, Hs, Ws * Cout), jnp.float32),
        grid=(Ns,),
        in_specs=[
            pl.BlockSpec((None, Hs, Ws * Cout), lambda n: (n, 0, 0)),
            pl.BlockSpec((1, Ws * Cout), lambda n: (0, 0)),
            pl.BlockSpec((1, Ws * Cout), lambda n: (0, 0)),
        ],
        out_specs=pl.BlockSpec((None, Hs, Ws * Cout), lambda n: (n, 0, 0)),
        compiler_params=pltpu.CompilerParams(dimension_semantics=("parallel",)),
    )(y2, scale_row, shift_row)

    out = out.reshape(Ns, Hs, Ws, Cout)
    return jnp.transpose(out, (0, 3, 1, 2))  # NHWC -> NCHW


# ---------------------------------------------------------------------------
# Deterministic parameter initialization (shapes dictated by Inception.__init__)
# ---------------------------------------------------------------------------
def make_params(key, in_channels, out_channels):
    mid = in_channels // 2
    ks = jax.random.split(key, 8)

    def w1x1(k, cin, cout):
        std = (2.0 / cin) ** 0.5
        return (std * jax.random.normal(k, (cin, cout))).astype(jnp.float32)

    def w3x3(k, cin, cout):
        std = (2.0 / (9 * cin)) ** 0.5
        return (std * jax.random.normal(k, (3, 3, cin, cout))).astype(jnp.float32)

    return dict(
        w0=w1x1(ks[0], in_channels, mid),
        w1a=w1x1(ks[1], in_channels, mid),
        w1b=w3x3(ks[2], mid, mid),
        w2a=w1x1(ks[3], in_channels, mid),
        w2b=w3x3(ks[4], mid, 3 * mid),
        w2c=w3x3(ks[5], 3 * mid, 3 * mid),
        w3=w1x1(ks[6], in_channels, mid),
        wc=w3x3(ks[7], 6 * mid, out_channels),
    )


# ---------------------------------------------------------------------------
# Pure-JAX f32 reference (lax.conv) for correctness sanity check
# ---------------------------------------------------------------------------
def reference_forward(x_nchw, params, *, stride=1, eps=1e-5):
    x = jnp.transpose(x_nchw, (0, 2, 3, 1)).astype(jnp.float32)
    hi = jax.lax.Precision.HIGHEST

    def c1(a, w):
        return jax.lax.conv_general_dilated(
            a, w.reshape(1, 1, *w.shape), (1, 1), "VALID",
            dimension_numbers=("NHWC", "HWIO", "NHWC"), precision=hi)

    def c3(a, w, s=1):
        return jax.lax.conv_general_dilated(
            a, w, (s, s), ((1, 1), (1, 1)),
            dimension_numbers=("NHWC", "HWIO", "NHWC"), precision=hi)

    relu = lambda a: jnp.maximum(a, 0.0)
    b0 = c1(x, params["w0"])
    b1 = c3(relu(c1(x, params["w1a"])), params["w1b"])
    b2 = c3(relu(c3(relu(c1(x, params["w2a"])), params["w2b"])), params["w2c"])
    xp = jnp.pad(x, ((0, 0), (1, 1), (1, 1), (0, 0)))
    pooled = jax.lax.reduce_window(xp, 0.0, jax.lax.add,
                                   (1, 3, 3, 1), (1, 1, 1, 1), "VALID") / 9.0
    b3 = c1(pooled, params["w3"])
    cat = jnp.concatenate([b0, b1, b2, b3], axis=-1)
    y = c3(cat, params["wc"], stride)
    mean = jnp.mean(y, axis=(0, 1, 2))
    var = jnp.mean(jnp.square(y - mean), axis=(0, 1, 2))
    out = jnp.maximum((y - mean) / jnp.sqrt(var + eps), 0.0)
    return jnp.transpose(out, (0, 3, 1, 2))


# ---------------------------------------------------------------------------
if __name__ == "__main__":
    # Small shapes consistent with the module: N=2, in_channels=4, 16x16 spatial.
    N, Cin, H, W = 2, 4, 16, 16
    out_channels = 8

    key = jax.random.PRNGKey(0)
    k_x, k_p = jax.random.split(key)
    x = jax.random.normal(k_x, (N, Cin, H, W), jnp.float32)   # PyTorch NCHW input
    params = make_params(k_p, Cin, out_channels)

    fwd = jax.jit(functools.partial(inception_forward, stride=1))
    out = fwd(x, params)
    out = jax.block_until_ready(out)

    ref = reference_forward(x, params, stride=1)
    ref = jax.block_until_ready(ref)

    assert out.shape == (N, out_channels, H, W), out.shape
    err = jnp.abs(out - ref)
    max_err = float(jnp.max(err))
    mean_err = float(jnp.mean(err))
    # Kernel uses bf16 MXU operands (f32 accumulation) through a chain of four
    # convs + BN; structural errors on the BN-normalized output would be O(1),
    # so these bounds still catch real mistakes while tolerating bf16 rounding.
    assert max_err < 0.15, f"max abs error too large: {max_err}"
    assert mean_err < 0.03, f"mean abs error too large: {mean_err}"

    print("KERNEL_OK")
</pallas_src>

<mosaic_0001>
module attributes {stable_mosaic.version = 11 : i64} {
  func.func @inception_kernel(%arg0: i32, %arg1: memref<1x16x16x4xf32, #tpu.memory_space<vmem>>, %arg2: memref<4x8xbf16, #tpu.memory_space<vmem>>, %arg3: memref<18x2xbf16, #tpu.memory_space<vmem>>, %arg4: memref<18x6xbf16, #tpu.memory_space<vmem>>, %arg5: memref<54x6xbf16, #tpu.memory_space<vmem>>, %arg6: memref<108x8xbf16, #tpu.memory_space<vmem>>, %arg7: memref<1x16x16x8xf32, #tpu.memory_space<vmem>>, %arg8: memref<1x2x8xf32, #tpu.memory_space<vmem>>, %arg9: memref<18x18x2xf32, #tpu.memory_space<vmem>>, %arg10: memref<18x18x6xf32, #tpu.memory_space<vmem>>, %arg11: memref<18x18x12xf32, #tpu.memory_space<vmem>>) attributes {dimension_semantics = [#tpu.dimension_semantics<parallel>], iteration_bounds = array<i64: 2>, scalar_prefetch = 0 : i64, scratch_operands = 3 : i64, tpu.core_type = #tpu.core_type<tc>, window_params = [{transform_indices = @transform_0, window_bounds = array<i64: 1, 16, 16, 4>}, {pipeline_mode = #tpu.pipeline_mode<synchronous>, transform_indices = @transform_1, window_bounds = array<i64: 4, 8>}, {pipeline_mode = #tpu.pipeline_mode<synchronous>, transform_indices = @transform_2, window_bounds = array<i64: 18, 2>}, {pipeline_mode = #tpu.pipeline_mode<synchronous>, transform_indices = @transform_3, window_bounds = array<i64: 18, 6>}, {pipeline_mode = #tpu.pipeline_mode<synchronous>, transform_indices = @transform_4, window_bounds = array<i64: 54, 6>}, {pipeline_mode = #tpu.pipeline_mode<synchronous>, transform_indices = @transform_5, window_bounds = array<i64: 108, 8>}, {transform_indices = @transform_6, window_bounds = array<i64: 1, 16, 16, 8>}, {transform_indices = @transform_7, window_bounds = array<i64: 1, 2, 8>}]} {
    %cst = arith.constant 0.000000e+00 : f32
    %0 = vector.broadcast %cst : f32 to vector<1x18x2xf32>
    %cst_0 = arith.constant 0.000000e+00 : f32
    %1 = vector.broadcast %cst_0 : f32 to vector<18x1x2xf32>
    %c0 = arith.constant 0 : index
    %c0_1 = arith.constant 0 : index
    %c0_2 = arith.constant 0 : index
    %2 = vector.load %arg9[%c0, %c0_1, %c0_2] : memref<18x18x2xf32, #tpu.memory_space<vmem>>, vector<1x18x2xf32>
    tpu.vector_store %arg9[%c0, %c0_1, %c0_2], %0 {strides = array<i32>} : memref<18x18x2xf32, #tpu.memory_space<vmem>>, vector<1x18x2xf32>,
    %c17 = arith.constant 17 : index
    %c0_3 = arith.constant 0 : index
    %c0_4 = arith.constant 0 : index
    %3 = vector.load %arg9[%c17, %c0_3, %c0_4] : memref<18x18x2xf32, #tpu.memory_space<vmem>>, vector<1x18x2xf32>
    tpu.vector_store %arg9[%c17, %c0_3, %c0_4], %0 {strides = array<i32>} : memref<18x18x2xf32, #tpu.memory_space<vmem>>, vector<1x18x2xf32>,
    %c0_5 = arith.constant 0 : index
    %c0_6 = arith.constant 0 : index
    %c0_7 = arith.constant 0 : index
    %4 = vector.load %arg9[%c0_5, %c0_6, %c0_7] : memref<18x18x2xf32, #tpu.memory_space<vmem>>, vector<18x1x2xf32>
    tpu.vector_store %arg9[%c0_5, %c0_6, %c0_7], %1 {strides = array<i32>} : memref<18x18x2xf32, #tpu.memory_space<vmem>>, vector<18x1x2xf32>,
    %c0_8 = arith.constant 0 : index
    %c17_9 = arith.constant 17 : index
    %c0_10 = arith.constant 0 : index
    %5 = vector.load %arg9[%c0_8, %c17_9, %c0_10] : memref<18x18x2xf32, #tpu.memory_space<vmem>>, vector<18x1x2xf32>
    tpu.vector_store %arg9[%c0_8, %c17_9, %c0_10], %1 {strides = array<i32>} : memref<18x18x2xf32, #tpu.memory_space<vmem>>, vector<18x1x2xf32>,
    %cst_11 = arith.constant 0.000000e+00 : f32
    %6 = vector.broadcast %cst_11 : f32 to vector<1x18x6xf32>
    %cst_12 = arith.constant 0.000000e+00 : f32
    %7 = vector.broadcast %cst_12 : f32 to vector<18x1x6xf32>
    %c0_13 = arith.constant 0 : index
    %c0_14 = arith.constant 0 : index
    %c0_15 = arith.constant 0 : index
    %8 = vector.load %arg10[%c0_13, %c0_14, %c0_15] : memref<18x18x6xf32, #tpu.memory_space<vmem>>, vector<1x18x6xf32>
    tpu.vector_store %arg10[%c0_13, %c0_14, %c0_15], %6 {strides = array<i32>} : memref<18x18x6xf32, #tpu.memory_space<vmem>>, vector<1x18x6xf32>,
    %c17_16 = arith.constant 17 : index
    %c0_17 = arith.constant 0 : index
    %c0_18 = arith.constant 0 : index
    %9 = vector.load %arg10[%c17_16, %c0_17, %c0_18] : memref<18x18x6xf32, #tpu.memory_space<vmem>>, vector<1x18x6xf32>
    tpu.vector_store %arg10[%c17_16, %c0_17, %c0_18], %6 {strides = array<i32>} : memref<18x18x6xf32, #tpu.memory_space<vmem>>, vector<1x18x6xf32>,
    %c0_19 = arith.constant 0 : index
    %c0_20 = arith.constant 0 : index
    %c0_21 = arith.constant 0 : index
    %10 = vector.load %arg10[%c0_19, %c0_20, %c0_21] : memref<18x18x6xf32, #tpu.memory_space<vmem>>, vector<18x1x6xf32>
    tpu.vector_store %arg10[%c0_19, %c0_20, %c0_21], %7 {strides = array<i32>} : memref<18x18x6xf32, #tpu.memory_space<vmem>>, vector<18x1x6xf32>,
    %c0_22 = arith.constant 0 : index
    %c17_23 = arith.constant 17 : index
    %c0_24 = arith.constant 0 : index
    %11 = vector.load %arg10[%c0_22, %c17_23, %c0_24] : memref<18x18x6xf32, #tpu.memory_space<vmem>>, vector<18x1x6xf32>
    tpu.vector_store %arg10[%c0_22, %c17_23, %c0_24], %7 {strides = array<i32>} : memref<18x18x6xf32, #tpu.memory_space<vmem>>, vector<18x1x6xf32>,
    %cst_25 = arith.constant 0.000000e+00 : f32
    %12 = vector.broadcast %cst_25 : f32 to vector<1x18x12xf32>
    %cst_26 = arith.constant 0.000000e+00 : f32
    %13 = vector.broadcast %cst_26 : f32 to vector<18x1x12xf32>
    %c0_27 = arith.constant 0 : index
    %c0_28 = arith.constant 0 : index
    %c0_29 = arith.constant 0 : index
    %14 = vector.load %arg11[%c0_27, %c0_28, %c0_29] : memref<18x18x12xf32, #tpu.memory_space<vmem>>, vector<1x18x12xf32>
    tpu.vector_store %arg11[%c0_27, %c0_28, %c0_29], %12 {strides = array<i32>} : memref<18x18x12xf32, #tpu.memory_space<vmem>>, vector<1x18x12xf32>,
    %c17_30 = arith.constant 17 : index
    %c0_31 = arith.constant 0 : index
    %c0_32 = arith.constant 0 : index
    %15 = vector.load %arg11[%c17_30, %c0_31, %c0_32] : memref<18x18x12xf32, #tpu.memory_space<vmem>>, vector<1x18x12xf32>
    tpu.vector_store %arg11[%c17_30, %c0_31, %c0_32], %12 {strides = array<i32>} : memref<18x18x12xf32, #tpu.memory_space<vmem>>, vector<1x18x12xf32>,
    %c0_33 = arith.constant 0 : index
    %c0_34 = arith.constant 0 : index
    %c0_35 = arith.constant 0 : index
    %16 = vector.load %arg11[%c0_33, %c0_34, %c0_35] : memref<18x18x12xf32, #tpu.memory_space<vmem>>, vector<18x1x12xf32>
    tpu.vector_store %arg11[%c0_33, %c0_34, %c0_35], %13 {strides = array<i32>} : memref<18x18x12xf32, #tpu.memory_space<vmem>>, vector<18x1x12xf32>,
    %c0_36 = arith.constant 0 : index
    %c17_37 = arith.constant 17 : index
    %c0_38 = arith.constant 0 : index
    %17 = vector.load %arg11[%c0_36, %c17_37, %c0_38] : memref<18x18x12xf32, #tpu.memory_space<vmem>>, vector<18x1x12xf32>
    tpu.vector_store %arg11[%c0_36, %c17_37, %c0_38], %13 {strides = array<i32>} : memref<18x18x12xf32, #tpu.memory_space<vmem>>, vector<18x1x12xf32>,
    %c0_39 = arith.constant 0 : index
    %c0_40 = arith.constant 0 : index
    %c0_41 = arith.constant 0 : index
    %c0_42 = arith.constant 0 : index
    %18 = vector.load %arg1[%c0_39, %c0_40, %c0_41, %c0_42] : memref<1x16x16x4xf32, #tpu.memory_space<vmem>>, vector<1x16x16x4xf32>
    %19 = vector.shape_cast %18 : vector<1x16x16x4xf32> to vector<16x16x4xf32>
    %20 = vector.shape_cast %19 : vector<16x16x4xf32> to vector<256x4xf32>
    %21 = arith.truncf %20 : vector<256x4xf32> to vector<256x4xbf16>
    %c0_43 = arith.constant 0 : index
    %c0_44 = arith.constant 0 : index
    %22 = vector.load %arg2[%c0_43, %c0_44] : memref<4x8xbf16, #tpu.memory_space<vmem>>, vector<4x8xbf16>
    %cst_45 = arith.constant dense<0.000000e+00> : vector<256x8xf32>
    %23 = tpu.matmul %21, %22, %cst_45 {dimension_numbers = #tpu.dot_dimension_numbers<[1], [0], [0], [1], [0, 0, 1, 1], [], []>} : vector<256x4xbf16>, vector<4x8xbf16>, vector<256x8xf32> -> vector<256x8xf32>
    %24 = vector.extract_strided_slice %23 {offsets = [0, 0], sizes = [256, 2], strides = [1, 1]} : vector<256x8xf32> to vector<256x2xf32>
    %25 = vector.shape_cast %24 : vector<256x2xf32> to vector<16x16x2xf32>
    %c1 = arith.constant 1 : index
    %c1_46 = arith.constant 1 : index
    %c0_47 = arith.constant 0 : index
    %26 = vector.load %arg11[%c1, %c1_46, %c0_47] : memref<18x18x12xf32, #tpu.memory_space<vmem>>, vector<16x16x2xf32>
    tpu.vector_store %arg11[%c1, %c1_46, %c0_47], %25 {strides = array<i32>} : memref<18x18x12xf32, #tpu.memory_space<vmem>>, vector<16x16x2xf32>,
    %27 = vector.extract_strided_slice %23 {offsets = [0, 2], sizes = [256, 2], strides = [1, 1]} : vector<256x8xf32> to vector<256x2xf32>
    %cst_48 = arith.constant 0.000000e+00 : f32
    %28 = vector.broadcast %cst_48 : f32 to vector<256x2xf32>
    %29 = arith.maximumf %27, %28 : vector<256x2xf32>
    %30 = vector.shape_cast %29 : vector<256x2xf32> to vector<16x16x2xf32>
    %c1_49 = arith.constant 1 : index
    %c1_50 = arith.constant 1 : index
    %c0_51 = arith.constant 0 : index
    %31 = vector.load %arg9[%c1_49, %c1_50, %c0_51] : memref<18x18x2xf32, #tpu.memory_space<vmem>>, vector<16x16x2xf32>
    tpu.vector_store %arg9[%c1_49, %c1_50, %c0_51], %30 {strides = array<i32>} : memref<18x18x2xf32, #tpu.memory_space<vmem>>, vector<16x16x2xf32>,
    %c0_52 = arith.constant 0 : index
    %c0_53 = arith.constant 0 : index
    %32 = vector.load %arg3[%c0_52, %c0_53] : memref<18x2xbf16, #tpu.memory_space<vmem>>, vector<18x2xbf16>
    %c0_54 = arith.constant 0 : index
    %c0_55 = arith.constant 0 : index
    %c0_56 = arith.constant 0 : index
    %33 = vector.load %arg9[%c0_54, %c0_55, %c0_56] : memref<18x18x2xf32, #tpu.memory_space<vmem>>, vector<16x16x2xf32>
    %34 = vector.shape_cast %33 : vector<16x16x2xf32> to vector<256x2xf32>
    %c0_57 = arith.constant 0 : index
    %c1_58 = arith.constant 1 : index
    %c0_59 = arith.constant 0 : index
    %35 = vector.load %arg9[%c0_57, %c1_58, %c0_59] : memref<18x18x2xf32, #tpu.memory_space<vmem>>, vector<16x16x2xf32>
    %36 = vector.shape_cast %35 : vector<16x16x2xf32> to vector<256x2xf32>
    %c0_60 = arith.constant 0 : index
    %c2 = arith.constant 2 : index
    %c0_61 = arith.constant 0 : index
    %37 = vector.load %arg9[%c0_60, %c2, %c0_61] : memref<18x18x2xf32, #tpu.memory_space<vmem>>, vector<16x16x2xf32>
    %38 = vector.shape_cast %37 : vector<16x16x2xf32> to vector<256x2xf32>
    %c1_62 = arith.constant 1 : index
    %c0_63 = arith.constant 0 : index
    %c0_64 = arith.constant 0 : index
    %39 = vector.load %arg9[%c1_62, %c0_63, %c0_64] : memref<18x18x2xf32, #tpu.memory_space<vmem>>, vector<16x16x2xf32>
    %40 = vector.shape_cast %39 : vector<16x16x2xf32> to vector<256x2xf32>
    %c1_65 = arith.constant 1 : index
    %c1_66 = arith.constant 1 : index
    %c0_67 = arith.constant 0 : index
    %41 = vector.load %arg9[%c1_65, %c1_66, %c0_67] : memref<18x18x2xf32, #tpu.memory_space<vmem>>, vector<16x16x2xf32>
    %42 = vector.shape_cast %41 : vector<16x16x2xf32> to vector<256x2xf32>
    %c1_68 = arith.constant 1 : index
    %c2_69 = arith.constant 2 : index
    %c0_70 = arith.constant 0 : index
    %43 = vector.load %arg9[%c1_68, %c2_69, %c0_70] : memref<18x18x2xf32, #tpu.memory_space<vmem>>, vector<16x16x2xf32>
    %44 = vector.shape_cast %43 : vector<16x16x2xf32> to vector<256x2xf32>
    %c2_71 = arith.constant 2 : index
    %c0_72 = arith.constant 0 : index
    %c0_73 = arith.constant 0 : index
    %45 = vector.load %arg9[%c2_71, %c0_72, %c0_73] : memref<18x18x2xf32, #tpu.memory_space<vmem>>, vector<16x16x2xf32>
    %46 = vector.shape_cast %45 : vector<16x16x2xf32> to vector<256x2xf32>
    %c2_74 = arith.constant 2 : index
    %c1_75 = arith.constant 1 : index
    %c0_76 = arith.constant 0 : index
    %47 = vector.load %arg9[%c2_74, %c1_75, %c0_76] : memref<18x18x2xf32, #tpu.memory_space<vmem>>, vector<16x16x2xf32>
    %48 = vector.shape_cast %47 : vector<16x16x2xf32> to vector<256x2xf32>
    %c2_77 = arith.constant 2 : index
    %c2_78 = arith.constant 2 : index
    %c0_79 = arith.constant 0 : index
    %49 = vector.load %arg9[%c2_77, %c2_78, %c0_79] : memref<18x18x2xf32, #tpu.memory_space<vmem>>, vector<16x16x2xf32>
    %50 = vector.shape_cast %49 : vector<16x16x2xf32> to vector<256x2xf32>
    %51 = tpu.concatenate %34, %36, %38, %40, %42, %44, %46, %48, %50 in 1 : vector<256x2xf32>, vector<256x2xf32>, vector<256x2xf32>, vector<256x2xf32>, vector<256x2xf32>, vector<256x2xf32>, vector<256x2xf32>, vector<256x2xf32>, vector<256x2xf32> -> vector<256x18xf32>
    %52 = arith.truncf %51 : vector<256x18xf32> to vector<256x18xbf16>
    %cst_80 = arith.constant dense<0.000000e+00> : vector<256x2xf32>
    %53 = tpu.matmul %52, %32, %cst_80 {dimension_numbers = #tpu.dot_dimension_numbers<[1], [0], [0], [1], [0, 0, 1, 1], [], []>} : vector<256x18xbf16>, vector<18x2xbf16>, vector<256x2xf32> -> vector<256x2xf32>
    %54 = vector.shape_cast %53 : vector<256x2xf32> to vector<16x16x2xf32>
    %c1_81 = arith.constant 1 : index
    %c1_82 = arith.constant 1 : index
    %c2_83 = arith.constant 2 : index
    %55 = vector.load %arg11[%c1_81, %c1_82, %c2_83] : memref<18x18x12xf32, #tpu.memory_space<vmem>>, vector<16x16x2xf32>
    tpu.vector_store %arg11[%c1_81, %c1_82, %c2_83], %54 {strides = array<i32>} : memref<18x18x12xf32, #tpu.memory_space<vmem>>, vector<16x16x2xf32>,
    %56 = vector.extract_strided_slice %23 {offsets = [0, 4], sizes = [256, 2], strides = [1, 1]} : vector<256x8xf32> to vector<256x2xf32>
    %cst_84 = arith.constant 0.000000e+00 : f32
    %57 = vector.broadcast %cst_84 : f32 to vector<256x2xf32>
    %58 = arith.maximumf %56, %57 : vector<256x2xf32>
    %59 = vector.shape_cast %58 : vector<256x2xf32> to vector<16x16x2xf32>
    %c1_85 = arith.constant 1 : index
    %c1_86 = arith.constant 1 : index
    %c0_87 = arith.constant 0 : index
    %60 = vector.load %arg9[%c1_85, %c1_86, %c0_87] : memref<18x18x2xf32, #tpu.memory_space<vmem>>, vector<16x16x2xf32>
    tpu.vector_store %arg9[%c1_85, %c1_86, %c0_87], %59 {strides = array<i32>} : memref<18x18x2xf32, #tpu.memory_space<vmem>>, vector<16x16x2xf32>,
    %c0_88 = arith.constant 0 : index
    %c0_89 = arith.constant 0 : index
    %61 = vector.load %arg4[%c0_88, %c0_89] : memref<18x6xbf16, #tpu.memory_space<vmem>>, vector<18x6xbf16>
    %c0_90 = arith.constant 0 : index
    %c0_91 = arith.constant 0 : index
    %c0_92 = arith.constant 0 : index
    %62 = vector.load %arg9[%c0_90, %c0_91, %c0_92] : memref<18x18x2xf32, #tpu.memory_space<vmem>>, vector<16x16x2xf32>
    %63 = vector.shape_cast %62 : vector<16x16x2xf32> to vector<256x2xf32>
    %c0_93 = arith.constant 0 : index
    %c1_94 = arith.constant 1 : index
    %c0_95 = arith.constant 0 : index
    %64 = vector.load %arg9[%c0_93, %c1_94, %c0_95] : memref<18x18x2xf32, #tpu.memory_space<vmem>>, vector<16x16x2xf32>
    %65 = vector.shape_cast %64 : vector<16x16x2xf32> to vector<256x2xf32>
    %c0_96 = arith.constant 0 : index
    %c2_97 = arith.constant 2 : index
    %c0_98 = arith.constant 0 : index
    %66 = vector.load %arg9[%c0_96, %c2_97, %c0_98] : memref<18x18x2xf32, #tpu.memory_space<vmem>>, vector<16x16x2xf32>
    %67 = vector.shape_cast %66 : vector<16x16x2xf32> to vector<256x2xf32>
    %c1_99 = arith.constant 1 : index
    %c0_100 = arith.constant 0 : index
    %c0_101 = arith.constant 0 : index
    %68 = vector.load %arg9[%c1_99, %c0_100, %c0_101] : memref<18x18x2xf32, #tpu.memory_space<vmem>>, vector<16x16x2xf32>
    %69 = vector.shape_cast %68 : vector<16x16x2xf32> to vector<256x2xf32>
    %c1_102 = arith.constant 1 : index
    %c1_103 = arith.constant 1 : index
    %c0_104 = arith.constant 0 : index
    %70 = vector.load %arg9[%c1_102, %c1_103, %c0_104] : memref<18x18x2xf32, #tpu.memory_space<vmem>>, vector<16x16x2xf32>
    %71 = vector.shape_cast %70 : vector<16x16x2xf32> to vector<256x2xf32>
    %c1_105 = arith.constant 1 : index
    %c2_106 = arith.constant 2 : index
    %c0_107 = arith.constant 0 : index
    %72 = vector.load %arg9[%c1_105, %c2_106, %c0_107] : memref<18x18x2xf32, #tpu.memory_space<vmem>>, vector<16x16x2xf32>
    %73 = vector.shape_cast %72 : vector<16x16x2xf32> to vector<256x2xf32>
    %c2_108 = arith.constant 2 : index
    %c0_109 = arith.constant 0 : index
    %c0_110 = arith.constant 0 : index
    %74 = vector.load %arg9[%c2_108, %c0_109, %c0_110] : memref<18x18x2xf32, #tpu.memory_space<vmem>>, vector<16x16x2xf32>
    %75 = vector.shape_cast %74 : vector<16x16x2xf32> to vector<256x2xf32>
    %c2_111 = arith.constant 2 : index
    %c1_112 = arith.constant 1 : index
    %c0_113 = arith.constant 0 : index
    %76 = vector.load %arg9[%c2_111, %c1_112, %c0_113] : memref<18x18x2xf32, #tpu.memory_space<vmem>>, vector<16x16x2xf32>
    %77 = vector.shape_cast %76 : vector<16x16x2xf32> to vector<256x2xf32>
    %c2_114 = arith.constant 2 : index
    %c2_115 = arith.constant 2 : index
    %c0_116 = arith.constant 0 : index
    %78 = vector.load %arg9[%c2_114, %c2_115, %c0_116] : memref<18x18x2xf32, #tpu.memory_space<vmem>>, vector<16x16x2xf32>
    %79 = vector.shape_cast %78 : vector<16x16x2xf32> to vector<256x2xf32>
    %80 = tpu.concatenate %63, %65, %67, %69, %71, %73, %75, %77, %79 in 1 : vector<256x2xf32>, vector<256x2xf32>, vector<256x2xf32>, vector<256x2xf32>, vector<256x2xf32>, vector<256x2xf32>, vector<256x2xf32>, vector<256x2xf32>, vector<256x2xf32> -> vector<256x18xf32>
    %81 = arith.truncf %80 : vector<256x18xf32> to vector<256x18xbf16>
    %cst_117 = arith.constant dense<0.000000e+00> : vector<256x6xf32>
    %82 = tpu.matmul %81, %61, %cst_117 {dimension_numbers = #tpu.dot_dimension_numbers<[1], [0], [0], [1], [0, 0, 1, 1], [], []>} : vector<256x18xbf16>, vector<18x6xbf16>, vector<256x6xf32> -> vector<256x6xf32>
    %cst_118 = arith.constant 0.000000e+00 : f32
    %83 = vector.broadcast %cst_118 : f32 to vector<256x6xf32>
    %84 = arith.maximumf %82, %83 : vector<256x6xf32>
    %85 = vector.shape_cast %84 : vector<256x6xf32> to vector<16x16x6xf32>
    %c1_119 = arith.constant 1 : index
    %c1_120 = arith.constant 1 : index
    %c0_121 = arith.constant 0 : index
    %86 = vector.load %arg10[%c1_119, %c1_120, %c0_121] : memref<18x18x6xf32, #tpu.memory_space<vmem>>, vector<16x16x6xf32>
    tpu.vector_store %arg10[%c1_119, %c1_120, %c0_121], %85 {strides = array<i32>} : memref<18x18x6xf32, #tpu.memory_space<vmem>>, vector<16x16x6xf32>,
    %c0_122 = arith.constant 0 : index
    %c0_123 = arith.constant 0 : index
    %87 = vector.load %arg5[%c0_122, %c0_123] : memref<54x6xbf16, #tpu.memory_space<vmem>>, vector<54x6xbf16>
    %c0_124 = arith.constant 0 : index
    %c0_125 = arith.constant 0 : index
    %c0_126 = arith.constant 0 : index
    %88 = vector.load %arg10[%c0_124, %c0_125, %c0_126] : memref<18x18x6xf32, #tpu.memory_space<vmem>>, vector<16x16x6xf32>
    %89 = vector.shape_cast %88 : vector<16x16x6xf32> to vector<256x6xf32>
    %c0_127 = arith.constant 0 : index
    %c1_128 = arith.constant 1 : index
    %c0_129 = arith.constant 0 : index
    %90 = vector.load %arg10[%c0_127, %c1_128, %c0_129] : memref<18x18x6xf32, #tpu.memory_space<vmem>>, vector<16x16x6xf32>
    %91 = vector.shape_cast %90 : vector<16x16x6xf32> to vector<256x6xf32>
    %c0_130 = arith.constant 0 : index
    %c2_131 = arith.constant 2 : index
    %c0_132 = arith.constant 0 : index
    %92 = vector.load %arg10[%c0_130, %c2_131, %c0_132] : memref<18x18x6xf32, #tpu.memory_space<vmem>>, vector<16x16x6xf32>
    %93 = vector.shape_cast %92 : vector<16x16x6xf32> to vector<256x6xf32>
    %c1_133 = arith.constant 1 : index
    %c0_134 = arith.constant 0 : index
    %c0_135 = arith.constant 0 : index
    %94 = vector.load %arg10[%c1_133, %c0_134, %c0_135] : memref<18x18x6xf32, #tpu.memory_space<vmem>>, vector<16x16x6xf32>
    %95 = vector.shape_cast %94 : vector<16x16x6xf32> to vector<256x6xf32>
    %c1_136 = arith.constant 1 : index
    %c1_137 = arith.constant 1 : index
    %c0_138 = arith.constant 0 : index
    %96 = vector.load %arg10[%c1_136, %c1_137, %c0_138] : memref<18x18x6xf32, #tpu.memory_space<vmem>>, vector<16x16x6xf32>
    %97 = vector.shape_cast %96 : vector<16x16x6xf32> to vector<256x6xf32>
    %c1_139 = arith.constant 1 : index
    %c2_140 = arith.constant 2 : index
    %c0_141 = arith.constant 0 : index
    %98 = vector.load %arg10[%c1_139, %c2_140, %c0_141] : memref<18x18x6xf32, #tpu.memory_space<vmem>>, vector<16x16x6xf32>
    %99 = vector.shape_cast %98 : vector<16x16x6xf32> to vector<256x6xf32>
    %c2_142 = arith.constant 2 : index
    %c0_143 = arith.constant 0 : index
    %c0_144 = arith.constant 0 : index
    %100 = vector.load %arg10[%c2_142, %c0_143, %c0_144] : memref<18x18x6xf32, #tpu.memory_space<vmem>>, vector<16x16x6xf32>
    %101 = vector.shape_cast %100 : vector<16x16x6xf32> to vector<256x6xf32>
    %c2_145 = arith.constant 2 : index
    %c1_146 = arith.constant 1 : index
    %c0_147 = arith.constant 0 : index
    %102 = vector.load %arg10[%c2_145, %c1_146, %c0_147] : memref<18x18x6xf32, #tpu.memory_space<vmem>>, vector<16x16x6xf32>
    %103 = vector.shape_cast %102 : vector<16x16x6xf32> to vector<256x6xf32>
    %c2_148 = arith.constant 2 : index
    %c2_149 = arith.constant 2 : index
    %c0_150 = arith.constant 0 : index
    %104 = vector.load %arg10[%c2_148, %c2_149, %c0_150] : memref<18x18x6xf32, #tpu.memory_space<vmem>>, vector<16x16x6xf32>
    %105 = vector.shape_cast %104 : vector<16x16x6xf32> to vector<256x6xf32>
    %106 = tpu.concatenate %89, %91, %93, %95, %97, %99, %101, %103, %105 in 1 : vector<256x6xf32>, vector<256x6xf32>, vector<256x6xf32>, vector<256x6xf32>, vector<256x6xf32>, vector<256x6xf32>, vector<256x6xf32>, vector<256x6xf32>, vector<256x6xf32> -> vector<256x54xf32>
    %107 = arith.truncf %106 : vector<256x54xf32> to vector<256x54xbf16>
    %cst_151 = arith.constant dense<0.000000e+00> : vector<256x6xf32>
    %108 = tpu.matmul %107, %87, %cst_151 {dimension_numbers = #tpu.dot_dimension_numbers<[1], [0], [0], [1], [0, 0, 1, 1], [], []>} : vector<256x54xbf16>, vector<54x6xbf16>, vector<256x6xf32> -> vector<256x6xf32>
    %109 = vector.shape_cast %108 : vector<256x6xf32> to vector<16x16x6xf32>
    %c1_152 = arith.constant 1 : index
    %c1_153 = arith.constant 1 : index
    %c4 = arith.constant 4 : index
    %110 = vector.load %arg11[%c1_152, %c1_153, %c4] : memref<18x18x12xf32, #tpu.memory_space<vmem>>, vector<16x16x6xf32>
    tpu.vector_store %arg11[%c1_152, %c1_153, %c4], %109 {strides = array<i32>} : memref<18x18x12xf32, #tpu.memory_space<vmem>>, vector<16x16x6xf32>,
    %111 = vector.extract_strided_slice %23 {offsets = [0, 6], sizes = [256, 2], strides = [1, 1]} : vector<256x8xf32> to vector<256x2xf32>
    %112 = vector.shape_cast %111 : vector<256x2xf32> to vector<16x16x2xf32>
    %c1_154 = arith.constant 1 : index
    %c1_155 = arith.constant 1 : index
    %c0_156 = arith.constant 0 : index
    %113 = vector.load %arg9[%c1_154, %c1_155, %c0_156] : memref<18x18x2xf32, #tpu.memory_space<vmem>>, vector<16x16x2xf32>
    tpu.vector_store %arg9[%c1_154, %c1_155, %c0_156], %112 {strides = array<i32>} : memref<18x18x2xf32, #tpu.memory_space<vmem>>, vector<16x16x2xf32>,
    %cst_157 = arith.constant 0.000000e+00 : f32
    %114 = vector.broadcast %cst_157 : f32 to vector<256x2xf32>
    %c0_158 = arith.constant 0 : index
    %c0_159 = arith.constant 0 : index
    %c0_160 = arith.constant 0 : index
    %115 = vector.load %arg9[%c0_158, %c0_159, %c0_160] : memref<18x18x2xf32, #tpu.memory_space<vmem>>, vector<16x16x2xf32>
    %116 = vector.shape_cast %115 : vector<16x16x2xf32> to vector<256x2xf32>
    %117 = arith.addf %114, %116 : vector<256x2xf32>
    %c0_161 = arith.constant 0 : index
    %c1_162 = arith.constant 1 : index
    %c0_163 = arith.constant 0 : index
    %118 = vector.load %arg9[%c0_161, %c1_162, %c0_163] : memref<18x18x2xf32, #tpu.memory_space<vmem>>, vector<16x16x2xf32>
    %119 = vector.shape_cast %118 : vector<16x16x2xf32> to vector<256x2xf32>
    %120 = arith.addf %117, %119 : vector<256x2xf32>
    %c0_164 = arith.constant 0 : index
    %c2_165 = arith.constant 2 : index
    %c0_166 = arith.constant 0 : index
    %121 = vector.load %arg9[%c0_164, %c2_165, %c0_166] : memref<18x18x2xf32, #tpu.memory_space<vmem>>, vector<16x16x2xf32>
    %122 = vector.shape_cast %121 : vector<16x16x2xf32> to vector<256x2xf32>
    %123 = arith.addf %120, %122 : vector<256x2xf32>
    %c1_167 = arith.constant 1 : index
    %c0_168 = arith.constant 0 : index
    %c0_169 = arith.constant 0 : index
    %124 = vector.load %arg9[%c1_167, %c0_168, %c0_169] : memref<18x18x2xf32, #tpu.memory_space<vmem>>, vector<16x16x2xf32>
    %125 = vector.shape_cast %124 : vector<16x16x2xf32> to vector<256x2xf32>
    %126 = arith.addf %123, %125 : vector<256x2xf32>
    %c1_170 = arith.constant 1 : index
    %c1_171 = arith.constant 1 : index
    %c0_172 = arith.constant 0 : index
    %127 = vector.load %arg9[%c1_170, %c1_171, %c0_172] : memref<18x18x2xf32, #tpu.memory_space<vmem>>, vector<16x16x2xf32>
    %128 = vector.shape_cast %127 : vector<16x16x2xf32> to vector<256x2xf32>
    %129 = arith.addf %126, %128 : vector<256x2xf32>
    %c1_173 = arith.constant 1 : index
    %c2_174 = arith.constant 2 : index
    %c0_175 = arith.constant 0 : index
    %130 = vector.load %arg9[%c1_173, %c2_174, %c0_175] : memref<18x18x2xf32, #tpu.memory_space<vmem>>, vector<16x16x2xf32>
    %131 = vector.shape_cast %130 : vector<16x16x2xf32> to vector<256x2xf32>
    %132 = arith.addf %129, %131 : vector<256x2xf32>
    %c2_176 = arith.constant 2 : index
    %c0_177 = arith.constant 0 : index
    %c0_178 = arith.constant 0 : index
    %133 = vector.load %arg9[%c2_176, %c0_177, %c0_178] : memref<18x18x2xf32, #tpu.memory_space<vmem>>, vector<16x16x2xf32>
    %134 = vector.shape_cast %133 : vector<16x16x2xf32> to vector<256x2xf32>
    %135 = arith.addf %132, %134 : vector<256x2xf32>
    %c2_179 = arith.constant 2 : index
    %c1_180 = arith.constant 1 : index
    %c0_181 = arith.constant 0 : index
    %136 = vector.load %arg9[%c2_179, %c1_180, %c0_181] : memref<18x18x2xf32, #tpu.memory_space<vmem>>, vector<16x16x2xf32>
    %137 = vector.shape_cast %136 : vector<16x16x2xf32> to vector<256x2xf32>
    %138 = arith.addf %135, %137 : vector<256x2xf32>
    %c2_182 = arith.constant 2 : index
    %c2_183 = arith.constant 2 : index
    %c0_184 = arith.constant 0 : index
    %139 = vector.load %arg9[%c2_182, %c2_183, %c0_184] : memref<18x18x2xf32, #tpu.memory_space<vmem>>, vector<16x16x2xf32>
    %140 = vector.shape_cast %139 : vector<16x16x2xf32> to vector<256x2xf32>
    %141 = arith.addf %138, %140 : vector<256x2xf32>
    %cst_185 = arith.constant 0.111111112 : f32
    %142 = vector.broadcast %cst_185 : f32 to vector<256x2xf32>
    %143 = arith.mulf %141, %142 : vector<256x2xf32>
    %144 = vector.shape_cast %143 : vector<256x2xf32> to vector<16x16x2xf32>
    %c1_186 = arith.constant 1 : index
    %c1_187 = arith.constant 1 : index
    %c10 = arith.constant 10 : index
    %145 = vector.load %arg11[%c1_186, %c1_187, %c10] : memref<18x18x12xf32, #tpu.memory_space<vmem>>, vector<16x16x2xf32>
    tpu.vector_store %arg11[%c1_186, %c1_187, %c10], %144 {strides = array<i32>} : memref<18x18x12xf32, #tpu.memory_space<vmem>>, vector<16x16x2xf32>,
    %c0_188 = arith.constant 0 : index
    %c0_189 = arith.constant 0 : index
    %146 = vector.load %arg6[%c0_188, %c0_189] : memref<108x8xbf16, #tpu.memory_space<vmem>>, vector<108x8xbf16>
    %c0_190 = arith.constant 0 : index
    %c0_191 = arith.constant 0 : index
    %c0_192 = arith.constant 0 : index
    %147 = vector.load %arg11[%c0_190, %c0_191, %c0_192] : memref<18x18x12xf32, #tpu.memory_space<vmem>>, vector<16x16x12xf32>
    %148 = vector.shape_cast %147 : vector<16x16x12xf32> to vector<256x12xf32>
    %c0_193 = arith.constant 0 : index
    %c1_194 = arith.constant 1 : index
    %c0_195 = arith.constant 0 : index
    %149 = vector.load %arg11[%c0_193, %c1_194, %c0_195] : memref<18x18x12xf32, #tpu.memory_space<vmem>>, vector<16x16x12xf32>
    %150 = vector.shape_cast %149 : vector<16x16x12xf32> to vector<256x12xf32>
    %c0_196 = arith.constant 0 : index
    %c2_197 = arith.constant 2 : index
    %c0_198 = arith.constant 0 : index
    %151 = vector.load %arg11[%c0_196, %c2_197, %c0_198] : memref<18x18x12xf32, #tpu.memory_space<vmem>>, vector<16x16x12xf32>
    %152 = vector.shape_cast %151 : vector<16x16x12xf32> to vector<256x12xf32>
    %c1_199 = arith.constant 1 : index
    %c0_200 = arith.constant 0 : index
    %c0_201 = arith.constant 0 : index
    %153 = vector.load %arg11[%c1_199, %c0_200, %c0_201] : memref<18x18x12xf32, #tpu.memory_space<vmem>>, vector<16x16x12xf32>
    %154 = vector.shape_cast %153 : vector<16x16x12xf32> to vector<256x12xf32>
    %c1_202 = arith.constant 1 : index
    %c1_203 = arith.constant 1 : index
    %c0_204 = arith.constant 0 : index
    %155 = vector.load %arg11[%c1_202, %c1_203, %c0_204] : memref<18x18x12xf32, #tpu.memory_space<vmem>>, vector<16x16x12xf32>
    %156 = vector.shape_cast %155 : vector<16x16x12xf32> to vector<256x12xf32>
    %c1_205 = arith.constant 1 : index
    %c2_206 = arith.constant 2 : index
    %c0_207 = arith.constant 0 : index
    %157 = vector.load %arg11[%c1_205, %c2_206, %c0_207] : memref<18x18x12xf32, #tpu.memory_space<vmem>>, vector<16x16x12xf32>
    %158 = vector.shape_cast %157 : vector<16x16x12xf32> to vector<256x12xf32>
    %c2_208 = arith.constant 2 : index
    %c0_209 = arith.constant 0 : index
    %c0_210 = arith.constant 0 : index
    %159 = vector.load %arg11[%c2_208, %c0_209, %c0_210] : memref<18x18x12xf32, #tpu.memory_space<vmem>>, vector<16x16x12xf32>
    %160 = vector.shape_cast %159 : vector<16x16x12xf32> to vector<256x12xf32>
    %c2_211 = arith.constant 2 : index
    %c1_212 = arith.constant 1 : index
    %c0_213 = arith.constant 0 : index
    %161 = vector.load %arg11[%c2_211, %c1_212, %c0_213] : memref<18x18x12xf32, #tpu.memory_space<vmem>>, vector<16x16x12xf32>
    %162 = vector.shape_cast %161 : vector<16x16x12xf32> to vector<256x12xf32>
    %c2_214 = arith.constant 2 : index
    %c2_215 = arith.constant 2 : index
    %c0_216 = arith.constant 0 : index
    %163 = vector.load %arg11[%c2_214, %c2_215, %c0_216] : memref<18x18x12xf32, #tpu.memory_space<vmem>>, vector<16x16x12xf32>
    %164 = vector.shape_cast %163 : vector<16x16x12xf32> to vector<256x12xf32>
    %165 = tpu.concatenate %148, %150, %152, %154, %156, %158, %160, %162, %164 in 1 : vector<256x12xf32>, vector<256x12xf32>, vector<256x12xf32>, vector<256x12xf32>, vector<256x12xf32>, vector<256x12xf32>, vector<256x12xf32>, vector<256x12xf32>, vector<256x12xf32> -> vector<256x108xf32>
    %166 = arith.truncf %165 : vector<256x108xf32> to vector<256x108xbf16>
    %cst_217 = arith.constant dense<0.000000e+00> : vector<256x8xf32>
    %167 = tpu.matmul %166, %146, %cst_217 {dimension_numbers = #tpu.dot_dimension_numbers<[1], [0], [0], [1], [0, 0, 1, 1], [], []>} : vector<256x108xbf16>, vector<108x8xbf16>, vector<256x8xf32> -> vector<256x8xf32>
    %168 = vector.shape_cast %167 : vector<256x8xf32> to vector<16x16x8xf32>
    %c0_218 = arith.constant 0 : index
    %c0_219 = arith.constant 0 : index
    %c0_220 = arith.constant 0 : index
    %c0_221 = arith.constant 0 : index
    %169 = vector.load %arg7[%c0_218, %c0_219, %c0_220, %c0_221] : memref<1x16x16x8xf32, #tpu.memory_space<vmem>>, vector<1x16x16x8xf32>
    %170 = vector.shape_cast %169 : vector<1x16x16x8xf32> to vector<16x16x8xf32>
    %171 = vector.shape_cast %168 : vector<16x16x8xf32> to vector<1x16x16x8xf32>
    tpu.vector_store %arg7[%c0_218, %c0_219, %c0_220, %c0_221], %171 {strides = array<i32>} : memref<1x16x16x8xf32, #tpu.memory_space<vmem>>, vector<1x16x16x8xf32>,
    %cst_222 = arith.constant dense<0.000000e+00> : vector<8xf32>
    %172 = vector.multi_reduction <add>, %167, %cst_222 [0] : vector<256x8xf32> to vector<8xf32>
    %173 = vector.shape_cast %172 : vector<8xf32> to vector<1x8xf32>
    %c0_223 = arith.constant 0 : index
    %c0_224 = arith.constant 0 : index
    %c0_225 = arith.constant 0 : index
    %174 = vector.load %arg8[%c0_223, %c0_224, %c0_225] : memref<1x2x8xf32, #tpu.memory_space<vmem>>, vector<1x1x8xf32>
    %175 = vector.shape_cast %174 : vector<1x1x8xf32> to vector<1x8xf32>
    %176 = vector.shape_cast %173 : vector<1x8xf32> to vector<1x1x8xf32>
    tpu.vector_store %arg8[%c0_223, %c0_224, %c0_225], %176 {strides = array<i32>} : memref<1x2x8xf32, #tpu.memory_space<vmem>>, vector<1x1x8xf32>,
    %177 = arith.mulf %167, %167 : vector<256x8xf32>
    %cst_226 = arith.constant dense<0.000000e+00> : vector<8xf32>
    %178 = vector.multi_reduction <add>, %177, %cst_226 [0] : vector<256x8xf32> to vector<8xf32>
    %179 = vector.shape_cast %178 : vector<8xf32> to vector<1x8xf32>
    %c0_227 = arith.constant 0 : index
    %c1_228 = arith.constant 1 : index
    %c0_229 = arith.constant 0 : index
    %180 = vector.load %arg8[%c0_227, %c1_228, %c0_229] : memref<1x2x8xf32, #tpu.memory_space<vmem>>, vector<1x1x8xf32>
    %181 = vector.shape_cast %180 : vector<1x1x8xf32> to vector<1x8xf32>
    %182 = vector.shape_cast %179 : vector<1x8xf32> to vector<1x1x8xf32>
    tpu.vector_store %arg8[%c0_227, %c1_228, %c0_229], %182 {strides = array<i32>} : memref<1x2x8xf32, #tpu.memory_space<vmem>>, vector<1x1x8xf32>,
    return
  }
  func.func @transform_0(%arg0: i32) -> (i32, i32, i32, i32) {
    %c0_i32 = arith.constant 0 : i32
    %c0_i32_0 = arith.constant 0 : i32
    %c0_i32_1 = arith.constant 0 : i32
    %c0_i32_2 = arith.constant 0 : i32
    return %arg0, %c0_i32, %c0_i32_0, %c0_i32_1 : i32, i32, i32, i32
  }
  func.func @transform_1(%arg0: i32) -> (i32, i32) {
    %c0_i32 = arith.constant 0 : i32
    %c0_i32_0 = arith.constant 0 : i32
    %c0_i32_1 = arith.constant 0 : i32
    return %c0_i32, %c0_i32_0 : i32, i32
  }
  func.func @transform_2(%arg0: i32) -> (i32, i32) {
    %c0_i32 = arith.constant 0 : i32
    %c0_i32_0 = arith.constant 0 : i32
    %c0_i32_1 = arith.constant 0 : i32
    return %c0_i32, %c0_i32_0 : i32, i32
  }
  func.func @transform_3(%arg0: i32) -> (i32, i32) {
    %c0_i32 = arith.constant 0 : i32
    %c0_i32_0 = arith.constant 0 : i32
    %c0_i32_1 = arith.constant 0 : i32
    return %c0_i32, %c0_i32_0 : i32, i32
  }
  func.func @transform_4(%arg0: i32) -> (i32, i32) {
    %c0_i32 = arith.constant 0 : i32
    %c0_i32_0 = arith.constant 0 : i32
    %c0_i32_1 = arith.constant 0 : i32
    return %c0_i32, %c0_i32_0 : i32, i32
  }
  func.func @transform_5(%arg0: i32) -> (i32, i32) {
    %c0_i32 = arith.constant 0 : i32
    %c0_i32_0 = arith.constant 0 : i32
    %c0_i32_1 = arith.constant 0 : i32
    return %c0_i32, %c0_i32_0 : i32, i32
  }
  func.func @transform_6(%arg0: i32) -> (i32, i32, i32, i32) {
    %c0_i32 = arith.constant 0 : i32
    %c0_i32_0 = arith.constant 0 : i32
    %c0_i32_1 = arith.constant 0 : i32
    %c0_i32_2 = arith.constant 0 : i32
    return %arg0, %c0_i32, %c0_i32_0, %c0_i32_1 : i32, i32, i32, i32
  }
  func.func @transform_7(%arg0: i32) -> (i32, i32, i32) {
    %c0_i32 = arith.constant 0 : i32
    %c0_i32_0 = arith.constant 0 : i32
    %c0_i32_1 = arith.constant 0 : i32
    return %arg0, %c0_i32, %c0_i32_0 : i32, i32, i32
  }
}

module attributes {stable_mosaic.version = 11 : i64} {
  func.func @bn_relu_kernel(%arg0: i32, %arg1: memref<1x16x128xf32, #tpu.memory_space<vmem>>, %arg2: memref<1x128xf32, #tpu.memory_space<vmem>>, %arg3: memref<1x128xf32, #tpu.memory_space<vmem>>, %arg4: memref<1x16x128xf32, #tpu.memory_space<vmem>>) attributes {dimension_semantics = [#tpu.dimension_semantics<parallel>], iteration_bounds = array<i64: 2>, scalar_prefetch = 0 : i64, scratch_operands = 0 : i64, tpu.core_type = #tpu.core_type<tc>, window_params = [{transform_indices = @transform_0, window_bounds = array<i64: 1, 16, 128>}, {pipeline_mode = #tpu.pipeline_mode<synchronous>, transform_indices = @transform_1, window_bounds = array<i64: 1, 128>}, {pipeline_mode = #tpu.pipeline_mode<synchronous>, transform_indices = @transform_2, window_bounds = array<i64: 1, 128>}, {transform_indices = @transform_3, window_bounds = array<i64: 1, 16, 128>}]} {
    %c0 = arith.constant 0 : index
    %c0_0 = arith.constant 0 : index
    %c0_1 = arith.constant 0 : index
    %0 = vector.load %arg1[%c0, %c0_0, %c0_1] : memref<1x16x128xf32, #tpu.memory_space<vmem>>, vector<1x16x128xf32>
    %1 = vector.shape_cast %0 : vector<1x16x128xf32> to vector<16x128xf32>
    %c0_2 = arith.constant 0 : index
    %c0_3 = arith.constant 0 : index
    %2 = vector.load %arg2[%c0_2, %c0_3] : memref<1x128xf32, #tpu.memory_space<vmem>>, vector<1x128xf32>
    %3 = vector.broadcast %2 : vector<1x128xf32> to vector<16x128xf32>
    %4 = arith.mulf %1, %3 : vector<16x128xf32>
    %c0_4 = arith.constant 0 : index
    %c0_5 = arith.constant 0 : index
    %5 = vector.load %arg3[%c0_4, %c0_5] : memref<1x128xf32, #tpu.memory_space<vmem>>, vector<1x128xf32>
    %6 = vector.broadcast %5 : vector<1x128xf32> to vector<16x128xf32>
    %7 = arith.addf %4, %6 : vector<16x128xf32>
    %cst = arith.constant 0.000000e+00 : f32
    %8 = vector.broadcast %cst : f32 to vector<16x128xf32>
    %9 = arith.maximumf %7, %8 : vector<16x128xf32>
    %c0_6 = arith.constant 0 : index
    %c0_7 = arith.constant 0 : index
    %c0_8 = arith.constant 0 : index
    %10 = vector.load %arg4[%c0_6, %c0_7, %c0_8] : memref<1x16x128xf32, #tpu.memory_space<vmem>>, vector<1x16x128xf32>
    %11 = vector.shape_cast %10 : vector<1x16x128xf32> to vector<16x128xf32>
    %12 = vector.shape_cast %9 : vector<16x128xf32> to vector<1x16x128xf32>
    tpu.vector_store %arg4[%c0_6, %c0_7, %c0_8], %12 {strides = array<i32>} : memref<1x16x128xf32, #tpu.memory_space<vmem>>, vector<1x16x128xf32>,
    return
  }
  func.func @transform_0(%arg0: i32) -> (i32, i32, i32) {
    %c0_i32 = arith.constant 0 : i32
    %c0_i32_0 = arith.constant 0 : i32
    %c0_i32_1 = arith.constant 0 : i32
    return %arg0, %c0_i32, %c0_i32_0 : i32, i32, i32
  }
  func.func @transform_1(%arg0: i32) -> (i32, i32) {
    %c0_i32 = arith.constant 0 : i32
    %c0_i32_0 = arith.constant 0 : i32
    %c0_i32_1 = arith.constant 0 : i32
    return %c0_i32, %c0_i32_0 : i32, i32
  }
  func.func @transform_2(%arg0: i32) -> (i32, i32) {
    %c0_i32 = arith.constant 0 : i32
    %c0_i32_0 = arith.constant 0 : i32
    %c0_i32_1 = arith.constant 0 : i32
    return %c0_i32, %c0_i32_0 : i32, i32
  }
  func.func @transform_3(%arg0: i32) -> (i32, i32, i32) {
    %c0_i32 = arith.constant 0 : i32
    %c0_i32_0 = arith.constant 0 : i32
    %c0_i32_1 = arith.constant 0 : i32
    return %arg0, %c0_i32, %c0_i32_0 : i32, i32, i32
  }
}

</mosaic_0001>

<llo_original>
// kernel: tile.18
$region0: #{tile.18}
  #allocation0 [shape = 's32[1]{0}', space=sflag, size = 0x4, scoped, tag = 'scoped memory for tile.18']
  %s0 = inlined_call_operand.vmem [shape: f32[8], index: 0, kind: input, shape index: {}]
  %s1 = inlined_call_operand.vmem [shape: f32[16,8], index: 1, kind: output, shape index: {}]
  // Predicated region
  $region2: #{tile.18} parent=0 // pred_check
    _
  $region3: #{tile.18} parent=0 // pred_check_branch
    %3 = sbr.rel (0) target = $region5
  $region4: #{tile.18} parent=0 // pred_region
    _
  $region5: #{tile.18} parent=0 // pred_fallthru
    _
  %v4 = vld [vmem:[%s0] ss:$0 sm:$0xff]
  %5 = vst [vmem:[%s1] sm:$0xff] %v4
  %s6 = scalar_lea.vmem %s1, 8
  %7 = vst [vmem:[%s6] sm:$0xff] %v4

// kernel: tile.19
$region0: #{tile.19}
  %s0 = inlined_call_operand.vmem [shape: f32[16,8], index: 0, kind: input, shape index: {}]
  %s1 = inlined_call_operand.vmem [shape: f32[1,128], index: 1, kind: output, shape index: {}]
  $region1: #{tile.19} parent=0
    #allocation0 [shape = 'u8[4096]{0}', space=vmem, size = 0x1000, scoped, tag = 'scoped mem for output reshape']
    %v2 = vld [vmem:[%s0] sm:$0x1]
    %vm3 = vcmask 64512
    %4 = vst.msk [vmem:[#allocation0] sm:$0x1] %vm3, %v2
    %s5 = scalar_lea.vmem %s0, 15
    %v6 = vld [vmem:[%s5] sm:$0x1]
    %7 = vrot.lane.b32.xlu0 %v6, 120
    %v8 = vpop.permute.xlu0 %7
    %vm9 = vcmask 1048512
    %10 = vst.msk [vmem:[#allocation0] sm:$0x1] %vm9, %v8
    %s11 = scalar_lea.vmem %s0, 14
    %v12 = vld [vmem:[%s11] sm:$0x1]
    %13 = vrot.lane.b32.xlu0 %v12, 112
    %v14 = vpop.permute.xlu0 %13
    %vm15 = vcmask 982912
    %16 = vst.msk [vmem:[#allocation0] sm:$0x1] %vm15, %v14
    %s17 = scalar_lea.vmem %s0, 13
    %v18 = vld [vmem:[%s17] sm:$0x1]
    %19 = vrot.lane.b32.xlu0 %v18, 104
    %v20 = vpop.permute.xlu0 %19
    %vm21 = vcmask 917312
    %22 = vst.msk [vmem:[#allocation0] sm:$0x1] %vm21, %v20
    %s23 = scalar_lea.vmem %s0, 12
    %v24 = vld [vmem:[%s23] sm:$0x1]
    %25 = vrot.lane.b32.xlu0 %v24, 96
    %v26 = vpop.permute.xlu0 %25
    %vm27 = vcmask 851712
    %28 = vst.msk [vmem:[#allocation0] sm:$0x1] %vm27, %v26
    %s29 = scalar_lea.vmem %s0, 11
    %v30 = vld [vmem:[%s29] sm:$0x1]
    %31 = vrot.lane.b32.xlu0 %v30, 88
    %v32 = vpop.permute.xlu0 %31
    %vm33 = vcmask 786112
    %34 = vst.msk [vmem:[#allocation0] sm:$0x1] %vm33, %v32
    %s35 = scalar_lea.vmem %s0, 10
    %v36 = vld [vmem:[%s35] sm:$0x1]
    %37 = vrot.lane.b32.xlu0 %v36, 80
    %v38 = vpop.permute.xlu0 %37
    %vm39 = vcmask 720512
    %40 = vst.msk [vmem:[#allocation0] sm:$0x1] %vm39, %v38
    %s41 = scalar_lea.vmem %s0, 9
    %v42 = vld [vmem:[%s41] sm:$0x1]
    %43 = vrot.lane.b32.xlu0 %v42, 72
    %v44 = vpop.permute.xlu0 %43
    %vm45 = vcmask 654912
    %46 = vst.msk [vmem:[#allocation0] sm:$0x1] %vm45, %v44
    %s47 = scalar_lea.vmem %s0, 8
    %v48 = vld [vmem:[%s47] sm:$0x1]
    %49 = vrot.lane.b32.xlu0 %v48, 64
    %v50 = vpop.permute.xlu0 %49
    %vm51 = vcmask 589312
    %52 = vst.msk [vmem:[#allocation0] sm:$0x1] %vm51, %v50
    %s53 = scalar_lea.vmem %s0, 7
    %v54 = vld [vmem:[%s53] sm:$0x1]
    %55 = vrot.lane.b32.xlu0 %v54, 56
    %v56 = vpop.permute.xlu0 %55
    %vm57 = vcmask 523712
    %58 = vst.msk [vmem:[#allocation0] sm:$0x1] %vm57, %v56
    %s59 = scalar_lea.vmem %s0, 6
    %v60 = vld [vmem:[%s59] sm:$0x1]
    %61 = vrot.lane.b32.xlu0 %v60, 48
    %v62 = vpop.permute.xlu0 %61
    %vm63 = vcmask 458112
    %64 = vst.msk [vmem:[#allocation0] sm:$0x1] %vm63, %v62
    %s65 = scalar_lea.vmem %s0, 5
    %v66 = vld [vmem:[%s65] sm:$0x1]
    %67 = vrot.lane.b32.xlu0 %v66, 40
    %v68 = vpop.permute.xlu0 %67
    %vm69 = vcmask 392512
    %70 = vst.msk [vmem:[#allocation0] sm:$0x1] %vm69, %v68
    %s71 = scalar_lea.vmem %s0, 4
    %v72 = vld [vmem:[%s71] sm:$0x1]
    %73 = vrot.lane.b32.xlu0 %v72, 32
    %v74 = vpop.permute.xlu0 %73
    %vm75 = vcmask 326912
    %76 = vst.msk [vmem:[#allocation0] sm:$0x1] %vm75, %v74
    %s77 = scalar_lea.vmem %s0, 3
    %v78 = vld [vmem:[%s77] sm:$0x1]
    %79 = vrot.lane.b32.xlu0 %v78, 24
    %v80 = vpop.permute.xlu0 %79
    %vm81 = vcmask 261312
    %82 = vst.msk [vmem:[#allocation0] sm:$0x1] %vm81, %v80
    %s83 = scalar_lea.vmem %s0, 2
    %v84 = vld [vmem:[%s83] sm:$0x1]
    %85 = vrot.lane.b32.xlu0 %v84, 16
    %v86 = vpop.permute.xlu0 %85
    %vm87 = vcmask 195712
    %88 = vst.msk [vmem:[#allocation0] sm:$0x1] %vm87, %v86
    %s89 = scalar_lea.vmem %s0, 1
    %v90 = vld [vmem:[%s89] sm:$0x1]
    %91 = vrot.lane.b32.xlu0 %v90, 8
    %v92 = vpop.permute.xlu0 %91
    %vm93 = vcmask 130112
    %94 = vst.msk [vmem:[#allocation0] sm:$0x1] %vm93, %v92
    %s96 = sshllo.u32 0, 1
    %v98 = vld [vmem:[#allocation0] sm:%s96]
    %s99 = sshllo.u32 0, 1
    %100 = vst [vmem:[%s1] sm:%s99] %v98

// kernel: inception_forward.3
$region0: #{inception_forward.3}
  #allocation0 [shape = 'u32[]', space=smem, size = 0x4, offset = 0x4, fixed_abs, tag = 'smem constant byte address 0x4 - core index']
  #allocation1 [shape = 'u32[144,128]{1,0:T(1,128)}', space=vmem, size = 0x12000, scoped, tag = 'internal scratch']
  %s0 = inlined_call_operand.vmem [shape: f32[2,16,128], index: 0, kind: input, shape index: {}]
  %s1 = inlined_call_operand.vmem [shape: f32[1,128], index: 1, kind: input, shape index: {}]
  %s2 = inlined_call_operand.vmem [shape: f32[1,128], index: 2, kind: input, shape index: {}]
  %s3 = inlined_call_operand.vmem [shape: f32[2,16,128], index: 3, kind: output, shape index: {}]
  %s4 = sld [smem:[#allocation0]]
  $region45: #{inception_forward.3} parent=0
    _
  %s6 = ssub.s32 1, %s4
  %s7 = scalar_select 0, %s6, %s4
  loop: start=0, step=1, limit=4
  $region2: #{inception_forward.3} parent=0 // loop_pre_header
    _
  $region3: #{inception_forward.3} parent=0 // loop_header
    %s9 = sphi 0, %s13
    %p10 = scmp.ge.s32.totalorder %s9, 4
    %s19 = sphi 0, %s21
    %s22 = sphi 0, %s19
    %s23 = sphi 0, %s22
    %s39 = sphi 0, %s23
    %s43 = sphi 0, %s43
    %s45 = sphi 0, %s43
    %s46 = sphi 0, %s45
    %s60 = sphi 0, %s46
    %s64 = sphi 0, %s64
    %s66 = sphi 0, %s64
    %s67 = sphi 0, %s66
    %s81 = sphi 0, %s67
    %s87 = sphi 0, %s89
    %s90 = sphi 0, %s87
    %s91 = sphi 0, %s90
    %s107 = sphi 0, %s91
  $region4: #{inception_forward.3} parent=0 // loop_header_branch
    %12 = sbr.rel (%p10) target = $region8
  $region5: #{inception_forward.3} parent=0 // loop_body
    %s14 = ssub.s32 %s9, 1
    %s15 = ssub.s32 %s9, 2
    %s16 = sadd.s32 %s9, 1
    %s17 = ssub.s32 %s9, %s16
    %p18 = scmp.eq.s32.totalorder %s17, 0
    %s20 = sadd.s32 %s19, 1
    %s21 = scalar_select %p18, %s19, %s20
    %p24 = pneg %p18
    %p25 = scmp.eq.s32.totalorder %s9, 1
    %p26 = por %p24, %p25
    %p27 = scmp.ne.s32.totalorder %s19, %s22
    %p28 = scmp.eq.s32.totalorder %s9, 0
    %p29 = por %p27, %p28
    %p30 = scmp.ne.s32.totalorder %s19, %s22
    %p31 = scmp.eq.s32.totalorder %s14, 1
    %p32 = por %p30, %p31
    %p33 = scmp.ne.s32.totalorder %s22, %s23
    %p34 = scmp.eq.s32.totalorder %s14, 0
    %p35 = por %p33, %p34
    %p36 = scmp.ne.s32.totalorder %s22, %s23
    %p37 = scmp.eq.s32.totalorder %s15, 1
    %p38 = por %p36, %p37
    %p40 = scmp.ne.s32.totalorder %s23, %s39
    %p41 = scmp.eq.s32.totalorder %s15, 0
    %p42 = por %p40, %p41
    %s44 = sadd.s32 %s43, 1
    %p47 = scmp.eq.s32.totalorder %s9, 1
    %p48 = scmp.ne.s32.totalorder %s43, %s45
    %p49 = scmp.eq.s32.totalorder %s9, 0
    %p50 = por %p48, %p49
    %p51 = scmp.ne.s32.totalorder %s43, %s45
    %p52 = scmp.eq.s32.totalorder %s14, 1
    %p53 = por %p51, %p52
    %p54 = scmp.ne.s32.totalorder %s45, %s46
    %p55 = scmp.eq.s32.totalorder %s14, 0
    %p56 = por %p54, %p55
    %p57 = scmp.ne.s32.totalorder %s45, %s46
    %p58 = scmp.eq.s32.totalorder %s15, 1
    %p59 = por %p57, %p58
    %p61 = scmp.ne.s32.totalorder %s46, %s60
    %p62 = scmp.eq.s32.totalorder %s15, 0
    %p63 = por %p61, %p62
    %s65 = sadd.s32 %s64, 1
    %p68 = scmp.eq.s32.totalorder %s9, 1
    %p69 = scmp.ne.s32.totalorder %s64, %s66
    %p70 = scmp.eq.s32.totalorder %s9, 0
    %p71 = por %p69, %p70
    %p72 = scmp.ne.s32.totalorder %s64, %s66
    %p73 = scmp.eq.s32.totalorder %s14, 1
    %p74 = por %p72, %p73
    %p75 = scmp.ne.s32.totalorder %s66, %s67
    %p76 = scmp.eq.s32.totalorder %s14, 0
    %p77 = por %p75, %p76
    %p78 = scmp.ne.s32.totalorder %s66, %s67
    %p79 = scmp.eq.s32.totalorder %s15, 1
    %p80 = por %p78, %p79
    %p82 = scmp.ne.s32.totalorder %s67, %s81
    %p83 = scmp.eq.s32.totalorder %s15, 0
    %p84 = por %p82, %p83
    %s85 = ssub.s32 %s9, %s16
    %p86 = scmp.eq.s32.totalorder %s85, 0
    %s88 = sadd.s32 %s87, 1
    %s89 = scalar_select %p86, %s87, %s88
    %p92 = pneg %p86
    %p93 = scmp.eq.s32.totalorder %s9, 1
    %p94 = por %p92, %p93
    %p95 = scmp.ne.s32.totalorder %s87, %s90
    %p96 = scmp.eq.s32.totalorder %s9, 0
    %p97 = por %p95, %p96
    %p98 = scmp.ne.s32.totalorder %s87, %s90
    %p99 = scmp.eq.s32.totalorder %s14, 1
    %p100 = por %p98, %p99
    %p101 = scmp.ne.s32.totalorder %s90, %s91
    %p102 = scmp.eq.s32.totalorder %s14, 0
    %p103 = por %p101, %p102
    %p104 = scmp.ne.s32.totalorder %s90, %s91
    %p105 = scmp.eq.s32.totalorder %s15, 1
    %p106 = por %p104, %p105
    %p108 = scmp.ne.s32.totalorder %s91, %s107
    %p109 = scmp.eq.s32.totalorder %s15, 0
    %p110 = por %p108, %p109
    %p111 = scmp.le.s32.totalorder 1, %s9
    %p112 = scmp.lt.s32.totalorder %s9, 3
    %p113 = pnand %p111, %p112
    %p114 = pneg %p113
    // Predicated region
    $region9: #{inception_forward.3} parent=5 // pred_check
      _
    $region10: #{inception_forward.3} parent=5 // pred_check_branch
      %116 = sbr.rel (%p113) target = $region12
    $region11: #{inception_forward.3} parent=5 // pred_region
      %s117 = ssub.s32 %s9, 1
      // Predicated region
      $region13: #{inception_forward.3} parent=11 // pred_check
        %p118 = pneg %p56
      $region14: #{inception_forward.3} parent=11 // pred_check_branch
        %120 = sbr.rel (%p118) target = $region16
      $region15: #{inception_forward.3} parent=11 // pred_region
        _
      $region16: #{inception_forward.3} parent=11 // pred_fallthru
        _
      // Predicated region
      $region17: #{inception_forward.3} parent=11 // pred_check
        %p121 = pneg %p77
      $region18: #{inception_forward.3} parent=11 // pred_check_branch
        %123 = sbr.rel (%p121) target = $region20
      $region19: #{inception_forward.3} parent=11 // pred_region
        _
      $region20: #{inception_forward.3} parent=11 // pred_fallthru
        _
    $region12: #{inception_forward.3} parent=5 // pred_fallthru
      _
    %p124 = scmp.lt.s32.totalorder %s9, 2
    // Predicated region
    $region21: #{inception_forward.3} parent=5 // pred_check
      %p125 = pneg %p124
    $region22: #{inception_forward.3} parent=5 // pred_check_branch
      %127 = sbr.rel (%p125) target = $region24
    $region23: #{inception_forward.3} parent=5 // pred_region
      // Predicated region
      $region25: #{inception_forward.3} parent=23 // pred_check
        %p128 = pneg %p29
      $region26: #{inception_forward.3} parent=23 // pred_check_branch
        %130 = sbr.rel (%p128) target = $region28
      $region27: #{inception_forward.3} parent=23 // pred_region
        %p131 = scmp.lt.s32.totalorder %s9, 1
        %s132 = scalar_select %p131, %s9, 1
        %s133 = smul.addr %s132, 2
        %s134 = smul.addr %s133, 8
        %s135 = scalar_lea.vmem %s0, %s134
      $region28: #{inception_forward.3} parent=23 // pred_fallthru
        _
    $region24: #{inception_forward.3} parent=5 // pred_fallthru
      _
    %p136 = scmp.le.s32.totalorder 1, %s9
    %p137 = scmp.lt.s32.totalorder %s9, 3
    %p138 = pnand %p136, %p137
    %p139 = pneg %p138
    // Predicated region
    $region29: #{inception_forward.3} parent=5 // pred_check
      _
    $region30: #{inception_forward.3} parent=5 // pred_check_branch
      %141 = sbr.rel (%p138) target = $region32
    $region31: #{inception_forward.3} parent=5 // pred_region
      %s142 = ssub.s32 %s9, 1
      %p143 = scmp.lt.s32.totalorder %s14, 1
      %s144 = scalar_select %p143, %s14, 1
      %s145 = smul.addr %s144, 2
      %s146 = smul.addr %s145, 8
      %s147 = scalar_lea.vmem %s0, %s146
      %p148 = pneg %p35
      %p149 = pneg %p32
      %p150 = pneg %p56
      %p151 = pneg %p53
      %p152 = pneg %p77
      %p153 = pneg %p74
      %p154 = pneg %p103
      %p155 = pneg %p100
      %p156 = scmp.lt.s32.totalorder %s14, 1
      %s157 = scalar_select %p156, %s14, 1
      %s158 = smul.addr %s157, 2
      %s159 = smul.addr %s158, 8
      %s160 = scalar_lea.vmem %s3, %s159
      %p161 = scmp.lt.s32.totalorder %s14, 1
      %s162 = scalar_select %p161, %s14, 1
      %s163 = smul.addr %s162, 2
      %s164 = smul.addr %s163, 8
      %s165 = scalar_lea.vmem %s0, %s164
      %p166 = scmp.lt.s32.totalorder %s14, 1
      %s167 = scalar_select %p166, %s14, 1
      %s168 = smul.addr %s167, 2
      %s169 = smul.addr %s168, 8
      %s170 = scalar_lea.vmem %s3, %s169
      %v171 = vld [vmem:[%s165] sm:$0xff]
      %v172 = vld [vmem:[%s165 + $0x8] sm:$0xff]
      %v173 = vld [vmem:[%s1] sm:$0x1]
      %v175 = vlaneseq
      %v176 = vshrl.u32 %v175, 7
      %v177 = vsub.s32 0, %v176
      %v178 = vrot.slane %v173, %v177
      %v180 = vmul.f32 %v171, %v178
      %v181 = vmul.f32 %v172, %v178
      %v182 = vld [vmem:[%s2] sm:$0x1]
      %v184 = vlaneseq
      %v185 = vshrl.u32 %v184, 7
      %v186 = vsub.s32 0, %v185
      %v187 = vrot.slane %v182, %v186
      %v189 = vadd.f32 %v180, %v187
      %v190 = vadd.f32 %v181, %v187
      %v191 = vmax.f32 %v189, 0.0
      %v192 = vmax.f32 %v190, 0.0
      %193 = vst [vmem:[%s170] sm:$0xff] %v191
      %194 = vst [vmem:[%s170 + $0x8] sm:$0xff] %v192
      %p195 = scmp.lt.s32.totalorder %s14, 1
      %s196 = scalar_select %p195, %s14, 1
      %s197 = smul.addr %s196, 2
      %s198 = smul.addr %s197, 8
      %s199 = scalar_lea.vmem %s3, %s198
      // Predicated region
      $region33: #{inception_forward.3} parent=31 // pred_check
        %p200 = pneg %p100
      $region34: #{inception_forward.3} parent=31 // pred_check_branch
        %202 = sbr.rel (%p200) target = $region36
      $region35: #{inception_forward.3} parent=31 // pred_region
        _
      $region36: #{inception_forward.3} parent=31 // pred_fallthru
        _
    $region32: #{inception_forward.3} parent=5 // pred_fallthru
      _
    %p203 = scmp.le.s32.totalorder 2, %s9
    // Predicated region
    $region37: #{inception_forward.3} parent=5 // pred_check
      %p204 = pneg %p203
    $region38: #{inception_forward.3} parent=5 // pred_check_branch
      %206 = sbr.rel (%p204) target = $region40
    $region39: #{inception_forward.3} parent=5 // pred_region
      %s207 = ssub.s32 %s9, 2
      // Predicated region
      $region41: #{inception_forward.3} parent=39 // pred_check
        %p208 = pneg %p106
      $region42: #{inception_forward.3} parent=39 // pred_check_branch
        %210 = sbr.rel (%p208) target = $region44
      $region43: #{inception_forward.3} parent=39 // pred_region
        %p211 = scmp.lt.s32.totalorder %s15, 1
        %s212 = scalar_select %p211, %s15, 1
        %s213 = smul.addr %s212, 2
        %s214 = smul.addr %s213, 8
        %s215 = scalar_lea.vmem %s3, %s214
      $region44: #{inception_forward.3} parent=39 // pred_fallthru
        _
    $region40: #{inception_forward.3} parent=5 // pred_fallthru
      _
  $region6: #{inception_forward.3} parent=0 // loop_footer
    %s13 = sadd.s32 1, %s9
  $region7: #{inception_forward.3} parent=0 // loop_footer_branch
    %8 = sbr.rel target = $region3
  $region8: #{inception_forward.3} parent=0 // loop_exit
    _

// kernel: inception_forward.2
$region0: #{inception_forward.2}
  #allocation0 [shape = 'u32[]', space=smem, size = 0x4, offset = 0x4, fixed_abs, tag = 'smem constant byte address 0x4 - core index']
  #allocation1 [shape = 'u32[144,128]{1,0:T(1,128)}', space=vmem, size = 0x12000, scoped, tag = 'internal scratch']
  #allocation2 [shape = 'f32[18,18,2]{2,1,0:T(8,128)}', space=vmem, size = 0x36000, scoped, tag = 'scratch operand']
  #allocation3 [shape = 'f32[18,18,6]{2,1,0:T(8,128)}', space=vmem, size = 0x36000, scoped, tag = 'scratch operand']
  #allocation4 [shape = 'f32[18,18,12]{2,1,0:T(8,128)}', space=vmem, size = 0x36000, scoped, tag = 'scratch operand']
  %s0 = inlined_call_operand.vmem [shape: f32[2,16,16,4], index: 0, kind: input, shape index: {}]
  %s1 = inlined_call_operand.vmem [shape: bf16[4,8], index: 1, kind: input, shape index: {}]
  %s2 = inlined_call_operand.vmem [shape: bf16[18,2], index: 2, kind: input, shape index: {}]
  %s3 = inlined_call_operand.vmem [shape: bf16[18,6], index: 3, kind: input, shape index: {}]
  %s4 = inlined_call_operand.vmem [shape: bf16[54,6], index: 4, kind: input, shape index: {}]
  %s5 = inlined_call_operand.vmem [shape: bf16[108,8], index: 5, kind: input, shape index: {}]
  %s6 = inlined_call_operand.vmem [shape: f32[2,16,16,8], index: 6, kind: output, shape index: {0}]
  %s7 = inlined_call_operand.vmem [shape: f32[2,2,8], index: 7, kind: output, shape index: {1}]
  %8 = xla_tuple %s6, %s7
  %s9 = sld [smem:[#allocation0]]
  $region65: #{inception_forward.2} parent=0
    _
  %s11 = ssub.s32 1, %s9
  %s12 = scalar_select 0, %s11, %s9
  loop: start=0, step=1, limit=4
  $region2: #{inception_forward.2} parent=0 // loop_pre_header
    _
  $region3: #{inception_forward.2} parent=0 // loop_header
    %s14 = sphi 0, %s18
    %p15 = scmp.ge.s32.totalorder %s14, 4
    %s24 = sphi 0, %s26
    %s27 = sphi 0, %s24
    %s28 = sphi 0, %s27
    %s44 = sphi 0, %s28
    %s48 = sphi 0, %s48
    %s50 = sphi 0, %s48
    %s51 = sphi 0, %s50
    %s65 = sphi 0, %s51
    %s69 = sphi 0, %s69
    %s71 = sphi 0, %s69
    %s72 = sphi 0, %s71
    %s86 = sphi 0, %s72
    %s90 = sphi 0, %s90
    %s92 = sphi 0, %s90
    %s93 = sphi 0, %s92
    %s107 = sphi 0, %s93
    %s111 = sphi 0, %s111
    %s113 = sphi 0, %s111
    %s114 = sphi 0, %s113
    %s128 = sphi 0, %s114
    %s132 = sphi 0, %s132
    %s134 = sphi 0, %s132
    %s135 = sphi 0, %s134
    %s149 = sphi 0, %s135
    %s155 = sphi 0, %s157
    %s158 = sphi 0, %s155
    %s159 = sphi 0, %s158
    %s175 = sphi 0, %s159
    %s181 = sphi 0, %s183
    %s184 = sphi 0, %s181
    %s185 = sphi 0, %s184
    %s201 = sphi 0, %s185
  $region4: #{inception_forward.2} parent=0 // loop_header_branch
    %17 = sbr.rel (%p15) target = $region8
  $region5: #{inception_forward.2} parent=0 // loop_body
    %s19 = ssub.s32 %s14, 1
    %s20 = ssub.s32 %s14, 2
    %s21 = sadd.s32 %s14, 1
    %s22 = ssub.s32 %s14, %s21
    %p23 = scmp.eq.s32.totalorder %s22, 0
    %s25 = sadd.s32 %s24, 1
    %s26 = scalar_select %p23, %s24, %s25
    %p29 = pneg %p23
    %p30 = scmp.eq.s32.totalorder %s14, 1
    %p31 = por %p29, %p30
    %p32 = scmp.ne.s32.totalorder %s24, %s27
    %p33 = scmp.eq.s32.totalorder %s14, 0
    %p34 = por %p32, %p33
    %p35 = scmp.ne.s32.totalorder %s24, %s27
    %p36 = scmp.eq.s32.totalorder %s19, 1
    %p37 = por %p35, %p36
    %p38 = scmp.ne.s32.totalorder %s27, %s28
    %p39 = scmp.eq.s32.totalorder %s19, 0
    %p40 = por %p38, %p39
    %p41 = scmp.ne.s32.totalorder %s27, %s28
    %p42 = scmp.eq.s32.totalorder %s20, 1
    %p43 = por %p41, %p42
    %p45 = scmp.ne.s32.totalorder %s28, %s44
    %p46 = scmp.eq.s32.totalorder %s20, 0
    %p47 = por %p45, %p46
    %s49 = sadd.s32 %s48, 1
    %p52 = scmp.eq.s32.totalorder %s14, 1
    %p53 = scmp.ne.s32.totalorder %s48, %s50
    %p54 = scmp.eq.s32.totalorder %s14, 0
    %p55 = por %p53, %p54
    %p56 = scmp.ne.s32.totalorder %s48, %s50
    %p57 = scmp.eq.s32.totalorder %s19, 1
    %p58 = por %p56, %p57
    %p59 = scmp.ne.s32.totalorder %s50, %s51
    %p60 = scmp.eq.s32.totalorder %s19, 0
    %p61 = por %p59, %p60
    %p62 = scmp.ne.s32.totalorder %s50, %s51
    %p63 = scmp.eq.s32.totalorder %s20, 1
    %p64 = por %p62, %p63
    %p66 = scmp.ne.s32.totalorder %s51, %s65
    %p67 = scmp.eq.s32.totalorder %s20, 0
    %p68 = por %p66, %p67
    %s70 = sadd.s32 %s69, 1
    %p73 = scmp.eq.s32.totalorder %s14, 1
    %p74 = scmp.ne.s32.totalorder %s69, %s71
    %p75 = scmp.eq.s32.totalorder %s14, 0
    %p76 = por %p74, %p75
    %p77 = scmp.ne.s32.totalorder %s69, %s71
    %p78 = scmp.eq.s32.totalorder %s19, 1
    %p79 = por %p77, %p78
    %p80 = scmp.ne.s32.totalorder %s71, %s72
    %p81 = scmp.eq.s32.totalorder %s19, 0
    %p82 = por %p80, %p81
    %p83 = scmp.ne.s32.totalorder %s71, %s72
    %p84 = scmp.eq.s32.totalorder %s20, 1
    %p85 = por %p83, %p84
    %p87 = scmp.ne.s32.totalorder %s72, %s86
    %p88 = scmp.eq.s32.totalorder %s20, 0
    %p89 = por %p87, %p88
    %s91 = sadd.s32 %s90, 1
    %p94 = scmp.eq.s32.totalorder %s14, 1
    %p95 = scmp.ne.s32.totalorder %s90, %s92
    %p96 = scmp.eq.s32.totalorder %s14, 0
    %p97 = por %p95, %p96
    %p98 = scmp.ne.s32.totalorder %s90, %s92
    %p99 = scmp.eq.s32.totalorder %s19, 1
    %p100 = por %p98, %p99
    %p101 = scmp.ne.s32.totalorder %s92, %s93
    %p102 = scmp.eq.s32.totalorder %s19, 0
    %p103 = por %p101, %p102
    %p104 = scmp.ne.s32.totalorder %s92, %s93
    %p105 = scmp.eq.s32.totalorder %s20, 1
    %p106 = por %p104, %p105
    %p108 = scmp.ne.s32.totalorder %s93, %s107
    %p109 = scmp.eq.s32.totalorder %s20, 0
    %p110 = por %p108, %p109
    %s112 = sadd.s32 %s111, 1
    %p115 = scmp.eq.s32.totalorder %s14, 1
    %p116 = scmp.ne.s32.totalorder %s111, %s113
    %p117 = scmp.eq.s32.totalorder %s14, 0
    %p118 = por %p116, %p117
    %p119 = scmp.ne.s32.totalorder %s111, %s113
    %p120 = scmp.eq.s32.totalorder %s19, 1
    %p121 = por %p119, %p120
    %p122 = scmp.ne.s32.totalorder %s113, %s114
    %p123 = scmp.eq.s32.totalorder %s19, 0
    %p124 = por %p122, %p123
    %p125 = scmp.ne.s32.totalorder %s113, %s114
    %p126 = scmp.eq.s32.totalorder %s20, 1
    %p127 = por %p125, %p126
    %p129 = scmp.ne.s32.totalorder %s114, %s128
    %p130 = scmp.eq.s32.totalorder %s20, 0
    %p131 = por %p129, %p130
    %s133 = sadd.s32 %s132, 1
    %p136 = scmp.eq.s32.totalorder %s14, 1
    %p137 = scmp.ne.s32.totalorder %s132, %s134
    %p138 = scmp.eq.s32.totalorder %s14, 0
    %p139 = por %p137, %p138
    %p140 = scmp.ne.s32.totalorder %s132, %s134
    %p141 = scmp.eq.s32.totalorder %s19, 1
    %p142 = por %p140, %p141
    %p143 = scmp.ne.s32.totalorder %s134, %s135
    %p144 = scmp.eq.s32.totalorder %s19, 0
    %p145 = por %p143, %p144
    %p146 = scmp.ne.s32.totalorder %s134, %s135
    %p147 = scmp.eq.s32.totalorder %s20, 1
    %p148 = por %p146, %p147
    %p150 = scmp.ne.s32.totalorder %s135, %s149
    %p151 = scmp.eq.s32.totalorder %s20, 0
    %p152 = por %p150, %p151
    %s153 = ssub.s32 %s14, %s21
    %p154 = scmp.eq.s32.totalorder %s153, 0
    %s156 = sadd.s32 %s155, 1
    %s157 = scalar_select %p154, %s155, %s156
    %p160 = pneg %p154
    %p161 = scmp.eq.s32.totalorder %s14, 1
    %p162 = por %p160, %p161
    %p163 = scmp.ne.s32.totalorder %s155, %s158
    %p164 = scmp.eq.s32.totalorder %s14, 0
    %p165 = por %p163, %p164
    %p166 = scmp.ne.s32.totalorder %s155, %s158
    %p167 = scmp.eq.s32.totalorder %s19, 1
    %p168 = por %p166, %p167
    %p169 = scmp.ne.s32.totalorder %s158, %s159
    %p170 = scmp.eq.s32.totalorder %s19, 0
    %p171 = por %p169, %p170
    %p172 = scmp.ne.s32.totalorder %s158, %s159
    %p173 = scmp.eq.s32.totalorder %s20, 1
    %p174 = por %p172, %p173
    %p176 = scmp.ne.s32.totalorder %s159, %s175
    %p177 = scmp.eq.s32.totalorder %s20, 0
    %p178 = por %p176, %p177
    %s179 = ssub.s32 %s14, %s21
    %p180 = scmp.eq.s32.totalorder %s179, 0
    %s182 = sadd.s32 %s181, 1
    %s183 = scalar_select %p180, %s181, %s182
    %p186 = pneg %p180
    %p187 = scmp.eq.s32.totalorder %s14, 1
    %p188 = por %p186, %p187
    %p189 = scmp.ne.s32.totalorder %s181, %s184
    %p190 = scmp.eq.s32.totalorder %s14, 0
    %p191 = por %p189, %p190
    %p192 = scmp.ne.s32.totalorder %s181, %s184
    %p193 = scmp.eq.s32.totalorder %s19, 1
    %p194 = por %p192, %p193
    %p195 = scmp.ne.s32.totalorder %s184, %s185
    %p196 = scmp.eq.s32.totalorder %s19, 0
    %p197 = por %p195, %p196
    %p198 = scmp.ne.s32.totalorder %s184, %s185
    %p199 = scmp.eq.s32.totalorder %s20, 1
    %p200 = por %p198, %p199
    %p202 = scmp.ne.s32.totalorder %s185, %s201
    %p203 = scmp.eq.s32.totalorder %s20, 0
    %p204 = por %p202, %p203
    %p205 = scmp.le.s32.totalorder 1, %s14
    %p206 = scmp.lt.s32.totalorder %s14, 3
    %p207 = pnand %p205, %p206
    %p208 = pneg %p207
    // Predicated region
    $region9: #{inception_forward.2} parent=5 // pred_check
      _
    $region10: #{inception_forward.2} parent=5 // pred_check_branch
      %210 = sbr.rel (%p207) target = $region12
    $region11: #{inception_forward.2} parent=5 // pred_region
      %s211 = ssub.s32 %s14, 1
      // Predicated region
      $region13: #{inception_forward.2} parent=11 // pred_check
        %p212 = pneg %p61
      $region14: #{inception_forward.2} parent=11 // pred_check_branch
        %214 = sbr.rel (%p212) target = $region16
      $region15: #{inception_forward.2} parent=11 // pred_region
        _
      $region16: #{inception_forward.2} parent=11 // pred_fallthru
        _
      // Predicated region
      $region17: #{inception_forward.2} parent=11 // pred_check
        %p215 = pneg %p82
      $region18: #{inception_forward.2} parent=11 // pred_check_branch
        %217 = sbr.rel (%p215) target = $region20
      $region19: #{inception_forward.2} parent=11 // pred_region
        _
      $region20: #{inception_forward.2} parent=11 // pred_fallthru
        _
      // Predicated region
      $region21: #{inception_forward.2} parent=11 // pred_check
        %p218 = pneg %p103
      $region22: #{inception_forward.2} parent=11 // pred_check_branch
        %220 = sbr.rel (%p218) target = $region24
      $region23: #{inception_forward.2} parent=11 // pred_region
        _
      $region24: #{inception_forward.2} parent=11 // pred_fallthru
        _
      // Predicated region
      $region25: #{inception_forward.2} parent=11 // pred_check
        %p221 = pneg %p124
      $region26: #{inception_forward.2} parent=11 // pred_check_branch
        %223 = sbr.rel (%p221) target = $region28
      $region27: #{inception_forward.2} parent=11 // pred_region
        _
      $region28: #{inception_forward.2} parent=11 // pred_fallthru
        _
      // Predicated region
      $region29: #{inception_forward.2} parent=11 // pred_check
        %p224 = pneg %p145
      $region30: #{inception_forward.2} parent=11 // pred_check_branch
        %226 = sbr.rel (%p224) target = $region32
      $region31: #{inception_forward.2} parent=11 // pred_region
        _
      $region32: #{inception_forward.2} parent=11 // pred_fallthru
        _
    $region12: #{inception_forward.2} parent=5 // pred_fallthru
      _
    %p227 = scmp.lt.s32.totalorder %s14, 2
    // Predicated region
    $region33: #{inception_forward.2} parent=5 // pred_check
      %p228 = pneg %p227
    $region34: #{inception_forward.2} parent=5 // pred_check_branch
      %230 = sbr.rel (%p228) target = $region36
    $region35: #{inception_forward.2} parent=5 // pred_region
      // Predicated region
      $region37: #{inception_forward.2} parent=35 // pred_check
        %p231 = pneg %p34
      $region38: #{inception_forward.2} parent=35 // pred_check_branch
        %233 = sbr.rel (%p231) target = $region40
      $region39: #{inception_forward.2} parent=35 // pred_region
        %p234 = scmp.lt.s32.totalorder %s14, 1
        %s235 = scalar_select %p234, %s14, 1
        %s236 = smul.addr %s235, 32
        %s237 = smul.addr %s236, 8
        %s238 = scalar_lea.vmem %s0, %s237
      $region40: #{inception_forward.2} parent=35 // pred_fallthru
        _
    $region36: #{inception_forward.2} parent=5 // pred_fallthru
      _
    %p239 = scmp.le.s32.totalorder 1, %s14
    %p240 = scmp.lt.s32.totalorder %s14, 3
    %p241 = pnand %p239, %p240
    %p242 = pneg %p241
    // Predicated region
    $region41: #{inception_forward.2} parent=5 // pred_check
      _
    $region42: #{inception_forward.2} parent=5 // pred_check_branch
      %244 = sbr.rel (%p241) target = $region44
    $region43: #{inception_forward.2} parent=5 // pred_region
      %s245 = ssub.s32 %s14, 1
      %p246 = scmp.lt.s32.totalorder %s19, 1
      %s247 = scalar_select %p246, %s19, 1
      %s248 = smul.addr %s247, 32
      %s249 = smul.addr %s248, 8
      %s250 = scalar_lea.vmem %s0, %s249
      %p251 = pneg %p40
      %p252 = pneg %p37
      %p253 = pneg %p61
      %p254 = pneg %p58
      %p255 = pneg %p82
      %p256 = pneg %p79
      %p257 = pneg %p103
      %p258 = pneg %p100
      %p259 = pneg %p124
      %p260 = pneg %p121
      %p261 = pneg %p145
      %p262 = pneg %p142
      %p263 = pneg %p171
      %p264 = pneg %p168
      %p265 = scmp.lt.s32.totalorder %s19, 1
      %s266 = scalar_select %p265, %s19, 1
      %s267 = smul.addr %s266, 32
      %s268 = smul.addr %s267, 8
      %s269 = scalar_lea.vmem %s6, %s268
      %p270 = pneg %p197
      %p271 = pneg %p194
      %p272 = scmp.lt.s32.totalorder %s19, 1
      %s273 = scalar_select %p272, %s19, 1
      %s274 = smul.addr %s273, 2
      %s275 = scalar_lea.vmem %s7, %s274
      %p276 = scmp.lt.s32.totalorder %s19, 1
      %s277 = scalar_select %p276, %s19, 1
      %s278 = smul.addr %s277, 32
      %s279 = smul.addr %s278, 8
      %s280 = scalar_lea.vmem %s0, %s279
      %p281 = scmp.lt.s32.totalorder %s19, 1
      %s282 = scalar_select %p281, %s19, 1
      %s283 = smul.addr %s282, 32
      %s284 = smul.addr %s283, 8
      %s285 = scalar_lea.vmem %s6, %s284
      %p286 = scmp.lt.s32.totalorder %s19, 1
      %s287 = scalar_select %p286, %s19, 1
      %s288 = smul.addr %s287, 2
      %s289 = scalar_lea.vmem %s7, %s288
      %vm291 = vcmask 15360
      %292 = vst.msk [vmem:[#allocation2] sm:$0xff] %vm291, 0.0
      %293 = vst.msk [vmem:[#allocation2 + $0x8] sm:$0xff] %vm291, 0.0
      %vm294 = vcmask 9216
      %295 = vst.msk [vmem:[#allocation2 + $0x10] sm:$0x3] %vm294, 0.0
      %s296 = scalar_lea.vmem [#allocation2], 408
      %297 = vst.msk [vmem:[%s296] sm:$0xff] %vm291, 0.0
      %298 = vst.msk [vmem:[%s296 + $0x8] sm:$0xff] %vm291, 0.0
      %299 = vst.msk [vmem:[%s296 + $0x10] sm:$0x3] %vm294, 0.0
      %vm300 = vcmask 8192
      %301 = vst.msk [vmem:[#allocation2] sm:$0x1] %vm300, 0.0
      %302 = vst.msk [vmem:[#allocation2 + $0x18] sm:$0x1] %vm300, 0.0
      %303 = vst.msk [vmem:[#allocation2 + $0x30] sm:$0x1] %vm300, 0.0
      %304 = vst.msk [vmem:[#allocation2 + $0x48] sm:$0x1] %vm300, 0.0
      %305 = vst.msk [vmem:[#allocation2 + $0x60] sm:$0x1] %vm300, 0.0
      %306 = vst.msk [vmem:[#allocation2 + $0x78] sm:$0x1] %vm300, 0.0
      %307 = vst.msk [vmem:[#allocation2 + $0x90] sm:$0x1] %vm300, 0.0
      %308 = vst.msk [vmem:[#allocation2 + $0xa8] sm:$0x1] %vm300, 0.0
      %309 = vst.msk [vmem:[#allocation2 + $0xc0] sm:$0x1] %vm300, 0.0
      %310 = vst.msk [vmem:[#allocation2 + $0xd8] sm:$0x1] %vm300, 0.0
      %311 = vst.msk [vmem:[#allocation2 + $0xf0] sm:$0x1] %vm300, 0.0
      %312 = vst.msk [vmem:[#allocation2 + $0x108] sm:$0x1] %vm300, 0.0
      %313 = vst.msk [vmem:[#allocation2 + $0x120] sm:$0x1] %vm300, 0.0
      %314 = vst.msk [vmem:[#allocation2 + $0x138] sm:$0x1] %vm300, 0.0
      %315 = vst.msk [vmem:[#allocation2 + $0x150] sm:$0x1] %vm300, 0.0
      %316 = vst.msk [vmem:[#allocation2 + $0x168] sm:$0x1] %vm300, 0.0
      %317 = vst.msk [vmem:[#allocation2 + $0x180] sm:$0x1] %vm300, 0.0
      %318 = vst.msk [vmem:[#allocation2 + $0x198] sm:$0x1] %vm300, 0.0
      %319 = vst.msk [vmem:[#allocation2 + $0x11] sm:$0x1] %vm300, 0.0
      %320 = vst.msk [vmem:[#allocation2 + $0x29] sm:$0x1] %vm300, 0.0
      %321 = vst.msk [vmem:[#allocation2 + $0x41] sm:$0x1] %vm300, 0.0
      %322 = vst.msk [vmem:[#allocation2 + $0x59] sm:$0x1] %vm300, 0.0
      %323 = vst.msk [vmem:[#allocation2 + $0x71] sm:$0x1] %vm300, 0.0
      %324 = vst.msk [vmem:[#allocation2 + $0x89] sm:$0x1] %vm300, 0.0
      %325 = vst.msk [vmem:[#allocation2 + $0xa1] sm:$0x1] %vm300, 0.0
      %326 = vst.msk [vmem:[#allocation2 + $0xb9] sm:$0x1] %vm300, 0.0
      %327 = vst.msk [vmem:[#allocation2 + $0xd1] sm:$0x1] %vm300, 0.0
      %328 = vst.msk [vmem:[#allocation2 + $0xe9] sm:$0x1] %vm300, 0.0
      %329 = vst.msk [vmem:[#allocation2 + $0x101] sm:$0x1] %vm300, 0.0
      %330 = vst.msk [vmem:[#allocation2 + $0x119] sm:$0x1] %vm300, 0.0
      %331 = vst.msk [vmem:[#allocation2 + $0x131] sm:$0x1] %vm300, 0.0
      %332 = vst.msk [vmem:[#allocation2 + $0x149] sm:$0x1] %vm300, 0.0
      %333 = vst.msk [vmem:[#allocation2 + $0x161] sm:$0x1] %vm300, 0.0
      %334 = vst.msk [vmem:[#allocation2 + $0x179] sm:$0x1] %vm300, 0.0
      %335 = vst.msk [vmem:[#allocation2 + $0x191] sm:$0x1] %vm300, 0.0
      %336 = vst.msk [vmem:[#allocation2 + $0x1a9] sm:$0x1] %vm300, 0.0
      %vm337 = vcmask 48128
      %338 = vst.msk [vmem:[#allocation3] sm:$0xff] %vm337, 0.0
      %339 = vst.msk [vmem:[#allocation3 + $0x8] sm:$0xff] %vm337, 0.0
      %vm340 = vcmask 41984
      %341 = vst.msk [vmem:[#allocation3 + $0x10] sm:$0x3] %vm340, 0.0
      %s342 = scalar_lea.vmem [#allocation3], 408
      %343 = vst.msk [vmem:[%s342] sm:$0xff] %vm337, 0.0
      %344 = vst.msk [vmem:[%s342 + $0x8] sm:$0xff] %vm337, 0.0
      %345 = vst.msk [vmem:[%s342 + $0x10] sm:$0x3] %vm340, 0.0
      %vm346 = vcmask 40960
      %347 = vst.msk [vmem:[#allocation3] sm:$0x1] %vm346, 0.0
      %348 = vst.msk [vmem:[#allocation3 + $0x18] sm:$0x1] %vm346, 0.0
      %349 = vst.msk [vmem:[#allocation3 + $0x30] sm:$0x1] %vm346, 0.0
      %350 = vst.msk [vmem:[#allocation3 + $0x48] sm:$0x1] %vm346, 0.0
      %351 = vst.msk [vmem:[#allocation3 + $0x60] sm:$0x1] %vm346, 0.0
      %352 = vst.msk [vmem:[#allocation3 + $0x78] sm:$0x1] %vm346, 0.0
      %353 = vst.msk [vmem:[#allocation3 + $0x90] sm:$0x1] %vm346, 0.0
      %354 = vst.msk [vmem:[#allocation3 + $0xa8] sm:$0x1] %vm346, 0.0
      %355 = vst.msk [vmem:[#allocation3 + $0xc0] sm:$0x1] %vm346, 0.0
      %356 = vst.msk [vmem:[#allocation3 + $0xd8] sm:$0x1] %vm346, 0.0
      %357 = vst.msk [vmem:[#allocation3 + $0xf0] sm:$0x1] %vm346, 0.0
      %358 = vst.msk [vmem:[#allocation3 + $0x108] sm:$0x1] %vm346, 0.0
      %359 = vst.msk [vmem:[#allocation3 + $0x120] sm:$0x1] %vm346, 0.0
      %360 = vst.msk [vmem:[#allocation3 + $0x138] sm:$0x1] %vm346, 0.0
      %361 = vst.msk [vmem:[#allocation3 + $0x150] sm:$0x1] %vm346, 0.0
      %362 = vst.msk [vmem:[#allocation3 + $0x168] sm:$0x1] %vm346, 0.0
      %363 = vst.msk [vmem:[#allocation3 + $0x180] sm:$0x1] %vm346, 0.0
      %364 = vst.msk [vmem:[#allocation3 + $0x198] sm:$0x1] %vm346, 0.0
      %365 = vst.msk [vmem:[#allocation3 + $0x11] sm:$0x1] %vm346, 0.0
      %366 = vst.msk [vmem:[#allocation3 + $0x29] sm:$0x1] %vm346, 0.0
      %367 = vst.msk [vmem:[#allocation3 + $0x41] sm:$0x1] %vm346, 0.0
      %368 = vst.msk [vmem:[#allocation3 + $0x59] sm:$0x1] %vm346, 0.0
      %369 = vst.msk [vmem:[#allocation3 + $0x71] sm:$0x1] %vm346, 0.0
      %370 = vst.msk [vmem:[#allocation3 + $0x89] sm:$0x1] %vm346, 0.0
      %371 = vst.msk [vmem:[#allocation3 + $0xa1] sm:$0x1] %vm346, 0.0
      %372 = vst.msk [vmem:[#allocation3 + $0xb9] sm:$0x1] %vm346, 0.0
      %373 = vst.msk [vmem:[#allocation3 + $0xd1] sm:$0x1] %vm346, 0.0
      %374 = vst.msk [vmem:[#allocation3 + $0xe9] sm:$0x1] %vm346, 0.0
      %375 = vst.msk [vmem:[#allocation3 + $0x101] sm:$0x1] %vm346, 0.0
      %376 = vst.msk [vmem:[#allocation3 + $0x119] sm:$0x1] %vm346, 0.0
      %377 = vst.msk [vmem:[#allocation3 + $0x131] sm:$0x1] %vm346, 0.0
      %378 = vst.msk [vmem:[#allocation3 + $0x149] sm:$0x1] %vm346, 0.0
      %379 = vst.msk [vmem:[#allocation3 + $0x161] sm:$0x1] %vm346, 0.0
      %380 = vst.msk [vmem:[#allocation3 + $0x179] sm:$0x1] %vm346, 0.0
      %381 = vst.msk [vmem:[#allocation3 + $0x191] sm:$0x1] %vm346, 0.0
      %382 = vst.msk [vmem:[#allocation3 + $0x1a9] sm:$0x1] %vm346, 0.0
      %vm383 = vcmask 97280
      %384 = vst.msk [vmem:[#allocation4] sm:$0xff] %vm383, 0.0
      %385 = vst.msk [vmem:[#allocation4 + $0x8] sm:$0xff] %vm383, 0.0
      %vm386 = vcmask 91136
      %387 = vst.msk [vmem:[#allocation4 + $0x10] sm:$0x3] %vm386, 0.0
      %s388 = scalar_lea.vmem [#allocation4], 408
      %389 = vst.msk [vmem:[%s388] sm:$0xff] %vm383, 0.0
      %390 = vst.msk [vmem:[%s388 + $0x8] sm:$0xff] %vm383, 0.0
      %391 = vst.msk [vmem:[%s388 + $0x10] sm:$0x3] %vm386, 0.0
      %vm392 = vcmask 90112
      %393 = vst.msk [vmem:[#allocation4] sm:$0x1] %vm392, 0.0
      %394 = vst.msk [vmem:[#allocation4 + $0x18] sm:$0x1] %vm392, 0.0
      %395 = vst.msk [vmem:[#allocation4 + $0x30] sm:$0x1] %vm392, 0.0
      %396 = vst.msk [vmem:[#allocation4 + $0x48] sm:$0x1] %vm392, 0.0
      %397 = vst.msk [vmem:[#allocation4 + $0x60] sm:$0x1] %vm392, 0.0
      %398 = vst.msk [vmem:[#allocation4 + $0x78] sm:$0x1] %vm392, 0.0
      %399 = vst.msk [vmem:[#allocation4 + $0x90] sm:$0x1] %vm392, 0.0
      %400 = vst.msk [vmem:[#allocation4 + $0xa8] sm:$0x1] %vm392, 0.0
      %401 = vst.msk [vmem:[#allocation4 + $0xc0] sm:$0x1] %vm392, 0.0
      %402 = vst.msk [vmem:[#allocation4 + $0xd8] sm:$0x1] %vm392, 0.0
      %403 = vst.msk [vmem:[#allocation4 + $0xf0] sm:$0x1] %vm392, 0.0
      %404 = vst.msk [vmem:[#allocation4 + $0x108] sm:$0x1] %vm392, 0.0
      %405 = vst.msk [vmem:[#allocation4 + $0x120] sm:$0x1] %vm392, 0.0
      %406 = vst.msk [vmem:[#allocation4 + $0x138] sm:$0x1] %vm392, 0.0
      %407 = vst.msk [vmem:[#allocation4 + $0x150] sm:$0x1] %vm392, 0.0
      %408 = vst.msk [vmem:[#allocation4 + $0x168] sm:$0x1] %vm392, 0.0
      %409 = vst.msk [vmem:[#allocation4 + $0x180] sm:$0x1] %vm392, 0.0
      %410 = vst.msk [vmem:[#allocation4 + $0x198] sm:$0x1] %vm392, 0.0
      %411 = vst.msk [vmem:[#allocation4 + $0x11] sm:$0x1] %vm392, 0.0
      %412 = vst.msk [vmem:[#allocation4 + $0x29] sm:$0x1] %vm392, 0.0
      %413 = vst.msk [vmem:[#allocation4 + $0x41] sm:$0x1] %vm392, 0.0
      %414 = vst.msk [vmem:[#allocation4 + $0x59] sm:$0x1] %vm392, 0.0
      %415 = vst.msk [vmem:[#allocation4 + $0x71] sm:$0x1] %vm392, 0.0
      %416 = vst.msk [vmem:[#allocation4 + $0x89] sm:$0x1] %vm392, 0.0
      %417 = vst.msk [vmem:[#allocation4 + $0xa1] sm:$0x1] %vm392, 0.0
      %418 = vst.msk [vmem:[#allocation4 + $0xb9] sm:$0x1] %vm392, 0.0
      %419 = vst.msk [vmem:[#allocation4 + $0xd1] sm:$0x1] %vm392, 0.0
      %420 = vst.msk [vmem:[#allocation4 + $0xe9] sm:$0x1] %vm392, 0.0
      %421 = vst.msk [vmem:[#allocation4 + $0x101] sm:$0x1] %vm392, 0.0
      %422 = vst.msk [vmem:[#allocation4 + $0x119] sm:$0x1] %vm392, 0.0
      %423 = vst.msk [vmem:[#allocation4 + $0x131] sm:$0x1] %vm392, 0.0
      %424 = vst.msk [vmem:[#allocation4 + $0x149] sm:$0x1] %vm392, 0.0
      %425 = vst.msk [vmem:[#allocation4 + $0x161] sm:$0x1] %vm392, 0.0
      %426 = vst.msk [vmem:[#allocation4 + $0x179] sm:$0x1] %vm392, 0.0
      %427 = vst.msk [vmem:[#allocation4 + $0x191] sm:$0x1] %vm392, 0.0
      %428 = vst.msk [vmem:[#allocation4 + $0x1a9] sm:$0x1] %vm392, 0.0
      %v429 = vld [vmem:[%s280] sm:$0xff]
      %v430 = vld [vmem:[%s280 + $0x8] sm:$0xff]
      %v431 = vld [vmem:[%s280 + $0x10] sm:$0xff]
      %v432 = vld [vmem:[%s280 + $0x18] sm:$0xff]
      %v433 = vld [vmem:[%s280 + $0x20] sm:$0xff]
      %v434 = vld [vmem:[%s280 + $0x28] sm:$0xff]
      %v435 = vld [vmem:[%s280 + $0x30] sm:$0xff]
      %v436 = vld [vmem:[%s280 + $0x38] sm:$0xff]
      %v437 = vld [vmem:[%s280 + $0x40] sm:$0xff]
      %v438 = vld [vmem:[%s280 + $0x48] sm:$0xff]
      %v439 = vld [vmem:[%s280 + $0x50] sm:$0xff]
      %v440 = vld [vmem:[%s280 + $0x58] sm:$0xff]
      %v441 = vld [vmem:[%s280 + $0x60] sm:$0xff]
      %v442 = vld [vmem:[%s280 + $0x68] sm:$0xff]
      %v443 = vld [vmem:[%s280 + $0x70] sm:$0xff]
      %v444 = vld [vmem:[%s280 + $0x78] sm:$0xff]
      %v445 = vld [vmem:[%s280 + $0x80] sm:$0xff]
      %v446 = vld [vmem:[%s280 + $0x88] sm:$0xff]
      %v447 = vld [vmem:[%s280 + $0x90] sm:$0xff]
      %v448 = vld [vmem:[%s280 + $0x98] sm:$0xff]
      %v449 = vld [vmem:[%s280 + $0xa0] sm:$0xff]
      %v450 = vld [vmem:[%s280 + $0xa8] sm:$0xff]
      %v451 = vld [vmem:[%s280 + $0xb0] sm:$0xff]
      %v452 = vld [vmem:[%s280 + $0xb8] sm:$0xff]
      %v453 = vld [vmem:[%s280 + $0xc0] sm:$0xff]
      %v454 = vld [vmem:[%s280 + $0xc8] sm:$0xff]
      %v455 = vld [vmem:[%s280 + $0xd0] sm:$0xff]
      %v456 = vld [vmem:[%s280 + $0xd8] sm:$0xff]
      %v457 = vld [vmem:[%s280 + $0xe0] sm:$0xff]
      %v458 = vld [vmem:[%s280 + $0xe8] sm:$0xff]
      %v459 = vld [vmem:[%s280 + $0xf0] sm:$0xff]
      %v460 = vld [vmem:[%s280 + $0xf8] sm:$0xff]
      %v461 = vpack.c.bf16 %v430, %v429
      %v462 = vpack.c.bf16 %v432, %v431
      %v463 = vpack.c.bf16 %v434, %v433
      %v464 = vpack.c.bf16 %v436, %v435
      %v465 = vpack.c.bf16 %v438, %v437
      %v466 = vpack.c.bf16 %v440, %v439
      %v467 = vpack.c.bf16 %v442, %v441
      %v468 = vpack.c.bf16 %v444, %v443
      %v469 = vpack.c.bf16 %v446, %v445
      %v470 = vpack.c.bf16 %v448, %v447
      %v471 = vpack.c.bf16 %v450, %v449
      %v472 = vpack.c.bf16 %v452, %v451
      %v473 = vpack.c.bf16 %v454, %v453
      %v474 = vpack.c.bf16 %v456, %v455
      %v475 = vpack.c.bf16 %v458, %v457
      %v476 = vpack.c.bf16 %v460, %v459
      %v477 = vld [vmem:[%s1] sm:$0x3]
      %vm478 = vcmask 31744
      %v480 = vsel %vm478, %v461, 0
      %v483 = vsel %vm478, %v462, 0
      %v486 = vsel %vm478, %v463, 0
      %v489 = vsel %vm478, %v464, 0
      %v492 = vsel %vm478, %v465, 0
      %v495 = vsel %vm478, %v466, 0
      %v498 = vsel %vm478, %v467, 0
      %v501 = vsel %vm478, %v468, 0
      %v504 = vsel %vm478, %v469, 0
      %v507 = vsel %vm478, %v470, 0
      %v510 = vsel %vm478, %v471, 0
      %v513 = vsel %vm478, %v472, 0
      %v516 = vsel %vm478, %v473, 0
      %v519 = vsel %vm478, %v474, 0
      %v522 = vsel %vm478, %v475, 0
      %v525 = vsel %vm478, %v476, 0
      %vm527 = vcmask 1041408
      %v529 = vsel %vm527, %v477, 0
      %531 = vmatprep.subr.bf16.mxu0 0
      %532 = vmatpush1.bf16.msra.mxu0 %v529
      %533 = vmatprep.subr.bf16.mxu0 0
      %534 = vmatpush1.bf16.msra.mxu0 0
      %535 = vmatprep.subr.bf16.mxu0 0
      %536 = vmatpush1.bf16.msra.mxu0 0
      %537 = vmatprep.subr.bf16.mxu0 0
      %538 = vmatpush1.bf16.msra.mxu0 0
      %539 = vmatprep.subr.bf16.mxu0 0
      %540 = vmatpush1.bf16.msra.mxu0 0
      %541 = vmatprep.subr.bf16.mxu0 0
      %542 = vmatpush1.bf16.msra.mxu0 0
      %543 = vmatprep.subr.bf16.mxu0 0
      %544 = vmatpush1.bf16.msra.mxu0 0
      %545 = vmatprep.subr.bf16.mxu0 0
      %546 = vmatpush1.bf16.msra.mxu0 0
      %547 = vmatprep.subr.bf16.mxu0 0
      %548 = vmatpush1.bf16.msra.mxu0 0
      %549 = vmatprep.subr.bf16.mxu0 0
      %550 = vmatpush1.bf16.msra.mxu0 0
      %551 = vmatprep.subr.bf16.mxu0 0
      %552 = vmatpush1.bf16.msra.mxu0 0
      %553 = vmatprep.subr.bf16.mxu0 0
      %554 = vmatpush1.bf16.msra.mxu0 0
      %555 = vmatprep.subr.bf16.mxu0 0
      %556 = vmatpush1.bf16.msra.mxu0 0
      %557 = vmatprep.subr.bf16.mxu0 0
      %558 = vmatpush1.bf16.msra.mxu0 0
      %559 = vmatprep.subr.bf16.mxu0 0
      %560 = vmatpush1.bf16.msra.mxu0 0
      %561 = vmatprep.subr.bf16.mxu0 0
      %562 = vmatpush1.bf16.msra.mxu0 0
      %563 = vmatprep.mubr.bf16.mxu0 0
      %564 = vmatmul.mubr.bf16.gmra.mrb[0].mxu0 %v480
      %v565 = vpop.f32.mrb[0].mxu0
      %v566 = vadd.f32 0.0, %v565
      %v567 = vpop.f32.mrb[0].mxu0
      %v568 = vpop.f32.mrb[0].mxu0
      %v569 = vadd.f32 0.0, %v568
      %v570 = vpop.f32.mrb[0].mxu0
      %571 = vmatprep.mubr.bf16.mxu0 0
      %572 = vmatmul.mubr.bf16.gmra.mrb[0].mxu0 %v483
      %v573 = vpop.f32.mrb[0].mxu0
      %v574 = vadd.f32 0.0, %v573
      %v575 = vpop.f32.mrb[0].mxu0
      %v576 = vpop.f32.mrb[0].mxu0
      %v577 = vadd.f32 0.0, %v576
      %v578 = vpop.f32.mrb[0].mxu0
      %579 = vmatprep.mubr.bf16.mxu0 0
      %580 = vmatmul.mubr.bf16.gmra.mrb[0].mxu0 %v486
      %v581 = vpop.f32.mrb[0].mxu0
      %v582 = vadd.f32 0.0, %v581
      %v583 = vpop.f32.mrb[0].mxu0
      %v584 = vpop.f32.mrb[0].mxu0
      %v585 = vadd.f32 0.0, %v584
      %v586 = vpop.f32.mrb[0].mxu0
      %587 = vmatprep.mubr.bf16.mxu0 0
      %588 = vmatmul.mubr.bf16.gmra.mrb[0].mxu0 %v489
      %v589 = vpop.f32.mrb[0].mxu0
      %v590 = vadd.f32 0.0, %v589
      %v591 = vpop.f32.mrb[0].mxu0
      %v592 = vpop.f32.mrb[0].mxu0
      %v593 = vadd.f32 0.0, %v592
      %v594 = vpop.f32.mrb[0].mxu0
      %595 = vmatprep.mubr.bf16.mxu0 0
      %596 = vmatmul.mubr.bf16.gmra.mrb[0].mxu0 %v492
      %v597 = vpop.f32.mrb[0].mxu0
      %v598 = vadd.f32 0.0, %v597
      %v599 = vpop.f32.mrb[0].mxu0
      %v600 = vpop.f32.mrb[0].mxu0
      %v601 = vadd.f32 0.0, %v600
      %v602 = vpop.f32.mrb[0].mxu0
      %603 = vmatprep.mubr.bf16.mxu0 0
      %604 = vmatmul.mubr.bf16.gmra.mrb[0].mxu0 %v495
      %v605 = vpop.f32.mrb[0].mxu0
      %v606 = vadd.f32 0.0, %v605
      %v607 = vpop.f32.mrb[0].mxu0
      %v608 = vpop.f32.mrb[0].mxu0
      %v609 = vadd.f32 0.0, %v608
      %v610 = vpop.f32.mrb[0].mxu0
      %611 = vmatprep.mubr.bf16.mxu0 0
      %612 = vmatmul.mubr.bf16.gmra.mrb[0].mxu0 %v498
      %v613 = vpop.f32.mrb[0].mxu0
      %v614 = vadd.f32 0.0, %v613
      %v615 = vpop.f32.mrb[0].mxu0
      %v616 = vpop.f32.mrb[0].mxu0
      %v617 = vadd.f32 0.0, %v616
      %v618 = vpop.f32.mrb[0].mxu0
      %619 = vmatprep.mubr.bf16.mxu0 0
      %620 = vmatmul.mubr.bf16.gmra.mrb[0].mxu0 %v501
      %v621 = vpop.f32.mrb[0].mxu0
      %v622 = vadd.f32 0.0, %v621
      %v623 = vpop.f32.mrb[0].mxu0
      %v624 = vpop.f32.mrb[0].mxu0
      %v625 = vadd.f32 0.0, %v624
      %v626 = vpop.f32.mrb[0].mxu0
      %627 = vmatprep.mubr.bf16.mxu0 0
      %628 = vmatmul.mubr.bf16.gmra.mrb[0].mxu0 %v504
      %v629 = vpop.f32.mrb[0].mxu0
      %v630 = vadd.f32 0.0, %v629
      %v631 = vpop.f32.mrb[0].mxu0
      %v632 = vpop.f32.mrb[0].mxu0
      %v633 = vadd.f32 0.0, %v632
      %v634 = vpop.f32.mrb[0].mxu0
      %635 = vmatprep.mubr.bf16.mxu0 0
      %636 = vmatmul.mubr.bf16.gmra.mrb[0].mxu0 %v507
      %v637 = vpop.f32.mrb[0].mxu0
      %v638 = vadd.f32 0.0, %v637
      %v639 = vpop.f32.mrb[0].mxu0
      %v640 = vpop.f32.mrb[0].mxu0
      %v641 = vadd.f32 0.0, %v640
      %v642 = vpop.f32.mrb[0].mxu0
      %643 = vmatprep.mubr.bf16.mxu0 0
      %644 = vmatmul.mubr.bf16.gmra.mrb[0].mxu0 %v510
      %v645 = vpop.f32.mrb[0].mxu0
      %v646 = vadd.f32 0.0, %v645
      %v647 = vpop.f32.mrb[0].mxu0
      %v648 = vpop.f32.mrb[0].mxu0
      %v649 = vadd.f32 0.0, %v648
      %v650 = vpop.f32.mrb[0].mxu0
      %651 = vmatprep.mubr.bf16.mxu0 0
      %652 = vmatmul.mubr.bf16.gmra.mrb[0].mxu0 %v513
      %v653 = vpop.f32.mrb[0].mxu0
      %v654 = vadd.f32 0.0, %v653
      %v655 = vpop.f32.mrb[0].mxu0
      %v656 = vpop.f32.mrb[0].mxu0
      %v657 = vadd.f32 0.0, %v656
      %v658 = vpop.f32.mrb[0].mxu0
      %659 = vmatprep.mubr.bf16.mxu0 0
      %660 = vmatmul.mubr.bf16.gmra.mrb[0].mxu0 %v516
      %v661 = vpop.f32.mrb[0].mxu0
      %v662 = vadd.f32 0.0, %v661
      %v663 = vpop.f32.mrb[0].mxu0
      %v664 = vpop.f32.mrb[0].mxu0
      %v665 = vadd.f32 0.0, %v664
      %v666 = vpop.f32.mrb[0].mxu0
      %667 = vmatprep.mubr.bf16.mxu0 0
      %668 = vmatmul.mubr.bf16.gmra.mrb[0].mxu0 %v519
      %v669 = vpop.f32.mrb[0].mxu0
      %v670 = vadd.f32 0.0, %v669
      %v671 = vpop.f32.mrb[0].mxu0
      %v672 = vpop.f32.mrb[0].mxu0
      %v673 = vadd.f32 0.0, %v672
      %v674 = vpop.f32.mrb[0].mxu0
      %675 = vmatprep.mubr.bf16.mxu0 0
      %676 = vmatmul.mubr.bf16.gmra.mrb[0].mxu0 %v522
      %v677 = vpop.f32.mrb[0].mxu0
      %v678 = vadd.f32 0.0, %v677
      %v679 = vpop.f32.mrb[0].mxu0
      %v680 = vpop.f32.mrb[0].mxu0
      %v681 = vadd.f32 0.0, %v680
      %v682 = vpop.f32.mrb[0].mxu0
      %683 = vmatprep.mubr.bf16.mxu0 0
      %684 = vmatmul.mubr.bf16.gmra.mrb[0].mxu0 %v525
      %v685 = vpop.f32.mrb[0].mxu0
      %v686 = vadd.f32 0.0, %v685
      %v687 = vpop.f32.mrb[0].mxu0
      %v688 = vpop.f32.mrb[0].mxu0
      %v689 = vadd.f32 0.0, %v688
      %v690 = vpop.f32.mrb[0].mxu0
      %691 = vdwg.mxu0
      %s692 = scalar_lea.vmem [#allocation4], 24
      %693 = vst.msk [vmem:[%s692 + $0x1] sm:$0xff] %vm291, %v566
      %694 = vst.msk [vmem:[%s692 + $0x9] sm:$0xff] %vm291, %v569
      %695 = vst.msk [vmem:[%s692 + $0x19] sm:$0xff] %vm291, %v574
      %696 = vst.msk [vmem:[%s692 + $0x21] sm:$0xff] %vm291, %v577
      %697 = vst.msk [vmem:[%s692 + $0x31] sm:$0xff] %vm291, %v582
      %698 = vst.msk [vmem:[%s692 + $0x39] sm:$0xff] %vm291, %v585
      %699 = vst.msk [vmem:[%s692 + $0x49] sm:$0xff] %vm291, %v590
      %700 = vst.msk [vmem:[%s692 + $0x51] sm:$0xff] %vm291, %v593
      %701 = vst.msk [vmem:[%s692 + $0x61] sm:$0xff] %vm291, %v598
      %702 = vst.msk [vmem:[%s692 + $0x69] sm:$0xff] %vm291, %v601
      %703 = vst.msk [vmem:[%s692 + $0x79] sm:$0xff] %vm291, %v606
      %704 = vst.msk [vmem:[%s692 + $0x81] sm:$0xff] %vm291, %v609
      %705 = vst.msk [vmem:[%s692 + $0x91] sm:$0xff] %vm291, %v614
      %706 = vst.msk [vmem:[%s692 + $0x99] sm:$0xff] %vm291, %v617
      %707 = vst.msk [vmem:[%s692 + $0xa9] sm:$0xff] %vm291, %v622
      %708 = vst.msk [vmem:[%s692 + $0xb1] sm:$0xff] %vm291, %v625
      %709 = vst.msk [vmem:[%s692 + $0xc1] sm:$0xff] %vm291, %v630
      %710 = vst.msk [vmem:[%s692 + $0xc9] sm:$0xff] %vm291, %v633
      %711 = vst.msk [vmem:[%s692 + $0xd9] sm:$0xff] %vm291, %v638
      %712 = vst.msk [vmem:[%s692 + $0xe1] sm:$0xff] %vm291, %v641
      %713 = vst.msk [vmem:[%s692 + $0xf1] sm:$0xff] %vm291, %v646
      %714 = vst.msk [vmem:[%s692 + $0xf9] sm:$0xff] %vm291, %v649
      %715 = vst.msk [vmem:[%s692 + $0x109] sm:$0xff] %vm291, %v654
      %716 = vst.msk [vmem:[%s692 + $0x111] sm:$0xff] %vm291, %v657
      %717 = vst.msk [vmem:[%s692 + $0x121] sm:$0xff] %vm291, %v662
      %718 = vst.msk [vmem:[%s692 + $0x129] sm:$0xff] %vm291, %v665
      %719 = vst.msk [vmem:[%s692 + $0x139] sm:$0xff] %vm291, %v670
      %720 = vst.msk [vmem:[%s692 + $0x141] sm:$0xff] %vm291, %v673
      %721 = vst.msk [vmem:[%s692 + $0x151] sm:$0xff] %vm291, %v678
      %722 = vst.msk [vmem:[%s692 + $0x159] sm:$0xff] %vm291, %v681
      %723 = vst.msk [vmem:[%s692 + $0x169] sm:$0xff] %vm291, %v686
      %724 = vst.msk [vmem:[%s692 + $0x171] sm:$0xff] %vm291, %v689
      %v725 = vmax.f32 %v566, 0.0
      %v726 = vmax.f32 %v569, 0.0
      %v727 = vmax.f32 %v574, 0.0
      %v728 = vmax.f32 %v577, 0.0
      %v729 = vmax.f32 %v582, 0.0
      %v730 = vmax.f32 %v585, 0.0
      %v731 = vmax.f32 %v590, 0.0
      %v732 = vmax.f32 %v593, 0.0
      %v733 = vmax.f32 %v598, 0.0
      %v734 = vmax.f32 %v601, 0.0
      %v735 = vmax.f32 %v606, 0.0
      %v736 = vmax.f32 %v609, 0.0
      %v737 = vmax.f32 %v614, 0.0
      %v738 = vmax.f32 %v617, 0.0
      %v739 = vmax.f32 %v622, 0.0
      %v740 = vmax.f32 %v625, 0.0
      %v741 = vmax.f32 %v630, 0.0
      %v742 = vmax.f32 %v633, 0.0
      %v743 = vmax.f32 %v638, 0.0
      %v744 = vmax.f32 %v641, 0.0
      %v745 = vmax.f32 %v646, 0.0
      %v746 = vmax.f32 %v649, 0.0
      %v747 = vmax.f32 %v654, 0.0
      %v748 = vmax.f32 %v657, 0.0
      %v749 = vmax.f32 %v662, 0.0
      %v750 = vmax.f32 %v665, 0.0
      %v751 = vmax.f32 %v670, 0.0
      %v752 = vmax.f32 %v673, 0.0
      %v753 = vmax.f32 %v678, 0.0
      %v754 = vmax.f32 %v681, 0.0
      %v755 = vmax.f32 %v686, 0.0
      %v756 = vmax.f32 %v689, 0.0
      %789 = vrot.lane.b32.xlu0 %v725, 126
      %v790 = vpop.permute.xlu0 %789
      %791 = vrot.lane.b32.xlu0 %v726, 126
      %v792 = vpop.permute.xlu0 %791
      %793 = vrot.lane.b32.xlu0 %v727, 126
      %v794 = vpop.permute.xlu0 %793
      %795 = vrot.lane.b32.xlu0 %v728, 126
      %v796 = vpop.permute.xlu0 %795
      %797 = vrot.lane.b32.xlu0 %v729, 126
      %v798 = vpop.permute.xlu0 %797
      %799 = vrot.lane.b32.xlu0 %v730, 126
      %v800 = vpop.permute.xlu0 %799
      %801 = vrot.lane.b32.xlu0 %v731, 126
      %v802 = vpop.permute.xlu0 %801
      %803 = vrot.lane.b32.xlu0 %v732, 126
      %v804 = vpop.permute.xlu0 %803
      %805 = vrot.lane.b32.xlu0 %v733, 126
      %v806 = vpop.permute.xlu0 %805
      %807 = vrot.lane.b32.xlu0 %v734, 126
      %v808 = vpop.permute.xlu0 %807
      %809 = vrot.lane.b32.xlu0 %v735, 126
      %v810 = vpop.permute.xlu0 %809
      %811 = vrot.lane.b32.xlu0 %v736, 126
      %v812 = vpop.permute.xlu0 %811
      %813 = vrot.lane.b32.xlu0 %v737, 126
      %v814 = vpop.permute.xlu0 %813
      %815 = vrot.lane.b32.xlu0 %v738, 126
      %v816 = vpop.permute.xlu0 %815
      %817 = vrot.lane.b32.xlu0 %v739, 126
      %v818 = vpop.permute.xlu0 %817
      %819 = vrot.lane.b32.xlu0 %v740, 126
      %v820 = vpop.permute.xlu0 %819
      %821 = vrot.lane.b32.xlu0 %v741, 126
      %v822 = vpop.permute.xlu0 %821
      %823 = vrot.lane.b32.xlu0 %v742, 126
      %v824 = vpop.permute.xlu0 %823
      %825 = vrot.lane.b32.xlu0 %v743, 126
      %v826 = vpop.permute.xlu0 %825
      %827 = vrot.lane.b32.xlu0 %v744, 126
      %v828 = vpop.permute.xlu0 %827
      %829 = vrot.lane.b32.xlu0 %v745, 126
      %v830 = vpop.permute.xlu0 %829
      %831 = vrot.lane.b32.xlu0 %v746, 126
      %v832 = vpop.permute.xlu0 %831
      %833 = vrot.lane.b32.xlu0 %v747, 126
      %v834 = vpop.permute.xlu0 %833
      %835 = vrot.lane.b32.xlu0 %v748, 126
      %v836 = vpop.permute.xlu0 %835
      %837 = vrot.lane.b32.xlu0 %v749, 126
      %v838 = vpop.permute.xlu0 %837
      %839 = vrot.lane.b32.xlu0 %v750, 126
      %v840 = vpop.permute.xlu0 %839
      %841 = vrot.lane.b32.xlu0 %v751, 126
      %v842 = vpop.permute.xlu0 %841
      %843 = vrot.lane.b32.xlu0 %v752, 126
      %v844 = vpop.permute.xlu0 %843
      %845 = vrot.lane.b32.xlu0 %v753, 126
      %v846 = vpop.permute.xlu0 %845
      %847 = vrot.lane.b32.xlu0 %v754, 126
      %v848 = vpop.permute.xlu0 %847
      %849 = vrot.lane.b32.xlu0 %v755, 126
      %v850 = vpop.permute.xlu0 %849
      %851 = vrot.lane.b32.xlu0 %v756, 126
      %v852 = vpop.permute.xlu0 %851
      %s885 = scalar_lea.vmem [#allocation2], 24
      %886 = vst.msk [vmem:[%s885 + $0x1] sm:$0xff] %vm291, %v790
      %887 = vst.msk [vmem:[%s885 + $0x9] sm:$0xff] %vm291, %v792
      %888 = vst.msk [vmem:[%s885 + $0x19] sm:$0xff] %vm291, %v794
      %889 = vst.msk [vmem:[%s885 + $0x21] sm:$0xff] %vm291, %v796
      %890 = vst.msk [vmem:[%s885 + $0x31] sm:$0xff] %vm291, %v798
      %891 = vst.msk [vmem:[%s885 + $0x39] sm:$0xff] %vm291, %v800
      %892 = vst.msk [vmem:[%s885 + $0x49] sm:$0xff] %vm291, %v802
      %893 = vst.msk [vmem:[%s885 + $0x51] sm:$0xff] %vm291, %v804
      %894 = vst.msk [vmem:[%s885 + $0x61] sm:$0xff] %vm291, %v806
      %895 = vst.msk [vmem:[%s885 + $0x69] sm:$0xff] %vm291, %v808
      %896 = vst.msk [vmem:[%s885 + $0x79] sm:$0xff] %vm291, %v810
      %897 = vst.msk [vmem:[%s885 + $0x81] sm:$0xff] %vm291, %v812
      %898 = vst.msk [vmem:[%s885 + $0x91] sm:$0xff] %vm291, %v814
      %899 = vst.msk [vmem:[%s885 + $0x99] sm:$0xff] %vm291, %v816
      %900 = vst.msk [vmem:[%s885 + $0xa9] sm:$0xff] %vm291, %v818
      %901 = vst.msk [vmem:[%s885 + $0xb1] sm:$0xff] %vm291, %v820
      %902 = vst.msk [vmem:[%s885 + $0xc1] sm:$0xff] %vm291, %v822
      %903 = vst.msk [vmem:[%s885 + $0xc9] sm:$0xff] %vm291, %v824
      %904 = vst.msk [vmem:[%s885 + $0xd9] sm:$0xff] %vm291, %v826
      %905 = vst.msk [vmem:[%s885 + $0xe1] sm:$0xff] %vm291, %v828
      %906 = vst.msk [vmem:[%s885 + $0xf1] sm:$0xff] %vm291, %v830
      %907 = vst.msk [vmem:[%s885 + $0xf9] sm:$0xff] %vm291, %v832
      %908 = vst.msk [vmem:[%s885 + $0x109] sm:$0xff] %vm291, %v834
      %909 = vst.msk [vmem:[%s885 + $0x111] sm:$0xff] %vm291, %v836
      %910 = vst.msk [vmem:[%s885 + $0x121] sm:$0xff] %vm291, %v838
      %911 = vst.msk [vmem:[%s885 + $0x129] sm:$0xff] %vm291, %v840
      %912 = vst.msk [vmem:[%s885 + $0x139] sm:$0xff] %vm291, %v842
      %913 = vst.msk [vmem:[%s885 + $0x141] sm:$0xff] %vm291, %v844
      %914 = vst.msk [vmem:[%s885 + $0x151] sm:$0xff] %vm291, %v846
      %915 = vst.msk [vmem:[%s885 + $0x159] sm:$0xff] %vm291, %v848
      %916 = vst.msk [vmem:[%s885 + $0x169] sm:$0xff] %vm291, %v850
      %917 = vst.msk [vmem:[%s885 + $0x171] sm:$0xff] %vm291, %v852
      %v918 = vld [vmem:[%s2] sm:$0xf]
      %v919 = vld [vmem:[%s2 + $0x4] sm:$0xf]
      %v920 = vld [vmem:[%s2 + $0x8] sm:$0x1]
      %v921 = vld [vmem:[#allocation2] sm:$0xff]
      %v922 = vld [vmem:[#allocation2 + $0x8] sm:$0xff]
      %v923 = vld [vmem:[#allocation2 + $0x18] sm:$0xff]
      %v924 = vld [vmem:[#allocation2 + $0x20] sm:$0xff]
      %v925 = vld [vmem:[#allocation2 + $0x30] sm:$0xff]
      %v926 = vld [vmem:[#allocation2 + $0x38] sm:$0xff]
      %v927 = vld [vmem:[#allocation2 + $0x48] sm:$0xff]
      %v928 = vld [vmem:[#allocation2 + $0x50] sm:$0xff]
      %v929 = vld [vmem:[#allocation2 + $0x60] sm:$0xff]
      %v930 = vld [vmem:[#allocation2 + $0x68] sm:$0xff]
      %v931 = vld [vmem:[#allocation2 + $0x78] sm:$0xff]
      %v932 = vld [vmem:[#allocation2 + $0x80] sm:$0xff]
      %v933 = vld [vmem:[#allocation2 + $0x90] sm:$0xff]
      %v934 = vld [vmem:[#allocation2 + $0x98] sm:$0xff]
      %v935 = vld [vmem:[#allocation2 + $0xa8] sm:$0xff]
      %v936 = vld [vmem:[#allocation2 + $0xb0] sm:$0xff]
      %v937 = vld [vmem:[#allocation2 + $0xc0] sm:$0xff]
      %v938 = vld [vmem:[#allocation2 + $0xc8] sm:$0xff]
      %v939 = vld [vmem:[#allocation2 + $0xd8] sm:$0xff]
      %v940 = vld [vmem:[#allocation2 + $0xe0] sm:$0xff]
      %v941 = vld [vmem:[#allocation2 + $0xf0] sm:$0xff]
      %v942 = vld [vmem:[#allocation2 + $0xf8] sm:$0xff]
      %v943 = vld [vmem:[#allocation2 + $0x108] sm:$0xff]
      %v944 = vld [vmem:[#allocation2 + $0x110] sm:$0xff]
      %v945 = vld [vmem:[#allocation2 + $0x120] sm:$0xff]
      %v946 = vld [vmem:[#allocation2 + $0x128] sm:$0xff]
      %v947 = vld [vmem:[#allocation2 + $0x138] sm:$0xff]
      %v948 = vld [vmem:[#allocation2 + $0x140] sm:$0xff]
      %v949 = vld [vmem:[#allocation2 + $0x150] sm:$0xff]
      %v950 = vld [vmem:[#allocation2 + $0x158] sm:$0xff]
      %v951 = vld [vmem:[#allocation2 + $0x168] sm:$0xff]
      %v952 = vld [vmem:[#allocation2 + $0x170] sm:$0xff]
      %v953 = vld [vmem:[#allocation2 + $0x1] sm:$0xff]
      %v954 = vld [vmem:[#allocation2 + $0x9] sm:$0xff]
      %v955 = vld [vmem:[#allocation2 + $0x19] sm:$0xff]
      %v956 = vld [vmem:[#allocation2 + $0x21] sm:$0xff]
      %v957 = vld [vmem:[#allocation2 + $0x31] sm:$0xff]
      %v958 = vld [vmem:[#allocation2 + $0x39] sm:$0xff]
      %v959 = vld [vmem:[#allocation2 + $0x49] sm:$0xff]
      %v960 = vld [vmem:[#allocation2 + $0x51] sm:$0xff]
      %v961 = vld [vmem:[#allocation2 + $0x61] sm:$0xff]
      %v962 = vld [vmem:[#allocation2 + $0x69] sm:$0xff]
      %v963 = vld [vmem:[#allocation2 + $0x79] sm:$0xff]
      %v964 = vld [vmem:[#allocation2 + $0x81] sm:$0xff]
      %v965 = vld [vmem:[#allocation2 + $0x91] sm:$0xff]
      %v966 = vld [vmem:[#allocation2 + $0x99] sm:$0xff]
      %v967 = vld [vmem:[#allocation2 + $0xa9] sm:$0xff]
      %v968 = vld [vmem:[#allocation2 + $0xb1] sm:$0xff]
      %v969 = vld [vmem:[#allocation2 + $0xc1] sm:$0xff]
      %v970 = vld [vmem:[#allocation2 + $0xc9] sm:$0xff]
      %v971 = vld [vmem:[#allocation2 + $0xd9] sm:$0xff]
      %v972 = vld [vmem:[#allocation2 + $0xe1] sm:$0xff]
      %v973 = vld [vmem:[#allocation2 + $0xf1] sm:$0xff]
      %v974 = vld [vmem:[#allocation2 + $0xf9] sm:$0xff]
      %v975 = vld [vmem:[#allocation2 + $0x109] sm:$0xff]
      %v976 = vld [vmem:[#allocation2 + $0x111] sm:$0xff]
      %v977 = vld [vmem:[#allocation2 + $0x121] sm:$0xff]
      %v978 = vld [vmem:[#allocation2 + $0x129] sm:$0xff]
      %v979 = vld [vmem:[#allocation2 + $0x139] sm:$0xff]
      %v980 = vld [vmem:[#allocation2 + $0x141] sm:$0xff]
      %v981 = vld [vmem:[#allocation2 + $0x151] sm:$0xff]
      %v982 = vld [vmem:[#allocation2 + $0x159] sm:$0xff]
      %v983 = vld [vmem:[#allocation2 + $0x169] sm:$0xff]
      %v984 = vld [vmem:[#allocation2 + $0x171] sm:$0xff]
      %v985 = vld [vmem:[#allocation2 + $0x2] sm:$0xff]
      %v986 = vld [vmem:[#allocation2 + $0xa] sm:$0xff]
      %v987 = vld [vmem:[#allocation2 + $0x1a] sm:$0xff]
      %v988 = vld [vmem:[#allocation2 + $0x22] sm:$0xff]
      %v989 = vld [vmem:[#allocation2 + $0x32] sm:$0xff]
      %v990 = vld [vmem:[#allocation2 + $0x3a] sm:$0xff]
      %v991 = vld [vmem:[#allocation2 + $0x4a] sm:$0xff]
      %v992 = vld [vmem:[#allocation2 + $0x52] sm:$0xff]
      %v993 = vld [vmem:[#allocation2 + $0x62] sm:$0xff]
      %v994 = vld [vmem:[#allocation2 + $0x6a] sm:$0xff]
      %v995 = vld [vmem:[#allocation2 + $0x7a] sm:$0xff]
      %v996 = vld [vmem:[#allocation2 + $0x82] sm:$0xff]
      %v997 = vld [vmem:[#allocation2 + $0x92] sm:$0xff]
      %v998 = vld [vmem:[#allocation2 + $0x9a] sm:$0xff]
      %v999 = vld [vmem:[#allocation2 + $0xaa] sm:$0xff]
      %v1000 = vld [vmem:[#allocation2 + $0xb2] sm:$0xff]
      %v1001 = vld [vmem:[#allocation2 + $0xc2] sm:$0xff]
      %v1002 = vld [vmem:[#allocation2 + $0xca] sm:$0xff]
      %v1003 = vld [vmem:[#allocation2 + $0xda] sm:$0xff]
      %v1004 = vld [vmem:[#allocation2 + $0xe2] sm:$0xff]
      %v1005 = vld [vmem:[#allocation2 + $0xf2] sm:$0xff]
      %v1006 = vld [vmem:[#allocation2 + $0xfa] sm:$0xff]
      %v1007 = vld [vmem:[#allocation2 + $0x10a] sm:$0xff]
      %v1008 = vld [vmem:[#allocation2 + $0x112] sm:$0xff]
      %v1009 = vld [vmem:[#allocation2 + $0x122] sm:$0xff]
      %v1010 = vld [vmem:[#allocation2 + $0x12a] sm:$0xff]
      %v1011 = vld [vmem:[#allocation2 + $0x13a] sm:$0xff]
      %v1012 = vld [vmem:[#allocation2 + $0x142] sm:$0xff]
      %v1013 = vld [vmem:[#allocation2 + $0x152] sm:$0xff]
      %v1014 = vld [vmem:[#allocation2 + $0x15a] sm:$0xff]
      %v1015 = vld [vmem:[#allocation2 + $0x16a] sm:$0xff]
      %v1016 = vld [vmem:[#allocation2 + $0x172] sm:$0xff]
      %v1017 = vld [vmem:[%s885] sm:$0xff]
      %v1018 = vld [vmem:[%s885 + $0x8] sm:$0xff]
      %v1019 = vld [vmem:[%s885 + $0x18] sm:$0xff]
      %v1020 = vld [vmem:[%s885 + $0x20] sm:$0xff]
      %v1021 = vld [vmem:[%s885 + $0x30] sm:$0xff]
      %v1022 = vld [vmem:[%s885 + $0x38] sm:$0xff]
      %v1023 = vld [vmem:[%s885 + $0x48] sm:$0xff]
      %v1024 = vld [vmem:[%s885 + $0x50] sm:$0xff]
      %v1025 = vld [vmem:[%s885 + $0x60] sm:$0xff]
      %v1026 = vld [vmem:[%s885 + $0x68] sm:$0xff]
      %v1027 = vld [vmem:[%s885 + $0x78] sm:$0xff]
      %v1028 = vld [vmem:[%s885 + $0x80] sm:$0xff]
      %v1029 = vld [vmem:[%s885 + $0x90] sm:$0xff]
      %v1030 = vld [vmem:[%s885 + $0x98] sm:$0xff]
      %v1031 = vld [vmem:[%s885 + $0xa8] sm:$0xff]
      %v1032 = vld [vmem:[%s885 + $0xb0] sm:$0xff]
      %v1033 = vld [vmem:[%s885 + $0xc0] sm:$0xff]
      %v1034 = vld [vmem:[%s885 + $0xc8] sm:$0xff]
      %v1035 = vld [vmem:[%s885 + $0xd8] sm:$0xff]
      %v1036 = vld [vmem:[%s885 + $0xe0] sm:$0xff]
      %v1037 = vld [vmem:[%s885 + $0xf0] sm:$0xff]
      %v1038 = vld [vmem:[%s885 + $0xf8] sm:$0xff]
      %v1039 = vld [vmem:[%s885 + $0x108] sm:$0xff]
      %v1040 = vld [vmem:[%s885 + $0x110] sm:$0xff]
      %v1041 = vld [vmem:[%s885 + $0x120] sm:$0xff]
      %v1042 = vld [vmem:[%s885 + $0x128] sm:$0xff]
      %v1043 = vld [vmem:[%s885 + $0x138] sm:$0xff]
      %v1044 = vld [vmem:[%s885 + $0x140] sm:$0xff]
      %v1045 = vld [vmem:[%s885 + $0x150] sm:$0xff]
      %v1046 = vld [vmem:[%s885 + $0x158] sm:$0xff]
      %v1047 = vld [vmem:[%s885 + $0x168] sm:$0xff]
      %v1048 = vld [vmem:[%s885 + $0x170] sm:$0xff]
      %v1049 = vld [vmem:[%s885 + $0x1] sm:$0xff]
      %v1050 = vld [vmem:[%s885 + $0x9] sm:$0xff]
      %v1051 = vld [vmem:[%s885 + $0x19] sm:$0xff]
      %v1052 = vld [vmem:[%s885 + $0x21] sm:$0xff]
      %v1053 = vld [vmem:[%s885 + $0x31] sm:$0xff]
      %v1054 = vld [vmem:[%s885 + $0x39] sm:$0xff]
      %v1055 = vld [vmem:[%s885 + $0x49] sm:$0xff]
      %v1056 = vld [vmem:[%s885 + $0x51] sm:$0xff]
      %v1057 = vld [vmem:[%s885 + $0x61] sm:$0xff]
      %v1058 = vld [vmem:[%s885 + $0x69] sm:$0xff]
      %v1059 = vld [vmem:[%s885 + $0x79] sm:$0xff]
      %v1060 = vld [vmem:[%s885 + $0x81] sm:$0xff]
      %v1061 = vld [vmem:[%s885 + $0x91] sm:$0xff]
      %v1062 = vld [vmem:[%s885 + $0x99] sm:$0xff]
      %v1063 = vld [vmem:[%s885 + $0xa9] sm:$0xff]
      %v1064 = vld [vmem:[%s885 + $0xb1] sm:$0xff]
      %v1065 = vld [vmem:[%s885 + $0xc1] sm:$0xff]
      %v1066 = vld [vmem:[%s885 + $0xc9] sm:$0xff]
      %v1067 = vld [vmem:[%s885 + $0xd9] sm:$0xff]
      %v1068 = vld [vmem:[%s885 + $0xe1] sm:$0xff]
      %v1069 = vld [vmem:[%s885 + $0xf1] sm:$0xff]
      %v1070 = vld [vmem:[%s885 + $0xf9] sm:$0xff]
      %v1071 = vld [vmem:[%s885 + $0x109] sm:$0xff]
      %v1072 = vld [vmem:[%s885 + $0x111] sm:$0xff]
      %v1073 = vld [vmem:[%s885 + $0x121] sm:$0xff]
      %v1074 = vld [vmem:[%s885 + $0x129] sm:$0xff]
      %v1075 = vld [vmem:[%s885 + $0x139] sm:$0xff]
      %v1076 = vld [vmem:[%s885 + $0x141] sm:$0xff]
      %v1077 = vld [vmem:[%s885 + $0x151] sm:$0xff]
      %v1078 = vld [vmem:[%s885 + $0x159] sm:$0xff]
      %v1079 = vld [vmem:[%s885 + $0x169] sm:$0xff]
      %v1080 = vld [vmem:[%s885 + $0x171] sm:$0xff]
      %v1081 = vld [vmem:[%s885 + $0x2] sm:$0xff]
      %v1082 = vld [vmem:[%s885 + $0xa] sm:$0xff]
      %v1083 = vld [vmem:[%s885 + $0x1a] sm:$0xff]
      %v1084 = vld [vmem:[%s885 + $0x22] sm:$0xff]
      %v1085 = vld [vmem:[%s885 + $0x32] sm:$0xff]
      %v1086 = vld [vmem:[%s885 + $0x3a] sm:$0xff]
      %v1087 = vld [vmem:[%s885 + $0x4a] sm:$0xff]
      %v1088 = vld [vmem:[%s885 + $0x52] sm:$0xff]
      %v1089 = vld [vmem:[%s885 + $0x62] sm:$0xff]
      %v1090 = vld [vmem:[%s885 + $0x6a] sm:$0xff]
      %v1091 = vld [vmem:[%s885 + $0x7a] sm:$0xff]
      %v1092 = vld [vmem:[%s885 + $0x82] sm:$0xff]
      %v1093 = vld [vmem:[%s885 + $0x92] sm:$0xff]
      %v1094 = vld [vmem:[%s885 + $0x9a] sm:$0xff]
      %v1095 = vld [vmem:[%s885 + $0xaa] sm:$0xff]
      %v1096 = vld [vmem:[%s885 + $0xb2] sm:$0xff]
      %v1097 = vld [vmem:[%s885 + $0xc2] sm:$0xff]
      %v1098 = vld [vmem:[%s885 + $0xca] sm:$0xff]
      %v1099 = vld [vmem:[%s885 + $0xda] sm:$0xff]
      %v1100 = vld [vmem:[%s885 + $0xe2] sm:$0xff]
      %v1101 = vld [vmem:[%s885 + $0xf2] sm:$0xff]
      %v1102 = vld [vmem:[%s885 + $0xfa] sm:$0xff]
      %v1103 = vld [vmem:[%s885 + $0x10a] sm:$0xff]
      %v1104 = vld [vmem:[%s885 + $0x112] sm:$0xff]
      %v1105 = vld [vmem:[%s885 + $0x122] sm:$0xff]
      %v1106 = vld [vmem:[%s885 + $0x12a] sm:$0xff]
      %v1107 = vld [vmem:[%s885 + $0x13a] sm:$0xff]
      %v1108 = vld [vmem:[%s885 + $0x142] sm:$0xff]
      %v1109 = vld [vmem:[%s885 + $0x152] sm:$0xff]
      %v1110 = vld [vmem:[%s885 + $0x15a] sm:$0xff]
      %v1111 = vld [vmem:[%s885 + $0x16a] sm:$0xff]
      %v1112 = vld [vmem:[%s885 + $0x172] sm:$0xff]
      %s1113 = scalar_lea.vmem [#allocation2], 48
      %v1114 = vld [vmem:[%s1113] sm:$0xff]
      %v1115 = vld [vmem:[%s1113 + $0x8] sm:$0xff]
      %v1116 = vld [vmem:[%s1113 + $0x18] sm:$0xff]
      %v1117 = vld [vmem:[%s1113 + $0x20] sm:$0xff]
      %v1118 = vld [vmem:[%s1113 + $0x30] sm:$0xff]
      %v1119 = vld [vmem:[%s1113 + $0x38] sm:$0xff]
      %v1120 = vld [vmem:[%s1113 + $0x48] sm:$0xff]
      %v1121 = vld [vmem:[%s1113 + $0x50] sm:$0xff]
      %v1122 = vld [vmem:[%s1113 + $0x60] sm:$0xff]
      %v1123 = vld [vmem:[%s1113 + $0x68] sm:$0xff]
      %v1124 = vld [vmem:[%s1113 + $0x78] sm:$0xff]
      %v1125 = vld [vmem:[%s1113 + $0x80] sm:$0xff]
      %v1126 = vld [vmem:[%s1113 + $0x90] sm:$0xff]
      %v1127 = vld [vmem:[%s1113 + $0x98] sm:$0xff]
      %v1128 = vld [vmem:[%s1113 + $0xa8] sm:$0xff]
      %v1129 = vld [vmem:[%s1113 + $0xb0] sm:$0xff]
      %v1130 = vld [vmem:[%s1113 + $0xc0] sm:$0xff]
      %v1131 = vld [vmem:[%s1113 + $0xc8] sm:$0xff]
      %v1132 = vld [vmem:[%s1113 + $0xd8] sm:$0xff]
      %v1133 = vld [vmem:[%s1113 + $0xe0] sm:$0xff]
      %v1134 = vld [vmem:[%s1113 + $0xf0] sm:$0xff]
      %v1135 = vld [vmem:[%s1113 + $0xf8] sm:$0xff]
      %v1136 = vld [vmem:[%s1113 + $0x108] sm:$0xff]
      %v1137 = vld [vmem:[%s1113 + $0x110] sm:$0xff]
      %v1138 = vld [vmem:[%s1113 + $0x120] sm:$0xff]
      %v1139 = vld [vmem:[%s1113 + $0x128] sm:$0xff]
      %v1140 = vld [vmem:[%s1113 + $0x138] sm:$0xff]
      %v1141 = vld [vmem:[%s1113 + $0x140] sm:$0xff]
      %v1142 = vld [vmem:[%s1113 + $0x150] sm:$0xff]
      %v1143 = vld [vmem:[%s1113 + $0x158] sm:$0xff]
      %v1144 = vld [vmem:[%s1113 + $0x168] sm:$0xff]
      %v1145 = vld [vmem:[%s1113 + $0x170] sm:$0xff]
      %v1146 = vld [vmem:[%s1113 + $0x1] sm:$0xff]
      %v1147 = vld [vmem:[%s1113 + $0x9] sm:$0xff]
      %v1148 = vld [vmem:[%s1113 + $0x19] sm:$0xff]
      %v1149 = vld [vmem:[%s1113 + $0x21] sm:$0xff]
      %v1150 = vld [vmem:[%s1113 + $0x31] sm:$0xff]
      %v1151 = vld [vmem:[%s1113 + $0x39] sm:$0xff]
      %v1152 = vld [vmem:[%s1113 + $0x49] sm:$0xff]
      %v1153 = vld [vmem:[%s1113 + $0x51] sm:$0xff]
      %v1154 = vld [vmem:[%s1113 + $0x61] sm:$0xff]
      %v1155 = vld [vmem:[%s1113 + $0x69] sm:$0xff]
      %v1156 = vld [vmem:[%s1113 + $0x79] sm:$0xff]
      %v1157 = vld [vmem:[%s1113 + $0x81] sm:$0xff]
      %v1158 = vld [vmem:[%s1113 + $0x91] sm:$0xff]
      %v1159 = vld [vmem:[%s1113 + $0x99] sm:$0xff]
      %v1160 = vld [vmem:[%s1113 + $0xa9] sm:$0xff]
      %v1161 = vld [vmem:[%s1113 + $0xb1] sm:$0xff]
      %v1162 = vld [vmem:[%s1113 + $0xc1] sm:$0xff]
      %v1163 = vld [vmem:[%s1113 + $0xc9] sm:$0xff]
      %v1164 = vld [vmem:[%s1113 + $0xd9] sm:$0xff]
      %v1165 = vld [vmem:[%s1113 + $0xe1] sm:$0xff]
      %v1166 = vld [vmem:[%s1113 + $0xf1] sm:$0xff]
      %v1167 = vld [vmem:[%s1113 + $0xf9] sm:$0xff]
      %v1168 = vld [vmem:[%s1113 + $0x109] sm:$0xff]
      %v1169 = vld [vmem:[%s1113 + $0x111] sm:$0xff]
      %v1170 = vld [vmem:[%s1113 + $0x121] sm:$0xff]
      %v1171 = vld [vmem:[%s1113 + $0x129] sm:$0xff]
      %v1172 = vld [vmem:[%s1113 + $0x139] sm:$0xff]
      %v1173 = vld [vmem:[%s1113 + $0x141] sm:$0xff]
      %v1174 = vld [vmem:[%s1113 + $0x151] sm:$0xff]
      %v1175 = vld [vmem:[%s1113 + $0x159] sm:$0xff]
      %v1176 = vld [vmem:[%s1113 + $0x169] sm:$0xff]
      %v1177 = vld [vmem:[%s1113 + $0x171] sm:$0xff]
      %v1178 = vld [vmem:[%s1113 + $0x2] sm:$0xff]
      %v1179 = vld [vmem:[%s1113 + $0xa] sm:$0xff]
      %v1180 = vld [vmem:[%s1113 + $0x1a] sm:$0xff]
      %v1181 = vld [vmem:[%s1113 + $0x22] sm:$0xff]
      %v1182 = vld [vmem:[%s1113 + $0x32] sm:$0xff]
      %v1183 = vld [vmem:[%s1113 + $0x3a] sm:$0xff]
      %v1184 = vld [vmem:[%s1113 + $0x4a] sm:$0xff]
      %v1185 = vld [vmem:[%s1113 + $0x52] sm:$0xff]
      %v1186 = vld [vmem:[%s1113 + $0x62] sm:$0xff]
      %v1187 = vld [vmem:[%s1113 + $0x6a] sm:$0xff]
      %v1188 = vld [vmem:[%s1113 + $0x7a] sm:$0xff]
      %v1189 = vld [vmem:[%s1113 + $0x82] sm:$0xff]
      %v1190 = vld [vmem:[%s1113 + $0x92] sm:$0xff]
      %v1191 = vld [vmem:[%s1113 + $0x9a] sm:$0xff]
      %v1192 = vld [vmem:[%s1113 + $0xaa] sm:$0xff]
      %v1193 = vld [vmem:[%s1113 + $0xb2] sm:$0xff]
      %v1194 = vld [vmem:[%s1113 + $0xc2] sm:$0xff]
      %v1195 = vld [vmem:[%s1113 + $0xca] sm:$0xff]
      %v1196 = vld [vmem:[%s1113 + $0xda] sm:$0xff]
      %v1197 = vld [vmem:[%s1113 + $0xe2] sm:$0xff]
      %v1198 = vld [vmem:[%s1113 + $0xf2] sm:$0xff]
      %v1199 = vld [vmem:[%s1113 + $0xfa] sm:$0xff]
      %v1200 = vld [vmem:[%s1113 + $0x10a] sm:$0xff]
      %v1201 = vld [vmem:[%s1113 + $0x112] sm:$0xff]
      %v1202 = vld [vmem:[%s1113 + $0x122] sm:$0xff]
      %v1203 = vld [vmem:[%s1113 + $0x12a] sm:$0xff]
      %v1204 = vld [vmem:[%s1113 + $0x13a] sm:$0xff]
      %v1205 = vld [vmem:[%s1113 + $0x142] sm:$0xff]
      %v1206 = vld [vmem:[%s1113 + $0x152] sm:$0xff]
      %v1207 = vld [vmem:[%s1113 + $0x15a] sm:$0xff]
      %v1208 = vld [vmem:[%s1113 + $0x16a] sm:$0xff]
      %v1209 = vld [vmem:[%s1113 + $0x172] sm:$0xff]
      %1242 = vrot.lane.b32.xlu0 %v953, 2
      %v1243 = vpop.permute.xlu0 %1242
      %1244 = vrot.lane.b32.xlu0 %v954, 2
      %v1245 = vpop.permute.xlu0 %1244
      %1246 = vrot.lane.b32.xlu0 %v955, 2
      %v1247 = vpop.permute.xlu0 %1246
      %1248 = vrot.lane.b32.xlu0 %v956, 2
      %v1249 = vpop.permute.xlu0 %1248
      %1250 = vrot.lane.b32.xlu0 %v957, 2
      %v1251 = vpop.permute.xlu0 %1250
      %1252 = vrot.lane.b32.xlu0 %v958, 2
      %v1253 = vpop.permute.xlu0 %1252
      %1254 = vrot.lane.b32.xlu0 %v959, 2
      %v1255 = vpop.permute.xlu0 %1254
      %1256 = vrot.lane.b32.xlu0 %v960, 2
      %v1257 = vpop.permute.xlu0 %1256
      %1258 = vrot.lane.b32.xlu0 %v961, 2
      %v1259 = vpop.permute.xlu0 %1258
      %1260 = vrot.lane.b32.xlu0 %v962, 2
      %v1261 = vpop.permute.xlu0 %1260
      %1262 = vrot.lane.b32.xlu0 %v963, 2
      %v1263 = vpop.permute.xlu0 %1262
      %1264 = vrot.lane.b32.xlu0 %v964, 2
      %v1265 = vpop.permute.xlu0 %1264
      %1266 = vrot.lane.b32.xlu0 %v965, 2
      %v1267 = vpop.permute.xlu0 %1266
      %1268 = vrot.lane.b32.xlu0 %v966, 2
      %v1269 = vpop.permute.xlu0 %1268
      %1270 = vrot.lane.b32.xlu0 %v967, 2
      %v1271 = vpop.permute.xlu0 %1270
      %1272 = vrot.lane.b32.xlu0 %v968, 2
      %v1273 = vpop.permute.xlu0 %1272
      %1274 = vrot.lane.b32.xlu0 %v969, 2
      %v1275 = vpop.permute.xlu0 %1274
      %1276 = vrot.lane.b32.xlu0 %v970, 2
      %v1277 = vpop.permute.xlu0 %1276
      %1278 = vrot.lane.b32.xlu0 %v971, 2
      %v1279 = vpop.permute.xlu0 %1278
      %1280 = vrot.lane.b32.xlu0 %v972, 2
      %v1281 = vpop.permute.xlu0 %1280
      %1282 = vrot.lane.b32.xlu0 %v973, 2
      %v1283 = vpop.permute.xlu0 %1282
      %1284 = vrot.lane.b32.xlu0 %v974, 2
      %v1285 = vpop.permute.xlu0 %1284
      %1286 = vrot.lane.b32.xlu0 %v975, 2
      %v1287 = vpop.permute.xlu0 %1286
      %1288 = vrot.lane.b32.xlu0 %v976, 2
      %v1289 = vpop.permute.xlu0 %1288
      %1290 = vrot.lane.b32.xlu0 %v977, 2
      %v1291 = vpop.permute.xlu0 %1290
      %1292 = vrot.lane.b32.xlu0 %v978, 2
      %v1293 = vpop.permute.xlu0 %1292
      %1294 = vrot.lane.b32.xlu0 %v979, 2
      %v1295 = vpop.permute.xlu0 %1294
      %1296 = vrot.lane.b32.xlu0 %v980, 2
      %v1297 = vpop.permute.xlu0 %1296
      %1298 = vrot.lane.b32.xlu0 %v981, 2
      %v1299 = vpop.permute.xlu0 %1298
      %1300 = vrot.lane.b32.xlu0 %v982, 2
      %v1301 = vpop.permute.xlu0 %1300
      %1302 = vrot.lane.b32.xlu0 %v983, 2
      %v1303 = vpop.permute.xlu0 %1302
      %1304 = vrot.lane.b32.xlu0 %v984, 2
      %v1305 = vpop.permute.xlu0 %1304
      %1370 = vrot.lane.b32.xlu0 %v985, 4
      %v1371 = vpop.permute.xlu0 %1370
      %1372 = vrot.lane.b32.xlu0 %v986, 4
      %v1373 = vpop.permute.xlu0 %1372
      %1374 = vrot.lane.b32.xlu0 %v987, 4
      %v1375 = vpop.permute.xlu0 %1374
      %1376 = vrot.lane.b32.xlu0 %v988, 4
      %v1377 = vpop.permute.xlu0 %1376
      %1378 = vrot.lane.b32.xlu0 %v989, 4
      %v1379 = vpop.permute.xlu0 %1378
      %1380 = vrot.lane.b32.xlu0 %v990, 4
      %v1381 = vpop.permute.xlu0 %1380
      %1382 = vrot.lane.b32.xlu0 %v991, 4
      %v1383 = vpop.permute.xlu0 %1382
      %1384 = vrot.lane.b32.xlu0 %v992, 4
      %v1385 = vpop.permute.xlu0 %1384
      %1386 = vrot.lane.b32.xlu0 %v993, 4
      %v1387 = vpop.permute.xlu0 %1386
      %1388 = vrot.lane.b32.xlu0 %v994, 4
      %v1389 = vpop.permute.xlu0 %1388
      %1390 = vrot.lane.b32.xlu0 %v995, 4
      %v1391 = vpop.permute.xlu0 %1390
      %1392 = vrot.lane.b32.xlu0 %v996, 4
      %v1393 = vpop.permute.xlu0 %1392
      %1394 = vrot.lane.b32.xlu0 %v997, 4
      %v1395 = vpop.permute.xlu0 %1394
      %1396 = vrot.lane.b32.xlu0 %v998, 4
      %v1397 = vpop.permute.xlu0 %1396
      %1398 = vrot.lane.b32.xlu0 %v999, 4
      %v1399 = vpop.permute.xlu0 %1398
      %1400 = vrot.lane.b32.xlu0 %v1000, 4
      %v1401 = vpop.permute.xlu0 %1400
      %1402 = vrot.lane.b32.xlu0 %v1001, 4
      %v1403 = vpop.permute.xlu0 %1402
      %1404 = vrot.lane.b32.xlu0 %v1002, 4
      %v1405 = vpop.permute.xlu0 %1404
      %1406 = vrot.lane.b32.xlu0 %v1003, 4
      %v1407 = vpop.permute.xlu0 %1406
      %1408 = vrot.lane.b32.xlu0 %v1004, 4
      %v1409 = vpop.permute.xlu0 %1408
      %1410 = vrot.lane.b32.xlu0 %v1005, 4
      %v1411 = vpop.permute.xlu0 %1410
      %1412 = vrot.lane.b32.xlu0 %v1006, 4
      %v1413 = vpop.permute.xlu0 %1412
      %1414 = vrot.lane.b32.xlu0 %v1007, 4
      %v1415 = vpop.permute.xlu0 %1414
      %1416 = vrot.lane.b32.xlu0 %v1008, 4
      %v1417 = vpop.permute.xlu0 %1416
      %1418 = vrot.lane.b32.xlu0 %v1009, 4
      %v1419 = vpop.permute.xlu0 %1418
      %1420 = vrot.lane.b32.xlu0 %v1010, 4
      %v1421 = vpop.permute.xlu0 %1420
      %1422 = vrot.lane.b32.xlu0 %v1011, 4
      %v1423 = vpop.permute.xlu0 %1422
      %1424 = vrot.lane.b32.xlu0 %v1012, 4
      %v1425 = vpop.permute.xlu0 %1424
      %1426 = vrot.lane.b32.xlu0 %v1013, 4
      %v1427 = vpop.permute.xlu0 %1426
      %1428 = vrot.lane.b32.xlu0 %v1014, 4
      %v1429 = vpop.permute.xlu0 %1428
      %1430 = vrot.lane.b32.xlu0 %v1015, 4
      %v1431 = vpop.permute.xlu0 %1430
      %1432 = vrot.lane.b32.xlu0 %v1016, 4
      %v1433 = vpop.permute.xlu0 %1432
      %1498 = vrot.lane.b32.xlu0 %v1017, 6
      %v1499 = vpop.permute.xlu0 %1498
      %1500 = vrot.lane.b32.xlu0 %v1018, 6
      %v1501 = vpop.permute.xlu0 %1500
      %1502 = vrot.lane.b32.xlu0 %v1019, 6
      %v1503 = vpop.permute.xlu0 %1502
      %1504 = vrot.lane.b32.xlu0 %v1020, 6
      %v1505 = vpop.permute.xlu0 %1504
      %1506 = vrot.lane.b32.xlu0 %v1021, 6
      %v1507 = vpop.permute.xlu0 %1506
      %1508 = vrot.lane.b32.xlu0 %v1022, 6
      %v1509 = vpop.permute.xlu0 %1508
      %1510 = vrot.lane.b32.xlu0 %v1023, 6
      %v1511 = vpop.permute.xlu0 %1510
      %1512 = vrot.lane.b32.xlu0 %v1024, 6
      %v1513 = vpop.permute.xlu0 %1512
      %1514 = vrot.lane.b32.xlu0 %v1025, 6
      %v1515 = vpop.permute.xlu0 %1514
      %1516 = vrot.lane.b32.xlu0 %v1026, 6
      %v1517 = vpop.permute.xlu0 %1516
      %1518 = vrot.lane.b32.xlu0 %v1027, 6
      %v1519 = vpop.permute.xlu0 %1518
      %1520 = vrot.lane.b32.xlu0 %v1028, 6
      %v1521 = vpop.permute.xlu0 %1520
      %1522 = vrot.lane.b32.xlu0 %v1029, 6
      %v1523 = vpop.permute.xlu0 %1522
      %1524 = vrot.lane.b32.xlu0 %v1030, 6
      %v1525 = vpop.permute.xlu0 %1524
      %1526 = vrot.lane.b32.xlu0 %v1031, 6
      %v1527 = vpop.permute.xlu0 %1526
      %1528 = vrot.lane.b32.xlu0 %v1032, 6
      %v1529 = vpop.permute.xlu0 %1528
      %1530 = vrot.lane.b32.xlu0 %v1033, 6
      %v1531 = vpop.permute.xlu0 %1530
      %1532 = vrot.lane.b32.xlu0 %v1034, 6
      %v1533 = vpop.permute.xlu0 %1532
      %1534 = vrot.lane.b32.xlu0 %v1035, 6
      %v1535 = vpop.permute.xlu0 %1534
      %1536 = vrot.lane.b32.xlu0 %v1036, 6
      %v1537 = vpop.permute.xlu0 %1536
      %1538 = vrot.lane.b32.xlu0 %v1037, 6
      %v1539 = vpop.permute.xlu0 %1538
      %1540 = vrot.lane.b32.xlu0 %v1038, 6
      %v1541 = vpop.permute.xlu0 %1540
      %1542 = vrot.lane.b32.xlu0 %v1039, 6
      %v1543 = vpop.permute.xlu0 %1542
      %1544 = vrot.lane.b32.xlu0 %v1040, 6
      %v1545 = vpop.permute.xlu0 %1544
      %1546 = vrot.lane.b32.xlu0 %v1041, 6
      %v1547 = vpop.permute.xlu0 %1546
      %1548 = vrot.lane.b32.xlu0 %v1042, 6
      %v1549 = vpop.permute.xlu0 %1548
      %1550 = vrot.lane.b32.xlu0 %v1043, 6
      %v1551 = vpop.permute.xlu0 %1550
      %1552 = vrot.lane.b32.xlu0 %v1044, 6
      %v1553 = vpop.permute.xlu0 %1552
      %1554 = vrot.lane.b32.xlu0 %v1045, 6
      %v1555 = vpop.permute.xlu0 %1554
      %1556 = vrot.lane.b32.xlu0 %v1046, 6
      %v1557 = vpop.permute.xlu0 %1556
      %1558 = vrot.lane.b32.xlu0 %v1047, 6
      %v1559 = vpop.permute.xlu0 %1558
      %1560 = vrot.lane.b32.xlu0 %v1048, 6
      %v1561 = vpop.permute.xlu0 %1560
      %1626 = vrot.lane.b32.xlu0 %v1049, 8
      %v1627 = vpop.permute.xlu0 %1626
      %1628 = vrot.lane.b32.xlu0 %v1050, 8
      %v1629 = vpop.permute.xlu0 %1628
      %1630 = vrot.lane.b32.xlu0 %v1051, 8
      %v1631 = vpop.permute.xlu0 %1630
      %1632 = vrot.lane.b32.xlu0 %v1052, 8
      %v1633 = vpop.permute.xlu0 %1632
      %1634 = vrot.lane.b32.xlu0 %v1053, 8
      %v1635 = vpop.permute.xlu0 %1634
      %1636 = vrot.lane.b32.xlu0 %v1054, 8
      %v1637 = vpop.permute.xlu0 %1636
      %1638 = vrot.lane.b32.xlu0 %v1055, 8
      %v1639 = vpop.permute.xlu0 %1638
      %1640 = vrot.lane.b32.xlu0 %v1056, 8
      %v1641 = vpop.permute.xlu0 %1640
      %1642 = vrot.lane.b32.xlu0 %v1057, 8
      %v1643 = vpop.permute.xlu0 %1642
      %1644 = vrot.lane.b32.xlu0 %v1058, 8
      %v1645 = vpop.permute.xlu0 %1644
      %1646 = vrot.lane.b32.xlu0 %v1059, 8
      %v1647 = vpop.permute.xlu0 %1646
      %1648 = vrot.lane.b32.xlu0 %v1060, 8
      %v1649 = vpop.permute.xlu0 %1648
      %1650 = vrot.lane.b32.xlu0 %v1061, 8
      %v1651 = vpop.permute.xlu0 %1650
      %1652 = vrot.lane.b32.xlu0 %v1062, 8
      %v1653 = vpop.permute.xlu0 %1652
      %1654 = vrot.lane.b32.xlu0 %v1063, 8
      %v1655 = vpop.permute.xlu0 %1654
      %1656 = vrot.lane.b32.xlu0 %v1064, 8
      %v1657 = vpop.permute.xlu0 %1656
      %1658 = vrot.lane.b32.xlu0 %v1065, 8
      %v1659 = vpop.permute.xlu0 %1658
      %1660 = vrot.lane.b32.xlu0 %v1066, 8
      %v1661 = vpop.permute.xlu0 %1660
      %1662 = vrot.lane.b32.xlu0 %v1067, 8
      %v1663 = vpop.permute.xlu0 %1662
      %1664 = vrot.lane.b32.xlu0 %v1068, 8
      %v1665 = vpop.permute.xlu0 %1664
      %1666 = vrot.lane.b32.xlu0 %v1069, 8
      %v1667 = vpop.permute.xlu0 %1666
      %1668 = vrot.lane.b32.xlu0 %v1070, 8
      %v1669 = vpop.permute.xlu0 %1668
      %1670 = vrot.lane.b32.xlu0 %v1071, 8
      %v1671 = vpop.permute.xlu0 %1670
      %1672 = vrot.lane.b32.xlu0 %v1072, 8
      %v1673 = vpop.permute.xlu0 %1672
      %1674 = vrot.lane.b32.xlu0 %v1073, 8
      %v1675 = vpop.permute.xlu0 %1674
      %1676 = vrot.lane.b32.xlu0 %v1074, 8
      %v1677 = vpop.permute.xlu0 %1676
      %1678 = vrot.lane.b32.xlu0 %v1075, 8
      %v1679 = vpop.permute.xlu0 %1678
      %1680 = vrot.lane.b32.xlu0 %v1076, 8
      %v1681 = vpop.permute.xlu0 %1680
      %1682 = vrot.lane.b32.xlu0 %v1077, 8
      %v1683 = vpop.permute.xlu0 %1682
      %1684 = vrot.lane.b32.xlu0 %v1078, 8
      %v1685 = vpop.permute.xlu0 %1684
      %1686 = vrot.lane.b32.xlu0 %v1079, 8
      %v1687 = vpop.permute.xlu0 %1686
      %1688 = vrot.lane.b32.xlu0 %v1080, 8
      %v1689 = vpop.permute.xlu0 %1688
      %1754 = vrot.lane.b32.xlu0 %v1081, 10
      %v1755 = vpop.permute.xlu0 %1754
      %1756 = vrot.lane.b32.xlu0 %v1082, 10
      %v1757 = vpop.permute.xlu0 %1756
      %1758 = vrot.lane.b32.xlu0 %v1083, 10
      %v1759 = vpop.permute.xlu0 %1758
      %1760 = vrot.lane.b32.xlu0 %v1084, 10
      %v1761 = vpop.permute.xlu0 %1760
      %1762 = vrot.lane.b32.xlu0 %v1085, 10
      %v1763 = vpop.permute.xlu0 %1762
      %1764 = vrot.lane.b32.xlu0 %v1086, 10
      %v1765 = vpop.permute.xlu0 %1764
      %1766 = vrot.lane.b32.xlu0 %v1087, 10
      %v1767 = vpop.permute.xlu0 %1766
      %1768 = vrot.lane.b32.xlu0 %v1088, 10
      %v1769 = vpop.permute.xlu0 %1768
      %1770 = vrot.lane.b32.xlu0 %v1089, 10
      %v1771 = vpop.permute.xlu0 %1770
      %1772 = vrot.lane.b32.xlu0 %v1090, 10
      %v1773 = vpop.permute.xlu0 %1772
      %1774 = vrot.lane.b32.xlu0 %v1091, 10
      %v1775 = vpop.permute.xlu0 %1774
      %1776 = vrot.lane.b32.xlu0 %v1092, 10
      %v1777 = vpop.permute.xlu0 %1776
      %1778 = vrot.lane.b32.xlu0 %v1093, 10
      %v1779 = vpop.permute.xlu0 %1778
      %1780 = vrot.lane.b32.xlu0 %v1094, 10
      %v1781 = vpop.permute.xlu0 %1780
      %1782 = vrot.lane.b32.xlu0 %v1095, 10
      %v1783 = vpop.permute.xlu0 %1782
      %1784 = vrot.lane.b32.xlu0 %v1096, 10
      %v1785 = vpop.permute.xlu0 %1784
      %1786 = vrot.lane.b32.xlu0 %v1097, 10
      %v1787 = vpop.permute.xlu0 %1786
      %1788 = vrot.lane.b32.xlu0 %v1098, 10
      %v1789 = vpop.permute.xlu0 %1788
      %1790 = vrot.lane.b32.xlu0 %v1099, 10
      %v1791 = vpop.permute.xlu0 %1790
      %1792 = vrot.lane.b32.xlu0 %v1100, 10
      %v1793 = vpop.permute.xlu0 %1792
      %1794 = vrot.lane.b32.xlu0 %v1101, 10
      %v1795 = vpop.permute.xlu0 %1794
      %1796 = vrot.lane.b32.xlu0 %v1102, 10
      %v1797 = vpop.permute.xlu0 %1796
      %1798 = vrot.lane.b32.xlu0 %v1103, 10
      %v1799 = vpop.permute.xlu0 %1798
      %1800 = vrot.lane.b32.xlu0 %v1104, 10
      %v1801 = vpop.permute.xlu0 %1800
      %1802 = vrot.lane.b32.xlu0 %v1105, 10
      %v1803 = vpop.permute.xlu0 %1802
      %1804 = vrot.lane.b32.xlu0 %v1106, 10
      %v1805 = vpop.permute.xlu0 %1804
      %1806 = vrot.lane.b32.xlu0 %v1107, 10
      %v1807 = vpop.permute.xlu0 %1806
      %1808 = vrot.lane.b32.xlu0 %v1108, 10
      %v1809 = vpop.permute.xlu0 %1808
      %1810 = vrot.lane.b32.xlu0 %v1109, 10
      %v1811 = vpop.permute.xlu0 %1810
      %1812 = vrot.lane.b32.xlu0 %v1110, 10
      %v1813 = vpop.permute.xlu0 %1812
      %1814 = vrot.lane.b32.xlu0 %v1111, 10
      %v1815 = vpop.permute.xlu0 %1814
      %1816 = vrot.lane.b32.xlu0 %v1112, 10
      %v1817 = vpop.permute.xlu0 %1816
      %1882 = vrot.lane.b32.xlu0 %v1114, 12
      %v1883 = vpop.permute.xlu0 %1882
      %1884 = vrot.lane.b32.xlu0 %v1115, 12
      %v1885 = vpop.permute.xlu0 %1884
      %1886 = vrot.lane.b32.xlu0 %v1116, 12
      %v1887 = vpop.permute.xlu0 %1886
      %1888 = vrot.lane.b32.xlu0 %v1117, 12
      %v1889 = vpop.permute.xlu0 %1888
      %1890 = vrot.lane.b32.xlu0 %v1118, 12
      %v1891 = vpop.permute.xlu0 %1890
      %1892 = vrot.lane.b32.xlu0 %v1119, 12
      %v1893 = vpop.permute.xlu0 %1892
      %1894 = vrot.lane.b32.xlu0 %v1120, 12
      %v1895 = vpop.permute.xlu0 %1894
      %1896 = vrot.lane.b32.xlu0 %v1121, 12
      %v1897 = vpop.permute.xlu0 %1896
      %1898 = vrot.lane.b32.xlu0 %v1122, 12
      %v1899 = vpop.permute.xlu0 %1898
      %1900 = vrot.lane.b32.xlu0 %v1123, 12
      %v1901 = vpop.permute.xlu0 %1900
      %1902 = vrot.lane.b32.xlu0 %v1124, 12
      %v1903 = vpop.permute.xlu0 %1902
      %1904 = vrot.lane.b32.xlu0 %v1125, 12
      %v1905 = vpop.permute.xlu0 %1904
      %1906 = vrot.lane.b32.xlu0 %v1126, 12
      %v1907 = vpop.permute.xlu0 %1906
      %1908 = vrot.lane.b32.xlu0 %v1127, 12
      %v1909 = vpop.permute.xlu0 %1908
      %1910 = vrot.lane.b32.xlu0 %v1128, 12
      %v1911 = vpop.permute.xlu0 %1910
      %1912 = vrot.lane.b32.xlu0 %v1129, 12
      %v1913 = vpop.permute.xlu0 %1912
      %1914 = vrot.lane.b32.xlu0 %v1130, 12
      %v1915 = vpop.permute.xlu0 %1914
      %1916 = vrot.lane.b32.xlu0 %v1131, 12
      %v1917 = vpop.permute.xlu0 %1916
      %1918 = vrot.lane.b32.xlu0 %v1132, 12
      %v1919 = vpop.permute.xlu0 %1918
      %1920 = vrot.lane.b32.xlu0 %v1133, 12
      %v1921 = vpop.permute.xlu0 %1920
      %1922 = vrot.lane.b32.xlu0 %v1134, 12
      %v1923 = vpop.permute.xlu0 %1922
      %1924 = vrot.lane.b32.xlu0 %v1135, 12
      %v1925 = vpop.permute.xlu0 %1924
      %1926 = vrot.lane.b32.xlu0 %v1136, 12
      %v1927 = vpop.permute.xlu0 %1926
      %1928 = vrot.lane.b32.xlu0 %v1137, 12
      %v1929 = vpop.permute.xlu0 %1928
      %1930 = vrot.lane.b32.xlu0 %v1138, 12
      %v1931 = vpop.permute.xlu0 %1930
      %1932 = vrot.lane.b32.xlu0 %v1139, 12
      %v1933 = vpop.permute.xlu0 %1932
      %1934 = vrot.lane.b32.xlu0 %v1140, 12
      %v1935 = vpop.permute.xlu0 %1934
      %1936 = vrot.lane.b32.xlu0 %v1141, 12
      %v1937 = vpop.permute.xlu0 %1936
      %1938 = vrot.lane.b32.xlu0 %v1142, 12
      %v1939 = vpop.permute.xlu0 %1938
      %1940 = vrot.lane.b32.xlu0 %v1143, 12
      %v1941 = vpop.permute.xlu0 %1940
      %1942 = vrot.lane.b32.xlu0 %v1144, 12
      %v1943 = vpop.permute.xlu0 %1942
      %1944 = vrot.lane.b32.xlu0 %v1145, 12
      %v1945 = vpop.permute.xlu0 %1944
      %2010 = vrot.lane.b32.xlu0 %v1146, 14
      %v2011 = vpop.permute.xlu0 %2010
      %2012 = vrot.lane.b32.xlu0 %v1147, 14
      %v2013 = vpop.permute.xlu0 %2012
      %2014 = vrot.lane.b32.xlu0 %v1148, 14
      %v2015 = vpop.permute.xlu0 %2014
      %2016 = vrot.lane.b32.xlu0 %v1149, 14
      %v2017 = vpop.permute.xlu0 %2016
      %2018 = vrot.lane.b32.xlu0 %v1150, 14
      %v2019 = vpop.permute.xlu0 %2018
      %2020 = vrot.lane.b32.xlu0 %v1151, 14
      %v2021 = vpop.permute.xlu0 %2020
      %2022 = vrot.lane.b32.xlu0 %v1152, 14
      %v2023 = vpop.permute.xlu0 %2022
      %2024 = vrot.lane.b32.xlu0 %v1153, 14
      %v2025 = vpop.permute.xlu0 %2024
      %2026 = vrot.lane.b32.xlu0 %v1154, 14
      %v2027 = vpop.permute.xlu0 %2026
      %2028 = vrot.lane.b32.xlu0 %v1155, 14
      %v2029 = vpop.permute.xlu0 %2028
      %2030 = vrot.lane.b32.xlu0 %v1156, 14
      %v2031 = vpop.permute.xlu0 %2030
      %2032 = vrot.lane.b32.xlu0 %v1157, 14
      %v2033 = vpop.permute.xlu0 %2032
      %2034 = vrot.lane.b32.xlu0 %v1158, 14
      %v2035 = vpop.permute.xlu0 %2034
      %2036 = vrot.lane.b32.xlu0 %v1159, 14
      %v2037 = vpop.permute.xlu0 %2036
      %2038 = vrot.lane.b32.xlu0 %v1160, 14
      %v2039 = vpop.permute.xlu0 %2038
      %2040 = vrot.lane.b32.xlu0 %v1161, 14
      %v2041 = vpop.permute.xlu0 %2040
      %2042 = vrot.lane.b32.xlu0 %v1162, 14
      %v2043 = vpop.permute.xlu0 %2042
      %2044 = vrot.lane.b32.xlu0 %v1163, 14
      %v2045 = vpop.permute.xlu0 %2044
      %2046 = vrot.lane.b32.xlu0 %v1164, 14
      %v2047 = vpop.permute.xlu0 %2046
      %2048 = vrot.lane.b32.xlu0 %v1165, 14
      %v2049 = vpop.permute.xlu0 %2048
      %2050 = vrot.lane.b32.xlu0 %v1166, 14
      %v2051 = vpop.permute.xlu0 %2050
      %2052 = vrot.lane.b32.xlu0 %v1167, 14
      %v2053 = vpop.permute.xlu0 %2052
      %2054 = vrot.lane.b32.xlu0 %v1168, 14
      %v2055 = vpop.permute.xlu0 %2054
      %2056 = vrot.lane.b32.xlu0 %v1169, 14
      %v2057 = vpop.permute.xlu0 %2056
      %2058 = vrot.lane.b32.xlu0 %v1170, 14
      %v2059 = vpop.permute.xlu0 %2058
      %2060 = vrot.lane.b32.xlu0 %v1171, 14
      %v2061 = vpop.permute.xlu0 %2060
      %2062 = vrot.lane.b32.xlu0 %v1172, 14
      %v2063 = vpop.permute.xlu0 %2062
      %2064 = vrot.lane.b32.xlu0 %v1173, 14
      %v2065 = vpop.permute.xlu0 %2064
      %2066 = vrot.lane.b32.xlu0 %v1174, 14
      %v2067 = vpop.permute.xlu0 %2066
      %2068 = vrot.lane.b32.xlu0 %v1175, 14
      %v2069 = vpop.permute.xlu0 %2068
      %2070 = vrot.lane.b32.xlu0 %v1176, 14
      %v2071 = vpop.permute.xlu0 %2070
      %2072 = vrot.lane.b32.xlu0 %v1177, 14
      %v2073 = vpop.permute.xlu0 %2072
      %2138 = vrot.lane.b32.xlu0 %v1178, 16
      %v2139 = vpop.permute.xlu0 %2138
      %2140 = vrot.lane.b32.xlu0 %v1179, 16
      %v2141 = vpop.permute.xlu0 %2140
      %2142 = vrot.lane.b32.xlu0 %v1180, 16
      %v2143 = vpop.permute.xlu0 %2142
      %2144 = vrot.lane.b32.xlu0 %v1181, 16
      %v2145 = vpop.permute.xlu0 %2144
      %2146 = vrot.lane.b32.xlu0 %v1182, 16
      %v2147 = vpop.permute.xlu0 %2146
      %2148 = vrot.lane.b32.xlu0 %v1183, 16
      %v2149 = vpop.permute.xlu0 %2148
      %2150 = vrot.lane.b32.xlu0 %v1184, 16
      %v2151 = vpop.permute.xlu0 %2150
      %2152 = vrot.lane.b32.xlu0 %v1185, 16
      %v2153 = vpop.permute.xlu0 %2152
      %2154 = vrot.lane.b32.xlu0 %v1186, 16
      %v2155 = vpop.permute.xlu0 %2154
      %2156 = vrot.lane.b32.xlu0 %v1187, 16
      %v2157 = vpop.permute.xlu0 %2156
      %2158 = vrot.lane.b32.xlu0 %v1188, 16
      %v2159 = vpop.permute.xlu0 %2158
      %2160 = vrot.lane.b32.xlu0 %v1189, 16
      %v2161 = vpop.permute.xlu0 %2160
      %2162 = vrot.lane.b32.xlu0 %v1190, 16
      %v2163 = vpop.permute.xlu0 %2162
      %2164 = vrot.lane.b32.xlu0 %v1191, 16
      %v2165 = vpop.permute.xlu0 %2164
      %2166 = vrot.lane.b32.xlu0 %v1192, 16
      %v2167 = vpop.permute.xlu0 %2166
      %2168 = vrot.lane.b32.xlu0 %v1193, 16
      %v2169 = vpop.permute.xlu0 %2168
      %2170 = vrot.lane.b32.xlu0 %v1194, 16
      %v2171 = vpop.permute.xlu0 %2170
      %2172 = vrot.lane.b32.xlu0 %v1195, 16
      %v2173 = vpop.permute.xlu0 %2172
      %2174 = vrot.lane.b32.xlu0 %v1196, 16
      %v2175 = vpop.permute.xlu0 %2174
      %2176 = vrot.lane.b32.xlu0 %v1197, 16
      %v2177 = vpop.permute.xlu0 %2176
      %2178 = vrot.lane.b32.xlu0 %v1198, 16
      %v2179 = vpop.permute.xlu0 %2178
      %2180 = vrot.lane.b32.xlu0 %v1199, 16
      %v2181 = vpop.permute.xlu0 %2180
      %2182 = vrot.lane.b32.xlu0 %v1200, 16
      %v2183 = vpop.permute.xlu0 %2182
      %2184 = vrot.lane.b32.xlu0 %v1201, 16
      %v2185 = vpop.permute.xlu0 %2184
      %2186 = vrot.lane.b32.xlu0 %v1202, 16
      %v2187 = vpop.permute.xlu0 %2186
      %2188 = vrot.lane.b32.xlu0 %v1203, 16
      %v2189 = vpop.permute.xlu0 %2188
      %2190 = vrot.lane.b32.xlu0 %v1204, 16
      %v2191 = vpop.permute.xlu0 %2190
      %2192 = vrot.lane.b32.xlu0 %v1205, 16
      %v2193 = vpop.permute.xlu0 %2192
      %2194 = vrot.lane.b32.xlu0 %v1206, 16
      %v2195 = vpop.permute.xlu0 %2194
      %2196 = vrot.lane.b32.xlu0 %v1207, 16
      %v2197 = vpop.permute.xlu0 %2196
      %2198 = vrot.lane.b32.xlu0 %v1208, 16
      %v2199 = vpop.permute.xlu0 %2198
      %2200 = vrot.lane.b32.xlu0 %v1209, 16
      %v2201 = vpop.permute.xlu0 %2200
      %v2234 = vsel %vm291, %v921, %v1243
      %v2235 = vsel %vm291, %v922, %v1245
      %v2236 = vsel %vm291, %v923, %v1247
      %v2237 = vsel %vm291, %v924, %v1249
      %v2238 = vsel %vm291, %v925, %v1251
      %v2239 = vsel %vm291, %v926, %v1253
      %v2240 = vsel %vm291, %v927, %v1255
      %v2241 = vsel %vm291, %v928, %v1257
      %v2242 = vsel %vm291, %v929, %v1259
      %v2243 = vsel %vm291, %v930, %v1261
      %v2244 = vsel %vm291, %v931, %v1263
      %v2245 = vsel %vm291, %v932, %v1265
      %v2246 = vsel %vm291, %v933, %v1267
      %v2247 = vsel %vm291, %v934, %v1269
      %v2248 = vsel %vm291, %v935, %v1271
      %v2249 = vsel %vm291, %v936, %v1273
      %v2250 = vsel %vm291, %v937, %v1275
      %v2251 = vsel %vm291, %v938, %v1277
      %v2252 = vsel %vm291, %v939, %v1279
      %v2253 = vsel %vm291, %v940, %v1281
      %v2254 = vsel %vm291, %v941, %v1283
      %v2255 = vsel %vm291, %v942, %v1285
      %v2256 = vsel %vm291, %v943, %v1287
      %v2257 = vsel %vm291, %v944, %v1289
      %v2258 = vsel %vm291, %v945, %v1291
      %v2259 = vsel %vm291, %v946, %v1293
      %v2260 = vsel %vm291, %v947, %v1295
      %v2261 = vsel %vm291, %v948, %v1297
      %v2262 = vsel %vm291, %v949, %v1299
      %v2263 = vsel %vm291, %v950, %v1301
      %v2264 = vsel %vm291, %v951, %v1303
      %v2265 = vsel %vm291, %v952, %v1305
      %v2266 = vsel %vm478, %v2234, %v1371
      %v2267 = vsel %vm478, %v2235, %v1373
      %v2268 = vsel %vm478, %v2236, %v1375
      %v2269 = vsel %vm478, %v2237, %v1377
      %v2270 = vsel %vm478, %v2238, %v1379
      %v2271 = vsel %vm478, %v2239, %v1381
      %v2272 = vsel %vm478, %v2240, %v1383
      %v2273 = vsel %vm478, %v2241, %v1385
      %v2274 = vsel %vm478, %v2242, %v1387
      %v2275 = vsel %vm478, %v2243, %v1389
      %v2276 = vsel %vm478, %v2244, %v1391
      %v2277 = vsel %vm478, %v2245, %v1393
      %v2278 = vsel %vm478, %v2246, %v1395
      %v2279 = vsel %vm478, %v2247, %v1397
      %v2280 = vsel %vm478, %v2248, %v1399
      %v2281 = vsel %vm478, %v2249, %v1401
      %v2282 = vsel %vm478, %v2250, %v1403
      %v2283 = vsel %vm478, %v2251, %v1405
      %v2284 = vsel %vm478, %v2252, %v1407
      %v2285 = vsel %vm478, %v2253, %v1409
      %v2286 = vsel %vm478, %v2254, %v1411
      %v2287 = vsel %vm478, %v2255, %v1413
      %v2288 = vsel %vm478, %v2256, %v1415
      %v2289 = vsel %vm478, %v2257, %v1417
      %v2290 = vsel %vm478, %v2258, %v1419
      %v2291 = vsel %vm478, %v2259, %v1421
      %v2292 = vsel %vm478, %v2260, %v1423
      %v2293 = vsel %vm478, %v2261, %v1425
      %v2294 = vsel %vm478, %v2262, %v1427
      %v2295 = vsel %vm478, %v2263, %v1429
      %v2296 = vsel %vm478, %v2264, %v1431
      %v2297 = vsel %vm478, %v2265, %v1433
      %v2298 = vsel %vm337, %v2266, %v1499
      %v2299 = vsel %vm337, %v2267, %v1501
      %v2300 = vsel %vm337, %v2268, %v1503
      %v2301 = vsel %vm337, %v2269, %v1505
      %v2302 = vsel %vm337, %v2270, %v1507
      %v2303 = vsel %vm337, %v2271, %v1509
      %v2304 = vsel %vm337, %v2272, %v1511
      %v2305 = vsel %vm337, %v2273, %v1513
      %v2306 = vsel %vm337, %v2274, %v1515
      %v2307 = vsel %vm337, %v2275, %v1517
      %v2308 = vsel %vm337, %v2276, %v1519
      %v2309 = vsel %vm337, %v2277, %v1521
      %v2310 = vsel %vm337, %v2278, %v1523
      %v2311 = vsel %vm337, %v2279, %v1525
      %v2312 = vsel %vm337, %v2280, %v1527
      %v2313 = vsel %vm337, %v2281, %v1529
      %v2314 = vsel %vm337, %v2282, %v1531
      %v2315 = vsel %vm337, %v2283, %v1533
      %v2316 = vsel %vm337, %v2284, %v1535
      %v2317 = vsel %vm337, %v2285, %v1537
      %v2318 = vsel %vm337, %v2286, %v1539
      %v2319 = vsel %vm337, %v2287, %v1541
      %v2320 = vsel %vm337, %v2288, %v1543
      %v2321 = vsel %vm337, %v2289, %v1545
      %v2322 = vsel %vm337, %v2290, %v1547
      %v2323 = vsel %vm337, %v2291, %v1549
      %v2324 = vsel %vm337, %v2292, %v1551
      %v2325 = vsel %vm337, %v2293, %v1553
      %v2326 = vsel %vm337, %v2294, %v1555
      %v2327 = vsel %vm337, %v2295, %v1557
      %v2328 = vsel %vm337, %v2296, %v1559
      %v2329 = vsel %vm337, %v2297, %v1561
      %vm2330 = vcmask 64512
      %v2331 = vsel %vm2330, %v2298, %v1627
      %v2332 = vsel %vm2330, %v2299, %v1629
      %v2333 = vsel %vm2330, %v2300, %v1631
      %v2334 = vsel %vm2330, %v2301, %v1633
      %v2335 = vsel %vm2330, %v2302, %v1635
      %v2336 = vsel %vm2330, %v2303, %v1637
      %v2337 = vsel %vm2330, %v2304, %v1639
      %v2338 = vsel %vm2330, %v2305, %v1641
      %v2339 = vsel %vm2330, %v2306, %v1643
      %v2340 = vsel %vm2330, %v2307, %v1645
      %v2341 = vsel %vm2330, %v2308, %v1647
      %v2342 = vsel %vm2330, %v2309, %v1649
      %v2343 = vsel %vm2330, %v2310, %v1651
      %v2344 = vsel %vm2330, %v2311, %v1653
      %v2345 = vsel %vm2330, %v2312, %v1655
      %v2346 = vsel %vm2330, %v2313, %v1657
      %v2347 = vsel %vm2330, %v2314, %v1659
      %v2348 = vsel %vm2330, %v2315, %v1661
      %v2349 = vsel %vm2330, %v2316, %v1663
      %v2350 = vsel %vm2330, %v2317, %v1665
      %v2351 = vsel %vm2330, %v2318, %v1667
      %v2352 = vsel %vm2330, %v2319, %v1669
      %v2353 = vsel %vm2330, %v2320, %v1671
      %v2354 = vsel %vm2330, %v2321, %v1673
      %v2355 = vsel %vm2330, %v2322, %v1675
      %v2356 = vsel %vm2330, %v2323, %v1677
      %v2357 = vsel %vm2330, %v2324, %v1679
      %v2358 = vsel %vm2330, %v2325, %v1681
      %v2359 = vsel %vm2330, %v2326, %v1683
      %v2360 = vsel %vm2330, %v2327, %v1685
      %v2361 = vsel %vm2330, %v2328, %v1687
      %v2362 = vsel %vm2330, %v2329, %v1689
      %vm2363 = vcmask 80896
      %v2364 = vsel %vm2363, %v2331, %v1755
      %v2365 = vsel %vm2363, %v2332, %v1757
      %v2366 = vsel %vm2363, %v2333, %v1759
      %v2367 = vsel %vm2363, %v2334, %v1761
      %v2368 = vsel %vm2363, %v2335, %v1763
      %v2369 = vsel %vm2363, %v2336, %v1765
      %v2370 = vsel %vm2363, %v2337, %v1767
      %v2371 = vsel %vm2363, %v2338, %v1769
      %v2372 = vsel %vm2363, %v2339, %v1771
      %v2373 = vsel %vm2363, %v2340, %v1773
      %v2374 = vsel %vm2363, %v2341, %v1775
      %v2375 = vsel %vm2363, %v2342, %v1777
      %v2376 = vsel %vm2363, %v2343, %v1779
      %v2377 = vsel %vm2363, %v2344, %v1781
      %v2378 = vsel %vm2363, %v2345, %v1783
      %v2379 = vsel %vm2363, %v2346, %v1785
      %v2380 = vsel %vm2363, %v2347, %v1787
      %v2381 = vsel %vm2363, %v2348, %v1789
      %v2382 = vsel %vm2363, %v2349, %v1791
      %v2383 = vsel %vm2363, %v2350, %v1793
      %v2384 = vsel %vm2363, %v2351, %v1795
      %v2385 = vsel %vm2363, %v2352, %v1797
      %v2386 = vsel %vm2363, %v2353, %v1799
      %v2387 = vsel %vm2363, %v2354, %v1801
      %v2388 = vsel %vm2363, %v2355, %v1803
      %v2389 = vsel %vm2363, %v2356, %v1805
      %v2390 = vsel %vm2363, %v2357, %v1807
      %v2391 = vsel %vm2363, %v2358, %v1809
      %v2392 = vsel %vm2363, %v2359, %v1811
      %v2393 = vsel %vm2363, %v2360, %v1813
      %v2394 = vsel %vm2363, %v2361, %v1815
      %v2395 = vsel %vm2363, %v2362, %v1817
      %v2396 = vsel %vm383, %v2364, %v1883
      %v2397 = vsel %vm383, %v2365, %v1885
      %v2398 = vsel %vm383, %v2366, %v1887
      %v2399 = vsel %vm383, %v2367, %v1889
      %v2400 = vsel %vm383, %v2368, %v1891
      %v2401 = vsel %vm383, %v2369, %v1893
      %v2402 = vsel %vm383, %v2370, %v1895
      %v2403 = vsel %vm383, %v2371, %v1897
      %v2404 = vsel %vm383, %v2372, %v1899
      %v2405 = vsel %vm383, %v2373, %v1901
      %v2406 = vsel %vm383, %v2374, %v1903
      %v2407 = vsel %vm383, %v2375, %v1905
      %v2408 = vsel %vm383, %v2376, %v1907
      %v2409 = vsel %vm383, %v2377, %v1909
      %v2410 = vsel %vm383, %v2378, %v1911
      %v2411 = vsel %vm383, %v2379, %v1913
      %v2412 = vsel %vm383, %v2380, %v1915
      %v2413 = vsel %vm383, %v2381, %v1917
      %v2414 = vsel %vm383, %v2382, %v1919
      %v2415 = vsel %vm383, %v2383, %v1921
      %v2416 = vsel %vm383, %v2384, %v1923
      %v2417 = vsel %vm383, %v2385, %v1925
      %v2418 = vsel %vm383, %v2386, %v1927
      %v2419 = vsel %vm383, %v2387, %v1929
      %v2420 = vsel %vm383, %v2388, %v1931
      %v2421 = vsel %vm383, %v2389, %v1933
      %v2422 = vsel %vm383, %v2390, %v1935
      %v2423 = vsel %vm383, %v2391, %v1937
      %v2424 = vsel %vm383, %v2392, %v1939
      %v2425 = vsel %vm383, %v2393, %v1941
      %v2426 = vsel %vm383, %v2394, %v1943
      %v2427 = vsel %vm383, %v2395, %v1945
      %vm2428 = vcmask 113664
      %v2429 = vsel %vm2428, %v2396, %v2011
      %v2430 = vsel %vm2428, %v2397, %v2013
      %v2431 = vsel %vm2428, %v2398, %v2015
      %v2432 = vsel %vm2428, %v2399, %v2017
      %v2433 = vsel %vm2428, %v2400, %v2019
      %v2434 = vsel %vm2428, %v2401, %v2021
      %v2435 = vsel %vm2428, %v2402, %v2023
      %v2436 = vsel %vm2428, %v2403, %v2025
      %v2437 = vsel %vm2428, %v2404, %v2027
      %v2438 = vsel %vm2428, %v2405, %v2029
      %v2439 = vsel %vm2428, %v2406, %v2031
      %v2440 = vsel %vm2428, %v2407, %v2033
      %v2441 = vsel %vm2428, %v2408, %v2035
      %v2442 = vsel %vm2428, %v2409, %v2037
      %v2443 = vsel %vm2428, %v2410, %v2039
      %v2444 = vsel %vm2428, %v2411, %v2041
      %v2445 = vsel %vm2428, %v2412, %v2043
      %v2446 = vsel %vm2428, %v2413, %v2045
      %v2447 = vsel %vm2428, %v2414, %v2047
      %v2448 = vsel %vm2428, %v2415, %v2049
      %v2449 = vsel %vm2428, %v2416, %v2051
      %v2450 = vsel %vm2428, %v2417, %v2053
      %v2451 = vsel %vm2428, %v2418, %v2055
      %v2452 = vsel %vm2428, %v2419, %v2057
      %v2453 = vsel %vm2428, %v2420, %v2059
      %v2454 = vsel %vm2428, %v2421, %v2061
      %v2455 = vsel %vm2428, %v2422, %v2063
      %v2456 = vsel %vm2428, %v2423, %v2065
      %v2457 = vsel %vm2428, %v2424, %v2067
      %v2458 = vsel %vm2428, %v2425, %v2069
      %v2459 = vsel %vm2428, %v2426, %v2071
      %v2460 = vsel %vm2428, %v2427, %v2073
      %vm2461 = vcmask 130048
      %v2462 = vsel %vm2461, %v2429, %v2139
      %v2463 = vsel %vm2461, %v2430, %v2141
      %v2464 = vsel %vm2461, %v2431, %v2143
      %v2465 = vsel %vm2461, %v2432, %v2145
      %v2466 = vsel %vm2461, %v2433, %v2147
      %v2467 = vsel %vm2461, %v2434, %v2149
      %v2468 = vsel %vm2461, %v2435, %v2151
      %v2469 = vsel %vm2461, %v2436, %v2153
      %v2470 = vsel %vm2461, %v2437, %v2155
      %v2471 = vsel %vm2461, %v2438, %v2157
      %v2472 = vsel %vm2461, %v2439, %v2159
      %v2473 = vsel %vm2461, %v2440, %v2161
      %v2474 = vsel %vm2461, %v2441, %v2163
      %v2475 = vsel %vm2461, %v2442, %v2165
      %v2476 = vsel %vm2461, %v2443, %v2167
      %v2477 = vsel %vm2461, %v2444, %v2169
      %v2478 = vsel %vm2461, %v2445, %v2171
      %v2479 = vsel %vm2461, %v2446, %v2173
      %v2480 = vsel %vm2461, %v2447, %v2175
      %v2481 = vsel %vm2461, %v2448, %v2177
      %v2482 = vsel %vm2461, %v2449, %v2179
      %v2483 = vsel %vm2461, %v2450, %v2181
      %v2484 = vsel %vm2461, %v2451, %v2183
      %v2485 = vsel %vm2461, %v2452, %v2185
      %v2486 = vsel %vm2461, %v2453, %v2187
      %v2487 = vsel %vm2461, %v2454, %v2189
      %v2488 = vsel %vm2461, %v2455, %v2191
      %v2489 = vsel %vm2461, %v2456, %v2193
      %v2490 = vsel %vm2461, %v2457, %v2195
      %v2491 = vsel %vm2461, %v2458, %v2197
      %v2492 = vsel %vm2461, %v2459, %v2199
      %v2493 = vsel %vm2461, %v2460, %v2201
      %v2494 = vpack.c.bf16 %v2463, %v2462
      %v2495 = vpack.c.bf16 %v2465, %v2464
      %v2496 = vpack.c.bf16 %v2467, %v2466
      %v2497 = vpack.c.bf16 %v2469, %v2468
      %v2498 = vpack.c.bf16 %v2471, %v2470
      %v2499 = vpack.c.bf16 %v2473, %v2472
      %v2500 = vpack.c.bf16 %v2475, %v2474
      %v2501 = vpack.c.bf16 %v2477, %v2476
      %v2502 = vpack.c.bf16 %v2479, %v2478
      %v2503 = vpack.c.bf16 %v2481, %v2480
      %v2504 = vpack.c.bf16 %v2483, %v2482
      %v2505 = vpack.c.bf16 %v2485, %v2484
      %v2506 = vpack.c.bf16 %v2487, %v2486
      %v2507 = vpack.c.bf16 %v2489, %v2488
      %v2508 = vpack.c.bf16 %v2491, %v2490
      %v2509 = vpack.c.bf16 %v2493, %v2492
      %v2513 = vunpack.c.l.b16 %v918
      %v2514 = vunpack.c.l.b16 %v919
      %v2515 = vunpack.c.l.b16 %v920
      %v2516 = vpack.c.b16 %v2514, %v2513
      %v2517 = vpack.c.b16 %v2515, %v2515
      %vm2519 = vcmask 146432
      %v2521 = vsel %vm2519, %v2494, 0
      %v2524 = vsel %vm2519, %v2495, 0
      %v2527 = vsel %vm2519, %v2496, 0
      %v2530 = vsel %vm2519, %v2497, 0
      %v2533 = vsel %vm2519, %v2498, 0
      %v2536 = vsel %vm2519, %v2499, 0
      %v2539 = vsel %vm2519, %v2500, 0
      %v2542 = vsel %vm2519, %v2501, 0
      %v2545 = vsel %vm2519, %v2502, 0
      %v2548 = vsel %vm2519, %v2503, 0
      %v2551 = vsel %vm2519, %v2504, 0
      %v2554 = vsel %vm2519, %v2505, 0
      %v2557 = vsel %vm2519, %v2506, 0
      %v2560 = vsel %vm2519, %v2507, 0
      %v2563 = vsel %vm2519, %v2508, 0
      %v2566 = vsel %vm2519, %v2509, 0
      %vm2568 = vcmask 1040384
      %v2570 = vsel %vm2568, %v2517, 0
      %2572 = vmatprep.subr.bf16.mxu0 0
      %2573 = vmatpush1.bf16.msra.mxu0 %v2516
      %2574 = vmatprep.subr.bf16.mxu0 0
      %2575 = vmatpush1.bf16.msra.mxu0 %v2570
      %2576 = vmatprep.subr.bf16.mxu0 0
      %2577 = vmatpush1.bf16.msra.mxu0 0
      %2578 = vmatprep.subr.bf16.mxu0 0
      %2579 = vmatpush1.bf16.msra.mxu0 0
      %2580 = vmatprep.subr.bf16.mxu0 0
      %2581 = vmatpush1.bf16.msra.mxu0 0
      %2582 = vmatprep.subr.bf16.mxu0 0
      %2583 = vmatpush1.bf16.msra.mxu0 0
      %2584 = vmatprep.subr.bf16.mxu0 0
      %2585 = vmatpush1.bf16.msra.mxu0 0
      %2586 = vmatprep.subr.bf16.mxu0 0
      %2587 = vmatpush1.bf16.msra.mxu0 0
      %2588 = vmatprep.subr.bf16.mxu0 0
      %2589 = vmatpush1.bf16.msra.mxu0 0
      %2590 = vmatprep.subr.bf16.mxu0 0
      %2591 = vmatpush1.bf16.msra.mxu0 0
      %2592 = vmatprep.subr.bf16.mxu0 0
      %2593 = vmatpush1.bf16.msra.mxu0 0
      %2594 = vmatprep.subr.bf16.mxu0 0
      %2595 = vmatpush1.bf16.msra.mxu0 0
      %2596 = vmatprep.subr.bf16.mxu0 0
      %2597 = vmatpush1.bf16.msra.mxu0 0
      %2598 = vmatprep.subr.bf16.mxu0 0
      %2599 = vmatpush1.bf16.msra.mxu0 0
      %2600 = vmatprep.subr.bf16.mxu0 0
      %2601 = vmatpush1.bf16.msra.mxu0 0
      %2602 = vmatprep.subr.bf16.mxu0 0
      %2603 = vmatpush1.bf16.msra.mxu0 0
      %2604 = vmatprep.mubr.bf16.mxu0 0
      %2605 = vmatmul.mubr.bf16.gmra.mrb[0].mxu0 %v2521
      %v2606 = vpop.f32.mrb[0].mxu0
      %v2607 = vadd.f32 0.0, %v2606
      %v2608 = vpop.f32.mrb[0].mxu0
      %v2609 = vpop.f32.mrb[0].mxu0
      %v2610 = vadd.f32 0.0, %v2609
      %v2611 = vpop.f32.mrb[0].mxu0
      %2612 = vmatprep.mubr.bf16.mxu0 0
      %2613 = vmatmul.mubr.bf16.gmra.mrb[0].mxu0 %v2524
      %v2614 = vpop.f32.mrb[0].mxu0
      %v2615 = vadd.f32 0.0, %v2614
      %v2616 = vpop.f32.mrb[0].mxu0
      %v2617 = vpop.f32.mrb[0].mxu0
      %v2618 = vadd.f32 0.0, %v2617
      %v2619 = vpop.f32.mrb[0].mxu0
      %2620 = vmatprep.mubr.bf16.mxu0 0
      %2621 = vmatmul.mubr.bf16.gmra.mrb[0].mxu0 %v2527
      %v2622 = vpop.f32.mrb[0].mxu0
      %v2623 = vadd.f32 0.0, %v2622
      %v2624 = vpop.f32.mrb[0].mxu0
      %v2625 = vpop.f32.mrb[0].mxu0
      %v2626 = vadd.f32 0.0, %v2625
      %v2627 = vpop.f32.mrb[0].mxu0
      %2628 = vmatprep.mubr.bf16.mxu0 0
      %2629 = vmatmul.mubr.bf16.gmra.mrb[0].mxu0 %v2530
      %v2630 = vpop.f32.mrb[0].mxu0
      %v2631 = vadd.f32 0.0, %v2630
      %v2632 = vpop.f32.mrb[0].mxu0
      %v2633 = vpop.f32.mrb[0].mxu0
      %v2634 = vadd.f32 0.0, %v2633
      %v2635 = vpop.f32.mrb[0].mxu0
      %2636 = vmatprep.mubr.bf16.mxu0 0
      %2637 = vmatmul.mubr.bf16.gmra.mrb[0].mxu0 %v2533
      %v2638 = vpop.f32.mrb[0].mxu0
      %v2639 = vadd.f32 0.0, %v2638
      %v2640 = vpop.f32.mrb[0].mxu0
      %v2641 = vpop.f32.mrb[0].mxu0
      %v2642 = vadd.f32 0.0, %v2641
      %v2643 = vpop.f32.mrb[0].mxu0
      %2644 = vmatprep.mubr.bf16.mxu0 0
      %2645 = vmatmul.mubr.bf16.gmra.mrb[0].mxu0 %v2536
      %v2646 = vpop.f32.mrb[0].mxu0
      %v2647 = vadd.f32 0.0, %v2646
      %v2648 = vpop.f32.mrb[0].mxu0
      %v2649 = vpop.f32.mrb[0].mxu0
      %v2650 = vadd.f32 0.0, %v2649
      %v2651 = vpop.f32.mrb[0].mxu0
      %2652 = vmatprep.mubr.bf16.mxu0 0
      %2653 = vmatmul.mubr.bf16.gmra.mrb[0].mxu0 %v2539
      %v2654 = vpop.f32.mrb[0].mxu0
      %v2655 = vadd.f32 0.0, %v2654
      %v2656 = vpop.f32.mrb[0].mxu0
      %v2657 = vpop.f32.mrb[0].mxu0
      %v2658 = vadd.f32 0.0, %v2657
      %v2659 = vpop.f32.mrb[0].mxu0
      %2660 = vmatprep.mubr.bf16.mxu0 0
      %2661 = vmatmul.mubr.bf16.gmra.mrb[0].mxu0 %v2542
      %v2662 = vpop.f32.mrb[0].mxu0
      %v2663 = vadd.f32 0.0, %v2662
      %v2664 = vpop.f32.mrb[0].mxu0
      %v2665 = vpop.f32.mrb[0].mxu0
      %v2666 = vadd.f32 0.0, %v2665
      %v2667 = vpop.f32.mrb[0].mxu0
      %2668 = vmatprep.mubr.bf16.mxu0 0
      %2669 = vmatmul.mubr.bf16.gmra.mrb[0].mxu0 %v2545
      %v2670 = vpop.f32.mrb[0].mxu0
      %v2671 = vadd.f32 0.0, %v2670
      %v2672 = vpop.f32.mrb[0].mxu0
      %v2673 = vpop.f32.mrb[0].mxu0
      %v2674 = vadd.f32 0.0, %v2673
      %v2675 = vpop.f32.mrb[0].mxu0
      %2676 = vmatprep.mubr.bf16.mxu0 0
      %2677 = vmatmul.mubr.bf16.gmra.mrb[0].mxu0 %v2548
      %v2678 = vpop.f32.mrb[0].mxu0
      %v2679 = vadd.f32 0.0, %v2678
      %v2680 = vpop.f32.mrb[0].mxu0
      %v2681 = vpop.f32.mrb[0].mxu0
      %v2682 = vadd.f32 0.0, %v2681
      %v2683 = vpop.f32.mrb[0].mxu0
      %2684 = vmatprep.mubr.bf16.mxu0 0
      %2685 = vmatmul.mubr.bf16.gmra.mrb[0].mxu0 %v2551
      %v2686 = vpop.f32.mrb[0].mxu0
      %v2687 = vadd.f32 0.0, %v2686
      %v2688 = vpop.f32.mrb[0].mxu0
      %v2689 = vpop.f32.mrb[0].mxu0
      %v2690 = vadd.f32 0.0, %v2689
      %v2691 = vpop.f32.mrb[0].mxu0
      %2692 = vmatprep.mubr.bf16.mxu0 0
      %2693 = vmatmul.mubr.bf16.gmra.mrb[0].mxu0 %v2554
      %v2694 = vpop.f32.mrb[0].mxu0
      %v2695 = vadd.f32 0.0, %v2694
      %v2696 = vpop.f32.mrb[0].mxu0
      %v2697 = vpop.f32.mrb[0].mxu0
      %v2698 = vadd.f32 0.0, %v2697
      %v2699 = vpop.f32.mrb[0].mxu0
      %2700 = vmatprep.mubr.bf16.mxu0 0
      %2701 = vmatmul.mubr.bf16.gmra.mrb[0].mxu0 %v2557
      %v2702 = vpop.f32.mrb[0].mxu0
      %v2703 = vadd.f32 0.0, %v2702
      %v2704 = vpop.f32.mrb[0].mxu0
      %v2705 = vpop.f32.mrb[0].mxu0
      %v2706 = vadd.f32 0.0, %v2705
      %v2707 = vpop.f32.mrb[0].mxu0
      %2708 = vmatprep.mubr.bf16.mxu0 0
      %2709 = vmatmul.mubr.bf16.gmra.mrb[0].mxu0 %v2560
      %v2710 = vpop.f32.mrb[0].mxu0
      %v2711 = vadd.f32 0.0, %v2710
      %v2712 = vpop.f32.mrb[0].mxu0
      %v2713 = vpop.f32.mrb[0].mxu0
      %v2714 = vadd.f32 0.0, %v2713
      %v2715 = vpop.f32.mrb[0].mxu0
      %2716 = vmatprep.mubr.bf16.mxu0 0
      %2717 = vmatmul.mubr.bf16.gmra.mrb[0].mxu0 %v2563
      %v2718 = vpop.f32.mrb[0].mxu0
      %v2719 = vadd.f32 0.0, %v2718
      %v2720 = vpop.f32.mrb[0].mxu0
      %v2721 = vpop.f32.mrb[0].mxu0
      %v2722 = vadd.f32 0.0, %v2721
      %v2723 = vpop.f32.mrb[0].mxu0
      %2724 = vmatprep.mubr.bf16.mxu0 0
      %2725 = vmatmul.mubr.bf16.gmra.mrb[0].mxu0 %v2566
      %v2726 = vpop.f32.mrb[0].mxu0
      %v2727 = vadd.f32 0.0, %v2726
      %v2728 = vpop.f32.mrb[0].mxu0
      %v2729 = vpop.f32.mrb[0].mxu0
      %v2730 = vadd.f32 0.0, %v2729
      %v2731 = vpop.f32.mrb[0].mxu0
      %2732 = vdwg.mxu0
      %2765 = vrot.lane.b32.xlu0 %v2607, 2
      %v2766 = vpop.permute.xlu0 %2765
      %2767 = vrot.lane.b32.xlu0 %v2610, 2
      %v2768 = vpop.permute.xlu0 %2767
      %2769 = vrot.lane.b32.xlu0 %v2615, 2
      %v2770 = vpop.permute.xlu0 %2769
      %2771 = vrot.lane.b32.xlu0 %v2618, 2
      %v2772 = vpop.permute.xlu0 %2771
      %2773 = vrot.lane.b32.xlu0 %v2623, 2
      %v2774 = vpop.permute.xlu0 %2773
      %2775 = vrot.lane.b32.xlu0 %v2626, 2
      %v2776 = vpop.permute.xlu0 %2775
      %2777 = vrot.lane.b32.xlu0 %v2631, 2
      %v2778 = vpop.permute.xlu0 %2777
      %2779 = vrot.lane.b32.xlu0 %v2634, 2
      %v2780 = vpop.permute.xlu0 %2779
      %2781 = vrot.lane.b32.xlu0 %v2639, 2
      %v2782 = vpop.permute.xlu0 %2781
      %2783 = vrot.lane.b32.xlu0 %v2642, 2
      %v2784 = vpop.permute.xlu0 %2783
      %2785 = vrot.lane.b32.xlu0 %v2647, 2
      %v2786 = vpop.permute.xlu0 %2785
      %2787 = vrot.lane.b32.xlu0 %v2650, 2
      %v2788 = vpop.permute.xlu0 %2787
      %2789 = vrot.lane.b32.xlu0 %v2655, 2
      %v2790 = vpop.permute.xlu0 %2789
      %2791 = vrot.lane.b32.xlu0 %v2658, 2
      %v2792 = vpop.permute.xlu0 %2791
      %2793 = vrot.lane.b32.xlu0 %v2663, 2
      %v2794 = vpop.permute.xlu0 %2793
      %2795 = vrot.lane.b32.xlu0 %v2666, 2
      %v2796 = vpop.permute.xlu0 %2795
      %2797 = vrot.lane.b32.xlu0 %v2671, 2
      %v2798 = vpop.permute.xlu0 %2797
      %2799 = vrot.lane.b32.xlu0 %v2674, 2
      %v2800 = vpop.permute.xlu0 %2799
      %2801 = vrot.lane.b32.xlu0 %v2679, 2
      %v2802 = vpop.permute.xlu0 %2801
      %2803 = vrot.lane.b32.xlu0 %v2682, 2
      %v2804 = vpop.permute.xlu0 %2803
      %2805 = vrot.lane.b32.xlu0 %v2687, 2
      %v2806 = vpop.permute.xlu0 %2805
      %2807 = vrot.lane.b32.xlu0 %v2690, 2
      %v2808 = vpop.permute.xlu0 %2807
      %2809 = vrot.lane.b32.xlu0 %v2695, 2
      %v2810 = vpop.permute.xlu0 %2809
      %2811 = vrot.lane.b32.xlu0 %v2698, 2
      %v2812 = vpop.permute.xlu0 %2811
      %2813 = vrot.lane.b32.xlu0 %v2703, 2
      %v2814 = vpop.permute.xlu0 %2813
      %2815 = vrot.lane.b32.xlu0 %v2706, 2
      %v2816 = vpop.permute.xlu0 %2815
      %2817 = vrot.lane.b32.xlu0 %v2711, 2
      %v2818 = vpop.permute.xlu0 %2817
      %2819 = vrot.lane.b32.xlu0 %v2714, 2
      %v2820 = vpop.permute.xlu0 %2819
      %2821 = vrot.lane.b32.xlu0 %v2719, 2
      %v2822 = vpop.permute.xlu0 %2821
      %2823 = vrot.lane.b32.xlu0 %v2722, 2
      %v2824 = vpop.permute.xlu0 %2823
      %2825 = vrot.lane.b32.xlu0 %v2727, 2
      %v2826 = vpop.permute.xlu0 %2825
      %2827 = vrot.lane.b32.xlu0 %v2730, 2
      %v2828 = vpop.permute.xlu0 %2827
      %vm2861 = vcmask 31760
      %2862 = vst.msk [vmem:[%s692 + $0x1] sm:$0xff] %vm2861, %v2766
      %2863 = vst.msk [vmem:[%s692 + $0x9] sm:$0xff] %vm2861, %v2768
      %2864 = vst.msk [vmem:[%s692 + $0x19] sm:$0xff] %vm2861, %v2770
      %2865 = vst.msk [vmem:[%s692 + $0x21] sm:$0xff] %vm2861, %v2772
      %2866 = vst.msk [vmem:[%s692 + $0x31] sm:$0xff] %vm2861, %v2774
      %2867 = vst.msk [vmem:[%s692 + $0x39] sm:$0xff] %vm2861, %v2776
      %2868 = vst.msk [vmem:[%s692 + $0x49] sm:$0xff] %vm2861, %v2778
      %2869 = vst.msk [vmem:[%s692 + $0x51] sm:$0xff] %vm2861, %v2780
      %2870 = vst.msk [vmem:[%s692 + $0x61] sm:$0xff] %vm2861, %v2782
      %2871 = vst.msk [vmem:[%s692 + $0x69] sm:$0xff] %vm2861, %v2784
      %2872 = vst.msk [vmem:[%s692 + $0x79] sm:$0xff] %vm2861, %v2786
      %2873 = vst.msk [vmem:[%s692 + $0x81] sm:$0xff] %vm2861, %v2788
      %2874 = vst.msk [vmem:[%s692 + $0x91] sm:$0xff] %vm2861, %v2790
      %2875 = vst.msk [vmem:[%s692 + $0x99] sm:$0xff] %vm2861, %v2792
      %2876 = vst.msk [vmem:[%s692 + $0xa9] sm:$0xff] %vm2861, %v2794
      %2877 = vst.msk [vmem:[%s692 + $0xb1] sm:$0xff] %vm2861, %v2796
      %2878 = vst.msk [vmem:[%s692 + $0xc1] sm:$0xff] %vm2861, %v2798
      %2879 = vst.msk [vmem:[%s692 + $0xc9] sm:$0xff] %vm2861, %v2800
      %2880 = vst.msk [vmem:[%s692 + $0xd9] sm:$0xff] %vm2861, %v2802
      %2881 = vst.msk [vmem:[%s692 + $0xe1] sm:$0xff] %vm2861, %v2804
      %2882 = vst.msk [vmem:[%s692 + $0xf1] sm:$0xff] %vm2861, %v2806
      %2883 = vst.msk [vmem:[%s692 + $0xf9] sm:$0xff] %vm2861, %v2808
      %2884 = vst.msk [vmem:[%s692 + $0x109] sm:$0xff] %vm2861, %v2810
      %2885 = vst.msk [vmem:[%s692 + $0x111] sm:$0xff] %vm2861, %v2812
      %2886 = vst.msk [vmem:[%s692 + $0x121] sm:$0xff] %vm2861, %v2814
      %2887 = vst.msk [vmem:[%s692 + $0x129] sm:$0xff] %vm2861, %v2816
      %2888 = vst.msk [vmem:[%s692 + $0x139] sm:$0xff] %vm2861, %v2818
      %2889 = vst.msk [vmem:[%s692 + $0x141] sm:$0xff] %vm2861, %v2820
      %2890 = vst.msk [vmem:[%s692 + $0x151] sm:$0xff] %vm2861, %v2822
      %2891 = vst.msk [vmem:[%s692 + $0x159] sm:$0xff] %vm2861, %v2824
      %2892 = vst.msk [vmem:[%s692 + $0x169] sm:$0xff] %vm2861, %v2826
      %2893 = vst.msk [vmem:[%s692 + $0x171] sm:$0xff] %vm2861, %v2828
      %2894 = vrot.lane.b32.xlu0 %v725, 124
      %v2895 = vpop.permute.xlu0 %2894
      %2896 = vrot.lane.b32.xlu0 %v726, 124
      %v2897 = vpop.permute.xlu0 %2896
      %2898 = vrot.lane.b32.xlu0 %v727, 124
      %v2899 = vpop.permute.xlu0 %2898
      %2900 = vrot.lane.b32.xlu0 %v728, 124
      %v2901 = vpop.permute.xlu0 %2900
      %2902 = vrot.lane.b32.xlu0 %v729, 124
      %v2903 = vpop.permute.xlu0 %2902
      %2904 = vrot.lane.b32.xlu0 %v730, 124
      %v2905 = vpop.permute.xlu0 %2904
      %2906 = vrot.lane.b32.xlu0 %v731, 124
      %v2907 = vpop.permute.xlu0 %2906
      %2908 = vrot.lane.b32.xlu0 %v732, 124
      %v2909 = vpop.permute.xlu0 %2908
      %2910 = vrot.lane.b32.xlu0 %v733, 124
      %v2911 = vpop.permute.xlu0 %2910
      %2912 = vrot.lane.b32.xlu0 %v734, 124
      %v2913 = vpop.permute.xlu0 %2912
      %2914 = vrot.lane.b32.xlu0 %v735, 124
      %v2915 = vpop.permute.xlu0 %2914
      %2916 = vrot.lane.b32.xlu0 %v736, 124
      %v2917 = vpop.permute.xlu0 %2916
      %2918 = vrot.lane.b32.xlu0 %v737, 124
      %v2919 = vpop.permute.xlu0 %2918
      %2920 = vrot.lane.b32.xlu0 %v738, 124
      %v2921 = vpop.permute.xlu0 %2920
      %2922 = vrot.lane.b32.xlu0 %v739, 124
      %v2923 = vpop.permute.xlu0 %2922
      %2924 = vrot.lane.b32.xlu0 %v740, 124
      %v2925 = vpop.permute.xlu0 %2924
      %2926 = vrot.lane.b32.xlu0 %v741, 124
      %v2927 = vpop.permute.xlu0 %2926
      %2928 = vrot.lane.b32.xlu0 %v742, 124
      %v2929 = vpop.permute.xlu0 %2928
      %2930 = vrot.lane.b32.xlu0 %v743, 124
      %v2931 = vpop.permute.xlu0 %2930
      %2932 = vrot.lane.b32.xlu0 %v744, 124
      %v2933 = vpop.permute.xlu0 %2932
      %2934 = vrot.lane.b32.xlu0 %v745, 124
      %v2935 = vpop.permute.xlu0 %2934
      %2936 = vrot.lane.b32.xlu0 %v746, 124
      %v2937 = vpop.permute.xlu0 %2936
      %2938 = vrot.lane.b32.xlu0 %v747, 124
      %v2939 = vpop.permute.xlu0 %2938
      %2940 = vrot.lane.b32.xlu0 %v748, 124
      %v2941 = vpop.permute.xlu0 %2940
      %2942 = vrot.lane.b32.xlu0 %v749, 124
      %v2943 = vpop.permute.xlu0 %2942
      %2944 = vrot.lane.b32.xlu0 %v750, 124
      %v2945 = vpop.permute.xlu0 %2944
      %2946 = vrot.lane.b32.xlu0 %v751, 124
      %v2947 = vpop.permute.xlu0 %2946
      %2948 = vrot.lane.b32.xlu0 %v752, 124
      %v2949 = vpop.permute.xlu0 %2948
      %2950 = vrot.lane.b32.xlu0 %v753, 124
      %v2951 = vpop.permute.xlu0 %2950
      %2952 = vrot.lane.b32.xlu0 %v754, 124
      %v2953 = vpop.permute.xlu0 %2952
      %2954 = vrot.lane.b32.xlu0 %v755, 124
      %v2955 = vpop.permute.xlu0 %2954
      %2956 = vrot.lane.b32.xlu0 %v756, 124
      %v2957 = vpop.permute.xlu0 %2956
      %2990 = vst.msk [vmem:[%s885 + $0x1] sm:$0xff] %vm291, %v2895
      %2991 = vst.msk [vmem:[%s885 + $0x9] sm:$0xff] %vm291, %v2897
      %2992 = vst.msk [vmem:[%s885 + $0x19] sm:$0xff] %vm291, %v2899
      %2993 = vst.msk [vmem:[%s885 + $0x21] sm:$0xff] %vm291, %v2901
      %2994 = vst.msk [vmem:[%s885 + $0x31] sm:$0xff] %vm291, %v2903
      %2995 = vst.msk [vmem:[%s885 + $0x39] sm:$0xff] %vm291, %v2905
      %2996 = vst.msk [vmem:[%s885 + $0x49] sm:$0xff] %vm291, %v2907
      %2997 = vst.msk [vmem:[%s885 + $0x51] sm:$0xff] %vm291, %v2909
      %2998 = vst.msk [vmem:[%s885 + $0x61] sm:$0xff] %vm291, %v2911
      %2999 = vst.msk [vmem:[%s885 + $0x69] sm:$0xff] %vm291, %v2913
      %3000 = vst.msk [vmem:[%s885 + $0x79] sm:$0xff] %vm291, %v2915
      %3001 = vst.msk [vmem:[%s885 + $0x81] sm:$0xff] %vm291, %v2917
      %3002 = vst.msk [vmem:[%s885 + $0x91] sm:$0xff] %vm291, %v2919
      %3003 = vst.msk [vmem:[%s885 + $0x99] sm:$0xff] %vm291, %v2921
      %3004 = vst.msk [vmem:[%s885 + $0xa9] sm:$0xff] %vm291, %v2923
      %3005 = vst.msk [vmem:[%s885 + $0xb1] sm:$0xff] %vm291, %v2925
      %3006 = vst.msk [vmem:[%s885 + $0xc1] sm:$0xff] %vm291, %v2927
      %3007 = vst.msk [vmem:[%s885 + $0xc9] sm:$0xff] %vm291, %v2929
      %3008 = vst.msk [vmem:[%s885 + $0xd9] sm:$0xff] %vm291, %v2931
      %3009 = vst.msk [vmem:[%s885 + $0xe1] sm:$0xff] %vm291, %v2933
      %3010 = vst.msk [vmem:[%s885 + $0xf1] sm:$0xff] %vm291, %v2935
      %3011 = vst.msk [vmem:[%s885 + $0xf9] sm:$0xff] %vm291, %v2937
      %3012 = vst.msk [vmem:[%s885 + $0x109] sm:$0xff] %vm291, %v2939
      %3013 = vst.msk [vmem:[%s885 + $0x111] sm:$0xff] %vm291, %v2941
      %3014 = vst.msk [vmem:[%s885 + $0x121] sm:$0xff] %vm291, %v2943
      %3015 = vst.msk [vmem:[%s885 + $0x129] sm:$0xff] %vm291, %v2945
      %3016 = vst.msk [vmem:[%s885 + $0x139] sm:$0xff] %vm291, %v2947
      %3017 = vst.msk [vmem:[%s885 + $0x141] sm:$0xff] %vm291, %v2949
      %3018 = vst.msk [vmem:[%s885 + $0x151] sm:$0xff] %vm291, %v2951
      %3019 = vst.msk [vmem:[%s885 + $0x159] sm:$0xff] %vm291, %v2953
      %3020 = vst.msk [vmem:[%s885 + $0x169] sm:$0xff] %vm291, %v2955
      %3021 = vst.msk [vmem:[%s885 + $0x171] sm:$0xff] %vm291, %v2957
      %v3022 = vld [vmem:[%s3] sm:$0xf]
      %v3023 = vld [vmem:[%s3 + $0x4] sm:$0xf]
      %v3024 = vld [vmem:[%s3 + $0x8] sm:$0x1]
      %v3025 = vld [vmem:[#allocation2] sm:$0xff]
      %v3026 = vld [vmem:[#allocation2 + $0x8] sm:$0xff]
      %v3027 = vld [vmem:[#allocation2 + $0x18] sm:$0xff]
      %v3028 = vld [vmem:[#allocation2 + $0x20] sm:$0xff]
      %v3029 = vld [vmem:[#allocation2 + $0x30] sm:$0xff]
      %v3030 = vld [vmem:[#allocation2 + $0x38] sm:$0xff]
      %v3031 = vld [vmem:[#allocation2 + $0x48] sm:$0xff]
      %v3032 = vld [vmem:[#allocation2 + $0x50] sm:$0xff]
      %v3033 = vld [vmem:[#allocation2 + $0x60] sm:$0xff]
      %v3034 = vld [vmem:[#allocation2 + $0x68] sm:$0xff]
      %v3035 = vld [vmem:[#allocation2 + $0x78] sm:$0xff]
      %v3036 = vld [vmem:[#allocation2 + $0x80] sm:$0xff]
      %v3037 = vld [vmem:[#allocation2 + $0x90] sm:$0xff]
      %v3038 = vld [vmem:[#allocation2 + $0x98] sm:$0xff]
      %v3039 = vld [vmem:[#allocation2 + $0xa8] sm:$0xff]
      %v3040 = vld [vmem:[#allocation2 + $0xb0] sm:$0xff]
      %v3041 = vld [vmem:[#allocation2 + $0xc0] sm:$0xff]
      %v3042 = vld [vmem:[#allocation2 + $0xc8] sm:$0xff]
      %v3043 = vld [vmem:[#allocation2 + $0xd8] sm:$0xff]
      %v3044 = vld [vmem:[#allocation2 + $0xe0] sm:$0xff]
      %v3045 = vld [vmem:[#allocation2 + $0xf0] sm:$0xff]
      %v3046 = vld [vmem:[#allocation2 + $0xf8] sm:$0xff]
      %v3047 = vld [vmem:[#allocation2 + $0x108] sm:$0xff]
      %v3048 = vld [vmem:[#allocation2 + $0x110] sm:$0xff]
      %v3049 = vld [vmem:[#allocation2 + $0x120] sm:$0xff]
      %v3050 = vld [vmem:[#allocation2 + $0x128] sm:$0xff]
      %v3051 = vld [vmem:[#allocation2 + $0x138] sm:$0xff]
      %v3052 = vld [vmem:[#allocation2 + $0x140] sm:$0xff]
      %v3053 = vld [vmem:[#allocation2 + $0x150] sm:$0xff]
      %v3054 = vld [vmem:[#allocation2 + $0x158] sm:$0xff]
      %v3055 = vld [vmem:[#allocation2 + $0x168] sm:$0xff]
      %v3056 = vld [vmem:[#allocation2 + $0x170] sm:$0xff]
      %v3057 = vld [vmem:[#allocation2 + $0x1] sm:$0xff]
      %v3058 = vld [vmem:[#allocation2 + $0x9] sm:$0xff]
      %v3059 = vld [vmem:[#allocation2 + $0x19] sm:$0xff]
      %v3060 = vld [vmem:[#allocation2 + $0x21] sm:$0xff]
      %v3061 = vld [vmem:[#allocation2 + $0x31] sm:$0xff]
      %v3062 = vld [vmem:[#allocation2 + $0x39] sm:$0xff]
      %v3063 = vld [vmem:[#allocation2 + $0x49] sm:$0xff]
      %v3064 = vld [vmem:[#allocation2 + $0x51] sm:$0xff]
      %v3065 = vld [vmem:[#allocation2 + $0x61] sm:$0xff]
      %v3066 = vld [vmem:[#allocation2 + $0x69] sm:$0xff]
      %v3067 = vld [vmem:[#allocation2 + $0x79] sm:$0xff]
      %v3068 = vld [vmem:[#allocation2 + $0x81] sm:$0xff]
      %v3069 = vld [vmem:[#allocation2 + $0x91] sm:$0xff]
      %v3070 = vld [vmem:[#allocation2 + $0x99] sm:$0xff]
      %v3071 = vld [vmem:[#allocation2 + $0xa9] sm:$0xff]
      %v3072 = vld [vmem:[#allocation2 + $0xb1] sm:$0xff]
      %v3073 = vld [vmem:[#allocation2 + $0xc1] sm:$0xff]
      %v3074 = vld [vmem:[#allocation2 + $0xc9] sm:$0xff]
      %v3075 = vld [vmem:[#allocation2 + $0xd9] sm:$0xff]
      %v3076 = vld [vmem:[#allocation2 + $0xe1] sm:$0xff]
      %v3077 = vld [vmem:[#allocation2 + $0xf1] sm:$0xff]
      %v3078 = vld [vmem:[#allocation2 + $0xf9] sm:$0xff]
      %v3079 = vld [vmem:[#allocation2 + $0x109] sm:$0xff]
      %v3080 = vld [vmem:[#allocation2 + $0x111] sm:$0xff]
      %v3081 = vld [vmem:[#allocation2 + $0x121] sm:$0xff]
      %v3082 = vld [vmem:[#allocation2 + $0x129] sm:$0xff]
      %v3083 = vld [vmem:[#allocation2 + $0x139] sm:$0xff]
      %v3084 = vld [vmem:[#allocation2 + $0x141] sm:$0xff]
      %v3085 = vld [vmem:[#allocation2 + $0x151] sm:$0xff]
      %v3086 = vld [vmem:[#allocation2 + $0x159] sm:$0xff]
      %v3087 = vld [vmem:[#allocation2 + $0x169] sm:$0xff]
      %v3088 = vld [vmem:[#allocation2 + $0x171] sm:$0xff]
      %v3089 = vld [vmem:[#allocation2 + $0x2] sm:$0xff]
      %v3090 = vld [vmem:[#allocation2 + $0xa] sm:$0xff]
      %v3091 = vld [vmem:[#allocation2 + $0x1a] sm:$0xff]
      %v3092 = vld [vmem:[#allocation2 + $0x22] sm:$0xff]
      %v3093 = vld [vmem:[#allocation2 + $0x32] sm:$0xff]
      %v3094 = vld [vmem:[#allocation2 + $0x3a] sm:$0xff]
      %v3095 = vld [vmem:[#allocation2 + $0x4a] sm:$0xff]
      %v3096 = vld [vmem:[#allocation2 + $0x52] sm:$0xff]
      %v3097 = vld [vmem:[#allocation2 + $0x62] sm:$0xff]
      %v3098 = vld [vmem:[#allocation2 + $0x6a] sm:$0xff]
      %v3099 = vld [vmem:[#allocation2 + $0x7a] sm:$0xff]
      %v3100 = vld [vmem:[#allocation2 + $0x82] sm:$0xff]
      %v3101 = vld [vmem:[#allocation2 + $0x92] sm:$0xff]
      %v3102 = vld [vmem:[#allocation2 + $0x9a] sm:$0xff]
      %v3103 = vld [vmem:[#allocation2 + $0xaa] sm:$0xff]
      %v3104 = vld [vmem:[#allocation2 + $0xb2] sm:$0xff]
      %v3105 = vld [vmem:[#allocation2 + $0xc2] sm:$0xff]
      %v3106 = vld [vmem:[#allocation2 + $0xca] sm:$0xff]
      %v3107 = vld [vmem:[#allocation2 + $0xda] sm:$0xff]
      %v3108 = vld [vmem:[#allocation2 + $0xe2] sm:$0xff]
      %v3109 = vld [vmem:[#allocation2 + $0xf2] sm:$0xff]
      %v3110 = vld [vmem:[#allocation2 + $0xfa] sm:$0xff]
      %v3111 = vld [vmem:[#allocation2 + $0x10a] sm:$0xff]
      %v3112 = vld [vmem:[#allocation2 + $0x112] sm:$0xff]
      %v3113 = vld [vmem:[#allocation2 + $0x122] sm:$0xff]
      %v3114 = vld [vmem:[#allocation2 + $0x12a] sm:$0xff]
      %v3115 = vld [vmem:[#allocation2 + $0x13a] sm:$0xff]
      %v3116 = vld [vmem:[#allocation2 + $0x142] sm:$0xff]
      %v3117 = vld [vmem:[#allocation2 + $0x152] sm:$0xff]
      %v3118 = vld [vmem:[#allocation2 + $0x15a] sm:$0xff]
      %v3119 = vld [vmem:[#allocation2 + $0x16a] sm:$0xff]
      %v3120 = vld [vmem:[#allocation2 + $0x172] sm:$0xff]
      %v3121 = vld [vmem:[%s885] sm:$0xff]
      %v3122 = vld [vmem:[%s885 + $0x8] sm:$0xff]
      %v3123 = vld [vmem:[%s885 + $0x18] sm:$0xff]
      %v3124 = vld [vmem:[%s885 + $0x20] sm:$0xff]
      %v3125 = vld [vmem:[%s885 + $0x30] sm:$0xff]
      %v3126 = vld [vmem:[%s885 + $0x38] sm:$0xff]
      %v3127 = vld [vmem:[%s885 + $0x48] sm:$0xff]
      %v3128 = vld [vmem:[%s885 + $0x50] sm:$0xff]
      %v3129 = vld [vmem:[%s885 + $0x60] sm:$0xff]
      %v3130 = vld [vmem:[%s885 + $0x68] sm:$0xff]
      %v3131 = vld [vmem:[%s885 + $0x78] sm:$0xff]
      %v3132 = vld [vmem:[%s885 + $0x80] sm:$0xff]
      %v3133 = vld [vmem:[%s885 + $0x90] sm:$0xff]
      %v3134 = vld [vmem:[%s885 + $0x98] sm:$0xff]
      %v3135 = vld [vmem:[%s885 + $0xa8] sm:$0xff]
      %v3136 = vld [vmem:[%s885 + $0xb0] sm:$0xff]
      %v3137 = vld [vmem:[%s885 + $0xc0] sm:$0xff]
      %v3138 = vld [vmem:[%s885 + $0xc8] sm:$0xff]
      %v3139 = vld [vmem:[%s885 + $0xd8] sm:$0xff]
      %v3140 = vld [vmem:[%s885 + $0xe0] sm:$0xff]
      %v3141 = vld [vmem:[%s885 + $0xf0] sm:$0xff]
      %v3142 = vld [vmem:[%s885 + $0xf8] sm:$0xff]
      %v3143 = vld [vmem:[%s885 + $0x108] sm:$0xff]
      %v3144 = vld [vmem:[%s885 + $0x110] sm:$0xff]
      %v3145 = vld [vmem:[%s885 + $0x120] sm:$0xff]
      %v3146 = vld [vmem:[%s885 + $0x128] sm:$0xff]
      %v3147 = vld [vmem:[%s885 + $0x138] sm:$0xff]
      %v3148 = vld [vmem:[%s885 + $0x140] sm:$0xff]
      %v3149 = vld [vmem:[%s885 + $0x150] sm:$0xff]
      %v3150 = vld [vmem:[%s885 + $0x158] sm:$0xff]
      %v3151 = vld [vmem:[%s885 + $0x168] sm:$0xff]
      %v3152 = vld [vmem:[%s885 + $0x170] sm:$0xff]
      %v3153 = vld [vmem:[%s885 + $0x1] sm:$0xff]
      %v3154 = vld [vmem:[%s885 + $0x9] sm:$0xff]
      %v3155 = vld [vmem:[%s885 + $0x19] sm:$0xff]
      %v3156 = vld [vmem:[%s885 + $0x21] sm:$0xff]
      %v3157 = vld [vmem:[%s885 + $0x31] sm:$0xff]
      %v3158 = vld [vmem:[%s885 + $0x39] sm:$0xff]
      %v3159 = vld [vmem:[%s885 + $0x49] sm:$0xff]
      %v3160 = vld [vmem:[%s885 + $0x51] sm:$0xff]
      %v3161 = vld [vmem:[%s885 + $0x61] sm:$0xff]
      %v3162 = vld [vmem:[%s885 + $0x69] sm:$0xff]
      %v3163 = vld [vmem:[%s885 + $0x79] sm:$0xff]
      %v3164 = vld [vmem:[%s885 + $0x81] sm:$0xff]
      %v3165 = vld [vmem:[%s885 + $0x91] sm:$0xff]
      %v3166 = vld [vmem:[%s885 + $0x99] sm:$0xff]
      %v3167 = vld [vmem:[%s885 + $0xa9] sm:$0xff]
      %v3168 = vld [vmem:[%s885 + $0xb1] sm:$0xff]
      %v3169 = vld [vmem:[%s885 + $0xc1] sm:$0xff]
      %v3170 = vld [vmem:[%s885 + $0xc9] sm:$0xff]
      %v3171 = vld [vmem:[%s885 + $0xd9] sm:$0xff]
      %v3172 = vld [vmem:[%s885 + $0xe1] sm:$0xff]
      %v3173 = vld [vmem:[%s885 + $0xf1] sm:$0xff]
      %v3174 = vld [vmem:[%s885 + $0xf9] sm:$0xff]
      %v3175 = vld [vmem:[%s885 + $0x109] sm:$0xff]
      %v3176 = vld [vmem:[%s885 + $0x111] sm:$0xff]
      %v3177 = vld [vmem:[%s885 + $0x121] sm:$0xff]
      %v3178 = vld [vmem:[%s885 + $0x129] sm:$0xff]
      %v3179 = vld [vmem:[%s885 + $0x139] sm:$0xff]
      %v3180 = vld [vmem:[%s885 + $0x141] sm:$0xff]
      %v3181 = vld [vmem:[%s885 + $0x151] sm:$0xff]
      %v3182 = vld [vmem:[%s885 + $0x159] sm:$0xff]
      %v3183 = vld [vmem:[%s885 + $0x169] sm:$0xff]
      %v3184 = vld [vmem:[%s885 + $0x171] sm:$0xff]
      %v3185 = vld [vmem:[%s885 + $0x2] sm:$0xff]
      %v3186 = vld [vmem:[%s885 + $0xa] sm:$0xff]
      %v3187 = vld [vmem:[%s885 + $0x1a] sm:$0xff]
      %v3188 = vld [vmem:[%s885 + $0x22] sm:$0xff]
      %v3189 = vld [vmem:[%s885 + $0x32] sm:$0xff]
      %v3190 = vld [vmem:[%s885 + $0x3a] sm:$0xff]
      %v3191 = vld [vmem:[%s885 + $0x4a] sm:$0xff]
      %v3192 = vld [vmem:[%s885 + $0x52] sm:$0xff]
      %v3193 = vld [vmem:[%s885 + $0x62] sm:$0xff]
      %v3194 = vld [vmem:[%s885 + $0x6a] sm:$0xff]
      %v3195 = vld [vmem:[%s885 + $0x7a] sm:$0xff]
      %v3196 = vld [vmem:[%s885 + $0x82] sm:$0xff]
      %v3197 = vld [vmem:[%s885 + $0x92] sm:$0xff]
      %v3198 = vld [vmem:[%s885 + $0x9a] sm:$0xff]
      %v3199 = vld [vmem:[%s885 + $0xaa] sm:$0xff]
      %v3200 = vld [vmem:[%s885 + $0xb2] sm:$0xff]
      %v3201 = vld [vmem:[%s885 + $0xc2] sm:$0xff]
      %v3202 = vld [vmem:[%s885 + $0xca] sm:$0xff]
      %v3203 = vld [vmem:[%s885 + $0xda] sm:$0xff]
      %v3204 = vld [vmem:[%s885 + $0xe2] sm:$0xff]
      %v3205 = vld [vmem:[%s885 + $0xf2] sm:$0xff]
      %v3206 = vld [vmem:[%s885 + $0xfa] sm:$0xff]
      %v3207 = vld [vmem:[%s885 + $0x10a] sm:$0xff]
      %v3208 = vld [vmem:[%s885 + $0x112] sm:$0xff]
      %v3209 = vld [vmem:[%s885 + $0x122] sm:$0xff]
      %v3210 = vld [vmem:[%s885 + $0x12a] sm:$0xff]
      %v3211 = vld [vmem:[%s885 + $0x13a] sm:$0xff]
      %v3212 = vld [vmem:[%s885 + $0x142] sm:$0xff]
      %v3213 = vld [vmem:[%s885 + $0x152] sm:$0xff]
      %v3214 = vld [vmem:[%s885 + $0x15a] sm:$0xff]
      %v3215 = vld [vmem:[%s885 + $0x16a] sm:$0xff]
      %v3216 = vld [vmem:[%s885 + $0x172] sm:$0xff]
      %v3217 = vld [vmem:[%s1113] sm:$0xff]
      %v3218 = vld [vmem:[%s1113 + $0x8] sm:$0xff]
      %v3219 = vld [vmem:[%s1113 + $0x18] sm:$0xff]
      %v3220 = vld [vmem:[%s1113 + $0x20] sm:$0xff]
      %v3221 = vld [vmem:[%s1113 + $0x30] sm:$0xff]
      %v3222 = vld [vmem:[%s1113 + $0x38] sm:$0xff]
      %v3223 = vld [vmem:[%s1113 + $0x48] sm:$0xff]
      %v3224 = vld [vmem:[%s1113 + $0x50] sm:$0xff]
      %v3225 = vld [vmem:[%s1113 + $0x60] sm:$0xff]
      %v3226 = vld [vmem:[%s1113 + $0x68] sm:$0xff]
      %v3227 = vld [vmem:[%s1113 + $0x78] sm:$0xff]
      %v3228 = vld [vmem:[%s1113 + $0x80] sm:$0xff]
      %v3229 = vld [vmem:[%s1113 + $0x90] sm:$0xff]
      %v3230 = vld [vmem:[%s1113 + $0x98] sm:$0xff]
      %v3231 = vld [vmem:[%s1113 + $0xa8] sm:$0xff]
      %v3232 = vld [vmem:[%s1113 + $0xb0] sm:$0xff]
      %v3233 = vld [vmem:[%s1113 + $0xc0] sm:$0xff]
      %v3234 = vld [vmem:[%s1113 + $0xc8] sm:$0xff]
      %v3235 = vld [vmem:[%s1113 + $0xd8] sm:$0xff]
      %v3236 = vld [vmem:[%s1113 + $0xe0] sm:$0xff]
      %v3237 = vld [vmem:[%s1113 + $0xf0] sm:$0xff]
      %v3238 = vld [vmem:[%s1113 + $0xf8] sm:$0xff]
      %v3239 = vld [vmem:[%s1113 + $0x108] sm:$0xff]
      %v3240 = vld [vmem:[%s1113 + $0x110] sm:$0xff]
      %v3241 = vld [vmem:[%s1113 + $0x120] sm:$0xff]
      %v3242 = vld [vmem:[%s1113 + $0x128] sm:$0xff]
      %v3243 = vld [vmem:[%s1113 + $0x138] sm:$0xff]
      %v3244 = vld [vmem:[%s1113 + $0x140] sm:$0xff]
      %v3245 = vld [vmem:[%s1113 + $0x150] sm:$0xff]
      %v3246 = vld [vmem:[%s1113 + $0x158] sm:$0xff]
      %v3247 = vld [vmem:[%s1113 + $0x168] sm:$0xff]
      %v3248 = vld [vmem:[%s1113 + $0x170] sm:$0xff]
      %v3249 = vld [vmem:[%s1113 + $0x1] sm:$0xff]
      %v3250 = vld [vmem:[%s1113 + $0x9] sm:$0xff]
      %v3251 = vld [vmem:[%s1113 + $0x19] sm:$0xff]
      %v3252 = vld [vmem:[%s1113 + $0x21] sm:$0xff]
      %v3253 = vld [vmem:[%s1113 + $0x31] sm:$0xff]
      %v3254 = vld [vmem:[%s1113 + $0x39] sm:$0xff]
      %v3255 = vld [vmem:[%s1113 + $0x49] sm:$0xff]
      %v3256 = vld [vmem:[%s1113 + $0x51] sm:$0xff]
      %v3257 = vld [vmem:[%s1113 + $0x61] sm:$0xff]
      %v3258 = vld [vmem:[%s1113 + $0x69] sm:$0xff]
      %v3259 = vld [vmem:[%s1113 + $0x79] sm:$0xff]
      %v3260 = vld [vmem:[%s1113 + $0x81] sm:$0xff]
      %v3261 = vld [vmem:[%s1113 + $0x91] sm:$0xff]
      %v3262 = vld [vmem:[%s1113 + $0x99] sm:$0xff]
      %v3263 = vld [vmem:[%s1113 + $0xa9] sm:$0xff]
      %v3264 = vld [vmem:[%s1113 + $0xb1] sm:$0xff]
      %v3265 = vld [vmem:[%s1113 + $0xc1] sm:$0xff]
      %v3266 = vld [vmem:[%s1113 + $0xc9] sm:$0xff]
      %v3267 = vld [vmem:[%s1113 + $0xd9] sm:$0xff]
      %v3268 = vld [vmem:[%s1113 + $0xe1] sm:$0xff]
      %v3269 = vld [vmem:[%s1113 + $0xf1] sm:$0xff]
      %v3270 = vld [vmem:[%s1113 + $0xf9] sm:$0xff]
      %v3271 = vld [vmem:[%s1113 + $0x109] sm:$0xff]
      %v3272 = vld [vmem:[%s1113 + $0x111] sm:$0xff]
      %v3273 = vld [vmem:[%s1113 + $0x121] sm:$0xff]
      %v3274 = vld [vmem:[%s1113 + $0x129] sm:$0xff]
      %v3275 = vld [vmem:[%s1113 + $0x139] sm:$0xff]
      %v3276 = vld [vmem:[%s1113 + $0x141] sm:$0xff]
      %v3277 = vld [vmem:[%s1113 + $0x151] sm:$0xff]
      %v3278 = vld [vmem:[%s1113 + $0x159] sm:$0xff]
      %v3279 = vld [vmem:[%s1113 + $0x169] sm:$0xff]
      %v3280 = vld [vmem:[%s1113 + $0x171] sm:$0xff]
      %v3281 = vld [vmem:[%s1113 + $0x2] sm:$0xff]
      %v3282 = vld [vmem:[%s1113 + $0xa] sm:$0xff]
      %v3283 = vld [vmem:[%s1113 + $0x1a] sm:$0xff]
      %v3284 = vld [vmem:[%s1113 + $0x22] sm:$0xff]
      %v3285 = vld [vmem:[%s1113 + $0x32] sm:$0xff]
      %v3286 = vld [vmem:[%s1113 + $0x3a] sm:$0xff]
      %v3287 = vld [vmem:[%s1113 + $0x4a] sm:$0xff]
      %v3288 = vld [vmem:[%s1113 + $0x52] sm:$0xff]
      %v3289 = vld [vmem:[%s1113 + $0x62] sm:$0xff]
      %v3290 = vld [vmem:[%s1113 + $0x6a] sm:$0xff]
      %v3291 = vld [vmem:[%s1113 + $0x7a] sm:$0xff]
      %v3292 = vld [vmem:[%s1113 + $0x82] sm:$0xff]
      %v3293 = vld [vmem:[%s1113 + $0x92] sm:$0xff]
      %v3294 = vld [vmem:[%s1113 + $0x9a] sm:$0xff]
      %v3295 = vld [vmem:[%s1113 + $0xaa] sm:$0xff]
      %v3296 = vld [vmem:[%s1113 + $0xb2] sm:$0xff]
      %v3297 = vld [vmem:[%s1113 + $0xc2] sm:$0xff]
      %v3298 = vld [vmem:[%s1113 + $0xca] sm:$0xff]
      %v3299 = vld [vmem:[%s1113 + $0xda] sm:$0xff]
      %v3300 = vld [vmem:[%s1113 + $0xe2] sm:$0xff]
      %v3301 = vld [vmem:[%s1113 + $0xf2] sm:$0xff]
      %v3302 = vld [vmem:[%s1113 + $0xfa] sm:$0xff]
      %v3303 = vld [vmem:[%s1113 + $0x10a] sm:$0xff]
      %v3304 = vld [vmem:[%s1113 + $0x112] sm:$0xff]
      %v3305 = vld [vmem:[%s1113 + $0x122] sm:$0xff]
      %v3306 = vld [vmem:[%s1113 + $0x12a] sm:$0xff]
      %v3307 = vld [vmem:[%s1113 + $0x13a] sm:$0xff]
      %v3308 = vld [vmem:[%s1113 + $0x142] sm:$0xff]
      %v3309 = vld [vmem:[%s1113 + $0x152] sm:$0xff]
      %v3310 = vld [vmem:[%s1113 + $0x15a] sm:$0xff]
      %v3311 = vld [vmem:[%s1113 + $0x16a] sm:$0xff]
      %v3312 = vld [vmem:[%s1113 + $0x172] sm:$0xff]
      %3345 = vrot.lane.b32.xlu0 %v3057, 2
      %v3346 = vpop.permute.xlu0 %3345
      %3347 = vrot.lane.b32.xlu0 %v3058, 2
      %v3348 = vpop.permute.xlu0 %3347
      %3349 = vrot.lane.b32.xlu0 %v3059, 2
      %v3350 = vpop.permute.xlu0 %3349
      %3351 = vrot.lane.b32.xlu0 %v3060, 2
      %v3352 = vpop.permute.xlu0 %3351
      %3353 = vrot.lane.b32.xlu0 %v3061, 2
      %v3354 = vpop.permute.xlu0 %3353
      %3355 = vrot.lane.b32.xlu0 %v3062, 2
      %v3356 = vpop.permute.xlu0 %3355
      %3357 = vrot.lane.b32.xlu0 %v3063, 2
      %v3358 = vpop.permute.xlu0 %3357
      %3359 = vrot.lane.b32.xlu0 %v3064, 2
      %v3360 = vpop.permute.xlu0 %3359
      %3361 = vrot.lane.b32.xlu0 %v3065, 2
      %v3362 = vpop.permute.xlu0 %3361
      %3363 = vrot.lane.b32.xlu0 %v3066, 2
      %v3364 = vpop.permute.xlu0 %3363
      %3365 = vrot.lane.b32.xlu0 %v3067, 2
      %v3366 = vpop.permute.xlu0 %3365
      %3367 = vrot.lane.b32.xlu0 %v3068, 2
      %v3368 = vpop.permute.xlu0 %3367
      %3369 = vrot.lane.b32.xlu0 %v3069, 2
      %v3370 = vpop.permute.xlu0 %3369
      %3371 = vrot.lane.b32.xlu0 %v3070, 2
      %v3372 = vpop.permute.xlu0 %3371
      %3373 = vrot.lane.b32.xlu0 %v3071, 2
      %v3374 = vpop.permute.xlu0 %3373
      %3375 = vrot.lane.b32.xlu0 %v3072, 2
      %v3376 = vpop.permute.xlu0 %3375
      %3377 = vrot.lane.b32.xlu0 %v3073, 2
      %v3378 = vpop.permute.xlu0 %3377
      %3379 = vrot.lane.b32.xlu0 %v3074, 2
      %v3380 = vpop.permute.xlu0 %3379
      %3381 = vrot.lane.b32.xlu0 %v3075, 2
      %v3382 = vpop.permute.xlu0 %3381
      %3383 = vrot.lane.b32.xlu0 %v3076, 2
      %v3384 = vpop.permute.xlu0 %3383
      %3385 = vrot.lane.b32.xlu0 %v3077, 2
      %v3386 = vpop.permute.xlu0 %3385
      %3387 = vrot.lane.b32.xlu0 %v3078, 2
      %v3388 = vpop.permute.xlu0 %3387
      %3389 = vrot.lane.b32.xlu0 %v3079, 2
      %v3390 = vpop.permute.xlu0 %3389
      %3391 = vrot.lane.b32.xlu0 %v3080, 2
      %v3392 = vpop.permute.xlu0 %3391
      %3393 = vrot.lane.b32.xlu0 %v3081, 2
      %v3394 = vpop.permute.xlu0 %3393
      %3395 = vrot.lane.b32.xlu0 %v3082, 2
      %v3396 = vpop.permute.xlu0 %3395
      %3397 = vrot.lane.b32.xlu0 %v3083, 2
      %v3398 = vpop.permute.xlu0 %3397
      %3399 = vrot.lane.b32.xlu0 %v3084, 2
      %v3400 = vpop.permute.xlu0 %3399
      %3401 = vrot.lane.b32.xlu0 %v3085, 2
      %v3402 = vpop.permute.xlu0 %3401
      %3403 = vrot.lane.b32.xlu0 %v3086, 2
      %v3404 = vpop.permute.xlu0 %3403
      %3405 = vrot.lane.b32.xlu0 %v3087, 2
      %v3406 = vpop.permute.xlu0 %3405
      %3407 = vrot.lane.b32.xlu0 %v3088, 2
      %v3408 = vpop.permute.xlu0 %3407
      %3473 = vrot.lane.b32.xlu0 %v3089, 4
      %v3474 = vpop.permute.xlu0 %3473
      %3475 = vrot.lane.b32.xlu0 %v3090, 4
      %v3476 = vpop.permute.xlu0 %3475
      %3477 = vrot.lane.b32.xlu0 %v3091, 4
      %v3478 = vpop.permute.xlu0 %3477
      %3479 = vrot.lane.b32.xlu0 %v3092, 4
      %v3480 = vpop.permute.xlu0 %3479
      %3481 = vrot.lane.b32.xlu0 %v3093, 4
      %v3482 = vpop.permute.xlu0 %3481
      %3483 = vrot.lane.b32.xlu0 %v3094, 4
      %v3484 = vpop.permute.xlu0 %3483
      %3485 = vrot.lane.b32.xlu0 %v3095, 4
      %v3486 = vpop.permute.xlu0 %3485
      %3487 = vrot.lane.b32.xlu0 %v3096, 4
      %v3488 = vpop.permute.xlu0 %3487
      %3489 = vrot.lane.b32.xlu0 %v3097, 4
      %v3490 = vpop.permute.xlu0 %3489
      %3491 = vrot.lane.b32.xlu0 %v3098, 4
      %v3492 = vpop.permute.xlu0 %3491
      %3493 = vrot.lane.b32.xlu0 %v3099, 4
      %v3494 = vpop.permute.xlu0 %3493
      %3495 = vrot.lane.b32.xlu0 %v3100, 4
      %v3496 = vpop.permute.xlu0 %3495
      %3497 = vrot.lane.b32.xlu0 %v3101, 4
      %v3498 = vpop.permute.xlu0 %3497
      %3499 = vrot.lane.b32.xlu0 %v3102, 4
      %v3500 = vpop.permute.xlu0 %3499
      %3501 = vrot.lane.b32.xlu0 %v3103, 4
      %v3502 = vpop.permute.xlu0 %3501
      %3503 = vrot.lane.b32.xlu0 %v3104, 4
      %v3504 = vpop.permute.xlu0 %3503
      %3505 = vrot.lane.b32.xlu0 %v3105, 4
      %v3506 = vpop.permute.xlu0 %3505
      %3507 = vrot.lane.b32.xlu0 %v3106, 4
      %v3508 = vpop.permute.xlu0 %3507
      %3509 = vrot.lane.b32.xlu0 %v3107, 4
      %v3510 = vpop.permute.xlu0 %3509
      %3511 = vrot.lane.b32.xlu0 %v3108, 4
      %v3512 = vpop.permute.xlu0 %3511
      %3513 = vrot.lane.b32.xlu0 %v3109, 4
      %v3514 = vpop.permute.xlu0 %3513
      %3515 = vrot.lane.b32.xlu0 %v3110, 4
      %v3516 = vpop.permute.xlu0 %3515
      %3517 = vrot.lane.b32.xlu0 %v3111, 4
      %v3518 = vpop.permute.xlu0 %3517
      %3519 = vrot.lane.b32.xlu0 %v3112, 4
      %v3520 = vpop.permute.xlu0 %3519
      %3521 = vrot.lane.b32.xlu0 %v3113, 4
      %v3522 = vpop.permute.xlu0 %3521
      %3523 = vrot.lane.b32.xlu0 %v3114, 4
      %v3524 = vpop.permute.xlu0 %3523
      %3525 = vrot.lane.b32.xlu0 %v3115, 4
      %v3526 = vpop.permute.xlu0 %3525
      %3527 = vrot.lane.b32.xlu0 %v3116, 4
      %v3528 = vpop.permute.xlu0 %3527
      %3529 = vrot.lane.b32.xlu0 %v3117, 4
      %v3530 = vpop.permute.xlu0 %3529
      %3531 = vrot.lane.b32.xlu0 %v3118, 4
      %v3532 = vpop.permute.xlu0 %3531
      %3533 = vrot.lane.b32.xlu0 %v3119, 4
      %v3534 = vpop.permute.xlu0 %3533
      %3535 = vrot.lane.b32.xlu0 %v3120, 4
      %v3536 = vpop.permute.xlu0 %3535
      %3601 = vrot.lane.b32.xlu0 %v3121, 6
      %v3602 = vpop.permute.xlu0 %3601
      %3603 = vrot.lane.b32.xlu0 %v3122, 6
      %v3604 = vpop.permute.xlu0 %3603
      %3605 = vrot.lane.b32.xlu0 %v3123, 6
      %v3606 = vpop.permute.xlu0 %3605
      %3607 = vrot.lane.b32.xlu0 %v3124, 6
      %v3608 = vpop.permute.xlu0 %3607
      %3609 = vrot.lane.b32.xlu0 %v3125, 6
      %v3610 = vpop.permute.xlu0 %3609
      %3611 = vrot.lane.b32.xlu0 %v3126, 6
      %v3612 = vpop.permute.xlu0 %3611
      %3613 = vrot.lane.b32.xlu0 %v3127, 6
      %v3614 = vpop.permute.xlu0 %3613
      %3615 = vrot.lane.b32.xlu0 %v3128, 6
      %v3616 = vpop.permute.xlu0 %3615
      %3617 = vrot.lane.b32.xlu0 %v3129, 6
      %v3618 = vpop.permute.xlu0 %3617
      %3619 = vrot.lane.b32.xlu0 %v3130, 6
      %v3620 = vpop.permute.xlu0 %3619
      %3621 = vrot.lane.b32.xlu0 %v3131, 6
      %v3622 = vpop.permute.xlu0 %3621
      %3623 = vrot.lane.b32.xlu0 %v3132, 6
      %v3624 = vpop.permute.xlu0 %3623
      %3625 = vrot.lane.b32.xlu0 %v3133, 6
      %v3626 = vpop.permute.xlu0 %3625
      %3627 = vrot.lane.b32.xlu0 %v3134, 6
      %v3628 = vpop.permute.xlu0 %3627
      %3629 = vrot.lane.b32.xlu0 %v3135, 6
      %v3630 = vpop.permute.xlu0 %3629
      %3631 = vrot.lane.b32.xlu0 %v3136, 6
      %v3632 = vpop.permute.xlu0 %3631
      %3633 = vrot.lane.b32.xlu0 %v3137, 6
      %v3634 = vpop.permute.xlu0 %3633
      %3635 = vrot.lane.b32.xlu0 %v3138, 6
      %v3636 = vpop.permute.xlu0 %3635
      %3637 = vrot.lane.b32.xlu0 %v3139, 6
      %v3638 = vpop.permute.xlu0 %3637
      %3639 = vrot.lane.b32.xlu0 %v3140, 6
      %v3640 = vpop.permute.xlu0 %3639
      %3641 = vrot.lane.b32.xlu0 %v3141, 6
      %v3642 = vpop.permute.xlu0 %3641
      %3643 = vrot.lane.b32.xlu0 %v3142, 6
      %v3644 = vpop.permute.xlu0 %3643
      %3645 = vrot.lane.b32.xlu0 %v3143, 6
      %v3646 = vpop.permute.xlu0 %3645
      %3647 = vrot.lane.b32.xlu0 %v3144, 6
      %v3648 = vpop.permute.xlu0 %3647
      %3649 = vrot.lane.b32.xlu0 %v3145, 6
      %v3650 = vpop.permute.xlu0 %3649
      %3651 = vrot.lane.b32.xlu0 %v3146, 6
      %v3652 = vpop.permute.xlu0 %3651
      %3653 = vrot.lane.b32.xlu0 %v3147, 6
      %v3654 = vpop.permute.xlu0 %3653
      %3655 = vrot.lane.b32.xlu0 %v3148, 6
      %v3656 = vpop.permute.xlu0 %3655
      %3657 = vrot.lane.b32.xlu0 %v3149, 6
      %v3658 = vpop.permute.xlu0 %3657
      %3659 = vrot.lane.b32.xlu0 %v3150, 6
      %v3660 = vpop.permute.xlu0 %3659
      %3661 = vrot.lane.b32.xlu0 %v3151, 6
      %v3662 = vpop.permute.xlu0 %3661
      %3663 = vrot.lane.b32.xlu0 %v3152, 6
      %v3664 = vpop.permute.xlu0 %3663
      %3729 = vrot.lane.b32.xlu0 %v3153, 8
      %v3730 = vpop.permute.xlu0 %3729
      %3731 = vrot.lane.b32.xlu0 %v3154, 8
      %v3732 = vpop.permute.xlu0 %3731
      %3733 = vrot.lane.b32.xlu0 %v3155, 8
      %v3734 = vpop.permute.xlu0 %3733
      %3735 = vrot.lane.b32.xlu0 %v3156, 8
      %v3736 = vpop.permute.xlu0 %3735
      %3737 = vrot.lane.b32.xlu0 %v3157, 8
      %v3738 = vpop.permute.xlu0 %3737
      %3739 = vrot.lane.b32.xlu0 %v3158, 8
      %v3740 = vpop.permute.xlu0 %3739
      %3741 = vrot.lane.b32.xlu0 %v3159, 8
      %v3742 = vpop.permute.xlu0 %3741
      %3743 = vrot.lane.b32.xlu0 %v3160, 8
      %v3744 = vpop.permute.xlu0 %3743
      %3745 = vrot.lane.b32.xlu0 %v3161, 8
      %v3746 = vpop.permute.xlu0 %3745
      %3747 = vrot.lane.b32.xlu0 %v3162, 8
      %v3748 = vpop.permute.xlu0 %3747
      %3749 = vrot.lane.b32.xlu0 %v3163, 8
      %v3750 = vpop.permute.xlu0 %3749
      %3751 = vrot.lane.b32.xlu0 %v3164, 8
      %v3752 = vpop.permute.xlu0 %3751
      %3753 = vrot.lane.b32.xlu0 %v3165, 8
      %v3754 = vpop.permute.xlu0 %3753
      %3755 = vrot.lane.b32.xlu0 %v3166, 8
      %v3756 = vpop.permute.xlu0 %3755
      %3757 = vrot.lane.b32.xlu0 %v3167, 8
      %v3758 = vpop.permute.xlu0 %3757
      %3759 = vrot.lane.b32.xlu0 %v3168, 8
      %v3760 = vpop.permute.xlu0 %3759
      %3761 = vrot.lane.b32.xlu0 %v3169, 8
      %v3762 = vpop.permute.xlu0 %3761
      %3763 = vrot.lane.b32.xlu0 %v3170, 8
      %v3764 = vpop.permute.xlu0 %3763
      %3765 = vrot.lane.b32.xlu0 %v3171, 8
      %v3766 = vpop.permute.xlu0 %3765
      %3767 = vrot.lane.b32.xlu0 %v3172, 8
      %v3768 = vpop.permute.xlu0 %3767
      %3769 = vrot.lane.b32.xlu0 %v3173, 8
      %v3770 = vpop.permute.xlu0 %3769
      %3771 = vrot.lane.b32.xlu0 %v3174, 8
      %v3772 = vpop.permute.xlu0 %3771
      %3773 = vrot.lane.b32.xlu0 %v3175, 8
      %v3774 = vpop.permute.xlu0 %3773
      %3775 = vrot.lane.b32.xlu0 %v3176, 8
      %v3776 = vpop.permute.xlu0 %3775
      %3777 = vrot.lane.b32.xlu0 %v3177, 8
      %v3778 = vpop.permute.xlu0 %3777
      %3779 = vrot.lane.b32.xlu0 %v3178, 8
      %v3780 = vpop.permute.xlu0 %3779
      %3781 = vrot.lane.b32.xlu0 %v3179, 8
      %v3782 = vpop.permute.xlu0 %3781
      %3783 = vrot.lane.b32.xlu0 %v3180, 8
      %v3784 = vpop.permute.xlu0 %3783
      %3785 = vrot.lane.b32.xlu0 %v3181, 8
      %v3786 = vpop.permute.xlu0 %3785
      %3787 = vrot.lane.b32.xlu0 %v3182, 8
      %v3788 = vpop.permute.xlu0 %3787
      %3789 = vrot.lane.b32.xlu0 %v3183, 8
      %v3790 = vpop.permute.xlu0 %3789
      %3791 = vrot.lane.b32.xlu0 %v3184, 8
      %v3792 = vpop.permute.xlu0 %3791
      %3857 = vrot.lane.b32.xlu0 %v3185, 10
      %v3858 = vpop.permute.xlu0 %3857
      %3859 = vrot.lane.b32.xlu0 %v3186, 10
      %v3860 = vpop.permute.xlu0 %3859
      %3861 = vrot.lane.b32.xlu0 %v3187, 10
      %v3862 = vpop.permute.xlu0 %3861
      %3863 = vrot.lane.b32.xlu0 %v3188, 10
      %v3864 = vpop.permute.xlu0 %3863
      %3865 = vrot.lane.b32.xlu0 %v3189, 10
      %v3866 = vpop.permute.xlu0 %3865
      %3867 = vrot.lane.b32.xlu0 %v3190, 10
      %v3868 = vpop.permute.xlu0 %3867
      %3869 = vrot.lane.b32.xlu0 %v3191, 10
      %v3870 = vpop.permute.xlu0 %3869
      %3871 = vrot.lane.b32.xlu0 %v3192, 10
      %v3872 = vpop.permute.xlu0 %3871
      %3873 = vrot.lane.b32.xlu0 %v3193, 10
      %v3874 = vpop.permute.xlu0 %3873
      %3875 = vrot.lane.b32.xlu0 %v3194, 10
      %v3876 = vpop.permute.xlu0 %3875
      %3877 = vrot.lane.b32.xlu0 %v3195, 10
      %v3878 = vpop.permute.xlu0 %3877
      %3879 = vrot.lane.b32.xlu0 %v3196, 10
      %v3880 = vpop.permute.xlu0 %3879
      %3881 = vrot.lane.b32.xlu0 %v3197, 10
      %v3882 = vpop.permute.xlu0 %3881
      %3883 = vrot.lane.b32.xlu0 %v3198, 10
      %v3884 = vpop.permute.xlu0 %3883
      %3885 = vrot.lane.b32.xlu0 %v3199, 10
      %v3886 = vpop.permute.xlu0 %3885
      %3887 = vrot.lane.b32.xlu0 %v3200, 10
      %v3888 = vpop.permute.xlu0 %3887
      %3889 = vrot.lane.b32.xlu0 %v3201, 10
      %v3890 = vpop.permute.xlu0 %3889
      %3891 = vrot.lane.b32.xlu0 %v3202, 10
      %v3892 = vpop.permute.xlu0 %3891
      %3893 = vrot.lane.b32.xlu0 %v3203, 10
      %v3894 = vpop.permute.xlu0 %3893
      %3895 = vrot.lane.b32.xlu0 %v3204, 10
      %v3896 = vpop.permute.xlu0 %3895
      %3897 = vrot.lane.b32.xlu0 %v3205, 10
      %v3898 = vpop.permute.xlu0 %3897
      %3899 = vrot.lane.b32.xlu0 %v3206, 10
      %v3900 = vpop.permute.xlu0 %3899
      %3901 = vrot.lane.b32.xlu0 %v3207, 10
      %v3902 = vpop.permute.xlu0 %3901
      %3903 = vrot.lane.b32.xlu0 %v3208, 10
      %v3904 = vpop.permute.xlu0 %3903
      %3905 = vrot.lane.b32.xlu0 %v3209, 10
      %v3906 = vpop.permute.xlu0 %3905
      %3907 = vrot.lane.b32.xlu0 %v3210, 10
      %v3908 = vpop.permute.xlu0 %3907
      %3909 = vrot.lane.b32.xlu0 %v3211, 10
      %v3910 = vpop.permute.xlu0 %3909
      %3911 = vrot.lane.b32.xlu0 %v3212, 10
      %v3912 = vpop.permute.xlu0 %3911
      %3913 = vrot.lane.b32.xlu0 %v3213, 10
      %v3914 = vpop.permute.xlu0 %3913
      %3915 = vrot.lane.b32.xlu0 %v3214, 10
      %v3916 = vpop.permute.xlu0 %3915
      %3917 = vrot.lane.b32.xlu0 %v3215, 10
      %v3918 = vpop.permute.xlu0 %3917
      %3919 = vrot.lane.b32.xlu0 %v3216, 10
      %v3920 = vpop.permute.xlu0 %3919
      %3985 = vrot.lane.b32.xlu0 %v3217, 12
      %v3986 = vpop.permute.xlu0 %3985
      %3987 = vrot.lane.b32.xlu0 %v3218, 12
      %v3988 = vpop.permute.xlu0 %3987
      %3989 = vrot.lane.b32.xlu0 %v3219, 12
      %v3990 = vpop.permute.xlu0 %3989
      %3991 = vrot.lane.b32.xlu0 %v3220, 12
      %v3992 = vpop.permute.xlu0 %3991
      %3993 = vrot.lane.b32.xlu0 %v3221, 12
      %v3994 = vpop.permute.xlu0 %3993
      %3995 = vrot.lane.b32.xlu0 %v3222, 12
      %v3996 = vpop.permute.xlu0 %3995
      %3997 = vrot.lane.b32.xlu0 %v3223, 12
      %v3998 = vpop.permute.xlu0 %3997
      %3999 = vrot.lane.b32.xlu0 %v3224, 12
      %v4000 = vpop.permute.xlu0 %3999
      %4001 = vrot.lane.b32.xlu0 %v3225, 12
      %v4002 = vpop.permute.xlu0 %4001
      %4003 = vrot.lane.b32.xlu0 %v3226, 12
      %v4004 = vpop.permute.xlu0 %4003
      %4005 = vrot.lane.b32.xlu0 %v3227, 12
      %v4006 = vpop.permute.xlu0 %4005
      %4007 = vrot.lane.b32.xlu0 %v3228, 12
      %v4008 = vpop.permute.xlu0 %4007
      %4009 = vrot.lane.b32.xlu0 %v3229, 12
      %v4010 = vpop.permute.xlu0 %4009
      %4011 = vrot.lane.b32.xlu0 %v3230, 12
      %v4012 = vpop.permute.xlu0 %4011
      %4013 = vrot.lane.b32.xlu0 %v3231, 12
      %v4014 = vpop.permute.xlu0 %4013
      %4015 = vrot.lane.b32.xlu0 %v3232, 12
      %v4016 = vpop.permute.xlu0 %4015
      %4017 = vrot.lane.b32.xlu0 %v3233, 12
      %v4018 = vpop.permute.xlu0 %4017
      %4019 = vrot.lane.b32.xlu0 %v3234, 12
      %v4020 = vpop.permute.xlu0 %4019
      %4021 = vrot.lane.b32.xlu0 %v3235, 12
      %v4022 = vpop.permute.xlu0 %4021
      %4023 = vrot.lane.b32.xlu0 %v3236, 12
      %v4024 = vpop.permute.xlu0 %4023
      %4025 = vrot.lane.b32.xlu0 %v3237, 12
      %v4026 = vpop.permute.xlu0 %4025
      %4027 = vrot.lane.b32.xlu0 %v3238, 12
      %v4028 = vpop.permute.xlu0 %4027
      %4029 = vrot.lane.b32.xlu0 %v3239, 12
      %v4030 = vpop.permute.xlu0 %4029
      %4031 = vrot.lane.b32.xlu0 %v3240, 12
      %v4032 = vpop.permute.xlu0 %4031
      %4033 = vrot.lane.b32.xlu0 %v3241, 12
      %v4034 = vpop.permute.xlu0 %4033
      %4035 = vrot.lane.b32.xlu0 %v3242, 12
      %v4036 = vpop.permute.xlu0 %4035
      %4037 = vrot.lane.b32.xlu0 %v3243, 12
      %v4038 = vpop.permute.xlu0 %4037
      %4039 = vrot.lane.b32.xlu0 %v3244, 12
      %v4040 = vpop.permute.xlu0 %4039
      %4041 = vrot.lane.b32.xlu0 %v3245, 12
      %v4042 = vpop.permute.xlu0 %4041
      %4043 = vrot.lane.b32.xlu0 %v3246, 12
      %v4044 = vpop.permute.xlu0 %4043
      %4045 = vrot.lane.b32.xlu0 %v3247, 12
      %v4046 = vpop.permute.xlu0 %4045
      %4047 = vrot.lane.b32.xlu0 %v3248, 12
      %v4048 = vpop.permute.xlu0 %4047
      %4113 = vrot.lane.b32.xlu0 %v3249, 14
      %v4114 = vpop.permute.xlu0 %4113
      %4115 = vrot.lane.b32.xlu0 %v3250, 14
      %v4116 = vpop.permute.xlu0 %4115
      %4117 = vrot.lane.b32.xlu0 %v3251, 14
      %v4118 = vpop.permute.xlu0 %4117
      %4119 = vrot.lane.b32.xlu0 %v3252, 14
      %v4120 = vpop.permute.xlu0 %4119
      %4121 = vrot.lane.b32.xlu0 %v3253, 14
      %v4122 = vpop.permute.xlu0 %4121
      %4123 = vrot.lane.b32.xlu0 %v3254, 14
      %v4124 = vpop.permute.xlu0 %4123
      %4125 = vrot.lane.b32.xlu0 %v3255, 14
      %v4126 = vpop.permute.xlu0 %4125
      %4127 = vrot.lane.b32.xlu0 %v3256, 14
      %v4128 = vpop.permute.xlu0 %4127
      %4129 = vrot.lane.b32.xlu0 %v3257, 14
      %v4130 = vpop.permute.xlu0 %4129
      %4131 = vrot.lane.b32.xlu0 %v3258, 14
      %v4132 = vpop.permute.xlu0 %4131
      %4133 = vrot.lane.b32.xlu0 %v3259, 14
      %v4134 = vpop.permute.xlu0 %4133
      %4135 = vrot.lane.b32.xlu0 %v3260, 14
      %v4136 = vpop.permute.xlu0 %4135
      %4137 = vrot.lane.b32.xlu0 %v3261, 14
      %v4138 = vpop.permute.xlu0 %4137
      %4139 = vrot.lane.b32.xlu0 %v3262, 14
      %v4140 = vpop.permute.xlu0 %4139
      %4141 = vrot.lane.b32.xlu0 %v3263, 14
      %v4142 = vpop.permute.xlu0 %4141
      %4143 = vrot.lane.b32.xlu0 %v3264, 14
      %v4144 = vpop.permute.xlu0 %4143
      %4145 = vrot.lane.b32.xlu0 %v3265, 14
      %v4146 = vpop.permute.xlu0 %4145
      %4147 = vrot.lane.b32.xlu0 %v3266, 14
      %v4148 = vpop.permute.xlu0 %4147
      %4149 = vrot.lane.b32.xlu0 %v3267, 14
      %v4150 = vpop.permute.xlu0 %4149
      %4151 = vrot.lane.b32.xlu0 %v3268, 14
      %v4152 = vpop.permute.xlu0 %4151
      %4153 = vrot.lane.b32.xlu0 %v3269, 14
      %v4154 = vpop.permute.xlu0 %4153
      %4155 = vrot.lane.b32.xlu0 %v3270, 14
      %v4156 = vpop.permute.xlu0 %4155
      %4157 = vrot.lane.b32.xlu0 %v3271, 14
      %v4158 = vpop.permute.xlu0 %4157
      %4159 = vrot.lane.b32.xlu0 %v3272, 14
      %v4160 = vpop.permute.xlu0 %4159
      %4161 = vrot.lane.b32.xlu0 %v3273, 14
      %v4162 = vpop.permute.xlu0 %4161
      %4163 = vrot.lane.b32.xlu0 %v3274, 14
      %v4164 = vpop.permute.xlu0 %4163
      %4165 = vrot.lane.b32.xlu0 %v3275, 14
      %v4166 = vpop.permute.xlu0 %4165
      %4167 = vrot.lane.b32.xlu0 %v3276, 14
      %v4168 = vpop.permute.xlu0 %4167
      %4169 = vrot.lane.b32.xlu0 %v3277, 14
      %v4170 = vpop.permute.xlu0 %4169
      %4171 = vrot.lane.b32.xlu0 %v3278, 14
      %v4172 = vpop.permute.xlu0 %4171
      %4173 = vrot.lane.b32.xlu0 %v3279, 14
      %v4174 = vpop.permute.xlu0 %4173
      %4175 = vrot.lane.b32.xlu0 %v3280, 14
      %v4176 = vpop.permute.xlu0 %4175
      %4241 = vrot.lane.b32.xlu0 %v3281, 16
      %v4242 = vpop.permute.xlu0 %4241
      %4243 = vrot.lane.b32.xlu0 %v3282, 16
      %v4244 = vpop.permute.xlu0 %4243
      %4245 = vrot.lane.b32.xlu0 %v3283, 16
      %v4246 = vpop.permute.xlu0 %4245
      %4247 = vrot.lane.b32.xlu0 %v3284, 16
      %v4248 = vpop.permute.xlu0 %4247
      %4249 = vrot.lane.b32.xlu0 %v3285, 16
      %v4250 = vpop.permute.xlu0 %4249
      %4251 = vrot.lane.b32.xlu0 %v3286, 16
      %v4252 = vpop.permute.xlu0 %4251
      %4253 = vrot.lane.b32.xlu0 %v3287, 16
      %v4254 = vpop.permute.xlu0 %4253
      %4255 = vrot.lane.b32.xlu0 %v3288, 16
      %v4256 = vpop.permute.xlu0 %4255
      %4257 = vrot.lane.b32.xlu0 %v3289, 16
      %v4258 = vpop.permute.xlu0 %4257
      %4259 = vrot.lane.b32.xlu0 %v3290, 16
      %v4260 = vpop.permute.xlu0 %4259
      %4261 = vrot.lane.b32.xlu0 %v3291, 16
      %v4262 = vpop.permute.xlu0 %4261
      %4263 = vrot.lane.b32.xlu0 %v3292, 16
      %v4264 = vpop.permute.xlu0 %4263
      %4265 = vrot.lane.b32.xlu0 %v3293, 16
      %v4266 = vpop.permute.xlu0 %4265
      %4267 = vrot.lane.b32.xlu0 %v3294, 16
      %v4268 = vpop.permute.xlu0 %4267
      %4269 = vrot.lane.b32.xlu0 %v3295, 16
      %v4270 = vpop.permute.xlu0 %4269
      %4271 = vrot.lane.b32.xlu0 %v3296, 16
      %v4272 = vpop.permute.xlu0 %4271
      %4273 = vrot.lane.b32.xlu0 %v3297, 16
      %v4274 = vpop.permute.xlu0 %4273
      %4275 = vrot.lane.b32.xlu0 %v3298, 16
      %v4276 = vpop.permute.xlu0 %4275
      %4277 = vrot.lane.b32.xlu0 %v3299, 16
      %v4278 = vpop.permute.xlu0 %4277
      %4279 = vrot.lane.b32.xlu0 %v3300, 16
      %v4280 = vpop.permute.xlu0 %4279
      %4281 = vrot.lane.b32.xlu0 %v3301, 16
      %v4282 = vpop.permute.xlu0 %4281
      %4283 = vrot.lane.b32.xlu0 %v3302, 16
      %v4284 = vpop.permute.xlu0 %4283
      %4285 = vrot.lane.b32.xlu0 %v3303, 16
      %v4286 = vpop.permute.xlu0 %4285
      %4287 = vrot.lane.b32.xlu0 %v3304, 16
      %v4288 = vpop.permute.xlu0 %4287
      %4289 = vrot.lane.b32.xlu0 %v3305, 16
      %v4290 = vpop.permute.xlu0 %4289
      %4291 = vrot.lane.b32.xlu0 %v3306, 16
      %v4292 = vpop.permute.xlu0 %4291
      %4293 = vrot.lane.b32.xlu0 %v3307, 16
      %v4294 = vpop.permute.xlu0 %4293
      %4295 = vrot.lane.b32.xlu0 %v3308, 16
      %v4296 = vpop.permute.xlu0 %4295
      %4297 = vrot.lane.b32.xlu0 %v3309, 16
      %v4298 = vpop.permute.xlu0 %4297
      %4299 = vrot.lane.b32.xlu0 %v3310, 16
      %v4300 = vpop.permute.xlu0 %4299
      %4301 = vrot.lane.b32.xlu0 %v3311, 16
      %v4302 = vpop.permute.xlu0 %4301
      %4303 = vrot.lane.b32.xlu0 %v3312, 16
      %v4304 = vpop.permute.xlu0 %4303
      %v4337 = vsel %vm291, %v3025, %v3346
      %v4338 = vsel %vm291, %v3026, %v3348
      %v4339 = vsel %vm291, %v3027, %v3350
      %v4340 = vsel %vm291, %v3028, %v3352
      %v4341 = vsel %vm291, %v3029, %v3354
      %v4342 = vsel %vm291, %v3030, %v3356
      %v4343 = vsel %vm291, %v3031, %v3358
      %v4344 = vsel %vm291, %v3032, %v3360
      %v4345 = vsel %vm291, %v3033, %v3362
      %v4346 = vsel %vm291, %v3034, %v3364
      %v4347 = vsel %vm291, %v3035, %v3366
      %v4348 = vsel %vm291, %v3036, %v3368
      %v4349 = vsel %vm291, %v3037, %v3370
      %v4350 = vsel %vm291, %v3038, %v3372
      %v4351 = vsel %vm291, %v3039, %v3374
      %v4352 = vsel %vm291, %v3040, %v3376
      %v4353 = vsel %vm291, %v3041, %v3378
      %v4354 = vsel %vm291, %v3042, %v3380
      %v4355 = vsel %vm291, %v3043, %v3382
      %v4356 = vsel %vm291, %v3044, %v3384
      %v4357 = vsel %vm291, %v3045, %v3386
      %v4358 = vsel %vm291, %v3046, %v3388
      %v4359 = vsel %vm291, %v3047, %v3390
      %v4360 = vsel %vm291, %v3048, %v3392
      %v4361 = vsel %vm291, %v3049, %v3394
      %v4362 = vsel %vm291, %v3050, %v3396
      %v4363 = vsel %vm291, %v3051, %v3398
      %v4364 = vsel %vm291, %v3052, %v3400
      %v4365 = vsel %vm291, %v3053, %v3402
      %v4366 = vsel %vm291, %v3054, %v3404
      %v4367 = vsel %vm291, %v3055, %v3406
      %v4368 = vsel %vm291, %v3056, %v3408
      %v4369 = vsel %vm478, %v4337, %v3474
      %v4370 = vsel %vm478, %v4338, %v3476
      %v4371 = vsel %vm478, %v4339, %v3478
      %v4372 = vsel %vm478, %v4340, %v3480
      %v4373 = vsel %vm478, %v4341, %v3482
      %v4374 = vsel %vm478, %v4342, %v3484
      %v4375 = vsel %vm478, %v4343, %v3486
      %v4376 = vsel %vm478, %v4344, %v3488
      %v4377 = vsel %vm478, %v4345, %v3490
      %v4378 = vsel %vm478, %v4346, %v3492
      %v4379 = vsel %vm478, %v4347, %v3494
      %v4380 = vsel %vm478, %v4348, %v3496
      %v4381 = vsel %vm478, %v4349, %v3498
      %v4382 = vsel %vm478, %v4350, %v3500
      %v4383 = vsel %vm478, %v4351, %v3502
      %v4384 = vsel %vm478, %v4352, %v3504
      %v4385 = vsel %vm478, %v4353, %v3506
      %v4386 = vsel %vm478, %v4354, %v3508
      %v4387 = vsel %vm478, %v4355, %v3510
      %v4388 = vsel %vm478, %v4356, %v3512
      %v4389 = vsel %vm478, %v4357, %v3514
      %v4390 = vsel %vm478, %v4358, %v3516
      %v4391 = vsel %vm478, %v4359, %v3518
      %v4392 = vsel %vm478, %v4360, %v3520
      %v4393 = vsel %vm478, %v4361, %v3522
      %v4394 = vsel %vm478, %v4362, %v3524
      %v4395 = vsel %vm478, %v4363, %v3526
      %v4396 = vsel %vm478, %v4364, %v3528
      %v4397 = vsel %vm478, %v4365, %v3530
      %v4398 = vsel %vm478, %v4366, %v3532
      %v4399 = vsel %vm478, %v4367, %v3534
      %v4400 = vsel %vm478, %v4368, %v3536
      %v4401 = vsel %vm337, %v4369, %v3602
      %v4402 = vsel %vm337, %v4370, %v3604
      %v4403 = vsel %vm337, %v4371, %v3606
      %v4404 = vsel %vm337, %v4372, %v3608
      %v4405 = vsel %vm337, %v4373, %v3610
      %v4406 = vsel %vm337, %v4374, %v3612
      %v4407 = vsel %vm337, %v4375, %v3614
      %v4408 = vsel %vm337, %v4376, %v3616
      %v4409 = vsel %vm337, %v4377, %v3618
      %v4410 = vsel %vm337, %v4378, %v3620
      %v4411 = vsel %vm337, %v4379, %v3622
      %v4412 = vsel %vm337, %v4380, %v3624
      %v4413 = vsel %vm337, %v4381, %v3626
      %v4414 = vsel %vm337, %v4382, %v3628
      %v4415 = vsel %vm337, %v4383, %v3630
      %v4416 = vsel %vm337, %v4384, %v3632
      %v4417 = vsel %vm337, %v4385, %v3634
      %v4418 = vsel %vm337, %v4386, %v3636
      %v4419 = vsel %vm337, %v4387, %v3638
      %v4420 = vsel %vm337, %v4388, %v3640
      %v4421 = vsel %vm337, %v4389, %v3642
      %v4422 = vsel %vm337, %v4390, %v3644
      %v4423 = vsel %vm337, %v4391, %v3646
      %v4424 = vsel %vm337, %v4392, %v3648
      %v4425 = vsel %vm337, %v4393, %v3650
      %v4426 = vsel %vm337, %v4394, %v3652
      %v4427 = vsel %vm337, %v4395, %v3654
      %v4428 = vsel %vm337, %v4396, %v3656
      %v4429 = vsel %vm337, %v4397, %v3658
      %v4430 = vsel %vm337, %v4398, %v3660
      %v4431 = vsel %vm337, %v4399, %v3662
      %v4432 = vsel %vm337, %v4400, %v3664
      %v4433 = vsel %vm2330, %v4401, %v3730
      %v4434 = vsel %vm2330, %v4402, %v3732
      %v4435 = vsel %vm2330, %v4403, %v3734
      %v4436 = vsel %vm2330, %v4404, %v3736
      %v4437 = vsel %vm2330, %v4405, %v3738
      %v4438 = vsel %vm2330, %v4406, %v3740
      %v4439 = vsel %vm2330, %v4407, %v3742
      %v4440 = vsel %vm2330, %v4408, %v3744
      %v4441 = vsel %vm2330, %v4409, %v3746
      %v4442 = vsel %vm2330, %v4410, %v3748
      %v4443 = vsel %vm2330, %v4411, %v3750
      %v4444 = vsel %vm2330, %v4412, %v3752
      %v4445 = vsel %vm2330, %v4413, %v3754
      %v4446 = vsel %vm2330, %v4414, %v3756
      %v4447 = vsel %vm2330, %v4415, %v3758
      %v4448 = vsel %vm2330, %v4416, %v3760
      %v4449 = vsel %vm2330, %v4417, %v3762
      %v4450 = vsel %vm2330, %v4418, %v3764
      %v4451 = vsel %vm2330, %v4419, %v3766
      %v4452 = vsel %vm2330, %v4420, %v3768
      %v4453 = vsel %vm2330, %v4421, %v3770
      %v4454 = vsel %vm2330, %v4422, %v3772
      %v4455 = vsel %vm2330, %v4423, %v3774
      %v4456 = vsel %vm2330, %v4424, %v3776
      %v4457 = vsel %vm2330, %v4425, %v3778
      %v4458 = vsel %vm2330, %v4426, %v3780
      %v4459 = vsel %vm2330, %v4427, %v3782
      %v4460 = vsel %vm2330, %v4428, %v3784
      %v4461 = vsel %vm2330, %v4429, %v3786
      %v4462 = vsel %vm2330, %v4430, %v3788
      %v4463 = vsel %vm2330, %v4431, %v3790
      %v4464 = vsel %vm2330, %v4432, %v3792
      %v4465 = vsel %vm2363, %v4433, %v3858
      %v4466 = vsel %vm2363, %v4434, %v3860
      %v4467 = vsel %vm2363, %v4435, %v3862
      %v4468 = vsel %vm2363, %v4436, %v3864
      %v4469 = vsel %vm2363, %v4437, %v3866
      %v4470 = vsel %vm2363, %v4438, %v3868
      %v4471 = vsel %vm2363, %v4439, %v3870
      %v4472 = vsel %vm2363, %v4440, %v3872
      %v4473 = vsel %vm2363, %v4441, %v3874
      %v4474 = vsel %vm2363, %v4442, %v3876
      %v4475 = vsel %vm2363, %v4443, %v3878
      %v4476 = vsel %vm2363, %v4444, %v3880
      %v4477 = vsel %vm2363, %v4445, %v3882
      %v4478 = vsel %vm2363, %v4446, %v3884
      %v4479 = vsel %vm2363, %v4447, %v3886
      %v4480 = vsel %vm2363, %v4448, %v3888
      %v4481 = vsel %vm2363, %v4449, %v3890
      %v4482 = vsel %vm2363, %v4450, %v3892
      %v4483 = vsel %vm2363, %v4451, %v3894
      %v4484 = vsel %vm2363, %v4452, %v3896
      %v4485 = vsel %vm2363, %v4453, %v3898
      %v4486 = vsel %vm2363, %v4454, %v3900
      %v4487 = vsel %vm2363, %v4455, %v3902
      %v4488 = vsel %vm2363, %v4456, %v3904
      %v4489 = vsel %vm2363, %v4457, %v3906
      %v4490 = vsel %vm2363, %v4458, %v3908
      %v4491 = vsel %vm2363, %v4459, %v3910
      %v4492 = vsel %vm2363, %v4460, %v3912
      %v4493 = vsel %vm2363, %v4461, %v3914
      %v4494 = vsel %vm2363, %v4462, %v3916
      %v4495 = vsel %vm2363, %v4463, %v3918
      %v4496 = vsel %vm2363, %v4464, %v3920
      %v4497 = vsel %vm383, %v4465, %v3986
      %v4498 = vsel %vm383, %v4466, %v3988
      %v4499 = vsel %vm383, %v4467, %v3990
      %v4500 = vsel %vm383, %v4468, %v3992
      %v4501 = vsel %vm383, %v4469, %v3994
      %v4502 = vsel %vm383, %v4470, %v3996
      %v4503 = vsel %vm383, %v4471, %v3998
      %v4504 = vsel %vm383, %v4472, %v4000
      %v4505 = vsel %vm383, %v4473, %v4002
      %v4506 = vsel %vm383, %v4474, %v4004
      %v4507 = vsel %vm383, %v4475, %v4006
      %v4508 = vsel %vm383, %v4476, %v4008
      %v4509 = vsel %vm383, %v4477, %v4010
      %v4510 = vsel %vm383, %v4478, %v4012
      %v4511 = vsel %vm383, %v4479, %v4014
      %v4512 = vsel %vm383, %v4480, %v4016
      %v4513 = vsel %vm383, %v4481, %v4018
      %v4514 = vsel %vm383, %v4482, %v4020
      %v4515 = vsel %vm383, %v4483, %v4022
      %v4516 = vsel %vm383, %v4484, %v4024
      %v4517 = vsel %vm383, %v4485, %v4026
      %v4518 = vsel %vm383, %v4486, %v4028
      %v4519 = vsel %vm383, %v4487, %v4030
      %v4520 = vsel %vm383, %v4488, %v4032
      %v4521 = vsel %vm383, %v4489, %v4034
      %v4522 = vsel %vm383, %v4490, %v4036
      %v4523 = vsel %vm383, %v4491, %v4038
      %v4524 = vsel %vm383, %v4492, %v4040
      %v4525 = vsel %vm383, %v4493, %v4042
      %v4526 = vsel %vm383, %v4494, %v4044
      %v4527 = vsel %vm383, %v4495, %v4046
      %v4528 = vsel %vm383, %v4496, %v4048
      %v4529 = vsel %vm2428, %v4497, %v4114
      %v4530 = vsel %vm2428, %v4498, %v4116
      %v4531 = vsel %vm2428, %v4499, %v4118
      %v4532 = vsel %vm2428, %v4500, %v4120
      %v4533 = vsel %vm2428, %v4501, %v4122
      %v4534 = vsel %vm2428, %v4502, %v4124
      %v4535 = vsel %vm2428, %v4503, %v4126
      %v4536 = vsel %vm2428, %v4504, %v4128
      %v4537 = vsel %vm2428, %v4505, %v4130
      %v4538 = vsel %vm2428, %v4506, %v4132
      %v4539 = vsel %vm2428, %v4507, %v4134
      %v4540 = vsel %vm2428, %v4508, %v4136
      %v4541 = vsel %vm2428, %v4509, %v4138
      %v4542 = vsel %vm2428, %v4510, %v4140
      %v4543 = vsel %vm2428, %v4511, %v4142
      %v4544 = vsel %vm2428, %v4512, %v4144
      %v4545 = vsel %vm2428, %v4513, %v4146
      %v4546 = vsel %vm2428, %v4514, %v4148
      %v4547 = vsel %vm2428, %v4515, %v4150
      %v4548 = vsel %vm2428, %v4516, %v4152
      %v4549 = vsel %vm2428, %v4517, %v4154
      %v4550 = vsel %vm2428, %v4518, %v4156
      %v4551 = vsel %vm2428, %v4519, %v4158
      %v4552 = vsel %vm2428, %v4520, %v4160
      %v4553 = vsel %vm2428, %v4521, %v4162
      %v4554 = vsel %vm2428, %v4522, %v4164
      %v4555 = vsel %vm2428, %v4523, %v4166
      %v4556 = vsel %vm2428, %v4524, %v4168
      %v4557 = vsel %vm2428, %v4525, %v4170
      %v4558 = vsel %vm2428, %v4526, %v4172
      %v4559 = vsel %vm2428, %v4527, %v4174
      %v4560 = vsel %vm2428, %v4528, %v4176
      %v4561 = vsel %vm2461, %v4529, %v4242
      %v4562 = vsel %vm2461, %v4530, %v4244
      %v4563 = vsel %vm2461, %v4531, %v4246
      %v4564 = vsel %vm2461, %v4532, %v4248
      %v4565 = vsel %vm2461, %v4533, %v4250
      %v4566 = vsel %vm2461, %v4534, %v4252
      %v4567 = vsel %vm2461, %v4535, %v4254
      %v4568 = vsel %vm2461, %v4536, %v4256
      %v4569 = vsel %vm2461, %v4537, %v4258
      %v4570 = vsel %vm2461, %v4538, %v4260
      %v4571 = vsel %vm2461, %v4539, %v4262
      %v4572 = vsel %vm2461, %v4540, %v4264
      %v4573 = vsel %vm2461, %v4541, %v4266
      %v4574 = vsel %vm2461, %v4542, %v4268
      %v4575 = vsel %vm2461, %v4543, %v4270
      %v4576 = vsel %vm2461, %v4544, %v4272
      %v4577 = vsel %vm2461, %v4545, %v4274
      %v4578 = vsel %vm2461, %v4546, %v4276
      %v4579 = vsel %vm2461, %v4547, %v4278
      %v4580 = vsel %vm2461, %v4548, %v4280
      %v4581 = vsel %vm2461, %v4549, %v4282
      %v4582 = vsel %vm2461, %v4550, %v4284
      %v4583 = vsel %vm2461, %v4551, %v4286
      %v4584 = vsel %vm2461, %v4552, %v4288
      %v4585 = vsel %vm2461, %v4553, %v4290
      %v4586 = vsel %vm2461, %v4554, %v4292
      %v4587 = vsel %vm2461, %v4555, %v4294
      %v4588 = vsel %vm2461, %v4556, %v4296
      %v4589 = vsel %vm2461, %v4557, %v4298
      %v4590 = vsel %vm2461, %v4558, %v4300
      %v4591 = vsel %vm2461, %v4559, %v4302
      %v4592 = vsel %vm2461, %v4560, %v4304
      %v4593 = vpack.c.bf16 %v4562, %v4561
      %v4594 = vpack.c.bf16 %v4564, %v4563
      %v4595 = vpack.c.bf16 %v4566, %v4565
      %v4596 = vpack.c.bf16 %v4568, %v4567
      %v4597 = vpack.c.bf16 %v4570, %v4569
      %v4598 = vpack.c.bf16 %v4572, %v4571
      %v4599 = vpack.c.bf16 %v4574, %v4573
      %v4600 = vpack.c.bf16 %v4576, %v4575
      %v4601 = vpack.c.bf16 %v4578, %v4577
      %v4602 = vpack.c.bf16 %v4580, %v4579
      %v4603 = vpack.c.bf16 %v4582, %v4581
      %v4604 = vpack.c.bf16 %v4584, %v4583
      %v4605 = vpack.c.bf16 %v4586, %v4585
      %v4606 = vpack.c.bf16 %v4588, %v4587
      %v4607 = vpack.c.bf16 %v4590, %v4589
      %v4608 = vpack.c.bf16 %v4592, %v4591
      %v4612 = vunpack.c.l.b16 %v3022
      %v4613 = vunpack.c.l.b16 %v3023
      %v4614 = vunpack.c.l.b16 %v3024
      %v4615 = vpack.c.b16 %v4613, %v4612
      %v4616 = vpack.c.b16 %v4614, %v4614
      %v4619 = vsel %vm2519, %v4593, 0
      %v4622 = vsel %vm2519, %v4594, 0
      %v4625 = vsel %vm2519, %v4595, 0
      %v4628 = vsel %vm2519, %v4596, 0
      %v4631 = vsel %vm2519, %v4597, 0
      %v4634 = vsel %vm2519, %v4598, 0
      %v4637 = vsel %vm2519, %v4599, 0
      %v4640 = vsel %vm2519, %v4600, 0
      %v4643 = vsel %vm2519, %v4601, 0
      %v4646 = vsel %vm2519, %v4602, 0
      %v4649 = vsel %vm2519, %v4603, 0
      %v4652 = vsel %vm2519, %v4604, 0
      %v4655 = vsel %vm2519, %v4605, 0
      %v4658 = vsel %vm2519, %v4606, 0
      %v4661 = vsel %vm2519, %v4607, 0
      %v4664 = vsel %vm2519, %v4608, 0
      %v4667 = vsel %vm2568, %v4616, 0
      %4669 = vmatprep.subr.bf16.mxu0 0
      %4670 = vmatpush1.bf16.msra.mxu0 %v4615
      %4671 = vmatprep.subr.bf16.mxu0 0
      %4672 = vmatpush1.bf16.msra.mxu0 %v4667
      %4673 = vmatprep.subr.bf16.mxu0 0
      %4674 = vmatpush1.bf16.msra.mxu0 0
      %4675 = vmatprep.subr.bf16.mxu0 0
      %4676 = vmatpush1.bf16.msra.mxu0 0
      %4677 = vmatprep.subr.bf16.mxu0 0
      %4678 = vmatpush1.bf16.msra.mxu0 0
      %4679 = vmatprep.subr.bf16.mxu0 0
      %4680 = vmatpush1.bf16.msra.mxu0 0
      %4681 = vmatprep.subr.bf16.mxu0 0
      %4682 = vmatpush1.bf16.msra.mxu0 0
      %4683 = vmatprep.subr.bf16.mxu0 0
      %4684 = vmatpush1.bf16.msra.mxu0 0
      %4685 = vmatprep.subr.bf16.mxu0 0
      %4686 = vmatpush1.bf16.msra.mxu0 0
      %4687 = vmatprep.subr.bf16.mxu0 0
      %4688 = vmatpush1.bf16.msra.mxu0 0
      %4689 = vmatprep.subr.bf16.mxu0 0
      %4690 = vmatpush1.bf16.msra.mxu0 0
      %4691 = vmatprep.subr.bf16.mxu0 0
      %4692 = vmatpush1.bf16.msra.mxu0 0
      %4693 = vmatprep.subr.bf16.mxu0 0
      %4694 = vmatpush1.bf16.msra.mxu0 0
      %4695 = vmatprep.subr.bf16.mxu0 0
      %4696 = vmatpush1.bf16.msra.mxu0 0
      %4697 = vmatprep.subr.bf16.mxu0 0
      %4698 = vmatpush1.bf16.msra.mxu0 0
      %4699 = vmatprep.subr.bf16.mxu0 0
      %4700 = vmatpush1.bf16.msra.mxu0 0
      %4701 = vmatprep.mubr.bf16.mxu0 0
      %4702 = vmatmul.mubr.bf16.gmra.mrb[0].mxu0 %v4619
      %v4703 = vpop.f32.mrb[0].mxu0
      %v4704 = vadd.f32 0.0, %v4703
      %v4705 = vpop.f32.mrb[0].mxu0
      %v4706 = vpop.f32.mrb[0].mxu0
      %v4707 = vadd.f32 0.0, %v4706
      %v4708 = vpop.f32.mrb[0].mxu0
      %4709 = vmatprep.mubr.bf16.mxu0 0
      %4710 = vmatmul.mubr.bf16.gmra.mrb[0].mxu0 %v4622
      %v4711 = vpop.f32.mrb[0].mxu0
      %v4712 = vadd.f32 0.0, %v4711
      %v4713 = vpop.f32.mrb[0].mxu0
      %v4714 = vpop.f32.mrb[0].mxu0
      %v4715 = vadd.f32 0.0, %v4714
      %v4716 = vpop.f32.mrb[0].mxu0
      %4717 = vmatprep.mubr.bf16.mxu0 0
      %4718 = vmatmul.mubr.bf16.gmra.mrb[0].mxu0 %v4625
      %v4719 = vpop.f32.mrb[0].mxu0
      %v4720 = vadd.f32 0.0, %v4719
      %v4721 = vpop.f32.mrb[0].mxu0
      %v4722 = vpop.f32.mrb[0].mxu0
      %v4723 = vadd.f32 0.0, %v4722
      %v4724 = vpop.f32.mrb[0].mxu0
      %4725 = vmatprep.mubr.bf16.mxu0 0
      %4726 = vmatmul.mubr.bf16.gmra.mrb[0].mxu0 %v4628
      %v4727 = vpop.f32.mrb[0].mxu0
      %v4728 = vadd.f32 0.0, %v4727
      %v4729 = vpop.f32.mrb[0].mxu0
      %v4730 = vpop.f32.mrb[0].mxu0
      %v4731 = vadd.f32 0.0, %v4730
      %v4732 = vpop.f32.mrb[0].mxu0
      %4733 = vmatprep.mubr.bf16.mxu0 0
      %4734 = vmatmul.mubr.bf16.gmra.mrb[0].mxu0 %v4631
      %v4735 = vpop.f32.mrb[0].mxu0
      %v4736 = vadd.f32 0.0, %v4735
      %v4737 = vpop.f32.mrb[0].mxu0
      %v4738 = vpop.f32.mrb[0].mxu0
      %v4739 = vadd.f32 0.0, %v4738
      %v4740 = vpop.f32.mrb[0].mxu0
      %4741 = vmatprep.mubr.bf16.mxu0 0
      %4742 = vmatmul.mubr.bf16.gmra.mrb[0].mxu0 %v4634
      %v4743 = vpop.f32.mrb[0].mxu0
      %v4744 = vadd.f32 0.0, %v4743
      %v4745 = vpop.f32.mrb[0].mxu0
      %v4746 = vpop.f32.mrb[0].mxu0
      %v4747 = vadd.f32 0.0, %v4746
      %v4748 = vpop.f32.mrb[0].mxu0
      %4749 = vmatprep.mubr.bf16.mxu0 0
      %4750 = vmatmul.mubr.bf16.gmra.mrb[0].mxu0 %v4637
      %v4751 = vpop.f32.mrb[0].mxu0
      %v4752 = vadd.f32 0.0, %v4751
      %v4753 = vpop.f32.mrb[0].mxu0
      %v4754 = vpop.f32.mrb[0].mxu0
      %v4755 = vadd.f32 0.0, %v4754
      %v4756 = vpop.f32.mrb[0].mxu0
      %4757 = vmatprep.mubr.bf16.mxu0 0
      %4758 = vmatmul.mubr.bf16.gmra.mrb[0].mxu0 %v4640
      %v4759 = vpop.f32.mrb[0].mxu0
      %v4760 = vadd.f32 0.0, %v4759
      %v4761 = vpop.f32.mrb[0].mxu0
      %v4762 = vpop.f32.mrb[0].mxu0
      %v4763 = vadd.f32 0.0, %v4762
      %v4764 = vpop.f32.mrb[0].mxu0
      %4765 = vmatprep.mubr.bf16.mxu0 0
      %4766 = vmatmul.mubr.bf16.gmra.mrb[0].mxu0 %v4643
      %v4767 = vpop.f32.mrb[0].mxu0
      %v4768 = vadd.f32 0.0, %v4767
      %v4769 = vpop.f32.mrb[0].mxu0
      %v4770 = vpop.f32.mrb[0].mxu0
      %v4771 = vadd.f32 0.0, %v4770
      %v4772 = vpop.f32.mrb[0].mxu0
      %4773 = vmatprep.mubr.bf16.mxu0 0
      %4774 = vmatmul.mubr.bf16.gmra.mrb[0].mxu0 %v4646
      %v4775 = vpop.f32.mrb[0].mxu0
      %v4776 = vadd.f32 0.0, %v4775
      %v4777 = vpop.f32.mrb[0].mxu0
      %v4778 = vpop.f32.mrb[0].mxu0
      %v4779 = vadd.f32 0.0, %v4778
      %v4780 = vpop.f32.mrb[0].mxu0
      %4781 = vmatprep.mubr.bf16.mxu0 0
      %4782 = vmatmul.mubr.bf16.gmra.mrb[0].mxu0 %v4649
      %v4783 = vpop.f32.mrb[0].mxu0
      %v4784 = vadd.f32 0.0, %v4783
      %v4785 = vpop.f32.mrb[0].mxu0
      %v4786 = vpop.f32.mrb[0].mxu0
      %v4787 = vadd.f32 0.0, %v4786
      %v4788 = vpop.f32.mrb[0].mxu0
      %4789 = vmatprep.mubr.bf16.mxu0 0
      %4790 = vmatmul.mubr.bf16.gmra.mrb[0].mxu0 %v4652
      %v4791 = vpop.f32.mrb[0].mxu0
      %v4792 = vadd.f32 0.0, %v4791
      %v4793 = vpop.f32.mrb[0].mxu0
      %v4794 = vpop.f32.mrb[0].mxu0
      %v4795 = vadd.f32 0.0, %v4794
      %v4796 = vpop.f32.mrb[0].mxu0
      %4797 = vmatprep.mubr.bf16.mxu0 0
      %4798 = vmatmul.mubr.bf16.gmra.mrb[0].mxu0 %v4655
      %v4799 = vpop.f32.mrb[0].mxu0
      %v4800 = vadd.f32 0.0, %v4799
      %v4801 = vpop.f32.mrb[0].mxu0
      %v4802 = vpop.f32.mrb[0].mxu0
      %v4803 = vadd.f32 0.0, %v4802
      %v4804 = vpop.f32.mrb[0].mxu0
      %4805 = vmatprep.mubr.bf16.mxu0 0
      %4806 = vmatmul.mubr.bf16.gmra.mrb[0].mxu0 %v4658
      %v4807 = vpop.f32.mrb[0].mxu0
      %v4808 = vadd.f32 0.0, %v4807
      %v4809 = vpop.f32.mrb[0].mxu0
      %v4810 = vpop.f32.mrb[0].mxu0
      %v4811 = vadd.f32 0.0, %v4810
      %v4812 = vpop.f32.mrb[0].mxu0
      %4813 = vmatprep.mubr.bf16.mxu0 0
      %4814 = vmatmul.mubr.bf16.gmra.mrb[0].mxu0 %v4661
      %v4815 = vpop.f32.mrb[0].mxu0
      %v4816 = vadd.f32 0.0, %v4815
      %v4817 = vpop.f32.mrb[0].mxu0
      %v4818 = vpop.f32.mrb[0].mxu0
      %v4819 = vadd.f32 0.0, %v4818
      %v4820 = vpop.f32.mrb[0].mxu0
      %4821 = vmatprep.mubr.bf16.mxu0 0
      %4822 = vmatmul.mubr.bf16.gmra.mrb[0].mxu0 %v4664
      %v4823 = vpop.f32.mrb[0].mxu0
      %v4824 = vadd.f32 0.0, %v4823
      %v4825 = vpop.f32.mrb[0].mxu0
      %v4826 = vpop.f32.mrb[0].mxu0
      %v4827 = vadd.f32 0.0, %v4826
      %v4828 = vpop.f32.mrb[0].mxu0
      %4829 = vdwg.mxu0
      %v4830 = vmax.f32 %v4704, 0.0
      %v4831 = vmax.f32 %v4707, 0.0
      %v4832 = vmax.f32 %v4712, 0.0
      %v4833 = vmax.f32 %v4715, 0.0
      %v4834 = vmax.f32 %v4720, 0.0
      %v4835 = vmax.f32 %v4723, 0.0
      %v4836 = vmax.f32 %v4728, 0.0
      %v4837 = vmax.f32 %v4731, 0.0
      %v4838 = vmax.f32 %v4736, 0.0
      %v4839 = vmax.f32 %v4739, 0.0
      %v4840 = vmax.f32 %v4744, 0.0
      %v4841 = vmax.f32 %v4747, 0.0
      %v4842 = vmax.f32 %v4752, 0.0
      %v4843 = vmax.f32 %v4755, 0.0
      %v4844 = vmax.f32 %v4760, 0.0
      %v4845 = vmax.f32 %v4763, 0.0
      %v4846 = vmax.f32 %v4768, 0.0
      %v4847 = vmax.f32 %v4771, 0.0
      %v4848 = vmax.f32 %v4776, 0.0
      %v4849 = vmax.f32 %v4779, 0.0
      %v4850 = vmax.f32 %v4784, 0.0
      %v4851 = vmax.f32 %v4787, 0.0
      %v4852 = vmax.f32 %v4792, 0.0
      %v4853 = vmax.f32 %v4795, 0.0
      %v4854 = vmax.f32 %v4800, 0.0
      %v4855 = vmax.f32 %v4803, 0.0
      %v4856 = vmax.f32 %v4808, 0.0
      %v4857 = vmax.f32 %v4811, 0.0
      %v4858 = vmax.f32 %v4816, 0.0
      %v4859 = vmax.f32 %v4819, 0.0
      %v4860 = vmax.f32 %v4824, 0.0
      %v4861 = vmax.f32 %v4827, 0.0
      %s4862 = scalar_lea.vmem [#allocation3], 24
      %4863 = vst.msk [vmem:[%s4862 + $0x1] sm:$0xff] %vm337, %v4830
      %4864 = vst.msk [vmem:[%s4862 + $0x9] sm:$0xff] %vm337, %v4831
      %4865 = vst.msk [vmem:[%s4862 + $0x19] sm:$0xff] %vm337, %v4832
      %4866 = vst.msk [vmem:[%s4862 + $0x21] sm:$0xff] %vm337, %v4833
      %4867 = vst.msk [vmem:[%s4862 + $0x31] sm:$0xff] %vm337, %v4834
      %4868 = vst.msk [vmem:[%s4862 + $0x39] sm:$0xff] %vm337, %v4835
      %4869 = vst.msk [vmem:[%s4862 + $0x49] sm:$0xff] %vm337, %v4836
      %4870 = vst.msk [vmem:[%s4862 + $0x51] sm:$0xff] %vm337, %v4837
      %4871 = vst.msk [vmem:[%s4862 + $0x61] sm:$0xff] %vm337, %v4838
      %4872 = vst.msk [vmem:[%s4862 + $0x69] sm:$0xff] %vm337, %v4839
      %4873 = vst.msk [vmem:[%s4862 + $0x79] sm:$0xff] %vm337, %v4840
      %4874 = vst.msk [vmem:[%s4862 + $0x81] sm:$0xff] %vm337, %v4841
      %4875 = vst.msk [vmem:[%s4862 + $0x91] sm:$0xff] %vm337, %v4842
      %4876 = vst.msk [vmem:[%s4862 + $0x99] sm:$0xff] %vm337, %v4843
      %4877 = vst.msk [vmem:[%s4862 + $0xa9] sm:$0xff] %vm337, %v4844
      %4878 = vst.msk [vmem:[%s4862 + $0xb1] sm:$0xff] %vm337, %v4845
      %4879 = vst.msk [vmem:[%s4862 + $0xc1] sm:$0xff] %vm337, %v4846
      %4880 = vst.msk [vmem:[%s4862 + $0xc9] sm:$0xff] %vm337, %v4847
      %4881 = vst.msk [vmem:[%s4862 + $0xd9] sm:$0xff] %vm337, %v4848
      %4882 = vst.msk [vmem:[%s4862 + $0xe1] sm:$0xff] %vm337, %v4849
      %4883 = vst.msk [vmem:[%s4862 + $0xf1] sm:$0xff] %vm337, %v4850
      %4884 = vst.msk [vmem:[%s4862 + $0xf9] sm:$0xff] %vm337, %v4851
      %4885 = vst.msk [vmem:[%s4862 + $0x109] sm:$0xff] %vm337, %v4852
      %4886 = vst.msk [vmem:[%s4862 + $0x111] sm:$0xff] %vm337, %v4853
      %4887 = vst.msk [vmem:[%s4862 + $0x121] sm:$0xff] %vm337, %v4854
      %4888 = vst.msk [vmem:[%s4862 + $0x129] sm:$0xff] %vm337, %v4855
      %4889 = vst.msk [vmem:[%s4862 + $0x139] sm:$0xff] %vm337, %v4856
      %4890 = vst.msk [vmem:[%s4862 + $0x141] sm:$0xff] %vm337, %v4857
      %4891 = vst.msk [vmem:[%s4862 + $0x151] sm:$0xff] %vm337, %v4858
      %4892 = vst.msk [vmem:[%s4862 + $0x159] sm:$0xff] %vm337, %v4859
      %4893 = vst.msk [vmem:[%s4862 + $0x169] sm:$0xff] %vm337, %v4860
      %4894 = vst.msk [vmem:[%s4862 + $0x171] sm:$0xff] %vm337, %v4861
      %v4895 = vld [vmem:[%s4] sm:$0xf]
      %v4896 = vld [vmem:[%s4 + $0x4] sm:$0xf]
      %v4897 = vld [vmem:[%s4 + $0x8] sm:$0xf]
      %v4898 = vld [vmem:[%s4 + $0xc] sm:$0xf]
      %v4899 = vld [vmem:[%s4 + $0x10] sm:$0xf]
      %v4900 = vld [vmem:[%s4 + $0x14] sm:$0xf]
      %v4901 = vld [vmem:[%s4 + $0x18] sm:$0x7]
      %v4902 = vld [vmem:[#allocation3] sm:$0xff]
      %v4903 = vld [vmem:[#allocation3 + $0x8] sm:$0xff]
      %v4904 = vld [vmem:[#allocation3 + $0x18] sm:$0xff]
      %v4905 = vld [vmem:[#allocation3 + $0x20] sm:$0xff]
      %v4906 = vld [vmem:[#allocation3 + $0x30] sm:$0xff]
      %v4907 = vld [vmem:[#allocation3 + $0x38] sm:$0xff]
      %v4908 = vld [vmem:[#allocation3 + $0x48] sm:$0xff]
      %v4909 = vld [vmem:[#allocation3 + $0x50] sm:$0xff]
      %v4910 = vld [vmem:[#allocation3 + $0x60] sm:$0xff]
      %v4911 = vld [vmem:[#allocation3 + $0x68] sm:$0xff]
      %v4912 = vld [vmem:[#allocation3 + $0x78] sm:$0xff]
      %v4913 = vld [vmem:[#allocation3 + $0x80] sm:$0xff]
      %v4914 = vld [vmem:[#allocation3 + $0x90] sm:$0xff]
      %v4915 = vld [vmem:[#allocation3 + $0x98] sm:$0xff]
      %v4916 = vld [vmem:[#allocation3 + $0xa8] sm:$0xff]
      %v4917 = vld [vmem:[#allocation3 + $0xb0] sm:$0xff]
      %v4918 = vld [vmem:[#allocation3 + $0xc0] sm:$0xff]
      %v4919 = vld [vmem:[#allocation3 + $0xc8] sm:$0xff]
      %v4920 = vld [vmem:[#allocation3 + $0xd8] sm:$0xff]
      %v4921 = vld [vmem:[#allocation3 + $0xe0] sm:$0xff]
      %v4922 = vld [vmem:[#allocation3 + $0xf0] sm:$0xff]
      %v4923 = vld [vmem:[#allocation3 + $0xf8] sm:$0xff]
      %v4924 = vld [vmem:[#allocation3 + $0x108] sm:$0xff]
      %v4925 = vld [vmem:[#allocation3 + $0x110] sm:$0xff]
      %v4926 = vld [vmem:[#allocation3 + $0x120] sm:$0xff]
      %v4927 = vld [vmem:[#allocation3 + $0x128] sm:$0xff]
      %v4928 = vld [vmem:[#allocation3 + $0x138] sm:$0xff]
      %v4929 = vld [vmem:[#allocation3 + $0x140] sm:$0xff]
      %v4930 = vld [vmem:[#allocation3 + $0x150] sm:$0xff]
      %v4931 = vld [vmem:[#allocation3 + $0x158] sm:$0xff]
      %v4932 = vld [vmem:[#allocation3 + $0x168] sm:$0xff]
      %v4933 = vld [vmem:[#allocation3 + $0x170] sm:$0xff]
      %v4934 = vld [vmem:[#allocation3 + $0x1] sm:$0xff]
      %v4935 = vld [vmem:[#allocation3 + $0x9] sm:$0xff]
      %v4936 = vld [vmem:[#allocation3 + $0x19] sm:$0xff]
      %v4937 = vld [vmem:[#allocation3 + $0x21] sm:$0xff]
      %v4938 = vld [vmem:[#allocation3 + $0x31] sm:$0xff]
      %v4939 = vld [vmem:[#allocation3 + $0x39] sm:$0xff]
      %v4940 = vld [vmem:[#allocation3 + $0x49] sm:$0xff]
      %v4941 = vld [vmem:[#allocation3 + $0x51] sm:$0xff]
      %v4942 = vld [vmem:[#allocation3 + $0x61] sm:$0xff]
      %v4943 = vld [vmem:[#allocation3 + $0x69] sm:$0xff]
      %v4944 = vld [vmem:[#allocation3 + $0x79] sm:$0xff]
      %v4945 = vld [vmem:[#allocation3 + $0x81] sm:$0xff]
      %v4946 = vld [vmem:[#allocation3 + $0x91] sm:$0xff]
      %v4947 = vld [vmem:[#allocation3 + $0x99] sm:$0xff]
      %v4948 = vld [vmem:[#allocation3 + $0xa9] sm:$0xff]
      %v4949 = vld [vmem:[#allocation3 + $0xb1] sm:$0xff]
      %v4950 = vld [vmem:[#allocation3 + $0xc1] sm:$0xff]
      %v4951 = vld [vmem:[#allocation3 + $0xc9] sm:$0xff]
      %v4952 = vld [vmem:[#allocation3 + $0xd9] sm:$0xff]
      %v4953 = vld [vmem:[#allocation3 + $0xe1] sm:$0xff]
      %v4954 = vld [vmem:[#allocation3 + $0xf1] sm:$0xff]
      %v4955 = vld [vmem:[#allocation3 + $0xf9] sm:$0xff]
      %v4956 = vld [vmem:[#allocation3 + $0x109] sm:$0xff]
      %v4957 = vld [vmem:[#allocation3 + $0x111] sm:$0xff]
      %v4958 = vld [vmem:[#allocation3 + $0x121] sm:$0xff]
      %v4959 = vld [vmem:[#allocation3 + $0x129] sm:$0xff]
      %v4960 = vld [vmem:[#allocation3 + $0x139] sm:$0xff]
      %v4961 = vld [vmem:[#allocation3 + $0x141] sm:$0xff]
      %v4962 = vld [vmem:[#allocation3 + $0x151] sm:$0xff]
      %v4963 = vld [vmem:[#allocation3 + $0x159] sm:$0xff]
      %v4964 = vld [vmem:[#allocation3 + $0x169] sm:$0xff]
      %v4965 = vld [vmem:[#allocation3 + $0x171] sm:$0xff]
      %v4966 = vld [vmem:[#allocation3 + $0x2] sm:$0xff]
      %v4967 = vld [vmem:[#allocation3 + $0xa] sm:$0xff]
      %v4968 = vld [vmem:[#allocation3 + $0x1a] sm:$0xff]
      %v4969 = vld [vmem:[#allocation3 + $0x22] sm:$0xff]
      %v4970 = vld [vmem:[#allocation3 + $0x32] sm:$0xff]
      %v4971 = vld [vmem:[#allocation3 + $0x3a] sm:$0xff]
      %v4972 = vld [vmem:[#allocation3 + $0x4a] sm:$0xff]
      %v4973 = vld [vmem:[#allocation3 + $0x52] sm:$0xff]
      %v4974 = vld [vmem:[#allocation3 + $0x62] sm:$0xff]
      %v4975 = vld [vmem:[#allocation3 + $0x6a] sm:$0xff]
      %v4976 = vld [vmem:[#allocation3 + $0x7a] sm:$0xff]
      %v4977 = vld [vmem:[#allocation3 + $0x82] sm:$0xff]
      %v4978 = vld [vmem:[#allocation3 + $0x92] sm:$0xff]
      %v4979 = vld [vmem:[#allocation3 + $0x9a] sm:$0xff]
      %v4980 = vld [vmem:[#allocation3 + $0xaa] sm:$0xff]
      %v4981 = vld [vmem:[#allocation3 + $0xb2] sm:$0xff]
      %v4982 = vld [vmem:[#allocation3 + $0xc2] sm:$0xff]
      %v4983 = vld [vmem:[#allocation3 + $0xca] sm:$0xff]
      %v4984 = vld [vmem:[#allocation3 + $0xda] sm:$0xff]
      %v4985 = vld [vmem:[#allocation3 + $0xe2] sm:$0xff]
      %v4986 = vld [vmem:[#allocation3 + $0xf2] sm:$0xff]
      %v4987 = vld [vmem:[#allocation3 + $0xfa] sm:$0xff]
      %v4988 = vld [vmem:[#allocation3 + $0x10a] sm:$0xff]
      %v4989 = vld [vmem:[#allocation3 + $0x112] sm:$0xff]
      %v4990 = vld [vmem:[#allocation3 + $0x122] sm:$0xff]
      %v4991 = vld [vmem:[#allocation3 + $0x12a] sm:$0xff]
      %v4992 = vld [vmem:[#allocation3 + $0x13a] sm:$0xff]
      %v4993 = vld [vmem:[#allocation3 + $0x142] sm:$0xff]
      %v4994 = vld [vmem:[#allocation3 + $0x152] sm:$0xff]
      %v4995 = vld [vmem:[#allocation3 + $0x15a] sm:$0xff]
      %v4996 = vld [vmem:[#allocation3 + $0x16a] sm:$0xff]
      %v4997 = vld [vmem:[#allocation3 + $0x172] sm:$0xff]
      %v4998 = vld [vmem:[%s4862] sm:$0xff]
      %v4999 = vld [vmem:[%s4862 + $0x8] sm:$0xff]
      %v5000 = vld [vmem:[%s4862 + $0x18] sm:$0xff]
      %v5001 = vld [vmem:[%s4862 + $0x20] sm:$0xff]
      %v5002 = vld [vmem:[%s4862 + $0x30] sm:$0xff]
      %v5003 = vld [vmem:[%s4862 + $0x38] sm:$0xff]
      %v5004 = vld [vmem:[%s4862 + $0x48] sm:$0xff]
      %v5005 = vld [vmem:[%s4862 + $0x50] sm:$0xff]
      %v5006 = vld [vmem:[%s4862 + $0x60] sm:$0xff]
      %v5007 = vld [vmem:[%s4862 + $0x68] sm:$0xff]
      %v5008 = vld [vmem:[%s4862 + $0x78] sm:$0xff]
      %v5009 = vld [vmem:[%s4862 + $0x80] sm:$0xff]
      %v5010 = vld [vmem:[%s4862 + $0x90] sm:$0xff]
      %v5011 = vld [vmem:[%s4862 + $0x98] sm:$0xff]
      %v5012 = vld [vmem:[%s4862 + $0xa8] sm:$0xff]
      %v5013 = vld [vmem:[%s4862 + $0xb0] sm:$0xff]
      %v5014 = vld [vmem:[%s4862 + $0xc0] sm:$0xff]
      %v5015 = vld [vmem:[%s4862 + $0xc8] sm:$0xff]
      %v5016 = vld [vmem:[%s4862 + $0xd8] sm:$0xff]
      %v5017 = vld [vmem:[%s4862 + $0xe0] sm:$0xff]
      %v5018 = vld [vmem:[%s4862 + $0xf0] sm:$0xff]
      %v5019 = vld [vmem:[%s4862 + $0xf8] sm:$0xff]
      %v5020 = vld [vmem:[%s4862 + $0x108] sm:$0xff]
      %v5021 = vld [vmem:[%s4862 + $0x110] sm:$0xff]
      %v5022 = vld [vmem:[%s4862 + $0x120] sm:$0xff]
      %v5023 = vld [vmem:[%s4862 + $0x128] sm:$0xff]
      %v5024 = vld [vmem:[%s4862 + $0x138] sm:$0xff]
      %v5025 = vld [vmem:[%s4862 + $0x140] sm:$0xff]
      %v5026 = vld [vmem:[%s4862 + $0x150] sm:$0xff]
      %v5027 = vld [vmem:[%s4862 + $0x158] sm:$0xff]
      %v5028 = vld [vmem:[%s4862 + $0x168] sm:$0xff]
      %v5029 = vld [vmem:[%s4862 + $0x170] sm:$0xff]
      %v5030 = vld [vmem:[%s4862 + $0x1] sm:$0xff]
      %v5031 = vld [vmem:[%s4862 + $0x9] sm:$0xff]
      %v5032 = vld [vmem:[%s4862 + $0x19] sm:$0xff]
      %v5033 = vld [vmem:[%s4862 + $0x21] sm:$0xff]
      %v5034 = vld [vmem:[%s4862 + $0x31] sm:$0xff]
      %v5035 = vld [vmem:[%s4862 + $0x39] sm:$0xff]
      %v5036 = vld [vmem:[%s4862 + $0x49] sm:$0xff]
      %v5037 = vld [vmem:[%s4862 + $0x51] sm:$0xff]
      %v5038 = vld [vmem:[%s4862 + $0x61] sm:$0xff]
      %v5039 = vld [vmem:[%s4862 + $0x69] sm:$0xff]
      %v5040 = vld [vmem:[%s4862 + $0x79] sm:$0xff]
      %v5041 = vld [vmem:[%s4862 + $0x81] sm:$0xff]
      %v5042 = vld [vmem:[%s4862 + $0x91] sm:$0xff]
      %v5043 = vld [vmem:[%s4862 + $0x99] sm:$0xff]
      %v5044 = vld [vmem:[%s4862 + $0xa9] sm:$0xff]
      %v5045 = vld [vmem:[%s4862 + $0xb1] sm:$0xff]
      %v5046 = vld [vmem:[%s4862 + $0xc1] sm:$0xff]
      %v5047 = vld [vmem:[%s4862 + $0xc9] sm:$0xff]
      %v5048 = vld [vmem:[%s4862 + $0xd9] sm:$0xff]
      %v5049 = vld [vmem:[%s4862 + $0xe1] sm:$0xff]
      %v5050 = vld [vmem:[%s4862 + $0xf1] sm:$0xff]
      %v5051 = vld [vmem:[%s4862 + $0xf9] sm:$0xff]
      %v5052 = vld [vmem:[%s4862 + $0x109] sm:$0xff]
      %v5053 = vld [vmem:[%s4862 + $0x111] sm:$0xff]
      %v5054 = vld [vmem:[%s4862 + $0x121] sm:$0xff]
      %v5055 = vld [vmem:[%s4862 + $0x129] sm:$0xff]
      %v5056 = vld [vmem:[%s4862 + $0x139] sm:$0xff]
      %v5057 = vld [vmem:[%s4862 + $0x141] sm:$0xff]
      %v5058 = vld [vmem:[%s4862 + $0x151] sm:$0xff]
      %v5059 = vld [vmem:[%s4862 + $0x159] sm:$0xff]
      %v5060 = vld [vmem:[%s4862 + $0x169] sm:$0xff]
      %v5061 = vld [vmem:[%s4862 + $0x171] sm:$0xff]
      %v5062 = vld [vmem:[%s4862 + $0x2] sm:$0xff]
      %v5063 = vld [vmem:[%s4862 + $0xa] sm:$0xff]
      %v5064 = vld [vmem:[%s4862 + $0x1a] sm:$0xff]
      %v5065 = vld [vmem:[%s4862 + $0x22] sm:$0xff]
      %v5066 = vld [vmem:[%s4862 + $0x32] sm:$0xff]
      %v5067 = vld [vmem:[%s4862 + $0x3a] sm:$0xff]
      %v5068 = vld [vmem:[%s4862 + $0x4a] sm:$0xff]
      %v5069 = vld [vmem:[%s4862 + $0x52] sm:$0xff]
      %v5070 = vld [vmem:[%s4862 + $0x62] sm:$0xff]
      %v5071 = vld [vmem:[%s4862 + $0x6a] sm:$0xff]
      %v5072 = vld [vmem:[%s4862 + $0x7a] sm:$0xff]
      %v5073 = vld [vmem:[%s4862 + $0x82] sm:$0xff]
      %v5074 = vld [vmem:[%s4862 + $0x92] sm:$0xff]
      %v5075 = vld [vmem:[%s4862 + $0x9a] sm:$0xff]
      %v5076 = vld [vmem:[%s4862 + $0xaa] sm:$0xff]
      %v5077 = vld [vmem:[%s4862 + $0xb2] sm:$0xff]
      %v5078 = vld [vmem:[%s4862 + $0xc2] sm:$0xff]
      %v5079 = vld [vmem:[%s4862 + $0xca] sm:$0xff]
      %v5080 = vld [vmem:[%s4862 + $0xda] sm:$0xff]
      %v5081 = vld [vmem:[%s4862 + $0xe2] sm:$0xff]
      %v5082 = vld [vmem:[%s4862 + $0xf2] sm:$0xff]
      %v5083 = vld [vmem:[%s4862 + $0xfa] sm:$0xff]
      %v5084 = vld [vmem:[%s4862 + $0x10a] sm:$0xff]
      %v5085 = vld [vmem:[%s4862 + $0x112] sm:$0xff]
      %v5086 = vld [vmem:[%s4862 + $0x122] sm:$0xff]
      %v5087 = vld [vmem:[%s4862 + $0x12a] sm:$0xff]
      %v5088 = vld [vmem:[%s4862 + $0x13a] sm:$0xff]
      %v5089 = vld [vmem:[%s4862 + $0x142] sm:$0xff]
      %v5090 = vld [vmem:[%s4862 + $0x152] sm:$0xff]
      %v5091 = vld [vmem:[%s4862 + $0x15a] sm:$0xff]
      %v5092 = vld [vmem:[%s4862 + $0x16a] sm:$0xff]
      %v5093 = vld [vmem:[%s4862 + $0x172] sm:$0xff]
      %s5094 = scalar_lea.vmem [#allocation3], 48
      %v5095 = vld [vmem:[%s5094] sm:$0xff]
      %v5096 = vld [vmem:[%s5094 + $0x8] sm:$0xff]
      %v5097 = vld [vmem:[%s5094 + $0x18] sm:$0xff]
      %v5098 = vld [vmem:[%s5094 + $0x20] sm:$0xff]
      %v5099 = vld [vmem:[%s5094 + $0x30] sm:$0xff]
      %v5100 = vld [vmem:[%s5094 + $0x38] sm:$0xff]
      %v5101 = vld [vmem:[%s5094 + $0x48] sm:$0xff]
      %v5102 = vld [vmem:[%s5094 + $0x50] sm:$0xff]
      %v5103 = vld [vmem:[%s5094 + $0x60] sm:$0xff]
      %v5104 = vld [vmem:[%s5094 + $0x68] sm:$0xff]
      %v5105 = vld [vmem:[%s5094 + $0x78] sm:$0xff]
      %v5106 = vld [vmem:[%s5094 + $0x80] sm:$0xff]
      %v5107 = vld [vmem:[%s5094 + $0x90] sm:$0xff]
      %v5108 = vld [vmem:[%s5094 + $0x98] sm:$0xff]
      %v5109 = vld [vmem:[%s5094 + $0xa8] sm:$0xff]
      %v5110 = vld [vmem:[%s5094 + $0xb0] sm:$0xff]
      %v5111 = vld [vmem:[%s5094 + $0xc0] sm:$0xff]
      %v5112 = vld [vmem:[%s5094 + $0xc8] sm:$0xff]
      %v5113 = vld [vmem:[%s5094 + $0xd8] sm:$0xff]
      %v5114 = vld [vmem:[%s5094 + $0xe0] sm:$0xff]
      %v5115 = vld [vmem:[%s5094 + $0xf0] sm:$0xff]
      %v5116 = vld [vmem:[%s5094 + $0xf8] sm:$0xff]
      %v5117 = vld [vmem:[%s5094 + $0x108] sm:$0xff]
      %v5118 = vld [vmem:[%s5094 + $0x110] sm:$0xff]
      %v5119 = vld [vmem:[%s5094 + $0x120] sm:$0xff]
      %v5120 = vld [vmem:[%s5094 + $0x128] sm:$0xff]
      %v5121 = vld [vmem:[%s5094 + $0x138] sm:$0xff]
      %v5122 = vld [vmem:[%s5094 + $0x140] sm:$0xff]
      %v5123 = vld [vmem:[%s5094 + $0x150] sm:$0xff]
      %v5124 = vld [vmem:[%s5094 + $0x158] sm:$0xff]
      %v5125 = vld [vmem:[%s5094 + $0x168] sm:$0xff]
      %v5126 = vld [vmem:[%s5094 + $0x170] sm:$0xff]
      %v5127 = vld [vmem:[%s5094 + $0x1] sm:$0xff]
      %v5128 = vld [vmem:[%s5094 + $0x9] sm:$0xff]
      %v5129 = vld [vmem:[%s5094 + $0x19] sm:$0xff]
      %v5130 = vld [vmem:[%s5094 + $0x21] sm:$0xff]
      %v5131 = vld [vmem:[%s5094 + $0x31] sm:$0xff]
      %v5132 = vld [vmem:[%s5094 + $0x39] sm:$0xff]
      %v5133 = vld [vmem:[%s5094 + $0x49] sm:$0xff]
      %v5134 = vld [vmem:[%s5094 + $0x51] sm:$0xff]
      %v5135 = vld [vmem:[%s5094 + $0x61] sm:$0xff]
      %v5136 = vld [vmem:[%s5094 + $0x69] sm:$0xff]
      %v5137 = vld [vmem:[%s5094 + $0x79] sm:$0xff]
      %v5138 = vld [vmem:[%s5094 + $0x81] sm:$0xff]
      %v5139 = vld [vmem:[%s5094 + $0x91] sm:$0xff]
      %v5140 = vld [vmem:[%s5094 + $0x99] sm:$0xff]
      %v5141 = vld [vmem:[%s5094 + $0xa9] sm:$0xff]
      %v5142 = vld [vmem:[%s5094 + $0xb1] sm:$0xff]
      %v5143 = vld [vmem:[%s5094 + $0xc1] sm:$0xff]
      %v5144 = vld [vmem:[%s5094 + $0xc9] sm:$0xff]
      %v5145 = vld [vmem:[%s5094 + $0xd9] sm:$0xff]
      %v5146 = vld [vmem:[%s5094 + $0xe1] sm:$0xff]
      %v5147 = vld [vmem:[%s5094 + $0xf1] sm:$0xff]
      %v5148 = vld [vmem:[%s5094 + $0xf9] sm:$0xff]
      %v5149 = vld [vmem:[%s5094 + $0x109] sm:$0xff]
      %v5150 = vld [vmem:[%s5094 + $0x111] sm:$0xff]
      %v5151 = vld [vmem:[%s5094 + $0x121] sm:$0xff]
      %v5152 = vld [vmem:[%s5094 + $0x129] sm:$0xff]
      %v5153 = vld [vmem:[%s5094 + $0x139] sm:$0xff]
      %v5154 = vld [vmem:[%s5094 + $0x141] sm:$0xff]
      %v5155 = vld [vmem:[%s5094 + $0x151] sm:$0xff]
      %v5156 = vld [vmem:[%s5094 + $0x159] sm:$0xff]
      %v5157 = vld [vmem:[%s5094 + $0x169] sm:$0xff]
      %v5158 = vld [vmem:[%s5094 + $0x171] sm:$0xff]
      %v5159 = vld [vmem:[%s5094 + $0x2] sm:$0xff]
      %v5160 = vld [vmem:[%s5094 + $0xa] sm:$0xff]
      %v5161 = vld [vmem:[%s5094 + $0x1a] sm:$0xff]
      %v5162 = vld [vmem:[%s5094 + $0x22] sm:$0xff]
      %v5163 = vld [vmem:[%s5094 + $0x32] sm:$0xff]
      %v5164 = vld [vmem:[%s5094 + $0x3a] sm:$0xff]
      %v5165 = vld [vmem:[%s5094 + $0x4a] sm:$0xff]
      %v5166 = vld [vmem:[%s5094 + $0x52] sm:$0xff]
      %v5167 = vld [vmem:[%s5094 + $0x62] sm:$0xff]
      %v5168 = vld [vmem:[%s5094 + $0x6a] sm:$0xff]
      %v5169 = vld [vmem:[%s5094 + $0x7a] sm:$0xff]
      %v5170 = vld [vmem:[%s5094 + $0x82] sm:$0xff]
      %v5171 = vld [vmem:[%s5094 + $0x92] sm:$0xff]
      %v5172 = vld [vmem:[%s5094 + $0x9a] sm:$0xff]
      %v5173 = vld [vmem:[%s5094 + $0xaa] sm:$0xff]
      %v5174 = vld [vmem:[%s5094 + $0xb2] sm:$0xff]
      %v5175 = vld [vmem:[%s5094 + $0xc2] sm:$0xff]
      %v5176 = vld [vmem:[%s5094 + $0xca] sm:$0xff]
      %v5177 = vld [vmem:[%s5094 + $0xda] sm:$0xff]
      %v5178 = vld [vmem:[%s5094 + $0xe2] sm:$0xff]
      %v5179 = vld [vmem:[%s5094 + $0xf2] sm:$0xff]
      %v5180 = vld [vmem:[%s5094 + $0xfa] sm:$0xff]
      %v5181 = vld [vmem:[%s5094 + $0x10a] sm:$0xff]
      %v5182 = vld [vmem:[%s5094 + $0x112] sm:$0xff]
      %v5183 = vld [vmem:[%s5094 + $0x122] sm:$0xff]
      %v5184 = vld [vmem:[%s5094 + $0x12a] sm:$0xff]
      %v5185 = vld [vmem:[%s5094 + $0x13a] sm:$0xff]
      %v5186 = vld [vmem:[%s5094 + $0x142] sm:$0xff]
      %v5187 = vld [vmem:[%s5094 + $0x152] sm:$0xff]
      %v5188 = vld [vmem:[%s5094 + $0x15a] sm:$0xff]
      %v5189 = vld [vmem:[%s5094 + $0x16a] sm:$0xff]
      %v5190 = vld [vmem:[%s5094 + $0x172] sm:$0xff]
      %5223 = vrot.lane.b32.xlu0 %v4934, 6
      %v5224 = vpop.permute.xlu0 %5223
      %5225 = vrot.lane.b32.xlu0 %v4935, 6
      %v5226 = vpop.permute.xlu0 %5225
      %5227 = vrot.lane.b32.xlu0 %v4936, 6
      %v5228 = vpop.permute.xlu0 %5227
      %5229 = vrot.lane.b32.xlu0 %v4937, 6
      %v5230 = vpop.permute.xlu0 %5229
      %5231 = vrot.lane.b32.xlu0 %v4938, 6
      %v5232 = vpop.permute.xlu0 %5231
      %5233 = vrot.lane.b32.xlu0 %v4939, 6
      %v5234 = vpop.permute.xlu0 %5233
      %5235 = vrot.lane.b32.xlu0 %v4940, 6
      %v5236 = vpop.permute.xlu0 %5235
      %5237 = vrot.lane.b32.xlu0 %v4941, 6
      %v5238 = vpop.permute.xlu0 %5237
      %5239 = vrot.lane.b32.xlu0 %v4942, 6
      %v5240 = vpop.permute.xlu0 %5239
      %5241 = vrot.lane.b32.xlu0 %v4943, 6
      %v5242 = vpop.permute.xlu0 %5241
      %5243 = vrot.lane.b32.xlu0 %v4944, 6
      %v5244 = vpop.permute.xlu0 %5243
      %5245 = vrot.lane.b32.xlu0 %v4945, 6
      %v5246 = vpop.permute.xlu0 %5245
      %5247 = vrot.lane.b32.xlu0 %v4946, 6
      %v5248 = vpop.permute.xlu0 %5247
      %5249 = vrot.lane.b32.xlu0 %v4947, 6
      %v5250 = vpop.permute.xlu0 %5249
      %5251 = vrot.lane.b32.xlu0 %v4948, 6
      %v5252 = vpop.permute.xlu0 %5251
      %5253 = vrot.lane.b32.xlu0 %v4949, 6
      %v5254 = vpop.permute.xlu0 %5253
      %5255 = vrot.lane.b32.xlu0 %v4950, 6
      %v5256 = vpop.permute.xlu0 %5255
      %5257 = vrot.lane.b32.xlu0 %v4951, 6
      %v5258 = vpop.permute.xlu0 %5257
      %5259 = vrot.lane.b32.xlu0 %v4952, 6
      %v5260 = vpop.permute.xlu0 %5259
      %5261 = vrot.lane.b32.xlu0 %v4953, 6
      %v5262 = vpop.permute.xlu0 %5261
      %5263 = vrot.lane.b32.xlu0 %v4954, 6
      %v5264 = vpop.permute.xlu0 %5263
      %5265 = vrot.lane.b32.xlu0 %v4955, 6
      %v5266 = vpop.permute.xlu0 %5265
      %5267 = vrot.lane.b32.xlu0 %v4956, 6
      %v5268 = vpop.permute.xlu0 %5267
      %5269 = vrot.lane.b32.xlu0 %v4957, 6
      %v5270 = vpop.permute.xlu0 %5269
      %5271 = vrot.lane.b32.xlu0 %v4958, 6
      %v5272 = vpop.permute.xlu0 %5271
      %5273 = vrot.lane.b32.xlu0 %v4959, 6
      %v5274 = vpop.permute.xlu0 %5273
      %5275 = vrot.lane.b32.xlu0 %v4960, 6
      %v5276 = vpop.permute.xlu0 %5275
      %5277 = vrot.lane.b32.xlu0 %v4961, 6
      %v5278 = vpop.permute.xlu0 %5277
      %5279 = vrot.lane.b32.xlu0 %v4962, 6
      %v5280 = vpop.permute.xlu0 %5279
      %5281 = vrot.lane.b32.xlu0 %v4963, 6
      %v5282 = vpop.permute.xlu0 %5281
      %5283 = vrot.lane.b32.xlu0 %v4964, 6
      %v5284 = vpop.permute.xlu0 %5283
      %5285 = vrot.lane.b32.xlu0 %v4965, 6
      %v5286 = vpop.permute.xlu0 %5285
      %5351 = vrot.lane.b32.xlu0 %v4966, 12
      %v5352 = vpop.permute.xlu0 %5351
      %5353 = vrot.lane.b32.xlu0 %v4967, 12
      %v5354 = vpop.permute.xlu0 %5353
      %5355 = vrot.lane.b32.xlu0 %v4968, 12
      %v5356 = vpop.permute.xlu0 %5355
      %5357 = vrot.lane.b32.xlu0 %v4969, 12
      %v5358 = vpop.permute.xlu0 %5357
      %5359 = vrot.lane.b32.xlu0 %v4970, 12
      %v5360 = vpop.permute.xlu0 %5359
      %5361 = vrot.lane.b32.xlu0 %v4971, 12
      %v5362 = vpop.permute.xlu0 %5361
      %5363 = vrot.lane.b32.xlu0 %v4972, 12
      %v5364 = vpop.permute.xlu0 %5363
      %5365 = vrot.lane.b32.xlu0 %v4973, 12
      %v5366 = vpop.permute.xlu0 %5365
      %5367 = vrot.lane.b32.xlu0 %v4974, 12
      %v5368 = vpop.permute.xlu0 %5367
      %5369 = vrot.lane.b32.xlu0 %v4975, 12
      %v5370 = vpop.permute.xlu0 %5369
      %5371 = vrot.lane.b32.xlu0 %v4976, 12
      %v5372 = vpop.permute.xlu0 %5371
      %5373 = vrot.lane.b32.xlu0 %v4977, 12
      %v5374 = vpop.permute.xlu0 %5373
      %5375 = vrot.lane.b32.xlu0 %v4978, 12
      %v5376 = vpop.permute.xlu0 %5375
      %5377 = vrot.lane.b32.xlu0 %v4979, 12
      %v5378 = vpop.permute.xlu0 %5377
      %5379 = vrot.lane.b32.xlu0 %v4980, 12
      %v5380 = vpop.permute.xlu0 %5379
      %5381 = vrot.lane.b32.xlu0 %v4981, 12
      %v5382 = vpop.permute.xlu0 %5381
      %5383 = vrot.lane.b32.xlu0 %v4982, 12
      %v5384 = vpop.permute.xlu0 %5383
      %5385 = vrot.lane.b32.xlu0 %v4983, 12
      %v5386 = vpop.permute.xlu0 %5385
      %5387 = vrot.lane.b32.xlu0 %v4984, 12
      %v5388 = vpop.permute.xlu0 %5387
      %5389 = vrot.lane.b32.xlu0 %v4985, 12
      %v5390 = vpop.permute.xlu0 %5389
      %5391 = vrot.lane.b32.xlu0 %v4986, 12
      %v5392 = vpop.permute.xlu0 %5391
      %5393 = vrot.lane.b32.xlu0 %v4987, 12
      %v5394 = vpop.permute.xlu0 %5393
      %5395 = vrot.lane.b32.xlu0 %v4988, 12
      %v5396 = vpop.permute.xlu0 %5395
      %5397 = vrot.lane.b32.xlu0 %v4989, 12
      %v5398 = vpop.permute.xlu0 %5397
      %5399 = vrot.lane.b32.xlu0 %v4990, 12
      %v5400 = vpop.permute.xlu0 %5399
      %5401 = vrot.lane.b32.xlu0 %v4991, 12
      %v5402 = vpop.permute.xlu0 %5401
      %5403 = vrot.lane.b32.xlu0 %v4992, 12
      %v5404 = vpop.permute.xlu0 %5403
      %5405 = vrot.lane.b32.xlu0 %v4993, 12
      %v5406 = vpop.permute.xlu0 %5405
      %5407 = vrot.lane.b32.xlu0 %v4994, 12
      %v5408 = vpop.permute.xlu0 %5407
      %5409 = vrot.lane.b32.xlu0 %v4995, 12
      %v5410 = vpop.permute.xlu0 %5409
      %5411 = vrot.lane.b32.xlu0 %v4996, 12
      %v5412 = vpop.permute.xlu0 %5411
      %5413 = vrot.lane.b32.xlu0 %v4997, 12
      %v5414 = vpop.permute.xlu0 %5413
      %5479 = vrot.lane.b32.xlu0 %v4998, 18
      %v5480 = vpop.permute.xlu0 %5479
      %5481 = vrot.lane.b32.xlu0 %v4999, 18
      %v5482 = vpop.permute.xlu0 %5481
      %5483 = vrot.lane.b32.xlu0 %v5000, 18
      %v5484 = vpop.permute.xlu0 %5483
      %5485 = vrot.lane.b32.xlu0 %v5001, 18
      %v5486 = vpop.permute.xlu0 %5485
      %5487 = vrot.lane.b32.xlu0 %v5002, 18
      %v5488 = vpop.permute.xlu0 %5487
      %5489 = vrot.lane.b32.xlu0 %v5003, 18
      %v5490 = vpop.permute.xlu0 %5489
      %5491 = vrot.lane.b32.xlu0 %v5004, 18
      %v5492 = vpop.permute.xlu0 %5491
      %5493 = vrot.lane.b32.xlu0 %v5005, 18
      %v5494 = vpop.permute.xlu0 %5493
      %5495 = vrot.lane.b32.xlu0 %v5006, 18
      %v5496 = vpop.permute.xlu0 %5495
      %5497 = vrot.lane.b32.xlu0 %v5007, 18
      %v5498 = vpop.permute.xlu0 %5497
      %5499 = vrot.lane.b32.xlu0 %v5008, 18
      %v5500 = vpop.permute.xlu0 %5499
      %5501 = vrot.lane.b32.xlu0 %v5009, 18
      %v5502 = vpop.permute.xlu0 %5501
      %5503 = vrot.lane.b32.xlu0 %v5010, 18
      %v5504 = vpop.permute.xlu0 %5503
      %5505 = vrot.lane.b32.xlu0 %v5011, 18
      %v5506 = vpop.permute.xlu0 %5505
      %5507 = vrot.lane.b32.xlu0 %v5012, 18
      %v5508 = vpop.permute.xlu0 %5507
      %5509 = vrot.lane.b32.xlu0 %v5013, 18
      %v5510 = vpop.permute.xlu0 %5509
      %5511 = vrot.lane.b32.xlu0 %v5014, 18
      %v5512 = vpop.permute.xlu0 %5511
      %5513 = vrot.lane.b32.xlu0 %v5015, 18
      %v5514 = vpop.permute.xlu0 %5513
      %5515 = vrot.lane.b32.xlu0 %v5016, 18
      %v5516 = vpop.permute.xlu0 %5515
      %5517 = vrot.lane.b32.xlu0 %v5017, 18
      %v5518 = vpop.permute.xlu0 %5517
      %5519 = vrot.lane.b32.xlu0 %v5018, 18
      %v5520 = vpop.permute.xlu0 %5519
      %5521 = vrot.lane.b32.xlu0 %v5019, 18
      %v5522 = vpop.permute.xlu0 %5521
      %5523 = vrot.lane.b32.xlu0 %v5020, 18
      %v5524 = vpop.permute.xlu0 %5523
      %5525 = vrot.lane.b32.xlu0 %v5021, 18
      %v5526 = vpop.permute.xlu0 %5525
      %5527 = vrot.lane.b32.xlu0 %v5022, 18
      %v5528 = vpop.permute.xlu0 %5527
      %5529 = vrot.lane.b32.xlu0 %v5023, 18
      %v5530 = vpop.permute.xlu0 %5529
      %5531 = vrot.lane.b32.xlu0 %v5024, 18
      %v5532 = vpop.permute.xlu0 %5531
      %5533 = vrot.lane.b32.xlu0 %v5025, 18
      %v5534 = vpop.permute.xlu0 %5533
      %5535 = vrot.lane.b32.xlu0 %v5026, 18
      %v5536 = vpop.permute.xlu0 %5535
      %5537 = vrot.lane.b32.xlu0 %v5027, 18
      %v5538 = vpop.permute.xlu0 %5537
      %5539 = vrot.lane.b32.xlu0 %v5028, 18
      %v5540 = vpop.permute.xlu0 %5539
      %5541 = vrot.lane.b32.xlu0 %v5029, 18
      %v5542 = vpop.permute.xlu0 %5541
      %5607 = vrot.lane.b32.xlu0 %v5030, 24
      %v5608 = vpop.permute.xlu0 %5607
      %5609 = vrot.lane.b32.xlu0 %v5031, 24
      %v5610 = vpop.permute.xlu0 %5609
      %5611 = vrot.lane.b32.xlu0 %v5032, 24
      %v5612 = vpop.permute.xlu0 %5611
      %5613 = vrot.lane.b32.xlu0 %v5033, 24
      %v5614 = vpop.permute.xlu0 %5613
      %5615 = vrot.lane.b32.xlu0 %v5034, 24
      %v5616 = vpop.permute.xlu0 %5615
      %5617 = vrot.lane.b32.xlu0 %v5035, 24
      %v5618 = vpop.permute.xlu0 %5617
      %5619 = vrot.lane.b32.xlu0 %v5036, 24
      %v5620 = vpop.permute.xlu0 %5619
      %5621 = vrot.lane.b32.xlu0 %v5037, 24
      %v5622 = vpop.permute.xlu0 %5621
      %5623 = vrot.lane.b32.xlu0 %v5038, 24
      %v5624 = vpop.permute.xlu0 %5623
      %5625 = vrot.lane.b32.xlu0 %v5039, 24
      %v5626 = vpop.permute.xlu0 %5625
      %5627 = vrot.lane.b32.xlu0 %v5040, 24
      %v5628 = vpop.permute.xlu0 %5627
      %5629 = vrot.lane.b32.xlu0 %v5041, 24
      %v5630 = vpop.permute.xlu0 %5629
      %5631 = vrot.lane.b32.xlu0 %v5042, 24
      %v5632 = vpop.permute.xlu0 %5631
      %5633 = vrot.lane.b32.xlu0 %v5043, 24
      %v5634 = vpop.permute.xlu0 %5633
      %5635 = vrot.lane.b32.xlu0 %v5044, 24
      %v5636 = vpop.permute.xlu0 %5635
      %5637 = vrot.lane.b32.xlu0 %v5045, 24
      %v5638 = vpop.permute.xlu0 %5637
      %5639 = vrot.lane.b32.xlu0 %v5046, 24
      %v5640 = vpop.permute.xlu0 %5639
      %5641 = vrot.lane.b32.xlu0 %v5047, 24
      %v5642 = vpop.permute.xlu0 %5641
      %5643 = vrot.lane.b32.xlu0 %v5048, 24
      %v5644 = vpop.permute.xlu0 %5643
      %5645 = vrot.lane.b32.xlu0 %v5049, 24
      %v5646 = vpop.permute.xlu0 %5645
      %5647 = vrot.lane.b32.xlu0 %v5050, 24
      %v5648 = vpop.permute.xlu0 %5647
      %5649 = vrot.lane.b32.xlu0 %v5051, 24
      %v5650 = vpop.permute.xlu0 %5649
      %5651 = vrot.lane.b32.xlu0 %v5052, 24
      %v5652 = vpop.permute.xlu0 %5651
      %5653 = vrot.lane.b32.xlu0 %v5053, 24
      %v5654 = vpop.permute.xlu0 %5653
      %5655 = vrot.lane.b32.xlu0 %v5054, 24
      %v5656 = vpop.permute.xlu0 %5655
      %5657 = vrot.lane.b32.xlu0 %v5055, 24
      %v5658 = vpop.permute.xlu0 %5657
      %5659 = vrot.lane.b32.xlu0 %v5056, 24
      %v5660 = vpop.permute.xlu0 %5659
      %5661 = vrot.lane.b32.xlu0 %v5057, 24
      %v5662 = vpop.permute.xlu0 %5661
      %5663 = vrot.lane.b32.xlu0 %v5058, 24
      %v5664 = vpop.permute.xlu0 %5663
      %5665 = vrot.lane.b32.xlu0 %v5059, 24
      %v5666 = vpop.permute.xlu0 %5665
      %5667 = vrot.lane.b32.xlu0 %v5060, 24
      %v5668 = vpop.permute.xlu0 %5667
      %5669 = vrot.lane.b32.xlu0 %v5061, 24
      %v5670 = vpop.permute.xlu0 %5669
      %5735 = vrot.lane.b32.xlu0 %v5062, 30
      %v5736 = vpop.permute.xlu0 %5735
      %5737 = vrot.lane.b32.xlu0 %v5063, 30
      %v5738 = vpop.permute.xlu0 %5737
      %5739 = vrot.lane.b32.xlu0 %v5064, 30
      %v5740 = vpop.permute.xlu0 %5739
      %5741 = vrot.lane.b32.xlu0 %v5065, 30
      %v5742 = vpop.permute.xlu0 %5741
      %5743 = vrot.lane.b32.xlu0 %v5066, 30
      %v5744 = vpop.permute.xlu0 %5743
      %5745 = vrot.lane.b32.xlu0 %v5067, 30
      %v5746 = vpop.permute.xlu0 %5745
      %5747 = vrot.lane.b32.xlu0 %v5068, 30
      %v5748 = vpop.permute.xlu0 %5747
      %5749 = vrot.lane.b32.xlu0 %v5069, 30
      %v5750 = vpop.permute.xlu0 %5749
      %5751 = vrot.lane.b32.xlu0 %v5070, 30
      %v5752 = vpop.permute.xlu0 %5751
      %5753 = vrot.lane.b32.xlu0 %v5071, 30
      %v5754 = vpop.permute.xlu0 %5753
      %5755 = vrot.lane.b32.xlu0 %v5072, 30
      %v5756 = vpop.permute.xlu0 %5755
      %5757 = vrot.lane.b32.xlu0 %v5073, 30
      %v5758 = vpop.permute.xlu0 %5757
      %5759 = vrot.lane.b32.xlu0 %v5074, 30
      %v5760 = vpop.permute.xlu0 %5759
      %5761 = vrot.lane.b32.xlu0 %v5075, 30
      %v5762 = vpop.permute.xlu0 %5761
      %5763 = vrot.lane.b32.xlu0 %v5076, 30
      %v5764 = vpop.permute.xlu0 %5763
      %5765 = vrot.lane.b32.xlu0 %v5077, 30
      %v5766 = vpop.permute.xlu0 %5765
      %5767 = vrot.lane.b32.xlu0 %v5078, 30
      %v5768 = vpop.permute.xlu0 %5767
      %5769 = vrot.lane.b32.xlu0 %v5079, 30
      %v5770 = vpop.permute.xlu0 %5769
      %5771 = vrot.lane.b32.xlu0 %v5080, 30
      %v5772 = vpop.permute.xlu0 %5771
      %5773 = vrot.lane.b32.xlu0 %v5081, 30
      %v5774 = vpop.permute.xlu0 %5773
      %5775 = vrot.lane.b32.xlu0 %v5082, 30
      %v5776 = vpop.permute.xlu0 %5775
      %5777 = vrot.lane.b32.xlu0 %v5083, 30
      %v5778 = vpop.permute.xlu0 %5777
      %5779 = vrot.lane.b32.xlu0 %v5084, 30
      %v5780 = vpop.permute.xlu0 %5779
      %5781 = vrot.lane.b32.xlu0 %v5085, 30
      %v5782 = vpop.permute.xlu0 %5781
      %5783 = vrot.lane.b32.xlu0 %v5086, 30
      %v5784 = vpop.permute.xlu0 %5783
      %5785 = vrot.lane.b32.xlu0 %v5087, 30
      %v5786 = vpop.permute.xlu0 %5785
      %5787 = vrot.lane.b32.xlu0 %v5088, 30
      %v5788 = vpop.permute.xlu0 %5787
      %5789 = vrot.lane.b32.xlu0 %v5089, 30
      %v5790 = vpop.permute.xlu0 %5789
      %5791 = vrot.lane.b32.xlu0 %v5090, 30
      %v5792 = vpop.permute.xlu0 %5791
      %5793 = vrot.lane.b32.xlu0 %v5091, 30
      %v5794 = vpop.permute.xlu0 %5793
      %5795 = vrot.lane.b32.xlu0 %v5092, 30
      %v5796 = vpop.permute.xlu0 %5795
      %5797 = vrot.lane.b32.xlu0 %v5093, 30
      %v5798 = vpop.permute.xlu0 %5797
      %5863 = vrot.lane.b32.xlu0 %v5095, 36
      %v5864 = vpop.permute.xlu0 %5863
      %5865 = vrot.lane.b32.xlu0 %v5096, 36
      %v5866 = vpop.permute.xlu0 %5865
      %5867 = vrot.lane.b32.xlu0 %v5097, 36
      %v5868 = vpop.permute.xlu0 %5867
      %5869 = vrot.lane.b32.xlu0 %v5098, 36
      %v5870 = vpop.permute.xlu0 %5869
      %5871 = vrot.lane.b32.xlu0 %v5099, 36
      %v5872 = vpop.permute.xlu0 %5871
      %5873 = vrot.lane.b32.xlu0 %v5100, 36
      %v5874 = vpop.permute.xlu0 %5873
      %5875 = vrot.lane.b32.xlu0 %v5101, 36
      %v5876 = vpop.permute.xlu0 %5875
      %5877 = vrot.lane.b32.xlu0 %v5102, 36
      %v5878 = vpop.permute.xlu0 %5877
      %5879 = vrot.lane.b32.xlu0 %v5103, 36
      %v5880 = vpop.permute.xlu0 %5879
      %5881 = vrot.lane.b32.xlu0 %v5104, 36
      %v5882 = vpop.permute.xlu0 %5881
      %5883 = vrot.lane.b32.xlu0 %v5105, 36
      %v5884 = vpop.permute.xlu0 %5883
      %5885 = vrot.lane.b32.xlu0 %v5106, 36
      %v5886 = vpop.permute.xlu0 %5885
      %5887 = vrot.lane.b32.xlu0 %v5107, 36
      %v5888 = vpop.permute.xlu0 %5887
      %5889 = vrot.lane.b32.xlu0 %v5108, 36
      %v5890 = vpop.permute.xlu0 %5889
      %5891 = vrot.lane.b32.xlu0 %v5109, 36
      %v5892 = vpop.permute.xlu0 %5891
      %5893 = vrot.lane.b32.xlu0 %v5110, 36
      %v5894 = vpop.permute.xlu0 %5893
      %5895 = vrot.lane.b32.xlu0 %v5111, 36
      %v5896 = vpop.permute.xlu0 %5895
      %5897 = vrot.lane.b32.xlu0 %v5112, 36
      %v5898 = vpop.permute.xlu0 %5897
      %5899 = vrot.lane.b32.xlu0 %v5113, 36
      %v5900 = vpop.permute.xlu0 %5899
      %5901 = vrot.lane.b32.xlu0 %v5114, 36
      %v5902 = vpop.permute.xlu0 %5901
      %5903 = vrot.lane.b32.xlu0 %v5115, 36
      %v5904 = vpop.permute.xlu0 %5903
      %5905 = vrot.lane.b32.xlu0 %v5116, 36
      %v5906 = vpop.permute.xlu0 %5905
      %5907 = vrot.lane.b32.xlu0 %v5117, 36
      %v5908 = vpop.permute.xlu0 %5907
      %5909 = vrot.lane.b32.xlu0 %v5118, 36
      %v5910 = vpop.permute.xlu0 %5909
      %5911 = vrot.lane.b32.xlu0 %v5119, 36
      %v5912 = vpop.permute.xlu0 %5911
      %5913 = vrot.lane.b32.xlu0 %v5120, 36
      %v5914 = vpop.permute.xlu0 %5913
      %5915 = vrot.lane.b32.xlu0 %v5121, 36
      %v5916 = vpop.permute.xlu0 %5915
      %5917 = vrot.lane.b32.xlu0 %v5122, 36
      %v5918 = vpop.permute.xlu0 %5917
      %5919 = vrot.lane.b32.xlu0 %v5123, 36
      %v5920 = vpop.permute.xlu0 %5919
      %5921 = vrot.lane.b32.xlu0 %v5124, 36
      %v5922 = vpop.permute.xlu0 %5921
      %5923 = vrot.lane.b32.xlu0 %v5125, 36
      %v5924 = vpop.permute.xlu0 %5923
      %5925 = vrot.lane.b32.xlu0 %v5126, 36
      %v5926 = vpop.permute.xlu0 %5925
      %5991 = vrot.lane.b32.xlu0 %v5127, 42
      %v5992 = vpop.permute.xlu0 %5991
      %5993 = vrot.lane.b32.xlu0 %v5128, 42
      %v5994 = vpop.permute.xlu0 %5993
      %5995 = vrot.lane.b32.xlu0 %v5129, 42
      %v5996 = vpop.permute.xlu0 %5995
      %5997 = vrot.lane.b32.xlu0 %v5130, 42
      %v5998 = vpop.permute.xlu0 %5997
      %5999 = vrot.lane.b32.xlu0 %v5131, 42
      %v6000 = vpop.permute.xlu0 %5999
      %6001 = vrot.lane.b32.xlu0 %v5132, 42
      %v6002 = vpop.permute.xlu0 %6001
      %6003 = vrot.lane.b32.xlu0 %v5133, 42
      %v6004 = vpop.permute.xlu0 %6003
      %6005 = vrot.lane.b32.xlu0 %v5134, 42
      %v6006 = vpop.permute.xlu0 %6005
      %6007 = vrot.lane.b32.xlu0 %v5135, 42
      %v6008 = vpop.permute.xlu0 %6007
      %6009 = vrot.lane.b32.xlu0 %v5136, 42
      %v6010 = vpop.permute.xlu0 %6009
      %6011 = vrot.lane.b32.xlu0 %v5137, 42
      %v6012 = vpop.permute.xlu0 %6011
      %6013 = vrot.lane.b32.xlu0 %v5138, 42
      %v6014 = vpop.permute.xlu0 %6013
      %6015 = vrot.lane.b32.xlu0 %v5139, 42
      %v6016 = vpop.permute.xlu0 %6015
      %6017 = vrot.lane.b32.xlu0 %v5140, 42
      %v6018 = vpop.permute.xlu0 %6017
      %6019 = vrot.lane.b32.xlu0 %v5141, 42
      %v6020 = vpop.permute.xlu0 %6019
      %6021 = vrot.lane.b32.xlu0 %v5142, 42
      %v6022 = vpop.permute.xlu0 %6021
      %6023 = vrot.lane.b32.xlu0 %v5143, 42
      %v6024 = vpop.permute.xlu0 %6023
      %6025 = vrot.lane.b32.xlu0 %v5144, 42
      %v6026 = vpop.permute.xlu0 %6025
      %6027 = vrot.lane.b32.xlu0 %v5145, 42
      %v6028 = vpop.permute.xlu0 %6027
      %6029 = vrot.lane.b32.xlu0 %v5146, 42
      %v6030 = vpop.permute.xlu0 %6029
      %6031 = vrot.lane.b32.xlu0 %v5147, 42
      %v6032 = vpop.permute.xlu0 %6031
      %6033 = vrot.lane.b32.xlu0 %v5148, 42
      %v6034 = vpop.permute.xlu0 %6033
      %6035 = vrot.lane.b32.xlu0 %v5149, 42
      %v6036 = vpop.permute.xlu0 %6035
      %6037 = vrot.lane.b32.xlu0 %v5150, 42
      %v6038 = vpop.permute.xlu0 %6037
      %6039 = vrot.lane.b32.xlu0 %v5151, 42
      %v6040 = vpop.permute.xlu0 %6039
      %6041 = vrot.lane.b32.xlu0 %v5152, 42
      %v6042 = vpop.permute.xlu0 %6041
      %6043 = vrot.lane.b32.xlu0 %v5153, 42
      %v6044 = vpop.permute.xlu0 %6043
      %6045 = vrot.lane.b32.xlu0 %v5154, 42
      %v6046 = vpop.permute.xlu0 %6045
      %6047 = vrot.lane.b32.xlu0 %v5155, 42
      %v6048 = vpop.permute.xlu0 %6047
      %6049 = vrot.lane.b32.xlu0 %v5156, 42
      %v6050 = vpop.permute.xlu0 %6049
      %6051 = vrot.lane.b32.xlu0 %v5157, 42
      %v6052 = vpop.permute.xlu0 %6051
      %6053 = vrot.lane.b32.xlu0 %v5158, 42
      %v6054 = vpop.permute.xlu0 %6053
      %6119 = vrot.lane.b32.xlu0 %v5159, 48
      %v6120 = vpop.permute.xlu0 %6119
      %6121 = vrot.lane.b32.xlu0 %v5160, 48
      %v6122 = vpop.permute.xlu0 %6121
      %6123 = vrot.lane.b32.xlu0 %v5161, 48
      %v6124 = vpop.permute.xlu0 %6123
      %6125 = vrot.lane.b32.xlu0 %v5162, 48
      %v6126 = vpop.permute.xlu0 %6125
      %6127 = vrot.lane.b32.xlu0 %v5163, 48
      %v6128 = vpop.permute.xlu0 %6127
      %6129 = vrot.lane.b32.xlu0 %v5164, 48
      %v6130 = vpop.permute.xlu0 %6129
      %6131 = vrot.lane.b32.xlu0 %v5165, 48
      %v6132 = vpop.permute.xlu0 %6131
      %6133 = vrot.lane.b32.xlu0 %v5166, 48
      %v6134 = vpop.permute.xlu0 %6133
      %6135 = vrot.lane.b32.xlu0 %v5167, 48
      %v6136 = vpop.permute.xlu0 %6135
      %6137 = vrot.lane.b32.xlu0 %v5168, 48
      %v6138 = vpop.permute.xlu0 %6137
      %6139 = vrot.lane.b32.xlu0 %v5169, 48
      %v6140 = vpop.permute.xlu0 %6139
      %6141 = vrot.lane.b32.xlu0 %v5170, 48
      %v6142 = vpop.permute.xlu0 %6141
      %6143 = vrot.lane.b32.xlu0 %v5171, 48
      %v6144 = vpop.permute.xlu0 %6143
      %6145 = vrot.lane.b32.xlu0 %v5172, 48
      %v6146 = vpop.permute.xlu0 %6145
      %6147 = vrot.lane.b32.xlu0 %v5173, 48
      %v6148 = vpop.permute.xlu0 %6147
      %6149 = vrot.lane.b32.xlu0 %v5174, 48
      %v6150 = vpop.permute.xlu0 %6149
      %6151 = vrot.lane.b32.xlu0 %v5175, 48
      %v6152 = vpop.permute.xlu0 %6151
      %6153 = vrot.lane.b32.xlu0 %v5176, 48
      %v6154 = vpop.permute.xlu0 %6153
      %6155 = vrot.lane.b32.xlu0 %v5177, 48
      %v6156 = vpop.permute.xlu0 %6155
      %6157 = vrot.lane.b32.xlu0 %v5178, 48
      %v6158 = vpop.permute.xlu0 %6157
      %6159 = vrot.lane.b32.xlu0 %v5179, 48
      %v6160 = vpop.permute.xlu0 %6159
      %6161 = vrot.lane.b32.xlu0 %v5180, 48
      %v6162 = vpop.permute.xlu0 %6161
      %6163 = vrot.lane.b32.xlu0 %v5181, 48
      %v6164 = vpop.permute.xlu0 %6163
      %6165 = vrot.lane.b32.xlu0 %v5182, 48
      %v6166 = vpop.permute.xlu0 %6165
      %6167 = vrot.lane.b32.xlu0 %v5183, 48
      %v6168 = vpop.permute.xlu0 %6167
      %6169 = vrot.lane.b32.xlu0 %v5184, 48
      %v6170 = vpop.permute.xlu0 %6169
      %6171 = vrot.lane.b32.xlu0 %v5185, 48
      %v6172 = vpop.permute.xlu0 %6171
      %6173 = vrot.lane.b32.xlu0 %v5186, 48
      %v6174 = vpop.permute.xlu0 %6173
      %6175 = vrot.lane.b32.xlu0 %v5187, 48
      %v6176 = vpop.permute.xlu0 %6175
      %6177 = vrot.lane.b32.xlu0 %v5188, 48
      %v6178 = vpop.permute.xlu0 %6177
      %6179 = vrot.lane.b32.xlu0 %v5189, 48
      %v6180 = vpop.permute.xlu0 %6179
      %6181 = vrot.lane.b32.xlu0 %v5190, 48
      %v6182 = vpop.permute.xlu0 %6181
      %v6215 = vsel %vm337, %v4902, %v5224
      %v6216 = vsel %vm337, %v4903, %v5226
      %v6217 = vsel %vm337, %v4904, %v5228
      %v6218 = vsel %vm337, %v4905, %v5230
      %v6219 = vsel %vm337, %v4906, %v5232
      %v6220 = vsel %vm337, %v4907, %v5234
      %v6221 = vsel %vm337, %v4908, %v5236
      %v6222 = vsel %vm337, %v4909, %v5238
      %v6223 = vsel %vm337, %v4910, %v5240
      %v6224 = vsel %vm337, %v4911, %v5242
      %v6225 = vsel %vm337, %v4912, %v5244
      %v6226 = vsel %vm337, %v4913, %v5246
      %v6227 = vsel %vm337, %v4914, %v5248
      %v6228 = vsel %vm337, %v4915, %v5250
      %v6229 = vsel %vm337, %v4916, %v5252
      %v6230 = vsel %vm337, %v4917, %v5254
      %v6231 = vsel %vm337, %v4918, %v5256
      %v6232 = vsel %vm337, %v4919, %v5258
      %v6233 = vsel %vm337, %v4920, %v5260
      %v6234 = vsel %vm337, %v4921, %v5262
      %v6235 = vsel %vm337, %v4922, %v5264
      %v6236 = vsel %vm337, %v4923, %v5266
      %v6237 = vsel %vm337, %v4924, %v5268
      %v6238 = vsel %vm337, %v4925, %v5270
      %v6239 = vsel %vm337, %v4926, %v5272
      %v6240 = vsel %vm337, %v4927, %v5274
      %v6241 = vsel %vm337, %v4928, %v5276
      %v6242 = vsel %vm337, %v4929, %v5278
      %v6243 = vsel %vm337, %v4930, %v5280
      %v6244 = vsel %vm337, %v4931, %v5282
      %v6245 = vsel %vm337, %v4932, %v5284
      %v6246 = vsel %vm337, %v4933, %v5286
      %v6247 = vsel %vm383, %v6215, %v5352
      %v6248 = vsel %vm383, %v6216, %v5354
      %v6249 = vsel %vm383, %v6217, %v5356
      %v6250 = vsel %vm383, %v6218, %v5358
      %v6251 = vsel %vm383, %v6219, %v5360
      %v6252 = vsel %vm383, %v6220, %v5362
      %v6253 = vsel %vm383, %v6221, %v5364
      %v6254 = vsel %vm383, %v6222, %v5366
      %v6255 = vsel %vm383, %v6223, %v5368
      %v6256 = vsel %vm383, %v6224, %v5370
      %v6257 = vsel %vm383, %v6225, %v5372
      %v6258 = vsel %vm383, %v6226, %v5374
      %v6259 = vsel %vm383, %v6227, %v5376
      %v6260 = vsel %vm383, %v6228, %v5378
      %v6261 = vsel %vm383, %v6229, %v5380
      %v6262 = vsel %vm383, %v6230, %v5382
      %v6263 = vsel %vm383, %v6231, %v5384
      %v6264 = vsel %vm383, %v6232, %v5386
      %v6265 = vsel %vm383, %v6233, %v5388
      %v6266 = vsel %vm383, %v6234, %v5390
      %v6267 = vsel %vm383, %v6235, %v5392
      %v6268 = vsel %vm383, %v6236, %v5394
      %v6269 = vsel %vm383, %v6237, %v5396
      %v6270 = vsel %vm383, %v6238, %v5398
      %v6271 = vsel %vm383, %v6239, %v5400
      %v6272 = vsel %vm383, %v6240, %v5402
      %v6273 = vsel %vm383, %v6241, %v5404
      %v6274 = vsel %vm383, %v6242, %v5406
      %v6275 = vsel %vm383, %v6243, %v5408
      %v6276 = vsel %vm383, %v6244, %v5410
      %v6277 = vsel %vm383, %v6245, %v5412
      %v6278 = vsel %vm383, %v6246, %v5414
      %v6279 = vsel %vm2519, %v6247, %v5480
      %v6280 = vsel %vm2519, %v6248, %v5482
      %v6281 = vsel %vm2519, %v6249, %v5484
      %v6282 = vsel %vm2519, %v6250, %v5486
      %v6283 = vsel %vm2519, %v6251, %v5488
      %v6284 = vsel %vm2519, %v6252, %v5490
      %v6285 = vsel %vm2519, %v6253, %v5492
      %v6286 = vsel %vm2519, %v6254, %v5494
      %v6287 = vsel %vm2519, %v6255, %v5496
      %v6288 = vsel %vm2519, %v6256, %v5498
      %v6289 = vsel %vm2519, %v6257, %v5500
      %v6290 = vsel %vm2519, %v6258, %v5502
      %v6291 = vsel %vm2519, %v6259, %v5504
      %v6292 = vsel %vm2519, %v6260, %v5506
      %v6293 = vsel %vm2519, %v6261, %v5508
      %v6294 = vsel %vm2519, %v6262, %v5510
      %v6295 = vsel %vm2519, %v6263, %v5512
      %v6296 = vsel %vm2519, %v6264, %v5514
      %v6297 = vsel %vm2519, %v6265, %v5516
      %v6298 = vsel %vm2519, %v6266, %v5518
      %v6299 = vsel %vm2519, %v6267, %v5520
      %v6300 = vsel %vm2519, %v6268, %v5522
      %v6301 = vsel %vm2519, %v6269, %v5524
      %v6302 = vsel %vm2519, %v6270, %v5526
      %v6303 = vsel %vm2519, %v6271, %v5528
      %v6304 = vsel %vm2519, %v6272, %v5530
      %v6305 = vsel %vm2519, %v6273, %v5532
      %v6306 = vsel %vm2519, %v6274, %v5534
      %v6307 = vsel %vm2519, %v6275, %v5536
      %v6308 = vsel %vm2519, %v6276, %v5538
      %v6309 = vsel %vm2519, %v6277, %v5540
      %v6310 = vsel %vm2519, %v6278, %v5542
      %vm6311 = vcmask 195584
      %v6312 = vsel %vm6311, %v6279, %v5608
      %v6313 = vsel %vm6311, %v6280, %v5610
      %v6314 = vsel %vm6311, %v6281, %v5612
      %v6315 = vsel %vm6311, %v6282, %v5614
      %v6316 = vsel %vm6311, %v6283, %v5616
      %v6317 = vsel %vm6311, %v6284, %v5618
      %v6318 = vsel %vm6311, %v6285, %v5620
      %v6319 = vsel %vm6311, %v6286, %v5622
      %v6320 = vsel %vm6311, %v6287, %v5624
      %v6321 = vsel %vm6311, %v6288, %v5626
      %v6322 = vsel %vm6311, %v6289, %v5628
      %v6323 = vsel %vm6311, %v6290, %v5630
      %v6324 = vsel %vm6311, %v6291, %v5632
      %v6325 = vsel %vm6311, %v6292, %v5634
      %v6326 = vsel %vm6311, %v6293, %v5636
      %v6327 = vsel %vm6311, %v6294, %v5638
      %v6328 = vsel %vm6311, %v6295, %v5640
      %v6329 = vsel %vm6311, %v6296, %v5642
      %v6330 = vsel %vm6311, %v6297, %v5644
      %v6331 = vsel %vm6311, %v6298, %v5646
      %v6332 = vsel %vm6311, %v6299, %v5648
      %v6333 = vsel %vm6311, %v6300, %v5650
      %v6334 = vsel %vm6311, %v6301, %v5652
      %v6335 = vsel %vm6311, %v6302, %v5654
      %v6336 = vsel %vm6311, %v6303, %v5656
      %v6337 = vsel %vm6311, %v6304, %v5658
      %v6338 = vsel %vm6311, %v6305, %v5660
      %v6339 = vsel %vm6311, %v6306, %v5662
      %v6340 = vsel %vm6311, %v6307, %v5664
      %v6341 = vsel %vm6311, %v6308, %v5666
      %v6342 = vsel %vm6311, %v6309, %v5668
      %v6343 = vsel %vm6311, %v6310, %v5670
      %vm6344 = vcmask 244736
      %v6345 = vsel %vm6344, %v6312, %v5736
      %v6346 = vsel %vm6344, %v6313, %v5738
      %v6347 = vsel %vm6344, %v6314, %v5740
      %v6348 = vsel %vm6344, %v6315, %v5742
      %v6349 = vsel %vm6344, %v6316, %v5744
      %v6350 = vsel %vm6344, %v6317, %v5746
      %v6351 = vsel %vm6344, %v6318, %v5748
      %v6352 = vsel %vm6344, %v6319, %v5750
      %v6353 = vsel %vm6344, %v6320, %v5752
      %v6354 = vsel %vm6344, %v6321, %v5754
      %v6355 = vsel %vm6344, %v6322, %v5756
      %v6356 = vsel %vm6344, %v6323, %v5758
      %v6357 = vsel %vm6344, %v6324, %v5760
      %v6358 = vsel %vm6344, %v6325, %v5762
      %v6359 = vsel %vm6344, %v6326, %v5764
      %v6360 = vsel %vm6344, %v6327, %v5766
      %v6361 = vsel %vm6344, %v6328, %v5768
      %v6362 = vsel %vm6344, %v6329, %v5770
      %v6363 = vsel %vm6344, %v6330, %v5772
      %v6364 = vsel %vm6344, %v6331, %v5774
      %v6365 = vsel %vm6344, %v6332, %v5776
      %v6366 = vsel %vm6344, %v6333, %v5778
      %v6367 = vsel %vm6344, %v6334, %v5780
      %v6368 = vsel %vm6344, %v6335, %v5782
      %v6369 = vsel %vm6344, %v6336, %v5784
      %v6370 = vsel %vm6344, %v6337, %v5786
      %v6371 = vsel %vm6344, %v6338, %v5788
      %v6372 = vsel %vm6344, %v6339, %v5790
      %v6373 = vsel %vm6344, %v6340, %v5792
      %v6374 = vsel %vm6344, %v6341, %v5794
      %v6375 = vsel %vm6344, %v6342, %v5796
      %v6376 = vsel %vm6344, %v6343, %v5798
      %vm6377 = vcmask 293888
      %v6378 = vsel %vm6377, %v6345, %v5864
      %v6379 = vsel %vm6377, %v6346, %v5866
      %v6380 = vsel %vm6377, %v6347, %v5868
      %v6381 = vsel %vm6377, %v6348, %v5870
      %v6382 = vsel %vm6377, %v6349, %v5872
      %v6383 = vsel %vm6377, %v6350, %v5874
      %v6384 = vsel %vm6377, %v6351, %v5876
      %v6385 = vsel %vm6377, %v6352, %v5878
      %v6386 = vsel %vm6377, %v6353, %v5880
      %v6387 = vsel %vm6377, %v6354, %v5882
      %v6388 = vsel %vm6377, %v6355, %v5884
      %v6389 = vsel %vm6377, %v6356, %v5886
      %v6390 = vsel %vm6377, %v6357, %v5888
      %v6391 = vsel %vm6377, %v6358, %v5890
      %v6392 = vsel %vm6377, %v6359, %v5892
      %v6393 = vsel %vm6377, %v6360, %v5894
      %v6394 = vsel %vm6377, %v6361, %v5896
      %v6395 = vsel %vm6377, %v6362, %v5898
      %v6396 = vsel %vm6377, %v6363, %v5900
      %v6397 = vsel %vm6377, %v6364, %v5902
      %v6398 = vsel %vm6377, %v6365, %v5904
      %v6399 = vsel %vm6377, %v6366, %v5906
      %v6400 = vsel %vm6377, %v6367, %v5908
      %v6401 = vsel %vm6377, %v6368, %v5910
      %v6402 = vsel %vm6377, %v6369, %v5912
      %v6403 = vsel %vm6377, %v6370, %v5914
      %v6404 = vsel %vm6377, %v6371, %v5916
      %v6405 = vsel %vm6377, %v6372, %v5918
      %v6406 = vsel %vm6377, %v6373, %v5920
      %v6407 = vsel %vm6377, %v6374, %v5922
      %v6408 = vsel %vm6377, %v6375, %v5924
      %v6409 = vsel %vm6377, %v6376, %v5926
      %vm6410 = vcmask 343040
      %v6411 = vsel %vm6410, %v6378, %v5992
      %v6412 = vsel %vm6410, %v6379, %v5994
      %v6413 = vsel %vm6410, %v6380, %v5996
      %v6414 = vsel %vm6410, %v6381, %v5998
      %v6415 = vsel %vm6410, %v6382, %v6000
      %v6416 = vsel %vm6410, %v6383, %v6002
      %v6417 = vsel %vm6410, %v6384, %v6004
      %v6418 = vsel %vm6410, %v6385, %v6006
      %v6419 = vsel %vm6410, %v6386, %v6008
      %v6420 = vsel %vm6410, %v6387, %v6010
      %v6421 = vsel %vm6410, %v6388, %v6012
      %v6422 = vsel %vm6410, %v6389, %v6014
      %v6423 = vsel %vm6410, %v6390, %v6016
      %v6424 = vsel %vm6410, %v6391, %v6018
      %v6425 = vsel %vm6410, %v6392, %v6020
      %v6426 = vsel %vm6410, %v6393, %v6022
      %v6427 = vsel %vm6410, %v6394, %v6024
      %v6428 = vsel %vm6410, %v6395, %v6026
      %v6429 = vsel %vm6410, %v6396, %v6028
      %v6430 = vsel %vm6410, %v6397, %v6030
      %v6431 = vsel %vm6410, %v6398, %v6032
      %v6432 = vsel %vm6410, %v6399, %v6034
      %v6433 = vsel %vm6410, %v6400, %v6036
      %v6434 = vsel %vm6410, %v6401, %v6038
      %v6435 = vsel %vm6410, %v6402, %v6040
      %v6436 = vsel %vm6410, %v6403, %v6042
      %v6437 = vsel %vm6410, %v6404, %v6044
      %v6438 = vsel %vm6410, %v6405, %v6046
      %v6439 = vsel %vm6410, %v6406, %v6048
      %v6440 = vsel %vm6410, %v6407, %v6050
      %v6441 = vsel %vm6410, %v6408, %v6052
      %v6442 = vsel %vm6410, %v6409, %v6054
      %vm6443 = vcmask 392192
      %v6444 = vsel %vm6443, %v6411, %v6120
      %v6445 = vsel %vm6443, %v6412, %v6122
      %v6446 = vsel %vm6443, %v6413, %v6124
      %v6447 = vsel %vm6443, %v6414, %v6126
      %v6448 = vsel %vm6443, %v6415, %v6128
      %v6449 = vsel %vm6443, %v6416, %v6130
      %v6450 = vsel %vm6443, %v6417, %v6132
      %v6451 = vsel %vm6443, %v6418, %v6134
      %v6452 = vsel %vm6443, %v6419, %v6136
      %v6453 = vsel %vm6443, %v6420, %v6138
      %v6454 = vsel %vm6443, %v6421, %v6140
      %v6455 = vsel %vm6443, %v6422, %v6142
      %v6456 = vsel %vm6443, %v6423, %v6144
      %v6457 = vsel %vm6443, %v6424, %v6146
      %v6458 = vsel %vm6443, %v6425, %v6148
      %v6459 = vsel %vm6443, %v6426, %v6150
      %v6460 = vsel %vm6443, %v6427, %v6152
      %v6461 = vsel %vm6443, %v6428, %v6154
      %v6462 = vsel %vm6443, %v6429, %v6156
      %v6463 = vsel %vm6443, %v6430, %v6158
      %v6464 = vsel %vm6443, %v6431, %v6160
      %v6465 = vsel %vm6443, %v6432, %v6162
      %v6466 = vsel %vm6443, %v6433, %v6164
      %v6467 = vsel %vm6443, %v6434, %v6166
      %v6468 = vsel %vm6443, %v6435, %v6168
      %v6469 = vsel %vm6443, %v6436, %v6170
      %v6470 = vsel %vm6443, %v6437, %v6172
      %v6471 = vsel %vm6443, %v6438, %v6174
      %v6472 = vsel %vm6443, %v6439, %v6176
      %v6473 = vsel %vm6443, %v6440, %v6178
      %v6474 = vsel %vm6443, %v6441, %v6180
      %v6475 = vsel %vm6443, %v6442, %v6182
      %v6476 = vpack.c.bf16 %v6445, %v6444
      %v6477 = vpack.c.bf16 %v6447, %v6446
      %v6478 = vpack.c.bf16 %v6449, %v6448
      %v6479 = vpack.c.bf16 %v6451, %v6450
      %v6480 = vpack.c.bf16 %v6453, %v6452
      %v6481 = vpack.c.bf16 %v6455, %v6454
      %v6482 = vpack.c.bf16 %v6457, %v6456
      %v6483 = vpack.c.bf16 %v6459, %v6458
      %v6484 = vpack.c.bf16 %v6461, %v6460
      %v6485 = vpack.c.bf16 %v6463, %v6462
      %v6486 = vpack.c.bf16 %v6465, %v6464
      %v6487 = vpack.c.bf16 %v6467, %v6466
      %v6488 = vpack.c.bf16 %v6469, %v6468
      %v6489 = vpack.c.bf16 %v6471, %v6470
      %v6490 = vpack.c.bf16 %v6473, %v6472
      %v6491 = vpack.c.bf16 %v6475, %v6474
      %v6499 = vunpack.c.l.b16 %v4895
      %v6500 = vunpack.c.l.b16 %v4896
      %v6501 = vunpack.c.l.b16 %v4897
      %v6502 = vunpack.c.l.b16 %v4898
      %v6503 = vunpack.c.l.b16 %v4899
      %v6504 = vunpack.c.l.b16 %v4900
      %v6505 = vunpack.c.l.b16 %v4901
      %v6506 = vpack.c.b16 %v6500, %v6499
      %v6507 = vpack.c.b16 %v6502, %v6501
      %v6508 = vpack.c.b16 %v6504, %v6503
      %v6509 = vpack.c.b16 %v6505, %v6505
      %vm6513 = vcmask 441344
      %v6515 = vsel %vm6513, %v6476, 0
      %v6518 = vsel %vm6513, %v6477, 0
      %v6521 = vsel %vm6513, %v6478, 0
      %v6524 = vsel %vm6513, %v6479, 0
      %v6527 = vsel %vm6513, %v6480, 0
      %v6530 = vsel %vm6513, %v6481, 0
      %v6533 = vsel %vm6513, %v6482, 0
      %v6536 = vsel %vm6513, %v6483, 0
      %v6539 = vsel %vm6513, %v6484, 0
      %v6542 = vsel %vm6513, %v6485, 0
      %v6545 = vsel %vm6513, %v6486, 0
      %v6548 = vsel %vm6513, %v6487, 0
      %v6551 = vsel %vm6513, %v6488, 0
      %v6554 = vsel %vm6513, %v6489, 0
      %v6557 = vsel %vm6513, %v6490, 0
      %v6560 = vsel %vm6513, %v6491, 0
      %vm6562 = vcmask 1042432
      %v6564 = vsel %vm6562, %v6509, 0
      %6566 = vmatprep.subr.bf16.mxu0 0
      %6567 = vmatpush1.bf16.msra.mxu0 %v6506
      %6568 = vmatprep.subr.bf16.mxu0 0
      %6569 = vmatpush1.bf16.msra.mxu0 %v6507
      %6570 = vmatprep.subr.bf16.mxu0 0
      %6571 = vmatpush1.bf16.msra.mxu0 %v6508
      %6572 = vmatprep.subr.bf16.mxu0 0
      %6573 = vmatpush1.bf16.msra.mxu0 %v6564
      %6574 = vmatprep.subr.bf16.mxu0 0
      %6575 = vmatpush1.bf16.msra.mxu0 0
      %6576 = vmatprep.subr.bf16.mxu0 0
      %6577 = vmatpush1.bf16.msra.mxu0 0
      %6578 = vmatprep.subr.bf16.mxu0 0
      %6579 = vmatpush1.bf16.msra.mxu0 0
      %6580 = vmatprep.subr.bf16.mxu0 0
      %6581 = vmatpush1.bf16.msra.mxu0 0
      %6582 = vmatprep.subr.bf16.mxu0 0
      %6583 = vmatpush1.bf16.msra.mxu0 0
      %6584 = vmatprep.subr.bf16.mxu0 0
      %6585 = vmatpush1.bf16.msra.mxu0 0
      %6586 = vmatprep.subr.bf16.mxu0 0
      %6587 = vmatpush1.bf16.msra.mxu0 0
      %6588 = vmatprep.subr.bf16.mxu0 0
      %6589 = vmatpush1.bf16.msra.mxu0 0
      %6590 = vmatprep.subr.bf16.mxu0 0
      %6591 = vmatpush1.bf16.msra.mxu0 0
      %6592 = vmatprep.subr.bf16.mxu0 0
      %6593 = vmatpush1.bf16.msra.mxu0 0
      %6594 = vmatprep.subr.bf16.mxu0 0
      %6595 = vmatpush1.bf16.msra.mxu0 0
      %6596 = vmatprep.subr.bf16.mxu0 0
      %6597 = vmatpush1.bf16.msra.mxu0 0
      %6598 = vmatprep.mubr.bf16.mxu0 0
      %6599 = vmatmul.mubr.bf16.gmra.mrb[0].mxu0 %v6515
      %v6600 = vpop.f32.mrb[0].mxu0
      %v6601 = vadd.f32 0.0, %v6600
      %v6602 = vpop.f32.mrb[0].mxu0
      %v6603 = vpop.f32.mrb[0].mxu0
      %v6604 = vadd.f32 0.0, %v6603
      %v6605 = vpop.f32.mrb[0].mxu0
      %6606 = vmatprep.mubr.bf16.mxu0 0
      %6607 = vmatmul.mubr.bf16.gmra.mrb[0].mxu0 %v6518
      %v6608 = vpop.f32.mrb[0].mxu0
      %v6609 = vadd.f32 0.0, %v6608
      %v6610 = vpop.f32.mrb[0].mxu0
      %v6611 = vpop.f32.mrb[0].mxu0
      %v6612 = vadd.f32 0.0, %v6611
      %v6613 = vpop.f32.mrb[0].mxu0
      %6614 = vmatprep.mubr.bf16.mxu0 0
      %6615 = vmatmul.mubr.bf16.gmra.mrb[0].mxu0 %v6521
      %v6616 = vpop.f32.mrb[0].mxu0
      %v6617 = vadd.f32 0.0, %v6616
      %v6618 = vpop.f32.mrb[0].mxu0
      %v6619 = vpop.f32.mrb[0].mxu0
      %v6620 = vadd.f32 0.0, %v6619
      %v6621 = vpop.f32.mrb[0].mxu0
      %6622 = vmatprep.mubr.bf16.mxu0 0
      %6623 = vmatmul.mubr.bf16.gmra.mrb[0].mxu0 %v6524
      %v6624 = vpop.f32.mrb[0].mxu0
      %v6625 = vadd.f32 0.0, %v6624
      %v6626 = vpop.f32.mrb[0].mxu0
      %v6627 = vpop.f32.mrb[0].mxu0
      %v6628 = vadd.f32 0.0, %v6627
      %v6629 = vpop.f32.mrb[0].mxu0
      %6630 = vmatprep.mubr.bf16.mxu0 0
      %6631 = vmatmul.mubr.bf16.gmra.mrb[0].mxu0 %v6527
      %v6632 = vpop.f32.mrb[0].mxu0
      %v6633 = vadd.f32 0.0, %v6632
      %v6634 = vpop.f32.mrb[0].mxu0
      %v6635 = vpop.f32.mrb[0].mxu0
      %v6636 = vadd.f32 0.0, %v6635
      %v6637 = vpop.f32.mrb[0].mxu0
      %6638 = vmatprep.mubr.bf16.mxu0 0
      %6639 = vmatmul.mubr.bf16.gmra.mrb[0].mxu0 %v6530
      %v6640 = vpop.f32.mrb[0].mxu0
      %v6641 = vadd.f32 0.0, %v6640
      %v6642 = vpop.f32.mrb[0].mxu0
      %v6643 = vpop.f32.mrb[0].mxu0
      %v6644 = vadd.f32 0.0, %v6643
      %v6645 = vpop.f32.mrb[0].mxu0
      %6646 = vmatprep.mubr.bf16.mxu0 0
      %6647 = vmatmul.mubr.bf16.gmra.mrb[0].mxu0 %v6533
      %v6648 = vpop.f32.mrb[0].mxu0
      %v6649 = vadd.f32 0.0, %v6648
      %v6650 = vpop.f32.mrb[0].mxu0
      %v6651 = vpop.f32.mrb[0].mxu0
      %v6652 = vadd.f32 0.0, %v6651
      %v6653 = vpop.f32.mrb[0].mxu0
      %6654 = vmatprep.mubr.bf16.mxu0 0
      %6655 = vmatmul.mubr.bf16.gmra.mrb[0].mxu0 %v6536
      %v6656 = vpop.f32.mrb[0].mxu0
      %v6657 = vadd.f32 0.0, %v6656
      %v6658 = vpop.f32.mrb[0].mxu0
      %v6659 = vpop.f32.mrb[0].mxu0
      %v6660 = vadd.f32 0.0, %v6659
      %v6661 = vpop.f32.mrb[0].mxu0
      %6662 = vmatprep.mubr.bf16.mxu0 0
      %6663 = vmatmul.mubr.bf16.gmra.mrb[0].mxu0 %v6539
      %v6664 = vpop.f32.mrb[0].mxu0
      %v6665 = vadd.f32 0.0, %v6664
      %v6666 = vpop.f32.mrb[0].mxu0
      %v6667 = vpop.f32.mrb[0].mxu0
      %v6668 = vadd.f32 0.0, %v6667
      %v6669 = vpop.f32.mrb[0].mxu0
      %6670 = vmatprep.mubr.bf16.mxu0 0
      %6671 = vmatmul.mubr.bf16.gmra.mrb[0].mxu0 %v6542
      %v6672 = vpop.f32.mrb[0].mxu0
      %v6673 = vadd.f32 0.0, %v6672
      %v6674 = vpop.f32.mrb[0].mxu0
      %v6675 = vpop.f32.mrb[0].mxu0
      %v6676 = vadd.f32 0.0, %v6675
      %v6677 = vpop.f32.mrb[0].mxu0
      %6678 = vmatprep.mubr.bf16.mxu0 0
      %6679 = vmatmul.mubr.bf16.gmra.mrb[0].mxu0 %v6545
      %v6680 = vpop.f32.mrb[0].mxu0
      %v6681 = vadd.f32 0.0, %v6680
      %v6682 = vpop.f32.mrb[0].mxu0
      %v6683 = vpop.f32.mrb[0].mxu0
      %v6684 = vadd.f32 0.0, %v6683
      %v6685 = vpop.f32.mrb[0].mxu0
      %6686 = vmatprep.mubr.bf16.mxu0 0
      %6687 = vmatmul.mubr.bf16.gmra.mrb[0].mxu0 %v6548
      %v6688 = vpop.f32.mrb[0].mxu0
      %v6689 = vadd.f32 0.0, %v6688
      %v6690 = vpop.f32.mrb[0].mxu0
      %v6691 = vpop.f32.mrb[0].mxu0
      %v6692 = vadd.f32 0.0, %v6691
      %v6693 = vpop.f32.mrb[0].mxu0
      %6694 = vmatprep.mubr.bf16.mxu0 0
      %6695 = vmatmul.mubr.bf16.gmra.mrb[0].mxu0 %v6551
      %v6696 = vpop.f32.mrb[0].mxu0
      %v6697 = vadd.f32 0.0, %v6696
      %v6698 = vpop.f32.mrb[0].mxu0
      %v6699 = vpop.f32.mrb[0].mxu0
      %v6700 = vadd.f32 0.0, %v6699
      %v6701 = vpop.f32.mrb[0].mxu0
      %6702 = vmatprep.mubr.bf16.mxu0 0
      %6703 = vmatmul.mubr.bf16.gmra.mrb[0].mxu0 %v6554
      %v6704 = vpop.f32.mrb[0].mxu0
      %v6705 = vadd.f32 0.0, %v6704
      %v6706 = vpop.f32.mrb[0].mxu0
      %v6707 = vpop.f32.mrb[0].mxu0
      %v6708 = vadd.f32 0.0, %v6707
      %v6709 = vpop.f32.mrb[0].mxu0
      %6710 = vmatprep.mubr.bf16.mxu0 0
      %6711 = vmatmul.mubr.bf16.gmra.mrb[0].mxu0 %v6557
      %v6712 = vpop.f32.mrb[0].mxu0
      %v6713 = vadd.f32 0.0, %v6712
      %v6714 = vpop.f32.mrb[0].mxu0
      %v6715 = vpop.f32.mrb[0].mxu0
      %v6716 = vadd.f32 0.0, %v6715
      %v6717 = vpop.f32.mrb[0].mxu0
      %6718 = vmatprep.mubr.bf16.mxu0 0
      %6719 = vmatmul.mubr.bf16.gmra.mrb[0].mxu0 %v6560
      %v6720 = vpop.f32.mrb[0].mxu0
      %v6721 = vadd.f32 0.0, %v6720
      %v6722 = vpop.f32.mrb[0].mxu0
      %v6723 = vpop.f32.mrb[0].mxu0
      %v6724 = vadd.f32 0.0, %v6723
      %v6725 = vpop.f32.mrb[0].mxu0
      %6726 = vdwg.mxu0
      %6759 = vrot.lane.b32.xlu0 %v6601, 4
      %v6760 = vpop.permute.xlu0 %6759
      %6761 = vrot.lane.b32.xlu0 %v6604, 4
      %v6762 = vpop.permute.xlu0 %6761
      %6763 = vrot.lane.b32.xlu0 %v6609, 4
      %v6764 = vpop.permute.xlu0 %6763
      %6765 = vrot.lane.b32.xlu0 %v6612, 4
      %v6766 = vpop.permute.xlu0 %6765
      %6767 = vrot.lane.b32.xlu0 %v6617, 4
      %v6768 = vpop.permute.xlu0 %6767
      %6769 = vrot.lane.b32.xlu0 %v6620, 4
      %v6770 = vpop.permute.xlu0 %6769
      %6771 = vrot.lane.b32.xlu0 %v6625, 4
      %v6772 = vpop.permute.xlu0 %6771
      %6773 = vrot.lane.b32.xlu0 %v6628, 4
      %v6774 = vpop.permute.xlu0 %6773
      %6775 = vrot.lane.b32.xlu0 %v6633, 4
      %v6776 = vpop.permute.xlu0 %6775
      %6777 = vrot.lane.b32.xlu0 %v6636, 4
      %v6778 = vpop.permute.xlu0 %6777
      %6779 = vrot.lane.b32.xlu0 %v6641, 4
      %v6780 = vpop.permute.xlu0 %6779
      %6781 = vrot.lane.b32.xlu0 %v6644, 4
      %v6782 = vpop.permute.xlu0 %6781
      %6783 = vrot.lane.b32.xlu0 %v6649, 4
      %v6784 = vpop.permute.xlu0 %6783
      %6785 = vrot.lane.b32.xlu0 %v6652, 4
      %v6786 = vpop.permute.xlu0 %6785
      %6787 = vrot.lane.b32.xlu0 %v6657, 4
      %v6788 = vpop.permute.xlu0 %6787
      %6789 = vrot.lane.b32.xlu0 %v6660, 4
      %v6790 = vpop.permute.xlu0 %6789
      %6791 = vrot.lane.b32.xlu0 %v6665, 4
      %v6792 = vpop.permute.xlu0 %6791
      %6793 = vrot.lane.b32.xlu0 %v6668, 4
      %v6794 = vpop.permute.xlu0 %6793
      %6795 = vrot.lane.b32.xlu0 %v6673, 4
      %v6796 = vpop.permute.xlu0 %6795
      %6797 = vrot.lane.b32.xlu0 %v6676, 4
      %v6798 = vpop.permute.xlu0 %6797
      %6799 = vrot.lane.b32.xlu0 %v6681, 4
      %v6800 = vpop.permute.xlu0 %6799
      %6801 = vrot.lane.b32.xlu0 %v6684, 4
      %v6802 = vpop.permute.xlu0 %6801
      %6803 = vrot.lane.b32.xlu0 %v6689, 4
      %v6804 = vpop.permute.xlu0 %6803
      %6805 = vrot.lane.b32.xlu0 %v6692, 4
      %v6806 = vpop.permute.xlu0 %6805
      %6807 = vrot.lane.b32.xlu0 %v6697, 4
      %v6808 = vpop.permute.xlu0 %6807
      %6809 = vrot.lane.b32.xlu0 %v6700, 4
      %v6810 = vpop.permute.xlu0 %6809
      %6811 = vrot.lane.b32.xlu0 %v6705, 4
      %v6812 = vpop.permute.xlu0 %6811
      %6813 = vrot.lane.b32.xlu0 %v6708, 4
      %v6814 = vpop.permute.xlu0 %6813
      %6815 = vrot.lane.b32.xlu0 %v6713, 4
      %v6816 = vpop.permute.xlu0 %6815
      %6817 = vrot.lane.b32.xlu0 %v6716, 4
      %v6818 = vpop.permute.xlu0 %6817
      %6819 = vrot.lane.b32.xlu0 %v6721, 4
      %v6820 = vpop.permute.xlu0 %6819
      %6821 = vrot.lane.b32.xlu0 %v6724, 4
      %v6822 = vpop.permute.xlu0 %6821
      %vm6855 = vcmask 80928
      %6856 = vst.msk [vmem:[%s692 + $0x1] sm:$0xff] %vm6855, %v6760
      %6857 = vst.msk [vmem:[%s692 + $0x9] sm:$0xff] %vm6855, %v6762
      %6858 = vst.msk [vmem:[%s692 + $0x19] sm:$0xff] %vm6855, %v6764
      %6859 = vst.msk [vmem:[%s692 + $0x21] sm:$0xff] %vm6855, %v6766
      %6860 = vst.msk [vmem:[%s692 + $0x31] sm:$0xff] %vm6855, %v6768
      %6861 = vst.msk [vmem:[%s692 + $0x39] sm:$0xff] %vm6855, %v6770
      %6862 = vst.msk [vmem:[%s692 + $0x49] sm:$0xff] %vm6855, %v6772
      %6863 = vst.msk [vmem:[%s692 + $0x51] sm:$0xff] %vm6855, %v6774
      %6864 = vst.msk [vmem:[%s692 + $0x61] sm:$0xff] %vm6855, %v6776
      %6865 = vst.msk [vmem:[%s692 + $0x69] sm:$0xff] %vm6855, %v6778
      %6866 = vst.msk [vmem:[%s692 + $0x79] sm:$0xff] %vm6855, %v6780
      %6867 = vst.msk [vmem:[%s692 + $0x81] sm:$0xff] %vm6855, %v6782
      %6868 = vst.msk [vmem:[%s692 + $0x91] sm:$0xff] %vm6855, %v6784
      %6869 = vst.msk [vmem:[%s692 + $0x99] sm:$0xff] %vm6855, %v6786
      %6870 = vst.msk [vmem:[%s692 + $0xa9] sm:$0xff] %vm6855, %v6788
      %6871 = vst.msk [vmem:[%s692 + $0xb1] sm:$0xff] %vm6855, %v6790
      %6872 = vst.msk [vmem:[%s692 + $0xc1] sm:$0xff] %vm6855, %v6792
      %6873 = vst.msk [vmem:[%s692 + $0xc9] sm:$0xff] %vm6855, %v6794
      %6874 = vst.msk [vmem:[%s692 + $0xd9] sm:$0xff] %vm6855, %v6796
      %6875 = vst.msk [vmem:[%s692 + $0xe1] sm:$0xff] %vm6855, %v6798
      %6876 = vst.msk [vmem:[%s692 + $0xf1] sm:$0xff] %vm6855, %v6800
      %6877 = vst.msk [vmem:[%s692 + $0xf9] sm:$0xff] %vm6855, %v6802
      %6878 = vst.msk [vmem:[%s692 + $0x109] sm:$0xff] %vm6855, %v6804
      %6879 = vst.msk [vmem:[%s692 + $0x111] sm:$0xff] %vm6855, %v6806
      %6880 = vst.msk [vmem:[%s692 + $0x121] sm:$0xff] %vm6855, %v6808
      %6881 = vst.msk [vmem:[%s692 + $0x129] sm:$0xff] %vm6855, %v6810
      %6882 = vst.msk [vmem:[%s692 + $0x139] sm:$0xff] %vm6855, %v6812
      %6883 = vst.msk [vmem:[%s692 + $0x141] sm:$0xff] %vm6855, %v6814
      %6884 = vst.msk [vmem:[%s692 + $0x151] sm:$0xff] %vm6855, %v6816
      %6885 = vst.msk [vmem:[%s692 + $0x159] sm:$0xff] %vm6855, %v6818
      %6886 = vst.msk [vmem:[%s692 + $0x169] sm:$0xff] %vm6855, %v6820
      %6887 = vst.msk [vmem:[%s692 + $0x171] sm:$0xff] %vm6855, %v6822
      %6920 = vrot.lane.b32.xlu0 %v566, 122
      %v6921 = vpop.permute.xlu0 %6920
      %6922 = vrot.lane.b32.xlu0 %v569, 122
      %v6923 = vpop.permute.xlu0 %6922
      %6924 = vrot.lane.b32.xlu0 %v574, 122
      %v6925 = vpop.permute.xlu0 %6924
      %6926 = vrot.lane.b32.xlu0 %v577, 122
      %v6927 = vpop.permute.xlu0 %6926
      %6928 = vrot.lane.b32.xlu0 %v582, 122
      %v6929 = vpop.permute.xlu0 %6928
      %6930 = vrot.lane.b32.xlu0 %v585, 122
      %v6931 = vpop.permute.xlu0 %6930
      %6932 = vrot.lane.b32.xlu0 %v590, 122
      %v6933 = vpop.permute.xlu0 %6932
      %6934 = vrot.lane.b32.xlu0 %v593, 122
      %v6935 = vpop.permute.xlu0 %6934
      %6936 = vrot.lane.b32.xlu0 %v598, 122
      %v6937 = vpop.permute.xlu0 %6936
      %6938 = vrot.lane.b32.xlu0 %v601, 122
      %v6939 = vpop.permute.xlu0 %6938
      %6940 = vrot.lane.b32.xlu0 %v606, 122
      %v6941 = vpop.permute.xlu0 %6940
      %6942 = vrot.lane.b32.xlu0 %v609, 122
      %v6943 = vpop.permute.xlu0 %6942
      %6944 = vrot.lane.b32.xlu0 %v614, 122
      %v6945 = vpop.permute.xlu0 %6944
      %6946 = vrot.lane.b32.xlu0 %v617, 122
      %v6947 = vpop.permute.xlu0 %6946
      %6948 = vrot.lane.b32.xlu0 %v622, 122
      %v6949 = vpop.permute.xlu0 %6948
      %6950 = vrot.lane.b32.xlu0 %v625, 122
      %v6951 = vpop.permute.xlu0 %6950
      %6952 = vrot.lane.b32.xlu0 %v630, 122
      %v6953 = vpop.permute.xlu0 %6952
      %6954 = vrot.lane.b32.xlu0 %v633, 122
      %v6955 = vpop.permute.xlu0 %6954
      %6956 = vrot.lane.b32.xlu0 %v638, 122
      %v6957 = vpop.permute.xlu0 %6956
      %6958 = vrot.lane.b32.xlu0 %v641, 122
      %v6959 = vpop.permute.xlu0 %6958
      %6960 = vrot.lane.b32.xlu0 %v646, 122
      %v6961 = vpop.permute.xlu0 %6960
      %6962 = vrot.lane.b32.xlu0 %v649, 122
      %v6963 = vpop.permute.xlu0 %6962
      %6964 = vrot.lane.b32.xlu0 %v654, 122
      %v6965 = vpop.permute.xlu0 %6964
      %6966 = vrot.lane.b32.xlu0 %v657, 122
      %v6967 = vpop.permute.xlu0 %6966
      %6968 = vrot.lane.b32.xlu0 %v662, 122
      %v6969 = vpop.permute.xlu0 %6968
      %6970 = vrot.lane.b32.xlu0 %v665, 122
      %v6971 = vpop.permute.xlu0 %6970
      %6972 = vrot.lane.b32.xlu0 %v670, 122
      %v6973 = vpop.permute.xlu0 %6972
      %6974 = vrot.lane.b32.xlu0 %v673, 122
      %v6975 = vpop.permute.xlu0 %6974
      %6976 = vrot.lane.b32.xlu0 %v678, 122
      %v6977 = vpop.permute.xlu0 %6976
      %6978 = vrot.lane.b32.xlu0 %v681, 122
      %v6979 = vpop.permute.xlu0 %6978
      %6980 = vrot.lane.b32.xlu0 %v686, 122
      %v6981 = vpop.permute.xlu0 %6980
      %6982 = vrot.lane.b32.xlu0 %v689, 122
      %v6983 = vpop.permute.xlu0 %6982
      %7016 = vst.msk [vmem:[%s885 + $0x1] sm:$0xff] %vm291, %v6921
      %7017 = vst.msk [vmem:[%s885 + $0x9] sm:$0xff] %vm291, %v6923
      %7018 = vst.msk [vmem:[%s885 + $0x19] sm:$0xff] %vm291, %v6925
      %7019 = vst.msk [vmem:[%s885 + $0x21] sm:$0xff] %vm291, %v6927
      %7020 = vst.msk [vmem:[%s885 + $0x31] sm:$0xff] %vm291, %v6929
      %7021 = vst.msk [vmem:[%s885 + $0x39] sm:$0xff] %vm291, %v6931
      %7022 = vst.msk [vmem:[%s885 + $0x49] sm:$0xff] %vm291, %v6933
      %7023 = vst.msk [vmem:[%s885 + $0x51] sm:$0xff] %vm291, %v6935
      %7024 = vst.msk [vmem:[%s885 + $0x61] sm:$0xff] %vm291, %v6937
      %7025 = vst.msk [vmem:[%s885 + $0x69] sm:$0xff] %vm291, %v6939
      %7026 = vst.msk [vmem:[%s885 + $0x79] sm:$0xff] %vm291, %v6941
      %7027 = vst.msk [vmem:[%s885 + $0x81] sm:$0xff] %vm291, %v6943
      %7028 = vst.msk [vmem:[%s885 + $0x91] sm:$0xff] %vm291, %v6945
      %7029 = vst.msk [vmem:[%s885 + $0x99] sm:$0xff] %vm291, %v6947
      %7030 = vst.msk [vmem:[%s885 + $0xa9] sm:$0xff] %vm291, %v6949
      %7031 = vst.msk [vmem:[%s885 + $0xb1] sm:$0xff] %vm291, %v6951
      %7032 = vst.msk [vmem:[%s885 + $0xc1] sm:$0xff] %vm291, %v6953
      %7033 = vst.msk [vmem:[%s885 + $0xc9] sm:$0xff] %vm291, %v6955
      %7034 = vst.msk [vmem:[%s885 + $0xd9] sm:$0xff] %vm291, %v6957
      %7035 = vst.msk [vmem:[%s885 + $0xe1] sm:$0xff] %vm291, %v6959
      %7036 = vst.msk [vmem:[%s885 + $0xf1] sm:$0xff] %vm291, %v6961
      %7037 = vst.msk [vmem:[%s885 + $0xf9] sm:$0xff] %vm291, %v6963
      %7038 = vst.msk [vmem:[%s885 + $0x109] sm:$0xff] %vm291, %v6965
      %7039 = vst.msk [vmem:[%s885 + $0x111] sm:$0xff] %vm291, %v6967
      %7040 = vst.msk [vmem:[%s885 + $0x121] sm:$0xff] %vm291, %v6969
      %7041 = vst.msk [vmem:[%s885 + $0x129] sm:$0xff] %vm291, %v6971
      %7042 = vst.msk [vmem:[%s885 + $0x139] sm:$0xff] %vm291, %v6973
      %7043 = vst.msk [vmem:[%s885 + $0x141] sm:$0xff] %vm291, %v6975
      %7044 = vst.msk [vmem:[%s885 + $0x151] sm:$0xff] %vm291, %v6977
      %7045 = vst.msk [vmem:[%s885 + $0x159] sm:$0xff] %vm291, %v6979
      %7046 = vst.msk [vmem:[%s885 + $0x169] sm:$0xff] %vm291, %v6981
      %7047 = vst.msk [vmem:[%s885 + $0x171] sm:$0xff] %vm291, %v6983
      %v7048 = vld [vmem:[#allocation2] sm:$0xff]
      %v7049 = vld [vmem:[#allocation2 + $0x8] sm:$0xff]
      %v7050 = vld [vmem:[#allocation2 + $0x18] sm:$0xff]
      %v7051 = vld [vmem:[#allocation2 + $0x20] sm:$0xff]
      %v7052 = vld [vmem:[#allocation2 + $0x30] sm:$0xff]
      %v7053 = vld [vmem:[#allocation2 + $0x38] sm:$0xff]
      %v7054 = vld [vmem:[#allocation2 + $0x48] sm:$0xff]
      %v7055 = vld [vmem:[#allocation2 + $0x50] sm:$0xff]
      %v7056 = vld [vmem:[#allocation2 + $0x60] sm:$0xff]
      %v7057 = vld [vmem:[#allocation2 + $0x68] sm:$0xff]
      %v7058 = vld [vmem:[#allocation2 + $0x78] sm:$0xff]
      %v7059 = vld [vmem:[#allocation2 + $0x80] sm:$0xff]
      %v7060 = vld [vmem:[#allocation2 + $0x90] sm:$0xff]
      %v7061 = vld [vmem:[#allocation2 + $0x98] sm:$0xff]
      %v7062 = vld [vmem:[#allocation2 + $0xa8] sm:$0xff]
      %v7063 = vld [vmem:[#allocation2 + $0xb0] sm:$0xff]
      %v7064 = vld [vmem:[#allocation2 + $0xc0] sm:$0xff]
      %v7065 = vld [vmem:[#allocation2 + $0xc8] sm:$0xff]
      %v7066 = vld [vmem:[#allocation2 + $0xd8] sm:$0xff]
      %v7067 = vld [vmem:[#allocation2 + $0xe0] sm:$0xff]
      %v7068 = vld [vmem:[#allocation2 + $0xf0] sm:$0xff]
      %v7069 = vld [vmem:[#allocation2 + $0xf8] sm:$0xff]
      %v7070 = vld [vmem:[#allocation2 + $0x108] sm:$0xff]
      %v7071 = vld [vmem:[#allocation2 + $0x110] sm:$0xff]
      %v7072 = vld [vmem:[#allocation2 + $0x120] sm:$0xff]
      %v7073 = vld [vmem:[#allocation2 + $0x128] sm:$0xff]
      %v7074 = vld [vmem:[#allocation2 + $0x138] sm:$0xff]
      %v7075 = vld [vmem:[#allocation2 + $0x140] sm:$0xff]
      %v7076 = vld [vmem:[#allocation2 + $0x150] sm:$0xff]
      %v7077 = vld [vmem:[#allocation2 + $0x158] sm:$0xff]
      %v7078 = vld [vmem:[#allocation2 + $0x168] sm:$0xff]
      %v7079 = vld [vmem:[#allocation2 + $0x170] sm:$0xff]
      %v7080 = vadd.f32 %v7048, 0.0
      %v7081 = vadd.f32 %v7049, 0.0
      %v7082 = vadd.f32 %v7050, 0.0
      %v7083 = vadd.f32 %v7051, 0.0
      %v7084 = vadd.f32 %v7052, 0.0
      %v7085 = vadd.f32 %v7053, 0.0
      %v7086 = vadd.f32 %v7054, 0.0
      %v7087 = vadd.f32 %v7055, 0.0
      %v7088 = vadd.f32 %v7056, 0.0
      %v7089 = vadd.f32 %v7057, 0.0
      %v7090 = vadd.f32 %v7058, 0.0
      %v7091 = vadd.f32 %v7059, 0.0
      %v7092 = vadd.f32 %v7060, 0.0
      %v7093 = vadd.f32 %v7061, 0.0
      %v7094 = vadd.f32 %v7062, 0.0
      %v7095 = vadd.f32 %v7063, 0.0
      %v7096 = vadd.f32 %v7064, 0.0
      %v7097 = vadd.f32 %v7065, 0.0
      %v7098 = vadd.f32 %v7066, 0.0
      %v7099 = vadd.f32 %v7067, 0.0
      %v7100 = vadd.f32 %v7068, 0.0
      %v7101 = vadd.f32 %v7069, 0.0
      %v7102 = vadd.f32 %v7070, 0.0
      %v7103 = vadd.f32 %v7071, 0.0
      %v7104 = vadd.f32 %v7072, 0.0
      %v7105 = vadd.f32 %v7073, 0.0
      %v7106 = vadd.f32 %v7074, 0.0
      %v7107 = vadd.f32 %v7075, 0.0
      %v7108 = vadd.f32 %v7076, 0.0
      %v7109 = vadd.f32 %v7077, 0.0
      %v7110 = vadd.f32 %v7078, 0.0
      %v7111 = vadd.f32 %v7079, 0.0
      %v7112 = vld [vmem:[#allocation2 + $0x1] sm:$0xff]
      %v7113 = vld [vmem:[#allocation2 + $0x9] sm:$0xff]
      %v7114 = vld [vmem:[#allocation2 + $0x19] sm:$0xff]
      %v7115 = vld [vmem:[#allocation2 + $0x21] sm:$0xff]
      %v7116 = vld [vmem:[#allocation2 + $0x31] sm:$0xff]
      %v7117 = vld [vmem:[#allocation2 + $0x39] sm:$0xff]
      %v7118 = vld [vmem:[#allocation2 + $0x49] sm:$0xff]
      %v7119 = vld [vmem:[#allocation2 + $0x51] sm:$0xff]
      %v7120 = vld [vmem:[#allocation2 + $0x61] sm:$0xff]
      %v7121 = vld [vmem:[#allocation2 + $0x69] sm:$0xff]
      %v7122 = vld [vmem:[#allocation2 + $0x79] sm:$0xff]
      %v7123 = vld [vmem:[#allocation2 + $0x81] sm:$0xff]
      %v7124 = vld [vmem:[#allocation2 + $0x91] sm:$0xff]
      %v7125 = vld [vmem:[#allocation2 + $0x99] sm:$0xff]
      %v7126 = vld [vmem:[#allocation2 + $0xa9] sm:$0xff]
      %v7127 = vld [vmem:[#allocation2 + $0xb1] sm:$0xff]
      %v7128 = vld [vmem:[#allocation2 + $0xc1] sm:$0xff]
      %v7129 = vld [vmem:[#allocation2 + $0xc9] sm:$0xff]
      %v7130 = vld [vmem:[#allocation2 + $0xd9] sm:$0xff]
      %v7131 = vld [vmem:[#allocation2 + $0xe1] sm:$0xff]
      %v7132 = vld [vmem:[#allocation2 + $0xf1] sm:$0xff]
      %v7133 = vld [vmem:[#allocation2 + $0xf9] sm:$0xff]
      %v7134 = vld [vmem:[#allocation2 + $0x109] sm:$0xff]
      %v7135 = vld [vmem:[#allocation2 + $0x111] sm:$0xff]
      %v7136 = vld [vmem:[#allocation2 + $0x121] sm:$0xff]
      %v7137 = vld [vmem:[#allocation2 + $0x129] sm:$0xff]
      %v7138 = vld [vmem:[#allocation2 + $0x139] sm:$0xff]
      %v7139 = vld [vmem:[#allocation2 + $0x141] sm:$0xff]
      %v7140 = vld [vmem:[#allocation2 + $0x151] sm:$0xff]
      %v7141 = vld [vmem:[#allocation2 + $0x159] sm:$0xff]
      %v7142 = vld [vmem:[#allocation2 + $0x169] sm:$0xff]
      %v7143 = vld [vmem:[#allocation2 + $0x171] sm:$0xff]
      %v7144 = vadd.f32 %v7080, %v7112
      %v7145 = vadd.f32 %v7081, %v7113
      %v7146 = vadd.f32 %v7082, %v7114
      %v7147 = vadd.f32 %v7083, %v7115
      %v7148 = vadd.f32 %v7084, %v7116
      %v7149 = vadd.f32 %v7085, %v7117
      %v7150 = vadd.f32 %v7086, %v7118
      %v7151 = vadd.f32 %v7087, %v7119
      %v7152 = vadd.f32 %v7088, %v7120
      %v7153 = vadd.f32 %v7089, %v7121
      %v7154 = vadd.f32 %v7090, %v7122
      %v7155 = vadd.f32 %v7091, %v7123
      %v7156 = vadd.f32 %v7092, %v7124
      %v7157 = vadd.f32 %v7093, %v7125
      %v7158 = vadd.f32 %v7094, %v7126
      %v7159 = vadd.f32 %v7095, %v7127
      %v7160 = vadd.f32 %v7096, %v7128
      %v7161 = vadd.f32 %v7097, %v7129
      %v7162 = vadd.f32 %v7098, %v7130
      %v7163 = vadd.f32 %v7099, %v7131
      %v7164 = vadd.f32 %v7100, %v7132
      %v7165 = vadd.f32 %v7101, %v7133
      %v7166 = vadd.f32 %v7102, %v7134
      %v7167 = vadd.f32 %v7103, %v7135
      %v7168 = vadd.f32 %v7104, %v7136
      %v7169 = vadd.f32 %v7105, %v7137
      %v7170 = vadd.f32 %v7106, %v7138
      %v7171 = vadd.f32 %v7107, %v7139
      %v7172 = vadd.f32 %v7108, %v7140
      %v7173 = vadd.f32 %v7109, %v7141
      %v7174 = vadd.f32 %v7110, %v7142
      %v7175 = vadd.f32 %v7111, %v7143
      %v7176 = vld [vmem:[#allocation2 + $0x2] sm:$0xff]
      %v7177 = vld [vmem:[#allocation2 + $0xa] sm:$0xff]
      %v7178 = vld [vmem:[#allocation2 + $0x1a] sm:$0xff]
      %v7179 = vld [vmem:[#allocation2 + $0x22] sm:$0xff]
      %v7180 = vld [vmem:[#allocation2 + $0x32] sm:$0xff]
      %v7181 = vld [vmem:[#allocation2 + $0x3a] sm:$0xff]
      %v7182 = vld [vmem:[#allocation2 + $0x4a] sm:$0xff]
      %v7183 = vld [vmem:[#allocation2 + $0x52] sm:$0xff]
      %v7184 = vld [vmem:[#allocation2 + $0x62] sm:$0xff]
      %v7185 = vld [vmem:[#allocation2 + $0x6a] sm:$0xff]
      %v7186 = vld [vmem:[#allocation2 + $0x7a] sm:$0xff]
      %v7187 = vld [vmem:[#allocation2 + $0x82] sm:$0xff]
      %v7188 = vld [vmem:[#allocation2 + $0x92] sm:$0xff]
      %v7189 = vld [vmem:[#allocation2 + $0x9a] sm:$0xff]
      %v7190 = vld [vmem:[#allocation2 + $0xaa] sm:$0xff]
      %v7191 = vld [vmem:[#allocation2 + $0xb2] sm:$0xff]
      %v7192 = vld [vmem:[#allocation2 + $0xc2] sm:$0xff]
      %v7193 = vld [vmem:[#allocation2 + $0xca] sm:$0xff]
      %v7194 = vld [vmem:[#allocation2 + $0xda] sm:$0xff]
      %v7195 = vld [vmem:[#allocation2 + $0xe2] sm:$0xff]
      %v7196 = vld [vmem:[#allocation2 + $0xf2] sm:$0xff]
      %v7197 = vld [vmem:[#allocation2 + $0xfa] sm:$0xff]
      %v7198 = vld [vmem:[#allocation2 + $0x10a] sm:$0xff]
      %v7199 = vld [vmem:[#allocation2 + $0x112] sm:$0xff]
      %v7200 = vld [vmem:[#allocation2 + $0x122] sm:$0xff]
      %v7201 = vld [vmem:[#allocation2 + $0x12a] sm:$0xff]
      %v7202 = vld [vmem:[#allocation2 + $0x13a] sm:$0xff]
      %v7203 = vld [vmem:[#allocation2 + $0x142] sm:$0xff]
      %v7204 = vld [vmem:[#allocation2 + $0x152] sm:$0xff]
      %v7205 = vld [vmem:[#allocation2 + $0x15a] sm:$0xff]
      %v7206 = vld [vmem:[#allocation2 + $0x16a] sm:$0xff]
      %v7207 = vld [vmem:[#allocation2 + $0x172] sm:$0xff]
      %v7208 = vadd.f32 %v7144, %v7176
      %v7209 = vadd.f32 %v7145, %v7177
      %v7210 = vadd.f32 %v7146, %v7178
      %v7211 = vadd.f32 %v7147, %v7179
      %v7212 = vadd.f32 %v7148, %v7180
      %v7213 = vadd.f32 %v7149, %v7181
      %v7214 = vadd.f32 %v7150, %v7182
      %v7215 = vadd.f32 %v7151, %v7183
      %v7216 = vadd.f32 %v7152, %v7184
      %v7217 = vadd.f32 %v7153, %v7185
      %v7218 = vadd.f32 %v7154, %v7186
      %v7219 = vadd.f32 %v7155, %v7187
      %v7220 = vadd.f32 %v7156, %v7188
      %v7221 = vadd.f32 %v7157, %v7189
      %v7222 = vadd.f32 %v7158, %v7190
      %v7223 = vadd.f32 %v7159, %v7191
      %v7224 = vadd.f32 %v7160, %v7192
      %v7225 = vadd.f32 %v7161, %v7193
      %v7226 = vadd.f32 %v7162, %v7194
      %v7227 = vadd.f32 %v7163, %v7195
      %v7228 = vadd.f32 %v7164, %v7196
      %v7229 = vadd.f32 %v7165, %v7197
      %v7230 = vadd.f32 %v7166, %v7198
      %v7231 = vadd.f32 %v7167, %v7199
      %v7232 = vadd.f32 %v7168, %v7200
      %v7233 = vadd.f32 %v7169, %v7201
      %v7234 = vadd.f32 %v7170, %v7202
      %v7235 = vadd.f32 %v7171, %v7203
      %v7236 = vadd.f32 %v7172, %v7204
      %v7237 = vadd.f32 %v7173, %v7205
      %v7238 = vadd.f32 %v7174, %v7206
      %v7239 = vadd.f32 %v7175, %v7207
      %v7240 = vld [vmem:[%s885] sm:$0xff]
      %v7241 = vld [vmem:[%s885 + $0x8] sm:$0xff]
      %v7242 = vld [vmem:[%s885 + $0x18] sm:$0xff]
      %v7243 = vld [vmem:[%s885 + $0x20] sm:$0xff]
      %v7244 = vld [vmem:[%s885 + $0x30] sm:$0xff]
      %v7245 = vld [vmem:[%s885 + $0x38] sm:$0xff]
      %v7246 = vld [vmem:[%s885 + $0x48] sm:$0xff]
      %v7247 = vld [vmem:[%s885 + $0x50] sm:$0xff]
      %v7248 = vld [vmem:[%s885 + $0x60] sm:$0xff]
      %v7249 = vld [vmem:[%s885 + $0x68] sm:$0xff]
      %v7250 = vld [vmem:[%s885 + $0x78] sm:$0xff]
      %v7251 = vld [vmem:[%s885 + $0x80] sm:$0xff]
      %v7252 = vld [vmem:[%s885 + $0x90] sm:$0xff]
      %v7253 = vld [vmem:[%s885 + $0x98] sm:$0xff]
      %v7254 = vld [vmem:[%s885 + $0xa8] sm:$0xff]
      %v7255 = vld [vmem:[%s885 + $0xb0] sm:$0xff]
      %v7256 = vld [vmem:[%s885 + $0xc0] sm:$0xff]
      %v7257 = vld [vmem:[%s885 + $0xc8] sm:$0xff]
      %v7258 = vld [vmem:[%s885 + $0xd8] sm:$0xff]
      %v7259 = vld [vmem:[%s885 + $0xe0] sm:$0xff]
      %v7260 = vld [vmem:[%s885 + $0xf0] sm:$0xff]
      %v7261 = vld [vmem:[%s885 + $0xf8] sm:$0xff]
      %v7262 = vld [vmem:[%s885 + $0x108] sm:$0xff]
      %v7263 = vld [vmem:[%s885 + $0x110] sm:$0xff]
      %v7264 = vld [vmem:[%s885 + $0x120] sm:$0xff]
      %v7265 = vld [vmem:[%s885 + $0x128] sm:$0xff]
      %v7266 = vld [vmem:[%s885 + $0x138] sm:$0xff]
      %v7267 = vld [vmem:[%s885 + $0x140] sm:$0xff]
      %v7268 = vld [vmem:[%s885 + $0x150] sm:$0xff]
      %v7269 = vld [vmem:[%s885 + $0x158] sm:$0xff]
      %v7270 = vld [vmem:[%s885 + $0x168] sm:$0xff]
      %v7271 = vld [vmem:[%s885 + $0x170] sm:$0xff]
      %v7272 = vadd.f32 %v7208, %v7240
      %v7273 = vadd.f32 %v7209, %v7241
      %v7274 = vadd.f32 %v7210, %v7242
      %v7275 = vadd.f32 %v7211, %v7243
      %v7276 = vadd.f32 %v7212, %v7244
      %v7277 = vadd.f32 %v7213, %v7245
      %v7278 = vadd.f32 %v7214, %v7246
      %v7279 = vadd.f32 %v7215, %v7247
      %v7280 = vadd.f32 %v7216, %v7248
      %v7281 = vadd.f32 %v7217, %v7249
      %v7282 = vadd.f32 %v7218, %v7250
      %v7283 = vadd.f32 %v7219, %v7251
      %v7284 = vadd.f32 %v7220, %v7252
      %v7285 = vadd.f32 %v7221, %v7253
      %v7286 = vadd.f32 %v7222, %v7254
      %v7287 = vadd.f32 %v7223, %v7255
      %v7288 = vadd.f32 %v7224, %v7256
      %v7289 = vadd.f32 %v7225, %v7257
      %v7290 = vadd.f32 %v7226, %v7258
      %v7291 = vadd.f32 %v7227, %v7259
      %v7292 = vadd.f32 %v7228, %v7260
      %v7293 = vadd.f32 %v7229, %v7261
      %v7294 = vadd.f32 %v7230, %v7262
      %v7295 = vadd.f32 %v7231, %v7263
      %v7296 = vadd.f32 %v7232, %v7264
      %v7297 = vadd.f32 %v7233, %v7265
      %v7298 = vadd.f32 %v7234, %v7266
      %v7299 = vadd.f32 %v7235, %v7267
      %v7300 = vadd.f32 %v7236, %v7268
      %v7301 = vadd.f32 %v7237, %v7269
      %v7302 = vadd.f32 %v7238, %v7270
      %v7303 = vadd.f32 %v7239, %v7271
      %v7304 = vld [vmem:[%s885 + $0x1] sm:$0xff]
      %v7305 = vld [vmem:[%s885 + $0x9] sm:$0xff]
      %v7306 = vld [vmem:[%s885 + $0x19] sm:$0xff]
      %v7307 = vld [vmem:[%s885 + $0x21] sm:$0xff]
      %v7308 = vld [vmem:[%s885 + $0x31] sm:$0xff]
      %v7309 = vld [vmem:[%s885 + $0x39] sm:$0xff]
      %v7310 = vld [vmem:[%s885 + $0x49] sm:$0xff]
      %v7311 = vld [vmem:[%s885 + $0x51] sm:$0xff]
      %v7312 = vld [vmem:[%s885 + $0x61] sm:$0xff]
      %v7313 = vld [vmem:[%s885 + $0x69] sm:$0xff]
      %v7314 = vld [vmem:[%s885 + $0x79] sm:$0xff]
      %v7315 = vld [vmem:[%s885 + $0x81] sm:$0xff]
      %v7316 = vld [vmem:[%s885 + $0x91] sm:$0xff]
      %v7317 = vld [vmem:[%s885 + $0x99] sm:$0xff]
      %v7318 = vld [vmem:[%s885 + $0xa9] sm:$0xff]
      %v7319 = vld [vmem:[%s885 + $0xb1] sm:$0xff]
      %v7320 = vld [vmem:[%s885 + $0xc1] sm:$0xff]
      %v7321 = vld [vmem:[%s885 + $0xc9] sm:$0xff]
      %v7322 = vld [vmem:[%s885 + $0xd9] sm:$0xff]
      %v7323 = vld [vmem:[%s885 + $0xe1] sm:$0xff]
      %v7324 = vld [vmem:[%s885 + $0xf1] sm:$0xff]
      %v7325 = vld [vmem:[%s885 + $0xf9] sm:$0xff]
      %v7326 = vld [vmem:[%s885 + $0x109] sm:$0xff]
      %v7327 = vld [vmem:[%s885 + $0x111] sm:$0xff]
      %v7328 = vld [vmem:[%s885 + $0x121] sm:$0xff]
      %v7329 = vld [vmem:[%s885 + $0x129] sm:$0xff]
      %v7330 = vld [vmem:[%s885 + $0x139] sm:$0xff]
      %v7331 = vld [vmem:[%s885 + $0x141] sm:$0xff]
      %v7332 = vld [vmem:[%s885 + $0x151] sm:$0xff]
      %v7333 = vld [vmem:[%s885 + $0x159] sm:$0xff]
      %v7334 = vld [vmem:[%s885 + $0x169] sm:$0xff]
      %v7335 = vld [vmem:[%s885 + $0x171] sm:$0xff]
      %v7336 = vadd.f32 %v7272, %v7304
      %v7337 = vadd.f32 %v7273, %v7305
      %v7338 = vadd.f32 %v7274, %v7306
      %v7339 = vadd.f32 %v7275, %v7307
      %v7340 = vadd.f32 %v7276, %v7308
      %v7341 = vadd.f32 %v7277, %v7309
      %v7342 = vadd.f32 %v7278, %v7310
      %v7343 = vadd.f32 %v7279, %v7311
      %v7344 = vadd.f32 %v7280, %v7312
      %v7345 = vadd.f32 %v7281, %v7313
      %v7346 = vadd.f32 %v7282, %v7314
      %v7347 = vadd.f32 %v7283, %v7315
      %v7348 = vadd.f32 %v7284, %v7316
      %v7349 = vadd.f32 %v7285, %v7317
      %v7350 = vadd.f32 %v7286, %v7318
      %v7351 = vadd.f32 %v7287, %v7319
      %v7352 = vadd.f32 %v7288, %v7320
      %v7353 = vadd.f32 %v7289, %v7321
      %v7354 = vadd.f32 %v7290, %v7322
      %v7355 = vadd.f32 %v7291, %v7323
      %v7356 = vadd.f32 %v7292, %v7324
      %v7357 = vadd.f32 %v7293, %v7325
      %v7358 = vadd.f32 %v7294, %v7326
      %v7359 = vadd.f32 %v7295, %v7327
      %v7360 = vadd.f32 %v7296, %v7328
      %v7361 = vadd.f32 %v7297, %v7329
      %v7362 = vadd.f32 %v7298, %v7330
      %v7363 = vadd.f32 %v7299, %v7331
      %v7364 = vadd.f32 %v7300, %v7332
      %v7365 = vadd.f32 %v7301, %v7333
      %v7366 = vadd.f32 %v7302, %v7334
      %v7367 = vadd.f32 %v7303, %v7335
      %v7368 = vld [vmem:[%s885 + $0x2] sm:$0xff]
      %v7369 = vld [vmem:[%s885 + $0xa] sm:$0xff]
      %v7370 = vld [vmem:[%s885 + $0x1a] sm:$0xff]
      %v7371 = vld [vmem:[%s885 + $0x22] sm:$0xff]
      %v7372 = vld [vmem:[%s885 + $0x32] sm:$0xff]
      %v7373 = vld [vmem:[%s885 + $0x3a] sm:$0xff]
      %v7374 = vld [vmem:[%s885 + $0x4a] sm:$0xff]
      %v7375 = vld [vmem:[%s885 + $0x52] sm:$0xff]
      %v7376 = vld [vmem:[%s885 + $0x62] sm:$0xff]
      %v7377 = vld [vmem:[%s885 + $0x6a] sm:$0xff]
      %v7378 = vld [vmem:[%s885 + $0x7a] sm:$0xff]
      %v7379 = vld [vmem:[%s885 + $0x82] sm:$0xff]
      %v7380 = vld [vmem:[%s885 + $0x92] sm:$0xff]
      %v7381 = vld [vmem:[%s885 + $0x9a] sm:$0xff]
      %v7382 = vld [vmem:[%s885 + $0xaa] sm:$0xff]
      %v7383 = vld [vmem:[%s885 + $0xb2] sm:$0xff]
      %v7384 = vld [vmem:[%s885 + $0xc2] sm:$0xff]
      %v7385 = vld [vmem:[%s885 + $0xca] sm:$0xff]
      %v7386 = vld [vmem:[%s885 + $0xda] sm:$0xff]
      %v7387 = vld [vmem:[%s885 + $0xe2] sm:$0xff]
      %v7388 = vld [vmem:[%s885 + $0xf2] sm:$0xff]
      %v7389 = vld [vmem:[%s885 + $0xfa] sm:$0xff]
      %v7390 = vld [vmem:[%s885 + $0x10a] sm:$0xff]
      %v7391 = vld [vmem:[%s885 + $0x112] sm:$0xff]
      %v7392 = vld [vmem:[%s885 + $0x122] sm:$0xff]
      %v7393 = vld [vmem:[%s885 + $0x12a] sm:$0xff]
      %v7394 = vld [vmem:[%s885 + $0x13a] sm:$0xff]
      %v7395 = vld [vmem:[%s885 + $0x142] sm:$0xff]
      %v7396 = vld [vmem:[%s885 + $0x152] sm:$0xff]
      %v7397 = vld [vmem:[%s885 + $0x15a] sm:$0xff]
      %v7398 = vld [vmem:[%s885 + $0x16a] sm:$0xff]
      %v7399 = vld [vmem:[%s885 + $0x172] sm:$0xff]
      %v7400 = vadd.f32 %v7336, %v7368
      %v7401 = vadd.f32 %v7337, %v7369
      %v7402 = vadd.f32 %v7338, %v7370
      %v7403 = vadd.f32 %v7339, %v7371
      %v7404 = vadd.f32 %v7340, %v7372
      %v7405 = vadd.f32 %v7341, %v7373
      %v7406 = vadd.f32 %v7342, %v7374
      %v7407 = vadd.f32 %v7343, %v7375
      %v7408 = vadd.f32 %v7344, %v7376
      %v7409 = vadd.f32 %v7345, %v7377
      %v7410 = vadd.f32 %v7346, %v7378
      %v7411 = vadd.f32 %v7347, %v7379
      %v7412 = vadd.f32 %v7348, %v7380
      %v7413 = vadd.f32 %v7349, %v7381
      %v7414 = vadd.f32 %v7350, %v7382
      %v7415 = vadd.f32 %v7351, %v7383
      %v7416 = vadd.f32 %v7352, %v7384
      %v7417 = vadd.f32 %v7353, %v7385
      %v7418 = vadd.f32 %v7354, %v7386
      %v7419 = vadd.f32 %v7355, %v7387
      %v7420 = vadd.f32 %v7356, %v7388
      %v7421 = vadd.f32 %v7357, %v7389
      %v7422 = vadd.f32 %v7358, %v7390
      %v7423 = vadd.f32 %v7359, %v7391
      %v7424 = vadd.f32 %v7360, %v7392
      %v7425 = vadd.f32 %v7361, %v7393
      %v7426 = vadd.f32 %v7362, %v7394
      %v7427 = vadd.f32 %v7363, %v7395
      %v7428 = vadd.f32 %v7364, %v7396
      %v7429 = vadd.f32 %v7365, %v7397
      %v7430 = vadd.f32 %v7366, %v7398
      %v7431 = vadd.f32 %v7367, %v7399
      %v7432 = vld [vmem:[%s1113] sm:$0xff]
      %v7433 = vld [vmem:[%s1113 + $0x8] sm:$0xff]
      %v7434 = vld [vmem:[%s1113 + $0x18] sm:$0xff]
      %v7435 = vld [vmem:[%s1113 + $0x20] sm:$0xff]
      %v7436 = vld [vmem:[%s1113 + $0x30] sm:$0xff]
      %v7437 = vld [vmem:[%s1113 + $0x38] sm:$0xff]
      %v7438 = vld [vmem:[%s1113 + $0x48] sm:$0xff]
      %v7439 = vld [vmem:[%s1113 + $0x50] sm:$0xff]
      %v7440 = vld [vmem:[%s1113 + $0x60] sm:$0xff]
      %v7441 = vld [vmem:[%s1113 + $0x68] sm:$0xff]
      %v7442 = vld [vmem:[%s1113 + $0x78] sm:$0xff]
      %v7443 = vld [vmem:[%s1113 + $0x80] sm:$0xff]
      %v7444 = vld [vmem:[%s1113 + $0x90] sm:$0xff]
      %v7445 = vld [vmem:[%s1113 + $0x98] sm:$0xff]
      %v7446 = vld [vmem:[%s1113 + $0xa8] sm:$0xff]
      %v7447 = vld [vmem:[%s1113 + $0xb0] sm:$0xff]
      %v7448 = vld [vmem:[%s1113 + $0xc0] sm:$0xff]
      %v7449 = vld [vmem:[%s1113 + $0xc8] sm:$0xff]
      %v7450 = vld [vmem:[%s1113 + $0xd8] sm:$0xff]
      %v7451 = vld [vmem:[%s1113 + $0xe0] sm:$0xff]
      %v7452 = vld [vmem:[%s1113 + $0xf0] sm:$0xff]
      %v7453 = vld [vmem:[%s1113 + $0xf8] sm:$0xff]
      %v7454 = vld [vmem:[%s1113 + $0x108] sm:$0xff]
      %v7455 = vld [vmem:[%s1113 + $0x110] sm:$0xff]
      %v7456 = vld [vmem:[%s1113 + $0x120] sm:$0xff]
      %v7457 = vld [vmem:[%s1113 + $0x128] sm:$0xff]
      %v7458 = vld [vmem:[%s1113 + $0x138] sm:$0xff]
      %v7459 = vld [vmem:[%s1113 + $0x140] sm:$0xff]
      %v7460 = vld [vmem:[%s1113 + $0x150] sm:$0xff]
      %v7461 = vld [vmem:[%s1113 + $0x158] sm:$0xff]
      %v7462 = vld [vmem:[%s1113 + $0x168] sm:$0xff]
      %v7463 = vld [vmem:[%s1113 + $0x170] sm:$0xff]
      %v7464 = vadd.f32 %v7400, %v7432
      %v7465 = vadd.f32 %v7401, %v7433
      %v7466 = vadd.f32 %v7402, %v7434
      %v7467 = vadd.f32 %v7403, %v7435
      %v7468 = vadd.f32 %v7404, %v7436
      %v7469 = vadd.f32 %v7405, %v7437
      %v7470 = vadd.f32 %v7406, %v7438
      %v7471 = vadd.f32 %v7407, %v7439
      %v7472 = vadd.f32 %v7408, %v7440
      %v7473 = vadd.f32 %v7409, %v7441
      %v7474 = vadd.f32 %v7410, %v7442
      %v7475 = vadd.f32 %v7411, %v7443
      %v7476 = vadd.f32 %v7412, %v7444
      %v7477 = vadd.f32 %v7413, %v7445
      %v7478 = vadd.f32 %v7414, %v7446
      %v7479 = vadd.f32 %v7415, %v7447
      %v7480 = vadd.f32 %v7416, %v7448
      %v7481 = vadd.f32 %v7417, %v7449
      %v7482 = vadd.f32 %v7418, %v7450
      %v7483 = vadd.f32 %v7419, %v7451
      %v7484 = vadd.f32 %v7420, %v7452
      %v7485 = vadd.f32 %v7421, %v7453
      %v7486 = vadd.f32 %v7422, %v7454
      %v7487 = vadd.f32 %v7423, %v7455
      %v7488 = vadd.f32 %v7424, %v7456
      %v7489 = vadd.f32 %v7425, %v7457
      %v7490 = vadd.f32 %v7426, %v7458
      %v7491 = vadd.f32 %v7427, %v7459
      %v7492 = vadd.f32 %v7428, %v7460
      %v7493 = vadd.f32 %v7429, %v7461
      %v7494 = vadd.f32 %v7430, %v7462
      %v7495 = vadd.f32 %v7431, %v7463
      %v7496 = vld [vmem:[%s1113 + $0x1] sm:$0xff]
      %v7497 = vld [vmem:[%s1113 + $0x9] sm:$0xff]
      %v7498 = vld [vmem:[%s1113 + $0x19] sm:$0xff]
      %v7499 = vld [vmem:[%s1113 + $0x21] sm:$0xff]
      %v7500 = vld [vmem:[%s1113 + $0x31] sm:$0xff]
      %v7501 = vld [vmem:[%s1113 + $0x39] sm:$0xff]
      %v7502 = vld [vmem:[%s1113 + $0x49] sm:$0xff]
      %v7503 = vld [vmem:[%s1113 + $0x51] sm:$0xff]
      %v7504 = vld [vmem:[%s1113 + $0x61] sm:$0xff]
      %v7505 = vld [vmem:[%s1113 + $0x69] sm:$0xff]
      %v7506 = vld [vmem:[%s1113 + $0x79] sm:$0xff]
      %v7507 = vld [vmem:[%s1113 + $0x81] sm:$0xff]
      %v7508 = vld [vmem:[%s1113 + $0x91] sm:$0xff]
      %v7509 = vld [vmem:[%s1113 + $0x99] sm:$0xff]
      %v7510 = vld [vmem:[%s1113 + $0xa9] sm:$0xff]
      %v7511 = vld [vmem:[%s1113 + $0xb1] sm:$0xff]
      %v7512 = vld [vmem:[%s1113 + $0xc1] sm:$0xff]
      %v7513 = vld [vmem:[%s1113 + $0xc9] sm:$0xff]
      %v7514 = vld [vmem:[%s1113 + $0xd9] sm:$0xff]
      %v7515 = vld [vmem:[%s1113 + $0xe1] sm:$0xff]
      %v7516 = vld [vmem:[%s1113 + $0xf1] sm:$0xff]
      %v7517 = vld [vmem:[%s1113 + $0xf9] sm:$0xff]
      %v7518 = vld [vmem:[%s1113 + $0x109] sm:$0xff]
      %v7519 = vld [vmem:[%s1113 + $0x111] sm:$0xff]
      %v7520 = vld [vmem:[%s1113 + $0x121] sm:$0xff]
      %v7521 = vld [vmem:[%s1113 + $0x129] sm:$0xff]
      %v7522 = vld [vmem:[%s1113 + $0x139] sm:$0xff]
      %v7523 = vld [vmem:[%s1113 + $0x141] sm:$0xff]
      %v7524 = vld [vmem:[%s1113 + $0x151] sm:$0xff]
      %v7525 = vld [vmem:[%s1113 + $0x159] sm:$0xff]
      %v7526 = vld [vmem:[%s1113 + $0x169] sm:$0xff]
      %v7527 = vld [vmem:[%s1113 + $0x171] sm:$0xff]
      %v7528 = vadd.f32 %v7464, %v7496
      %v7529 = vadd.f32 %v7465, %v7497
      %v7530 = vadd.f32 %v7466, %v7498
      %v7531 = vadd.f32 %v7467, %v7499
      %v7532 = vadd.f32 %v7468, %v7500
      %v7533 = vadd.f32 %v7469, %v7501
      %v7534 = vadd.f32 %v7470, %v7502
      %v7535 = vadd.f32 %v7471, %v7503
      %v7536 = vadd.f32 %v7472, %v7504
      %v7537 = vadd.f32 %v7473, %v7505
      %v7538 = vadd.f32 %v7474, %v7506
      %v7539 = vadd.f32 %v7475, %v7507
      %v7540 = vadd.f32 %v7476, %v7508
      %v7541 = vadd.f32 %v7477, %v7509
      %v7542 = vadd.f32 %v7478, %v7510
      %v7543 = vadd.f32 %v7479, %v7511
      %v7544 = vadd.f32 %v7480, %v7512
      %v7545 = vadd.f32 %v7481, %v7513
      %v7546 = vadd.f32 %v7482, %v7514
      %v7547 = vadd.f32 %v7483, %v7515
      %v7548 = vadd.f32 %v7484, %v7516
      %v7549 = vadd.f32 %v7485, %v7517
      %v7550 = vadd.f32 %v7486, %v7518
      %v7551 = vadd.f32 %v7487, %v7519
      %v7552 = vadd.f32 %v7488, %v7520
      %v7553 = vadd.f32 %v7489, %v7521
      %v7554 = vadd.f32 %v7490, %v7522
      %v7555 = vadd.f32 %v7491, %v7523
      %v7556 = vadd.f32 %v7492, %v7524
      %v7557 = vadd.f32 %v7493, %v7525
      %v7558 = vadd.f32 %v7494, %v7526
      %v7559 = vadd.f32 %v7495, %v7527
      %v7560 = vld [vmem:[%s1113 + $0x2] sm:$0xff]
      %v7561 = vld [vmem:[%s1113 + $0xa] sm:$0xff]
      %v7562 = vld [vmem:[%s1113 + $0x1a] sm:$0xff]
      %v7563 = vld [vmem:[%s1113 + $0x22] sm:$0xff]
      %v7564 = vld [vmem:[%s1113 + $0x32] sm:$0xff]
      %v7565 = vld [vmem:[%s1113 + $0x3a] sm:$0xff]
      %v7566 = vld [vmem:[%s1113 + $0x4a] sm:$0xff]
      %v7567 = vld [vmem:[%s1113 + $0x52] sm:$0xff]
      %v7568 = vld [vmem:[%s1113 + $0x62] sm:$0xff]
      %v7569 = vld [vmem:[%s1113 + $0x6a] sm:$0xff]
      %v7570 = vld [vmem:[%s1113 + $0x7a] sm:$0xff]
      %v7571 = vld [vmem:[%s1113 + $0x82] sm:$0xff]
      %v7572 = vld [vmem:[%s1113 + $0x92] sm:$0xff]
      %v7573 = vld [vmem:[%s1113 + $0x9a] sm:$0xff]
      %v7574 = vld [vmem:[%s1113 + $0xaa] sm:$0xff]
      %v7575 = vld [vmem:[%s1113 + $0xb2] sm:$0xff]
      %v7576 = vld [vmem:[%s1113 + $0xc2] sm:$0xff]
      %v7577 = vld [vmem:[%s1113 + $0xca] sm:$0xff]
      %v7578 = vld [vmem:[%s1113 + $0xda] sm:$0xff]
      %v7579 = vld [vmem:[%s1113 + $0xe2] sm:$0xff]
      %v7580 = vld [vmem:[%s1113 + $0xf2] sm:$0xff]
      %v7581 = vld [vmem:[%s1113 + $0xfa] sm:$0xff]
      %v7582 = vld [vmem:[%s1113 + $0x10a] sm:$0xff]
      %v7583 = vld [vmem:[%s1113 + $0x112] sm:$0xff]
      %v7584 = vld [vmem:[%s1113 + $0x122] sm:$0xff]
      %v7585 = vld [vmem:[%s1113 + $0x12a] sm:$0xff]
      %v7586 = vld [vmem:[%s1113 + $0x13a] sm:$0xff]
      %v7587 = vld [vmem:[%s1113 + $0x142] sm:$0xff]
      %v7588 = vld [vmem:[%s1113 + $0x152] sm:$0xff]
      %v7589 = vld [vmem:[%s1113 + $0x15a] sm:$0xff]
      %v7590 = vld [vmem:[%s1113 + $0x16a] sm:$0xff]
      %v7591 = vld [vmem:[%s1113 + $0x172] sm:$0xff]
      %v7592 = vadd.f32 %v7528, %v7560
      %v7593 = vadd.f32 %v7529, %v7561
      %v7594 = vadd.f32 %v7530, %v7562
      %v7595 = vadd.f32 %v7531, %v7563
      %v7596 = vadd.f32 %v7532, %v7564
      %v7597 = vadd.f32 %v7533, %v7565
      %v7598 = vadd.f32 %v7534, %v7566
      %v7599 = vadd.f32 %v7535, %v7567
      %v7600 = vadd.f32 %v7536, %v7568
      %v7601 = vadd.f32 %v7537, %v7569
      %v7602 = vadd.f32 %v7538, %v7570
      %v7603 = vadd.f32 %v7539, %v7571
      %v7604 = vadd.f32 %v7540, %v7572
      %v7605 = vadd.f32 %v7541, %v7573
      %v7606 = vadd.f32 %v7542, %v7574
      %v7607 = vadd.f32 %v7543, %v7575
      %v7608 = vadd.f32 %v7544, %v7576
      %v7609 = vadd.f32 %v7545, %v7577
      %v7610 = vadd.f32 %v7546, %v7578
      %v7611 = vadd.f32 %v7547, %v7579
      %v7612 = vadd.f32 %v7548, %v7580
      %v7613 = vadd.f32 %v7549, %v7581
      %v7614 = vadd.f32 %v7550, %v7582
      %v7615 = vadd.f32 %v7551, %v7583
      %v7616 = vadd.f32 %v7552, %v7584
      %v7617 = vadd.f32 %v7553, %v7585
      %v7618 = vadd.f32 %v7554, %v7586
      %v7619 = vadd.f32 %v7555, %v7587
      %v7620 = vadd.f32 %v7556, %v7588
      %v7621 = vadd.f32 %v7557, %v7589
      %v7622 = vadd.f32 %v7558, %v7590
      %v7623 = vadd.f32 %v7559, %v7591
      %v7624 = vmul.f32 %v7592, 0.11111111
      %v7625 = vmul.f32 %v7593, 0.11111111
      %v7626 = vmul.f32 %v7594, 0.11111111
      %v7627 = vmul.f32 %v7595, 0.11111111
      %v7628 = vmul.f32 %v7596, 0.11111111
      %v7629 = vmul.f32 %v7597, 0.11111111
      %v7630 = vmul.f32 %v7598, 0.11111111
      %v7631 = vmul.f32 %v7599, 0.11111111
      %v7632 = vmul.f32 %v7600, 0.11111111
      %v7633 = vmul.f32 %v7601, 0.11111111
      %v7634 = vmul.f32 %v7602, 0.11111111
      %v7635 = vmul.f32 %v7603, 0.11111111
      %v7636 = vmul.f32 %v7604, 0.11111111
      %v7637 = vmul.f32 %v7605, 0.11111111
      %v7638 = vmul.f32 %v7606, 0.11111111
      %v7639 = vmul.f32 %v7607, 0.11111111
      %v7640 = vmul.f32 %v7608, 0.11111111
      %v7641 = vmul.f32 %v7609, 0.11111111
      %v7642 = vmul.f32 %v7610, 0.11111111
      %v7643 = vmul.f32 %v7611, 0.11111111
      %v7644 = vmul.f32 %v7612, 0.11111111
      %v7645 = vmul.f32 %v7613, 0.11111111
      %v7646 = vmul.f32 %v7614, 0.11111111
      %v7647 = vmul.f32 %v7615, 0.11111111
      %v7648 = vmul.f32 %v7616, 0.11111111
      %v7649 = vmul.f32 %v7617, 0.11111111
      %v7650 = vmul.f32 %v7618, 0.11111111
      %v7651 = vmul.f32 %v7619, 0.11111111
      %v7652 = vmul.f32 %v7620, 0.11111111
      %v7653 = vmul.f32 %v7621, 0.11111111
      %v7654 = vmul.f32 %v7622, 0.11111111
      %v7655 = vmul.f32 %v7623, 0.11111111
      %7688 = vrot.lane.b32.xlu0 %v7624, 10
      %v7689 = vpop.permute.xlu0 %7688
      %7690 = vrot.lane.b32.xlu0 %v7625, 10
      %v7691 = vpop.permute.xlu0 %7690
      %7692 = vrot.lane.b32.xlu0 %v7626, 10
      %v7693 = vpop.permute.xlu0 %7692
      %7694 = vrot.lane.b32.xlu0 %v7627, 10
      %v7695 = vpop.permute.xlu0 %7694
      %7696 = vrot.lane.b32.xlu0 %v7628, 10
      %v7697 = vpop.permute.xlu0 %7696
      %7698 = vrot.lane.b32.xlu0 %v7629, 10
      %v7699 = vpop.permute.xlu0 %7698
      %7700 = vrot.lane.b32.xlu0 %v7630, 10
      %v7701 = vpop.permute.xlu0 %7700
      %7702 = vrot.lane.b32.xlu0 %v7631, 10
      %v7703 = vpop.permute.xlu0 %7702
      %7704 = vrot.lane.b32.xlu0 %v7632, 10
      %v7705 = vpop.permute.xlu0 %7704
      %7706 = vrot.lane.b32.xlu0 %v7633, 10
      %v7707 = vpop.permute.xlu0 %7706
      %7708 = vrot.lane.b32.xlu0 %v7634, 10
      %v7709 = vpop.permute.xlu0 %7708
      %7710 = vrot.lane.b32.xlu0 %v7635, 10
      %v7711 = vpop.permute.xlu0 %7710
      %7712 = vrot.lane.b32.xlu0 %v7636, 10
      %v7713 = vpop.permute.xlu0 %7712
      %7714 = vrot.lane.b32.xlu0 %v7637, 10
      %v7715 = vpop.permute.xlu0 %7714
      %7716 = vrot.lane.b32.xlu0 %v7638, 10
      %v7717 = vpop.permute.xlu0 %7716
      %7718 = vrot.lane.b32.xlu0 %v7639, 10
      %v7719 = vpop.permute.xlu0 %7718
      %7720 = vrot.lane.b32.xlu0 %v7640, 10
      %v7721 = vpop.permute.xlu0 %7720
      %7722 = vrot.lane.b32.xlu0 %v7641, 10
      %v7723 = vpop.permute.xlu0 %7722
      %7724 = vrot.lane.b32.xlu0 %v7642, 10
      %v7725 = vpop.permute.xlu0 %7724
      %7726 = vrot.lane.b32.xlu0 %v7643, 10
      %v7727 = vpop.permute.xlu0 %7726
      %7728 = vrot.lane.b32.xlu0 %v7644, 10
      %v7729 = vpop.permute.xlu0 %7728
      %7730 = vrot.lane.b32.xlu0 %v7645, 10
      %v7731 = vpop.permute.xlu0 %7730
      %7732 = vrot.lane.b32.xlu0 %v7646, 10
      %v7733 = vpop.permute.xlu0 %7732
      %7734 = vrot.lane.b32.xlu0 %v7647, 10
      %v7735 = vpop.permute.xlu0 %7734
      %7736 = vrot.lane.b32.xlu0 %v7648, 10
      %v7737 = vpop.permute.xlu0 %7736
      %7738 = vrot.lane.b32.xlu0 %v7649, 10
      %v7739 = vpop.permute.xlu0 %7738
      %7740 = vrot.lane.b32.xlu0 %v7650, 10
      %v7741 = vpop.permute.xlu0 %7740
      %7742 = vrot.lane.b32.xlu0 %v7651, 10
      %v7743 = vpop.permute.xlu0 %7742
      %7744 = vrot.lane.b32.xlu0 %v7652, 10
      %v7745 = vpop.permute.xlu0 %7744
      %7746 = vrot.lane.b32.xlu0 %v7653, 10
      %v7747 = vpop.permute.xlu0 %7746
      %7748 = vrot.lane.b32.xlu0 %v7654, 10
      %v7749 = vpop.permute.xlu0 %7748
      %7750 = vrot.lane.b32.xlu0 %v7655, 10
      %v7751 = vpop.permute.xlu0 %7750
      %vm7784 = vcmask 97360
      %7785 = vst.msk [vmem:[%s692 + $0x1] sm:$0xff] %vm7784, %v7689
      %7786 = vst.msk [vmem:[%s692 + $0x9] sm:$0xff] %vm7784, %v7691
      %7787 = vst.msk [vmem:[%s692 + $0x19] sm:$0xff] %vm7784, %v7693
      %7788 = vst.msk [vmem:[%s692 + $0x21] sm:$0xff] %vm7784, %v7695
      %7789 = vst.msk [vmem:[%s692 + $0x31] sm:$0xff] %vm7784, %v7697
      %7790 = vst.msk [vmem:[%s692 + $0x39] sm:$0xff] %vm7784, %v7699
      %7791 = vst.msk [vmem:[%s692 + $0x49] sm:$0xff] %vm7784, %v7701
      %7792 = vst.msk [vmem:[%s692 + $0x51] sm:$0xff] %vm7784, %v7703
      %7793 = vst.msk [vmem:[%s692 + $0x61] sm:$0xff] %vm7784, %v7705
      %7794 = vst.msk [vmem:[%s692 + $0x69] sm:$0xff] %vm7784, %v7707
      %7795 = vst.msk [vmem:[%s692 + $0x79] sm:$0xff] %vm7784, %v7709
      %7796 = vst.msk [vmem:[%s692 + $0x81] sm:$0xff] %vm7784, %v7711
      %7797 = vst.msk [vmem:[%s692 + $0x91] sm:$0xff] %vm7784, %v7713
      %7798 = vst.msk [vmem:[%s692 + $0x99] sm:$0xff] %vm7784, %v7715
      %7799 = vst.msk [vmem:[%s692 + $0xa9] sm:$0xff] %vm7784, %v7717
      %7800 = vst.msk [vmem:[%s692 + $0xb1] sm:$0xff] %vm7784, %v7719
      %7801 = vst.msk [vmem:[%s692 + $0xc1] sm:$0xff] %vm7784, %v7721
      %7802 = vst.msk [vmem:[%s692 + $0xc9] sm:$0xff] %vm7784, %v7723
      %7803 = vst.msk [vmem:[%s692 + $0xd9] sm:$0xff] %vm7784, %v7725
      %7804 = vst.msk [vmem:[%s692 + $0xe1] sm:$0xff] %vm7784, %v7727
      %7805 = vst.msk [vmem:[%s692 + $0xf1] sm:$0xff] %vm7784, %v7729
      %7806 = vst.msk [vmem:[%s692 + $0xf9] sm:$0xff] %vm7784, %v7731
      %7807 = vst.msk [vmem:[%s692 + $0x109] sm:$0xff] %vm7784, %v7733
      %7808 = vst.msk [vmem:[%s692 + $0x111] sm:$0xff] %vm7784, %v7735
      %7809 = vst.msk [vmem:[%s692 + $0x121] sm:$0xff] %vm7784, %v7737
      %7810 = vst.msk [vmem:[%s692 + $0x129] sm:$0xff] %vm7784, %v7739
      %7811 = vst.msk [vmem:[%s692 + $0x139] sm:$0xff] %vm7784, %v7741
      %7812 = vst.msk [vmem:[%s692 + $0x141] sm:$0xff] %vm7784, %v7743
      %7813 = vst.msk [vmem:[%s692 + $0x151] sm:$0xff] %vm7784, %v7745
      %7814 = vst.msk [vmem:[%s692 + $0x159] sm:$0xff] %vm7784, %v7747
      %7815 = vst.msk [vmem:[%s692 + $0x169] sm:$0xff] %vm7784, %v7749
      %7816 = vst.msk [vmem:[%s692 + $0x171] sm:$0xff] %vm7784, %v7751
      %v7817 = vld [vmem:[%s5] sm:$0xf]
      %v7818 = vld [vmem:[%s5 + $0x4] sm:$0xf]
      %v7819 = vld [vmem:[%s5 + $0x8] sm:$0xf]
      %v7820 = vld [vmem:[%s5 + $0xc] sm:$0xf]
      %v7821 = vld [vmem:[%s5 + $0x10] sm:$0xf]
      %v7822 = vld [vmem:[%s5 + $0x14] sm:$0xf]
      %v7823 = vld [vmem:[%s5 + $0x18] sm:$0xf]
      %v7824 = vld [vmem:[%s5 + $0x1c] sm:$0xf]
      %v7825 = vld [vmem:[%s5 + $0x20] sm:$0xf]
      %v7826 = vld [vmem:[%s5 + $0x24] sm:$0xf]
      %v7827 = vld [vmem:[%s5 + $0x28] sm:$0xf]
      %v7828 = vld [vmem:[%s5 + $0x2c] sm:$0xf]
      %v7829 = vld [vmem:[%s5 + $0x30] sm:$0xf]
      %v7830 = vld [vmem:[%s5 + $0x34] sm:$0x3]
      %v7831 = vld [vmem:[#allocation4] sm:$0xff]
      %v7832 = vld [vmem:[#allocation4 + $0x8] sm:$0xff]
      %v7833 = vld [vmem:[#allocation4 + $0x18] sm:$0xff]
      %v7834 = vld [vmem:[#allocation4 + $0x20] sm:$0xff]
      %v7835 = vld [vmem:[#allocation4 + $0x30] sm:$0xff]
      %v7836 = vld [vmem:[#allocation4 + $0x38] sm:$0xff]
      %v7837 = vld [vmem:[#allocation4 + $0x48] sm:$0xff]
      %v7838 = vld [vmem:[#allocation4 + $0x50] sm:$0xff]
      %v7839 = vld [vmem:[#allocation4 + $0x60] sm:$0xff]
      %v7840 = vld [vmem:[#allocation4 + $0x68] sm:$0xff]
      %v7841 = vld [vmem:[#allocation4 + $0x78] sm:$0xff]
      %v7842 = vld [vmem:[#allocation4 + $0x80] sm:$0xff]
      %v7843 = vld [vmem:[#allocation4 + $0x90] sm:$0xff]
      %v7844 = vld [vmem:[#allocation4 + $0x98] sm:$0xff]
      %v7845 = vld [vmem:[#allocation4 + $0xa8] sm:$0xff]
      %v7846 = vld [vmem:[#allocation4 + $0xb0] sm:$0xff]
      %v7847 = vld [vmem:[#allocation4 + $0xc0] sm:$0xff]
      %v7848 = vld [vmem:[#allocation4 + $0xc8] sm:$0xff]
      %v7849 = vld [vmem:[#allocation4 + $0xd8] sm:$0xff]
      %v7850 = vld [vmem:[#allocation4 + $0xe0] sm:$0xff]
      %v7851 = vld [vmem:[#allocation4 + $0xf0] sm:$0xff]
      %v7852 = vld [vmem:[#allocation4 + $0xf8] sm:$0xff]
      %v7853 = vld [vmem:[#allocation4 + $0x108] sm:$0xff]
      %v7854 = vld [vmem:[#allocation4 + $0x110] sm:$0xff]
      %v7855 = vld [vmem:[#allocation4 + $0x120] sm:$0xff]
      %v7856 = vld [vmem:[#allocation4 + $0x128] sm:$0xff]
      %v7857 = vld [vmem:[#allocation4 + $0x138] sm:$0xff]
      %v7858 = vld [vmem:[#allocation4 + $0x140] sm:$0xff]
      %v7859 = vld [vmem:[#allocation4 + $0x150] sm:$0xff]
      %v7860 = vld [vmem:[#allocation4 + $0x158] sm:$0xff]
      %v7861 = vld [vmem:[#allocation4 + $0x168] sm:$0xff]
      %v7862 = vld [vmem:[#allocation4 + $0x170] sm:$0xff]
      %v7863 = vld [vmem:[#allocation4 + $0x1] sm:$0xff]
      %v7864 = vld [vmem:[#allocation4 + $0x9] sm:$0xff]
      %v7865 = vld [vmem:[#allocation4 + $0x19] sm:$0xff]
      %v7866 = vld [vmem:[#allocation4 + $0x21] sm:$0xff]
      %v7867 = vld [vmem:[#allocation4 + $0x31] sm:$0xff]
      %v7868 = vld [vmem:[#allocation4 + $0x39] sm:$0xff]
      %v7869 = vld [vmem:[#allocation4 + $0x49] sm:$0xff]
      %v7870 = vld [vmem:[#allocation4 + $0x51] sm:$0xff]
      %v7871 = vld [vmem:[#allocation4 + $0x61] sm:$0xff]
      %v7872 = vld [vmem:[#allocation4 + $0x69] sm:$0xff]
      %v7873 = vld [vmem:[#allocation4 + $0x79] sm:$0xff]
      %v7874 = vld [vmem:[#allocation4 + $0x81] sm:$0xff]
      %v7875 = vld [vmem:[#allocation4 + $0x91] sm:$0xff]
      %v7876 = vld [vmem:[#allocation4 + $0x99] sm:$0xff]
      %v7877 = vld [vmem:[#allocation4 + $0xa9] sm:$0xff]
      %v7878 = vld [vmem:[#allocation4 + $0xb1] sm:$0xff]
      %v7879 = vld [vmem:[#allocation4 + $0xc1] sm:$0xff]
      %v7880 = vld [vmem:[#allocation4 + $0xc9] sm:$0xff]
      %v7881 = vld [vmem:[#allocation4 + $0xd9] sm:$0xff]
      %v7882 = vld [vmem:[#allocation4 + $0xe1] sm:$0xff]
      %v7883 = vld [vmem:[#allocation4 + $0xf1] sm:$0xff]
      %v7884 = vld [vmem:[#allocation4 + $0xf9] sm:$0xff]
      %v7885 = vld [vmem:[#allocation4 + $0x109] sm:$0xff]
      %v7886 = vld [vmem:[#allocation4 + $0x111] sm:$0xff]
      %v7887 = vld [vmem:[#allocation4 + $0x121] sm:$0xff]
      %v7888 = vld [vmem:[#allocation4 + $0x129] sm:$0xff]
      %v7889 = vld [vmem:[#allocation4 + $0x139] sm:$0xff]
      %v7890 = vld [vmem:[#allocation4 + $0x141] sm:$0xff]
      %v7891 = vld [vmem:[#allocation4 + $0x151] sm:$0xff]
      %v7892 = vld [vmem:[#allocation4 + $0x159] sm:$0xff]
      %v7893 = vld [vmem:[#allocation4 + $0x169] sm:$0xff]
      %v7894 = vld [vmem:[#allocation4 + $0x171] sm:$0xff]
      %v7895 = vld [vmem:[#allocation4 + $0x2] sm:$0xff]
      %v7896 = vld [vmem:[#allocation4 + $0xa] sm:$0xff]
      %v7897 = vld [vmem:[#allocation4 + $0x1a] sm:$0xff]
      %v7898 = vld [vmem:[#allocation4 + $0x22] sm:$0xff]
      %v7899 = vld [vmem:[#allocation4 + $0x32] sm:$0xff]
      %v7900 = vld [vmem:[#allocation4 + $0x3a] sm:$0xff]
      %v7901 = vld [vmem:[#allocation4 + $0x4a] sm:$0xff]
      %v7902 = vld [vmem:[#allocation4 + $0x52] sm:$0xff]
      %v7903 = vld [vmem:[#allocation4 + $0x62] sm:$0xff]
      %v7904 = vld [vmem:[#allocation4 + $0x6a] sm:$0xff]
      %v7905 = vld [vmem:[#allocation4 + $0x7a] sm:$0xff]
      %v7906 = vld [vmem:[#allocation4 + $0x82] sm:$0xff]
      %v7907 = vld [vmem:[#allocation4 + $0x92] sm:$0xff]
      %v7908 = vld [vmem:[#allocation4 + $0x9a] sm:$0xff]
      %v7909 = vld [vmem:[#allocation4 + $0xaa] sm:$0xff]
      %v7910 = vld [vmem:[#allocation4 + $0xb2] sm:$0xff]
      %v7911 = vld [vmem:[#allocation4 + $0xc2] sm:$0xff]
      %v7912 = vld [vmem:[#allocation4 + $0xca] sm:$0xff]
      %v7913 = vld [vmem:[#allocation4 + $0xda] sm:$0xff]
      %v7914 = vld [vmem:[#allocation4 + $0xe2] sm:$0xff]
      %v7915 = vld [vmem:[#allocation4 + $0xf2] sm:$0xff]
      %v7916 = vld [vmem:[#allocation4 + $0xfa] sm:$0xff]
      %v7917 = vld [vmem:[#allocation4 + $0x10a] sm:$0xff]
      %v7918 = vld [vmem:[#allocation4 + $0x112] sm:$0xff]
      %v7919 = vld [vmem:[#allocation4 + $0x122] sm:$0xff]
      %v7920 = vld [vmem:[#allocation4 + $0x12a] sm:$0xff]
      %v7921 = vld [vmem:[#allocation4 + $0x13a] sm:$0xff]
      %v7922 = vld [vmem:[#allocation4 + $0x142] sm:$0xff]
      %v7923 = vld [vmem:[#allocation4 + $0x152] sm:$0xff]
      %v7924 = vld [vmem:[#allocation4 + $0x15a] sm:$0xff]
      %v7925 = vld [vmem:[#allocation4 + $0x16a] sm:$0xff]
      %v7926 = vld [vmem:[#allocation4 + $0x172] sm:$0xff]
      %v7927 = vld [vmem:[%s692] sm:$0xff]
      %v7928 = vld [vmem:[%s692 + $0x8] sm:$0xff]
      %v7929 = vld [vmem:[%s692 + $0x18] sm:$0xff]
      %v7930 = vld [vmem:[%s692 + $0x20] sm:$0xff]
      %v7931 = vld [vmem:[%s692 + $0x30] sm:$0xff]
      %v7932 = vld [vmem:[%s692 + $0x38] sm:$0xff]
      %v7933 = vld [vmem:[%s692 + $0x48] sm:$0xff]
      %v7934 = vld [vmem:[%s692 + $0x50] sm:$0xff]
      %v7935 = vld [vmem:[%s692 + $0x60] sm:$0xff]
      %v7936 = vld [vmem:[%s692 + $0x68] sm:$0xff]
      %v7937 = vld [vmem:[%s692 + $0x78] sm:$0xff]
      %v7938 = vld [vmem:[%s692 + $0x80] sm:$0xff]
      %v7939 = vld [vmem:[%s692 + $0x90] sm:$0xff]
      %v7940 = vld [vmem:[%s692 + $0x98] sm:$0xff]
      %v7941 = vld [vmem:[%s692 + $0xa8] sm:$0xff]
      %v7942 = vld [vmem:[%s692 + $0xb0] sm:$0xff]
      %v7943 = vld [vmem:[%s692 + $0xc0] sm:$0xff]
      %v7944 = vld [vmem:[%s692 + $0xc8] sm:$0xff]
      %v7945 = vld [vmem:[%s692 + $0xd8] sm:$0xff]
      %v7946 = vld [vmem:[%s692 + $0xe0] sm:$0xff]
      %v7947 = vld [vmem:[%s692 + $0xf0] sm:$0xff]
      %v7948 = vld [vmem:[%s692 + $0xf8] sm:$0xff]
      %v7949 = vld [vmem:[%s692 + $0x108] sm:$0xff]
      %v7950 = vld [vmem:[%s692 + $0x110] sm:$0xff]
      %v7951 = vld [vmem:[%s692 + $0x120] sm:$0xff]
      %v7952 = vld [vmem:[%s692 + $0x128] sm:$0xff]
      %v7953 = vld [vmem:[%s692 + $0x138] sm:$0xff]
      %v7954 = vld [vmem:[%s692 + $0x140] sm:$0xff]
      %v7955 = vld [vmem:[%s692 + $0x150] sm:$0xff]
      %v7956 = vld [vmem:[%s692 + $0x158] sm:$0xff]
      %v7957 = vld [vmem:[%s692 + $0x168] sm:$0xff]
      %v7958 = vld [vmem:[%s692 + $0x170] sm:$0xff]
      %v7959 = vld [vmem:[%s692 + $0x1] sm:$0xff]
      %v7960 = vld [vmem:[%s692 + $0x9] sm:$0xff]
      %v7961 = vld [vmem:[%s692 + $0x19] sm:$0xff]
      %v7962 = vld [vmem:[%s692 + $0x21] sm:$0xff]
      %v7963 = vld [vmem:[%s692 + $0x31] sm:$0xff]
      %v7964 = vld [vmem:[%s692 + $0x39] sm:$0xff]
      %v7965 = vld [vmem:[%s692 + $0x49] sm:$0xff]
      %v7966 = vld [vmem:[%s692 + $0x51] sm:$0xff]
      %v7967 = vld [vmem:[%s692 + $0x61] sm:$0xff]
      %v7968 = vld [vmem:[%s692 + $0x69] sm:$0xff]
      %v7969 = vld [vmem:[%s692 + $0x79] sm:$0xff]
      %v7970 = vld [vmem:[%s692 + $0x81] sm:$0xff]
      %v7971 = vld [vmem:[%s692 + $0x91] sm:$0xff]
      %v7972 = vld [vmem:[%s692 + $0x99] sm:$0xff]
      %v7973 = vld [vmem:[%s692 + $0xa9] sm:$0xff]
      %v7974 = vld [vmem:[%s692 + $0xb1] sm:$0xff]
      %v7975 = vld [vmem:[%s692 + $0xc1] sm:$0xff]
      %v7976 = vld [vmem:[%s692 + $0xc9] sm:$0xff]
      %v7977 = vld [vmem:[%s692 + $0xd9] sm:$0xff]
      %v7978 = vld [vmem:[%s692 + $0xe1] sm:$0xff]
      %v7979 = vld [vmem:[%s692 + $0xf1] sm:$0xff]
      %v7980 = vld [vmem:[%s692 + $0xf9] sm:$0xff]
      %v7981 = vld [vmem:[%s692 + $0x109] sm:$0xff]
      %v7982 = vld [vmem:[%s692 + $0x111] sm:$0xff]
      %v7983 = vld [vmem:[%s692 + $0x121] sm:$0xff]
      %v7984 = vld [vmem:[%s692 + $0x129] sm:$0xff]
      %v7985 = vld [vmem:[%s692 + $0x139] sm:$0xff]
      %v7986 = vld [vmem:[%s692 + $0x141] sm:$0xff]
      %v7987 = vld [vmem:[%s692 + $0x151] sm:$0xff]
      %v7988 = vld [vmem:[%s692 + $0x159] sm:$0xff]
      %v7989 = vld [vmem:[%s692 + $0x169] sm:$0xff]
      %v7990 = vld [vmem:[%s692 + $0x171] sm:$0xff]
      %v7991 = vld [vmem:[%s692 + $0x2] sm:$0xff]
      %v7992 = vld [vmem:[%s692 + $0xa] sm:$0xff]
      %v7993 = vld [vmem:[%s692 + $0x1a] sm:$0xff]
      %v7994 = vld [vmem:[%s692 + $0x22] sm:$0xff]
      %v7995 = vld [vmem:[%s692 + $0x32] sm:$0xff]
      %v7996 = vld [vmem:[%s692 + $0x3a] sm:$0xff]
      %v7997 = vld [vmem:[%s692 + $0x4a] sm:$0xff]
      %v7998 = vld [vmem:[%s692 + $0x52] sm:$0xff]
      %v7999 = vld [vmem:[%s692 + $0x62] sm:$0xff]
      %v8000 = vld [vmem:[%s692 + $0x6a] sm:$0xff]
      %v8001 = vld [vmem:[%s692 + $0x7a] sm:$0xff]
      %v8002 = vld [vmem:[%s692 + $0x82] sm:$0xff]
      %v8003 = vld [vmem:[%s692 + $0x92] sm:$0xff]
      %v8004 = vld [vmem:[%s692 + $0x9a] sm:$0xff]
      %v8005 = vld [vmem:[%s692 + $0xaa] sm:$0xff]
      %v8006 = vld [vmem:[%s692 + $0xb2] sm:$0xff]
      %v8007 = vld [vmem:[%s692 + $0xc2] sm:$0xff]
      %v8008 = vld [vmem:[%s692 + $0xca] sm:$0xff]
      %v8009 = vld [vmem:[%s692 + $0xda] sm:$0xff]
      %v8010 = vld [vmem:[%s692 + $0xe2] sm:$0xff]
      %v8011 = vld [vmem:[%s692 + $0xf2] sm:$0xff]
      %v8012 = vld [vmem:[%s692 + $0xfa] sm:$0xff]
      %v8013 = vld [vmem:[%s692 + $0x10a] sm:$0xff]
      %v8014 = vld [vmem:[%s692 + $0x112] sm:$0xff]
      %v8015 = vld [vmem:[%s692 + $0x122] sm:$0xff]
      %v8016 = vld [vmem:[%s692 + $0x12a] sm:$0xff]
      %v8017 = vld [vmem:[%s692 + $0x13a] sm:$0xff]
      %v8018 = vld [vmem:[%s692 + $0x142] sm:$0xff]
      %v8019 = vld [vmem:[%s692 + $0x152] sm:$0xff]
      %v8020 = vld [vmem:[%s692 + $0x15a] sm:$0xff]
      %v8021 = vld [vmem:[%s692 + $0x16a] sm:$0xff]
      %v8022 = vld [vmem:[%s692 + $0x172] sm:$0xff]
      %s8023 = scalar_lea.vmem [#allocation4], 48
      %v8024 = vld [vmem:[%s8023] sm:$0xff]
      %v8025 = vld [vmem:[%s8023 + $0x8] sm:$0xff]
      %v8026 = vld [vmem:[%s8023 + $0x18] sm:$0xff]
      %v8027 = vld [vmem:[%s8023 + $0x20] sm:$0xff]
      %v8028 = vld [vmem:[%s8023 + $0x30] sm:$0xff]
      %v8029 = vld [vmem:[%s8023 + $0x38] sm:$0xff]
      %v8030 = vld [vmem:[%s8023 + $0x48] sm:$0xff]
      %v8031 = vld [vmem:[%s8023 + $0x50] sm:$0xff]
      %v8032 = vld [vmem:[%s8023 + $0x60] sm:$0xff]
      %v8033 = vld [vmem:[%s8023 + $0x68] sm:$0xff]
      %v8034 = vld [vmem:[%s8023 + $0x78] sm:$0xff]
      %v8035 = vld [vmem:[%s8023 + $0x80] sm:$0xff]
      %v8036 = vld [vmem:[%s8023 + $0x90] sm:$0xff]
      %v8037 = vld [vmem:[%s8023 + $0x98] sm:$0xff]
      %v8038 = vld [vmem:[%s8023 + $0xa8] sm:$0xff]
      %v8039 = vld [vmem:[%s8023 + $0xb0] sm:$0xff]
      %v8040 = vld [vmem:[%s8023 + $0xc0] sm:$0xff]
      %v8041 = vld [vmem:[%s8023 + $0xc8] sm:$0xff]
      %v8042 = vld [vmem:[%s8023 + $0xd8] sm:$0xff]
      %v8043 = vld [vmem:[%s8023 + $0xe0] sm:$0xff]
      %v8044 = vld [vmem:[%s8023 + $0xf0] sm:$0xff]
      %v8045 = vld [vmem:[%s8023 + $0xf8] sm:$0xff]
      %v8046 = vld [vmem:[%s8023 + $0x108] sm:$0xff]
      %v8047 = vld [vmem:[%s8023 + $0x110] sm:$0xff]
      %v8048 = vld [vmem:[%s8023 + $0x120] sm:$0xff]
      %v8049 = vld [vmem:[%s8023 + $0x128] sm:$0xff]
      %v8050 = vld [vmem:[%s8023 + $0x138] sm:$0xff]
      %v8051 = vld [vmem:[%s8023 + $0x140] sm:$0xff]
      %v8052 = vld [vmem:[%s8023 + $0x150] sm:$0xff]
      %v8053 = vld [vmem:[%s8023 + $0x158] sm:$0xff]
      %v8054 = vld [vmem:[%s8023 + $0x168] sm:$0xff]
      %v8055 = vld [vmem:[%s8023 + $0x170] sm:$0xff]
      %v8056 = vld [vmem:[%s8023 + $0x1] sm:$0xff]
      %v8057 = vld [vmem:[%s8023 + $0x9] sm:$0xff]
      %v8058 = vld [vmem:[%s8023 + $0x19] sm:$0xff]
      %v8059 = vld [vmem:[%s8023 + $0x21] sm:$0xff]
      %v8060 = vld [vmem:[%s8023 + $0x31] sm:$0xff]
      %v8061 = vld [vmem:[%s8023 + $0x39] sm:$0xff]
      %v8062 = vld [vmem:[%s8023 + $0x49] sm:$0xff]
      %v8063 = vld [vmem:[%s8023 + $0x51] sm:$0xff]
      %v8064 = vld [vmem:[%s8023 + $0x61] sm:$0xff]
      %v8065 = vld [vmem:[%s8023 + $0x69] sm:$0xff]
      %v8066 = vld [vmem:[%s8023 + $0x79] sm:$0xff]
      %v8067 = vld [vmem:[%s8023 + $0x81] sm:$0xff]
      %v8068 = vld [vmem:[%s8023 + $0x91] sm:$0xff]
      %v8069 = vld [vmem:[%s8023 + $0x99] sm:$0xff]
      %v8070 = vld [vmem:[%s8023 + $0xa9] sm:$0xff]
      %v8071 = vld [vmem:[%s8023 + $0xb1] sm:$0xff]
      %v8072 = vld [vmem:[%s8023 + $0xc1] sm:$0xff]
      %v8073 = vld [vmem:[%s8023 + $0xc9] sm:$0xff]
      %v8074 = vld [vmem:[%s8023 + $0xd9] sm:$0xff]
      %v8075 = vld [vmem:[%s8023 + $0xe1] sm:$0xff]
      %v8076 = vld [vmem:[%s8023 + $0xf1] sm:$0xff]
      %v8077 = vld [vmem:[%s8023 + $0xf9] sm:$0xff]
      %v8078 = vld [vmem:[%s8023 + $0x109] sm:$0xff]
      %v8079 = vld [vmem:[%s8023 + $0x111] sm:$0xff]
      %v8080 = vld [vmem:[%s8023 + $0x121] sm:$0xff]
      %v8081 = vld [vmem:[%s8023 + $0x129] sm:$0xff]
      %v8082 = vld [vmem:[%s8023 + $0x139] sm:$0xff]
      %v8083 = vld [vmem:[%s8023 + $0x141] sm:$0xff]
      %v8084 = vld [vmem:[%s8023 + $0x151] sm:$0xff]
      %v8085 = vld [vmem:[%s8023 + $0x159] sm:$0xff]
      %v8086 = vld [vmem:[%s8023 + $0x169] sm:$0xff]
      %v8087 = vld [vmem:[%s8023 + $0x171] sm:$0xff]
      %v8088 = vld [vmem:[%s8023 + $0x2] sm:$0xff]
      %v8089 = vld [vmem:[%s8023 + $0xa] sm:$0xff]
      %v8090 = vld [vmem:[%s8023 + $0x1a] sm:$0xff]
      %v8091 = vld [vmem:[%s8023 + $0x22] sm:$0xff]
      %v8092 = vld [vmem:[%s8023 + $0x32] sm:$0xff]
      %v8093 = vld [vmem:[%s8023 + $0x3a] sm:$0xff]
      %v8094 = vld [vmem:[%s8023 + $0x4a] sm:$0xff]
      %v8095 = vld [vmem:[%s8023 + $0x52] sm:$0xff]
      %v8096 = vld [vmem:[%s8023 + $0x62] sm:$0xff]
      %v8097 = vld [vmem:[%s8023 + $0x6a] sm:$0xff]
      %v8098 = vld [vmem:[%s8023 + $0x7a] sm:$0xff]
      %v8099 = vld [vmem:[%s8023 + $0x82] sm:$0xff]
      %v8100 = vld [vmem:[%s8023 + $0x92] sm:$0xff]
      %v8101 = vld [vmem:[%s8023 + $0x9a] sm:$0xff]
      %v8102 = vld [vmem:[%s8023 + $0xaa] sm:$0xff]
      %v8103 = vld [vmem:[%s8023 + $0xb2] sm:$0xff]
      %v8104 = vld [vmem:[%s8023 + $0xc2] sm:$0xff]
      %v8105 = vld [vmem:[%s8023 + $0xca] sm:$0xff]
      %v8106 = vld [vmem:[%s8023 + $0xda] sm:$0xff]
      %v8107 = vld [vmem:[%s8023 + $0xe2] sm:$0xff]
      %v8108 = vld [vmem:[%s8023 + $0xf2] sm:$0xff]
      %v8109 = vld [vmem:[%s8023 + $0xfa] sm:$0xff]
      %v8110 = vld [vmem:[%s8023 + $0x10a] sm:$0xff]
      %v8111 = vld [vmem:[%s8023 + $0x112] sm:$0xff]
      %v8112 = vld [vmem:[%s8023 + $0x122] sm:$0xff]
      %v8113 = vld [vmem:[%s8023 + $0x12a] sm:$0xff]
      %v8114 = vld [vmem:[%s8023 + $0x13a] sm:$0xff]
      %v8115 = vld [vmem:[%s8023 + $0x142] sm:$0xff]
      %v8116 = vld [vmem:[%s8023 + $0x152] sm:$0xff]
      %v8117 = vld [vmem:[%s8023 + $0x15a] sm:$0xff]
      %v8118 = vld [vmem:[%s8023 + $0x16a] sm:$0xff]
      %v8119 = vld [vmem:[%s8023 + $0x172] sm:$0xff]
      %8152 = vrot.lane.b32.xlu0 %v7863, 12
      %v8153 = vpop.permute.xlu0 %8152
      %8154 = vrot.lane.b32.xlu0 %v7864, 12
      %v8155 = vpop.permute.xlu0 %8154
      %8156 = vrot.lane.b32.xlu0 %v7865, 12
      %v8157 = vpop.permute.xlu0 %8156
      %8158 = vrot.lane.b32.xlu0 %v7866, 12
      %v8159 = vpop.permute.xlu0 %8158
      %8160 = vrot.lane.b32.xlu0 %v7867, 12
      %v8161 = vpop.permute.xlu0 %8160
      %8162 = vrot.lane.b32.xlu0 %v7868, 12
      %v8163 = vpop.permute.xlu0 %8162
      %8164 = vrot.lane.b32.xlu0 %v7869, 12
      %v8165 = vpop.permute.xlu0 %8164
      %8166 = vrot.lane.b32.xlu0 %v7870, 12
      %v8167 = vpop.permute.xlu0 %8166
      %8168 = vrot.lane.b32.xlu0 %v7871, 12
      %v8169 = vpop.permute.xlu0 %8168
      %8170 = vrot.lane.b32.xlu0 %v7872, 12
      %v8171 = vpop.permute.xlu0 %8170
      %8172 = vrot.lane.b32.xlu0 %v7873, 12
      %v8173 = vpop.permute.xlu0 %8172
      %8174 = vrot.lane.b32.xlu0 %v7874, 12
      %v8175 = vpop.permute.xlu0 %8174
      %8176 = vrot.lane.b32.xlu0 %v7875, 12
      %v8177 = vpop.permute.xlu0 %8176
      %8178 = vrot.lane.b32.xlu0 %v7876, 12
      %v8179 = vpop.permute.xlu0 %8178
      %8180 = vrot.lane.b32.xlu0 %v7877, 12
      %v8181 = vpop.permute.xlu0 %8180
      %8182 = vrot.lane.b32.xlu0 %v7878, 12
      %v8183 = vpop.permute.xlu0 %8182
      %8184 = vrot.lane.b32.xlu0 %v7879, 12
      %v8185 = vpop.permute.xlu0 %8184
      %8186 = vrot.lane.b32.xlu0 %v7880, 12
      %v8187 = vpop.permute.xlu0 %8186
      %8188 = vrot.lane.b32.xlu0 %v7881, 12
      %v8189 = vpop.permute.xlu0 %8188
      %8190 = vrot.lane.b32.xlu0 %v7882, 12
      %v8191 = vpop.permute.xlu0 %8190
      %8192 = vrot.lane.b32.xlu0 %v7883, 12
      %v8193 = vpop.permute.xlu0 %8192
      %8194 = vrot.lane.b32.xlu0 %v7884, 12
      %v8195 = vpop.permute.xlu0 %8194
      %8196 = vrot.lane.b32.xlu0 %v7885, 12
      %v8197 = vpop.permute.xlu0 %8196
      %8198 = vrot.lane.b32.xlu0 %v7886, 12
      %v8199 = vpop.permute.xlu0 %8198
      %8200 = vrot.lane.b32.xlu0 %v7887, 12
      %v8201 = vpop.permute.xlu0 %8200
      %8202 = vrot.lane.b32.xlu0 %v7888, 12
      %v8203 = vpop.permute.xlu0 %8202
      %8204 = vrot.lane.b32.xlu0 %v7889, 12
      %v8205 = vpop.permute.xlu0 %8204
      %8206 = vrot.lane.b32.xlu0 %v7890, 12
      %v8207 = vpop.permute.xlu0 %8206
      %8208 = vrot.lane.b32.xlu0 %v7891, 12
      %v8209 = vpop.permute.xlu0 %8208
      %8210 = vrot.lane.b32.xlu0 %v7892, 12
      %v8211 = vpop.permute.xlu0 %8210
      %8212 = vrot.lane.b32.xlu0 %v7893, 12
      %v8213 = vpop.permute.xlu0 %8212
      %8214 = vrot.lane.b32.xlu0 %v7894, 12
      %v8215 = vpop.permute.xlu0 %8214
      %8280 = vrot.lane.b32.xlu0 %v7895, 24
      %v8281 = vpop.permute.xlu0 %8280
      %8282 = vrot.lane.b32.xlu0 %v7896, 24
      %v8283 = vpop.permute.xlu0 %8282
      %8284 = vrot.lane.b32.xlu0 %v7897, 24
      %v8285 = vpop.permute.xlu0 %8284
      %8286 = vrot.lane.b32.xlu0 %v7898, 24
      %v8287 = vpop.permute.xlu0 %8286
      %8288 = vrot.lane.b32.xlu0 %v7899, 24
      %v8289 = vpop.permute.xlu0 %8288
      %8290 = vrot.lane.b32.xlu0 %v7900, 24
      %v8291 = vpop.permute.xlu0 %8290
      %8292 = vrot.lane.b32.xlu0 %v7901, 24
      %v8293 = vpop.permute.xlu0 %8292
      %8294 = vrot.lane.b32.xlu0 %v7902, 24
      %v8295 = vpop.permute.xlu0 %8294
      %8296 = vrot.lane.b32.xlu0 %v7903, 24
      %v8297 = vpop.permute.xlu0 %8296
      %8298 = vrot.lane.b32.xlu0 %v7904, 24
      %v8299 = vpop.permute.xlu0 %8298
      %8300 = vrot.lane.b32.xlu0 %v7905, 24
      %v8301 = vpop.permute.xlu0 %8300
      %8302 = vrot.lane.b32.xlu0 %v7906, 24
      %v8303 = vpop.permute.xlu0 %8302
      %8304 = vrot.lane.b32.xlu0 %v7907, 24
      %v8305 = vpop.permute.xlu0 %8304
      %8306 = vrot.lane.b32.xlu0 %v7908, 24
      %v8307 = vpop.permute.xlu0 %8306
      %8308 = vrot.lane.b32.xlu0 %v7909, 24
      %v8309 = vpop.permute.xlu0 %8308
      %8310 = vrot.lane.b32.xlu0 %v7910, 24
      %v8311 = vpop.permute.xlu0 %8310
      %8312 = vrot.lane.b32.xlu0 %v7911, 24
      %v8313 = vpop.permute.xlu0 %8312
      %8314 = vrot.lane.b32.xlu0 %v7912, 24
      %v8315 = vpop.permute.xlu0 %8314
      %8316 = vrot.lane.b32.xlu0 %v7913, 24
      %v8317 = vpop.permute.xlu0 %8316
      %8318 = vrot.lane.b32.xlu0 %v7914, 24
      %v8319 = vpop.permute.xlu0 %8318
      %8320 = vrot.lane.b32.xlu0 %v7915, 24
      %v8321 = vpop.permute.xlu0 %8320
      %8322 = vrot.lane.b32.xlu0 %v7916, 24
      %v8323 = vpop.permute.xlu0 %8322
      %8324 = vrot.lane.b32.xlu0 %v7917, 24
      %v8325 = vpop.permute.xlu0 %8324
      %8326 = vrot.lane.b32.xlu0 %v7918, 24
      %v8327 = vpop.permute.xlu0 %8326
      %8328 = vrot.lane.b32.xlu0 %v7919, 24
      %v8329 = vpop.permute.xlu0 %8328
      %8330 = vrot.lane.b32.xlu0 %v7920, 24
      %v8331 = vpop.permute.xlu0 %8330
      %8332 = vrot.lane.b32.xlu0 %v7921, 24
      %v8333 = vpop.permute.xlu0 %8332
      %8334 = vrot.lane.b32.xlu0 %v7922, 24
      %v8335 = vpop.permute.xlu0 %8334
      %8336 = vrot.lane.b32.xlu0 %v7923, 24
      %v8337 = vpop.permute.xlu0 %8336
      %8338 = vrot.lane.b32.xlu0 %v7924, 24
      %v8339 = vpop.permute.xlu0 %8338
      %8340 = vrot.lane.b32.xlu0 %v7925, 24
      %v8341 = vpop.permute.xlu0 %8340
      %8342 = vrot.lane.b32.xlu0 %v7926, 24
      %v8343 = vpop.permute.xlu0 %8342
      %8408 = vrot.lane.b32.xlu0 %v7927, 36
      %v8409 = vpop.permute.xlu0 %8408
      %8410 = vrot.lane.b32.xlu0 %v7928, 36
      %v8411 = vpop.permute.xlu0 %8410
      %8412 = vrot.lane.b32.xlu0 %v7929, 36
      %v8413 = vpop.permute.xlu0 %8412
      %8414 = vrot.lane.b32.xlu0 %v7930, 36
      %v8415 = vpop.permute.xlu0 %8414
      %8416 = vrot.lane.b32.xlu0 %v7931, 36
      %v8417 = vpop.permute.xlu0 %8416
      %8418 = vrot.lane.b32.xlu0 %v7932, 36
      %v8419 = vpop.permute.xlu0 %8418
      %8420 = vrot.lane.b32.xlu0 %v7933, 36
      %v8421 = vpop.permute.xlu0 %8420
      %8422 = vrot.lane.b32.xlu0 %v7934, 36
      %v8423 = vpop.permute.xlu0 %8422
      %8424 = vrot.lane.b32.xlu0 %v7935, 36
      %v8425 = vpop.permute.xlu0 %8424
      %8426 = vrot.lane.b32.xlu0 %v7936, 36
      %v8427 = vpop.permute.xlu0 %8426
      %8428 = vrot.lane.b32.xlu0 %v7937, 36
      %v8429 = vpop.permute.xlu0 %8428
      %8430 = vrot.lane.b32.xlu0 %v7938, 36
      %v8431 = vpop.permute.xlu0 %8430
      %8432 = vrot.lane.b32.xlu0 %v7939, 36
      %v8433 = vpop.permute.xlu0 %8432
      %8434 = vrot.lane.b32.xlu0 %v7940, 36
      %v8435 = vpop.permute.xlu0 %8434
      %8436 = vrot.lane.b32.xlu0 %v7941, 36
      %v8437 = vpop.permute.xlu0 %8436
      %8438 = vrot.lane.b32.xlu0 %v7942, 36
      %v8439 = vpop.permute.xlu0 %8438
      %8440 = vrot.lane.b32.xlu0 %v7943, 36
      %v8441 = vpop.permute.xlu0 %8440
      %8442 = vrot.lane.b32.xlu0 %v7944, 36
      %v8443 = vpop.permute.xlu0 %8442
      %8444 = vrot.lane.b32.xlu0 %v7945, 36
      %v8445 = vpop.permute.xlu0 %8444
      %8446 = vrot.lane.b32.xlu0 %v7946, 36
      %v8447 = vpop.permute.xlu0 %8446
      %8448 = vrot.lane.b32.xlu0 %v7947, 36
      %v8449 = vpop.permute.xlu0 %8448
      %8450 = vrot.lane.b32.xlu0 %v7948, 36
      %v8451 = vpop.permute.xlu0 %8450
      %8452 = vrot.lane.b32.xlu0 %v7949, 36
      %v8453 = vpop.permute.xlu0 %8452
      %8454 = vrot.lane.b32.xlu0 %v7950, 36
      %v8455 = vpop.permute.xlu0 %8454
      %8456 = vrot.lane.b32.xlu0 %v7951, 36
      %v8457 = vpop.permute.xlu0 %8456
      %8458 = vrot.lane.b32.xlu0 %v7952, 36
      %v8459 = vpop.permute.xlu0 %8458
      %8460 = vrot.lane.b32.xlu0 %v7953, 36
      %v8461 = vpop.permute.xlu0 %8460
      %8462 = vrot.lane.b32.xlu0 %v7954, 36
      %v8463 = vpop.permute.xlu0 %8462
      %8464 = vrot.lane.b32.xlu0 %v7955, 36
      %v8465 = vpop.permute.xlu0 %8464
      %8466 = vrot.lane.b32.xlu0 %v7956, 36
      %v8467 = vpop.permute.xlu0 %8466
      %8468 = vrot.lane.b32.xlu0 %v7957, 36
      %v8469 = vpop.permute.xlu0 %8468
      %8470 = vrot.lane.b32.xlu0 %v7958, 36
      %v8471 = vpop.permute.xlu0 %8470
      %8536 = vrot.lane.b32.xlu0 %v7959, 48
      %v8537 = vpop.permute.xlu0 %8536
      %8538 = vrot.lane.b32.xlu0 %v7960, 48
      %v8539 = vpop.permute.xlu0 %8538
      %8540 = vrot.lane.b32.xlu0 %v7961, 48
      %v8541 = vpop.permute.xlu0 %8540
      %8542 = vrot.lane.b32.xlu0 %v7962, 48
      %v8543 = vpop.permute.xlu0 %8542
      %8544 = vrot.lane.b32.xlu0 %v7963, 48
      %v8545 = vpop.permute.xlu0 %8544
      %8546 = vrot.lane.b32.xlu0 %v7964, 48
      %v8547 = vpop.permute.xlu0 %8546
      %8548 = vrot.lane.b32.xlu0 %v7965, 48
      %v8549 = vpop.permute.xlu0 %8548
      %8550 = vrot.lane.b32.xlu0 %v7966, 48
      %v8551 = vpop.permute.xlu0 %8550
      %8552 = vrot.lane.b32.xlu0 %v7967, 48
      %v8553 = vpop.permute.xlu0 %8552
      %8554 = vrot.lane.b32.xlu0 %v7968, 48
      %v8555 = vpop.permute.xlu0 %8554
      %8556 = vrot.lane.b32.xlu0 %v7969, 48
      %v8557 = vpop.permute.xlu0 %8556
      %8558 = vrot.lane.b32.xlu0 %v7970, 48
      %v8559 = vpop.permute.xlu0 %8558
      %8560 = vrot.lane.b32.xlu0 %v7971, 48
      %v8561 = vpop.permute.xlu0 %8560
      %8562 = vrot.lane.b32.xlu0 %v7972, 48
      %v8563 = vpop.permute.xlu0 %8562
      %8564 = vrot.lane.b32.xlu0 %v7973, 48
      %v8565 = vpop.permute.xlu0 %8564
      %8566 = vrot.lane.b32.xlu0 %v7974, 48
      %v8567 = vpop.permute.xlu0 %8566
      %8568 = vrot.lane.b32.xlu0 %v7975, 48
      %v8569 = vpop.permute.xlu0 %8568
      %8570 = vrot.lane.b32.xlu0 %v7976, 48
      %v8571 = vpop.permute.xlu0 %8570
      %8572 = vrot.lane.b32.xlu0 %v7977, 48
      %v8573 = vpop.permute.xlu0 %8572
      %8574 = vrot.lane.b32.xlu0 %v7978, 48
      %v8575 = vpop.permute.xlu0 %8574
      %8576 = vrot.lane.b32.xlu0 %v7979, 48
      %v8577 = vpop.permute.xlu0 %8576
      %8578 = vrot.lane.b32.xlu0 %v7980, 48
      %v8579 = vpop.permute.xlu0 %8578
      %8580 = vrot.lane.b32.xlu0 %v7981, 48
      %v8581 = vpop.permute.xlu0 %8580
      %8582 = vrot.lane.b32.xlu0 %v7982, 48
      %v8583 = vpop.permute.xlu0 %8582
      %8584 = vrot.lane.b32.xlu0 %v7983, 48
      %v8585 = vpop.permute.xlu0 %8584
      %8586 = vrot.lane.b32.xlu0 %v7984, 48
      %v8587 = vpop.permute.xlu0 %8586
      %8588 = vrot.lane.b32.xlu0 %v7985, 48
      %v8589 = vpop.permute.xlu0 %8588
      %8590 = vrot.lane.b32.xlu0 %v7986, 48
      %v8591 = vpop.permute.xlu0 %8590
      %8592 = vrot.lane.b32.xlu0 %v7987, 48
      %v8593 = vpop.permute.xlu0 %8592
      %8594 = vrot.lane.b32.xlu0 %v7988, 48
      %v8595 = vpop.permute.xlu0 %8594
      %8596 = vrot.lane.b32.xlu0 %v7989, 48
      %v8597 = vpop.permute.xlu0 %8596
      %8598 = vrot.lane.b32.xlu0 %v7990, 48
      %v8599 = vpop.permute.xlu0 %8598
      %8664 = vrot.lane.b32.xlu0 %v7991, 60
      %v8665 = vpop.permute.xlu0 %8664
      %8666 = vrot.lane.b32.xlu0 %v7992, 60
      %v8667 = vpop.permute.xlu0 %8666
      %8668 = vrot.lane.b32.xlu0 %v7993, 60
      %v8669 = vpop.permute.xlu0 %8668
      %8670 = vrot.lane.b32.xlu0 %v7994, 60
      %v8671 = vpop.permute.xlu0 %8670
      %8672 = vrot.lane.b32.xlu0 %v7995, 60
      %v8673 = vpop.permute.xlu0 %8672
      %8674 = vrot.lane.b32.xlu0 %v7996, 60
      %v8675 = vpop.permute.xlu0 %8674
      %8676 = vrot.lane.b32.xlu0 %v7997, 60
      %v8677 = vpop.permute.xlu0 %8676
      %8678 = vrot.lane.b32.xlu0 %v7998, 60
      %v8679 = vpop.permute.xlu0 %8678
      %8680 = vrot.lane.b32.xlu0 %v7999, 60
      %v8681 = vpop.permute.xlu0 %8680
      %8682 = vrot.lane.b32.xlu0 %v8000, 60
      %v8683 = vpop.permute.xlu0 %8682
      %8684 = vrot.lane.b32.xlu0 %v8001, 60
      %v8685 = vpop.permute.xlu0 %8684
      %8686 = vrot.lane.b32.xlu0 %v8002, 60
      %v8687 = vpop.permute.xlu0 %8686
      %8688 = vrot.lane.b32.xlu0 %v8003, 60
      %v8689 = vpop.permute.xlu0 %8688
      %8690 = vrot.lane.b32.xlu0 %v8004, 60
      %v8691 = vpop.permute.xlu0 %8690
      %8692 = vrot.lane.b32.xlu0 %v8005, 60
      %v8693 = vpop.permute.xlu0 %8692
      %8694 = vrot.lane.b32.xlu0 %v8006, 60
      %v8695 = vpop.permute.xlu0 %8694
      %8696 = vrot.lane.b32.xlu0 %v8007, 60
      %v8697 = vpop.permute.xlu0 %8696
      %8698 = vrot.lane.b32.xlu0 %v8008, 60
      %v8699 = vpop.permute.xlu0 %8698
      %8700 = vrot.lane.b32.xlu0 %v8009, 60
      %v8701 = vpop.permute.xlu0 %8700
      %8702 = vrot.lane.b32.xlu0 %v8010, 60
      %v8703 = vpop.permute.xlu0 %8702
      %8704 = vrot.lane.b32.xlu0 %v8011, 60
      %v8705 = vpop.permute.xlu0 %8704
      %8706 = vrot.lane.b32.xlu0 %v8012, 60
      %v8707 = vpop.permute.xlu0 %8706
      %8708 = vrot.lane.b32.xlu0 %v8013, 60
      %v8709 = vpop.permute.xlu0 %8708
      %8710 = vrot.lane.b32.xlu0 %v8014, 60
      %v8711 = vpop.permute.xlu0 %8710
      %8712 = vrot.lane.b32.xlu0 %v8015, 60
      %v8713 = vpop.permute.xlu0 %8712
      %8714 = vrot.lane.b32.xlu0 %v8016, 60
      %v8715 = vpop.permute.xlu0 %8714
      %8716 = vrot.lane.b32.xlu0 %v8017, 60
      %v8717 = vpop.permute.xlu0 %8716
      %8718 = vrot.lane.b32.xlu0 %v8018, 60
      %v8719 = vpop.permute.xlu0 %8718
      %8720 = vrot.lane.b32.xlu0 %v8019, 60
      %v8721 = vpop.permute.xlu0 %8720
      %8722 = vrot.lane.b32.xlu0 %v8020, 60
      %v8723 = vpop.permute.xlu0 %8722
      %8724 = vrot.lane.b32.xlu0 %v8021, 60
      %v8725 = vpop.permute.xlu0 %8724
      %8726 = vrot.lane.b32.xlu0 %v8022, 60
      %v8727 = vpop.permute.xlu0 %8726
      %8792 = vrot.lane.b32.xlu0 %v8024, 72
      %v8793 = vpop.permute.xlu0 %8792
      %8794 = vrot.lane.b32.xlu0 %v8025, 72
      %v8795 = vpop.permute.xlu0 %8794
      %8796 = vrot.lane.b32.xlu0 %v8026, 72
      %v8797 = vpop.permute.xlu0 %8796
      %8798 = vrot.lane.b32.xlu0 %v8027, 72
      %v8799 = vpop.permute.xlu0 %8798
      %8800 = vrot.lane.b32.xlu0 %v8028, 72
      %v8801 = vpop.permute.xlu0 %8800
      %8802 = vrot.lane.b32.xlu0 %v8029, 72
      %v8803 = vpop.permute.xlu0 %8802
      %8804 = vrot.lane.b32.xlu0 %v8030, 72
      %v8805 = vpop.permute.xlu0 %8804
      %8806 = vrot.lane.b32.xlu0 %v8031, 72
      %v8807 = vpop.permute.xlu0 %8806
      %8808 = vrot.lane.b32.xlu0 %v8032, 72
      %v8809 = vpop.permute.xlu0 %8808
      %8810 = vrot.lane.b32.xlu0 %v8033, 72
      %v8811 = vpop.permute.xlu0 %8810
      %8812 = vrot.lane.b32.xlu0 %v8034, 72
      %v8813 = vpop.permute.xlu0 %8812
      %8814 = vrot.lane.b32.xlu0 %v8035, 72
      %v8815 = vpop.permute.xlu0 %8814
      %8816 = vrot.lane.b32.xlu0 %v8036, 72
      %v8817 = vpop.permute.xlu0 %8816
      %8818 = vrot.lane.b32.xlu0 %v8037, 72
      %v8819 = vpop.permute.xlu0 %8818
      %8820 = vrot.lane.b32.xlu0 %v8038, 72
      %v8821 = vpop.permute.xlu0 %8820
      %8822 = vrot.lane.b32.xlu0 %v8039, 72
      %v8823 = vpop.permute.xlu0 %8822
      %8824 = vrot.lane.b32.xlu0 %v8040, 72
      %v8825 = vpop.permute.xlu0 %8824
      %8826 = vrot.lane.b32.xlu0 %v8041, 72
      %v8827 = vpop.permute.xlu0 %8826
      %8828 = vrot.lane.b32.xlu0 %v8042, 72
      %v8829 = vpop.permute.xlu0 %8828
      %8830 = vrot.lane.b32.xlu0 %v8043, 72
      %v8831 = vpop.permute.xlu0 %8830
      %8832 = vrot.lane.b32.xlu0 %v8044, 72
      %v8833 = vpop.permute.xlu0 %8832
      %8834 = vrot.lane.b32.xlu0 %v8045, 72
      %v8835 = vpop.permute.xlu0 %8834
      %8836 = vrot.lane.b32.xlu0 %v8046, 72
      %v8837 = vpop.permute.xlu0 %8836
      %8838 = vrot.lane.b32.xlu0 %v8047, 72
      %v8839 = vpop.permute.xlu0 %8838
      %8840 = vrot.lane.b32.xlu0 %v8048, 72
      %v8841 = vpop.permute.xlu0 %8840
      %8842 = vrot.lane.b32.xlu0 %v8049, 72
      %v8843 = vpop.permute.xlu0 %8842
      %8844 = vrot.lane.b32.xlu0 %v8050, 72
      %v8845 = vpop.permute.xlu0 %8844
      %8846 = vrot.lane.b32.xlu0 %v8051, 72
      %v8847 = vpop.permute.xlu0 %8846
      %8848 = vrot.lane.b32.xlu0 %v8052, 72
      %v8849 = vpop.permute.xlu0 %8848
      %8850 = vrot.lane.b32.xlu0 %v8053, 72
      %v8851 = vpop.permute.xlu0 %8850
      %8852 = vrot.lane.b32.xlu0 %v8054, 72
      %v8853 = vpop.permute.xlu0 %8852
      %8854 = vrot.lane.b32.xlu0 %v8055, 72
      %v8855 = vpop.permute.xlu0 %8854
      %8920 = vrot.lane.b32.xlu0 %v8056, 84
      %v8921 = vpop.permute.xlu0 %8920
      %8922 = vrot.lane.b32.xlu0 %v8057, 84
      %v8923 = vpop.permute.xlu0 %8922
      %8924 = vrot.lane.b32.xlu0 %v8058, 84
      %v8925 = vpop.permute.xlu0 %8924
      %8926 = vrot.lane.b32.xlu0 %v8059, 84
      %v8927 = vpop.permute.xlu0 %8926
      %8928 = vrot.lane.b32.xlu0 %v8060, 84
      %v8929 = vpop.permute.xlu0 %8928
      %8930 = vrot.lane.b32.xlu0 %v8061, 84
      %v8931 = vpop.permute.xlu0 %8930
      %8932 = vrot.lane.b32.xlu0 %v8062, 84
      %v8933 = vpop.permute.xlu0 %8932
      %8934 = vrot.lane.b32.xlu0 %v8063, 84
      %v8935 = vpop.permute.xlu0 %8934
      %8936 = vrot.lane.b32.xlu0 %v8064, 84
      %v8937 = vpop.permute.xlu0 %8936
      %8938 = vrot.lane.b32.xlu0 %v8065, 84
      %v8939 = vpop.permute.xlu0 %8938
      %8940 = vrot.lane.b32.xlu0 %v8066, 84
      %v8941 = vpop.permute.xlu0 %8940
      %8942 = vrot.lane.b32.xlu0 %v8067, 84
      %v8943 = vpop.permute.xlu0 %8942
      %8944 = vrot.lane.b32.xlu0 %v8068, 84
      %v8945 = vpop.permute.xlu0 %8944
      %8946 = vrot.lane.b32.xlu0 %v8069, 84
      %v8947 = vpop.permute.xlu0 %8946
      %8948 = vrot.lane.b32.xlu0 %v8070, 84
      %v8949 = vpop.permute.xlu0 %8948
      %8950 = vrot.lane.b32.xlu0 %v8071, 84
      %v8951 = vpop.permute.xlu0 %8950
      %8952 = vrot.lane.b32.xlu0 %v8072, 84
      %v8953 = vpop.permute.xlu0 %8952
      %8954 = vrot.lane.b32.xlu0 %v8073, 84
      %v8955 = vpop.permute.xlu0 %8954
      %8956 = vrot.lane.b32.xlu0 %v8074, 84
      %v8957 = vpop.permute.xlu0 %8956
      %8958 = vrot.lane.b32.xlu0 %v8075, 84
      %v8959 = vpop.permute.xlu0 %8958
      %8960 = vrot.lane.b32.xlu0 %v8076, 84
      %v8961 = vpop.permute.xlu0 %8960
      %8962 = vrot.lane.b32.xlu0 %v8077, 84
      %v8963 = vpop.permute.xlu0 %8962
      %8964 = vrot.lane.b32.xlu0 %v8078, 84
      %v8965 = vpop.permute.xlu0 %8964
      %8966 = vrot.lane.b32.xlu0 %v8079, 84
      %v8967 = vpop.permute.xlu0 %8966
      %8968 = vrot.lane.b32.xlu0 %v8080, 84
      %v8969 = vpop.permute.xlu0 %8968
      %8970 = vrot.lane.b32.xlu0 %v8081, 84
      %v8971 = vpop.permute.xlu0 %8970
      %8972 = vrot.lane.b32.xlu0 %v8082, 84
      %v8973 = vpop.permute.xlu0 %8972
      %8974 = vrot.lane.b32.xlu0 %v8083, 84
      %v8975 = vpop.permute.xlu0 %8974
      %8976 = vrot.lane.b32.xlu0 %v8084, 84
      %v8977 = vpop.permute.xlu0 %8976
      %8978 = vrot.lane.b32.xlu0 %v8085, 84
      %v8979 = vpop.permute.xlu0 %8978
      %8980 = vrot.lane.b32.xlu0 %v8086, 84
      %v8981 = vpop.permute.xlu0 %8980
      %8982 = vrot.lane.b32.xlu0 %v8087, 84
      %v8983 = vpop.permute.xlu0 %8982
      %9048 = vrot.lane.b32.xlu0 %v8088, 96
      %v9049 = vpop.permute.xlu0 %9048
      %9050 = vrot.lane.b32.xlu0 %v8089, 96
      %v9051 = vpop.permute.xlu0 %9050
      %9052 = vrot.lane.b32.xlu0 %v8090, 96
      %v9053 = vpop.permute.xlu0 %9052
      %9054 = vrot.lane.b32.xlu0 %v8091, 96
      %v9055 = vpop.permute.xlu0 %9054
      %9056 = vrot.lane.b32.xlu0 %v8092, 96
      %v9057 = vpop.permute.xlu0 %9056
      %9058 = vrot.lane.b32.xlu0 %v8093, 96
      %v9059 = vpop.permute.xlu0 %9058
      %9060 = vrot.lane.b32.xlu0 %v8094, 96
      %v9061 = vpop.permute.xlu0 %9060
      %9062 = vrot.lane.b32.xlu0 %v8095, 96
      %v9063 = vpop.permute.xlu0 %9062
      %9064 = vrot.lane.b32.xlu0 %v8096, 96
      %v9065 = vpop.permute.xlu0 %9064
      %9066 = vrot.lane.b32.xlu0 %v8097, 96
      %v9067 = vpop.permute.xlu0 %9066
      %9068 = vrot.lane.b32.xlu0 %v8098, 96
      %v9069 = vpop.permute.xlu0 %9068
      %9070 = vrot.lane.b32.xlu0 %v8099, 96
      %v9071 = vpop.permute.xlu0 %9070
      %9072 = vrot.lane.b32.xlu0 %v8100, 96
      %v9073 = vpop.permute.xlu0 %9072
      %9074 = vrot.lane.b32.xlu0 %v8101, 96
      %v9075 = vpop.permute.xlu0 %9074
      %9076 = vrot.lane.b32.xlu0 %v8102, 96
      %v9077 = vpop.permute.xlu0 %9076
      %9078 = vrot.lane.b32.xlu0 %v8103, 96
      %v9079 = vpop.permute.xlu0 %9078
      %9080 = vrot.lane.b32.xlu0 %v8104, 96
      %v9081 = vpop.permute.xlu0 %9080
      %9082 = vrot.lane.b32.xlu0 %v8105, 96
      %v9083 = vpop.permute.xlu0 %9082
      %9084 = vrot.lane.b32.xlu0 %v8106, 96
      %v9085 = vpop.permute.xlu0 %9084
      %9086 = vrot.lane.b32.xlu0 %v8107, 96
      %v9087 = vpop.permute.xlu0 %9086
      %9088 = vrot.lane.b32.xlu0 %v8108, 96
      %v9089 = vpop.permute.xlu0 %9088
      %9090 = vrot.lane.b32.xlu0 %v8109, 96
      %v9091 = vpop.permute.xlu0 %9090
      %9092 = vrot.lane.b32.xlu0 %v8110, 96
      %v9093 = vpop.permute.xlu0 %9092
      %9094 = vrot.lane.b32.xlu0 %v8111, 96
      %v9095 = vpop.permute.xlu0 %9094
      %9096 = vrot.lane.b32.xlu0 %v8112, 96
      %v9097 = vpop.permute.xlu0 %9096
      %9098 = vrot.lane.b32.xlu0 %v8113, 96
      %v9099 = vpop.permute.xlu0 %9098
      %9100 = vrot.lane.b32.xlu0 %v8114, 96
      %v9101 = vpop.permute.xlu0 %9100
      %9102 = vrot.lane.b32.xlu0 %v8115, 96
      %v9103 = vpop.permute.xlu0 %9102
      %9104 = vrot.lane.b32.xlu0 %v8116, 96
      %v9105 = vpop.permute.xlu0 %9104
      %9106 = vrot.lane.b32.xlu0 %v8117, 96
      %v9107 = vpop.permute.xlu0 %9106
      %9108 = vrot.lane.b32.xlu0 %v8118, 96
      %v9109 = vpop.permute.xlu0 %9108
      %9110 = vrot.lane.b32.xlu0 %v8119, 96
      %v9111 = vpop.permute.xlu0 %9110
      %v9144 = vsel %vm383, %v7831, %v8153
      %v9145 = vsel %vm383, %v7832, %v8155
      %v9146 = vsel %vm383, %v7833, %v8157
      %v9147 = vsel %vm383, %v7834, %v8159
      %v9148 = vsel %vm383, %v7835, %v8161
      %v9149 = vsel %vm383, %v7836, %v8163
      %v9150 = vsel %vm383, %v7837, %v8165
      %v9151 = vsel %vm383, %v7838, %v8167
      %v9152 = vsel %vm383, %v7839, %v8169
      %v9153 = vsel %vm383, %v7840, %v8171
      %v9154 = vsel %vm383, %v7841, %v8173
      %v9155 = vsel %vm383, %v7842, %v8175
      %v9156 = vsel %vm383, %v7843, %v8177
      %v9157 = vsel %vm383, %v7844, %v8179
      %v9158 = vsel %vm383, %v7845, %v8181
      %v9159 = vsel %vm383, %v7846, %v8183
      %v9160 = vsel %vm383, %v7847, %v8185
      %v9161 = vsel %vm383, %v7848, %v8187
      %v9162 = vsel %vm383, %v7849, %v8189
      %v9163 = vsel %vm383, %v7850, %v8191
      %v9164 = vsel %vm383, %v7851, %v8193
      %v9165 = vsel %vm383, %v7852, %v8195
      %v9166 = vsel %vm383, %v7853, %v8197
      %v9167 = vsel %vm383, %v7854, %v8199
      %v9168 = vsel %vm383, %v7855, %v8201
      %v9169 = vsel %vm383, %v7856, %v8203
      %v9170 = vsel %vm383, %v7857, %v8205
      %v9171 = vsel %vm383, %v7858, %v8207
      %v9172 = vsel %vm383, %v7859, %v8209
      %v9173 = vsel %vm383, %v7860, %v8211
      %v9174 = vsel %vm383, %v7861, %v8213
      %v9175 = vsel %vm383, %v7862, %v8215
      %v9176 = vsel %vm6311, %v9144, %v8281
      %v9177 = vsel %vm6311, %v9145, %v8283
      %v9178 = vsel %vm6311, %v9146, %v8285
      %v9179 = vsel %vm6311, %v9147, %v8287
      %v9180 = vsel %vm6311, %v9148, %v8289
      %v9181 = vsel %vm6311, %v9149, %v8291
      %v9182 = vsel %vm6311, %v9150, %v8293
      %v9183 = vsel %vm6311, %v9151, %v8295
      %v9184 = vsel %vm6311, %v9152, %v8297
      %v9185 = vsel %vm6311, %v9153, %v8299
      %v9186 = vsel %vm6311, %v9154, %v8301
      %v9187 = vsel %vm6311, %v9155, %v8303
      %v9188 = vsel %vm6311, %v9156, %v8305
      %v9189 = vsel %vm6311, %v9157, %v8307
      %v9190 = vsel %vm6311, %v9158, %v8309
      %v9191 = vsel %vm6311, %v9159, %v8311
      %v9192 = vsel %vm6311, %v9160, %v8313
      %v9193 = vsel %vm6311, %v9161, %v8315
      %v9194 = vsel %vm6311, %v9162, %v8317
      %v9195 = vsel %vm6311, %v9163, %v8319
      %v9196 = vsel %vm6311, %v9164, %v8321
      %v9197 = vsel %vm6311, %v9165, %v8323
      %v9198 = vsel %vm6311, %v9166, %v8325
      %v9199 = vsel %vm6311, %v9167, %v8327
      %v9200 = vsel %vm6311, %v9168, %v8329
      %v9201 = vsel %vm6311, %v9169, %v8331
      %v9202 = vsel %vm6311, %v9170, %v8333
      %v9203 = vsel %vm6311, %v9171, %v8335
      %v9204 = vsel %vm6311, %v9172, %v8337
      %v9205 = vsel %vm6311, %v9173, %v8339
      %v9206 = vsel %vm6311, %v9174, %v8341
      %v9207 = vsel %vm6311, %v9175, %v8343
      %v9208 = vsel %vm6377, %v9176, %v8409
      %v9209 = vsel %vm6377, %v9177, %v8411
      %v9210 = vsel %vm6377, %v9178, %v8413
      %v9211 = vsel %vm6377, %v9179, %v8415
      %v9212 = vsel %vm6377, %v9180, %v8417
      %v9213 = vsel %vm6377, %v9181, %v8419
      %v9214 = vsel %vm6377, %v9182, %v8421
      %v9215 = vsel %vm6377, %v9183, %v8423
      %v9216 = vsel %vm6377, %v9184, %v8425
      %v9217 = vsel %vm6377, %v9185, %v8427
      %v9218 = vsel %vm6377, %v9186, %v8429
      %v9219 = vsel %vm6377, %v9187, %v8431
      %v9220 = vsel %vm6377, %v9188, %v8433
      %v9221 = vsel %vm6377, %v9189, %v8435
      %v9222 = vsel %vm6377, %v9190, %v8437
      %v9223 = vsel %vm6377, %v9191, %v8439
      %v9224 = vsel %vm6377, %v9192, %v8441
      %v9225 = vsel %vm6377, %v9193, %v8443
      %v9226 = vsel %vm6377, %v9194, %v8445
      %v9227 = vsel %vm6377, %v9195, %v8447
      %v9228 = vsel %vm6377, %v9196, %v8449
      %v9229 = vsel %vm6377, %v9197, %v8451
      %v9230 = vsel %vm6377, %v9198, %v8453
      %v9231 = vsel %vm6377, %v9199, %v8455
      %v9232 = vsel %vm6377, %v9200, %v8457
      %v9233 = vsel %vm6377, %v9201, %v8459
      %v9234 = vsel %vm6377, %v9202, %v8461
      %v9235 = vsel %vm6377, %v9203, %v8463
      %v9236 = vsel %vm6377, %v9204, %v8465
      %v9237 = vsel %vm6377, %v9205, %v8467
      %v9238 = vsel %vm6377, %v9206, %v8469
      %v9239 = vsel %vm6377, %v9207, %v8471
      %v9240 = vsel %vm6443, %v9208, %v8537
      %v9241 = vsel %vm6443, %v9209, %v8539
      %v9242 = vsel %vm6443, %v9210, %v8541
      %v9243 = vsel %vm6443, %v9211, %v8543
      %v9244 = vsel %vm6443, %v9212, %v8545
      %v9245 = vsel %vm6443, %v9213, %v8547
      %v9246 = vsel %vm6443, %v9214, %v8549
      %v9247 = vsel %vm6443, %v9215, %v8551
      %v9248 = vsel %vm6443, %v9216, %v8553
      %v9249 = vsel %vm6443, %v9217, %v8555
      %v9250 = vsel %vm6443, %v9218, %v8557
      %v9251 = vsel %vm6443, %v9219, %v8559
      %v9252 = vsel %vm6443, %v9220, %v8561
      %v9253 = vsel %vm6443, %v9221, %v8563
      %v9254 = vsel %vm6443, %v9222, %v8565
      %v9255 = vsel %vm6443, %v9223, %v8567
      %v9256 = vsel %vm6443, %v9224, %v8569
      %v9257 = vsel %vm6443, %v9225, %v8571
      %v9258 = vsel %vm6443, %v9226, %v8573
      %v9259 = vsel %vm6443, %v9227, %v8575
      %v9260 = vsel %vm6443, %v9228, %v8577
      %v9261 = vsel %vm6443, %v9229, %v8579
      %v9262 = vsel %vm6443, %v9230, %v8581
      %v9263 = vsel %vm6443, %v9231, %v8583
      %v9264 = vsel %vm6443, %v9232, %v8585
      %v9265 = vsel %vm6443, %v9233, %v8587
      %v9266 = vsel %vm6443, %v9234, %v8589
      %v9267 = vsel %vm6443, %v9235, %v8591
      %v9268 = vsel %vm6443, %v9236, %v8593
      %v9269 = vsel %vm6443, %v9237, %v8595
      %v9270 = vsel %vm6443, %v9238, %v8597
      %v9271 = vsel %vm6443, %v9239, %v8599
      %vm9272 = vcmask 490496
      %v9273 = vsel %vm9272, %v9240, %v8665
      %v9274 = vsel %vm9272, %v9241, %v8667
      %v9275 = vsel %vm9272, %v9242, %v8669
      %v9276 = vsel %vm9272, %v9243, %v8671
      %v9277 = vsel %vm9272, %v9244, %v8673
      %v9278 = vsel %vm9272, %v9245, %v8675
      %v9279 = vsel %vm9272, %v9246, %v8677
      %v9280 = vsel %vm9272, %v9247, %v8679
      %v9281 = vsel %vm9272, %v9248, %v8681
      %v9282 = vsel %vm9272, %v9249, %v8683
      %v9283 = vsel %vm9272, %v9250, %v8685
      %v9284 = vsel %vm9272, %v9251, %v8687
      %v9285 = vsel %vm9272, %v9252, %v8689
      %v9286 = vsel %vm9272, %v9253, %v8691
      %v9287 = vsel %vm9272, %v9254, %v8693
      %v9288 = vsel %vm9272, %v9255, %v8695
      %v9289 = vsel %vm9272, %v9256, %v8697
      %v9290 = vsel %vm9272, %v9257, %v8699
      %v9291 = vsel %vm9272, %v9258, %v8701
      %v9292 = vsel %vm9272, %v9259, %v8703
      %v9293 = vsel %vm9272, %v9260, %v8705
      %v9294 = vsel %vm9272, %v9261, %v8707
      %v9295 = vsel %vm9272, %v9262, %v8709
      %v9296 = vsel %vm9272, %v9263, %v8711
      %v9297 = vsel %vm9272, %v9264, %v8713
      %v9298 = vsel %vm9272, %v9265, %v8715
      %v9299 = vsel %vm9272, %v9266, %v8717
      %v9300 = vsel %vm9272, %v9267, %v8719
      %v9301 = vsel %vm9272, %v9268, %v8721
      %v9302 = vsel %vm9272, %v9269, %v8723
      %v9303 = vsel %vm9272, %v9270, %v8725
      %v9304 = vsel %vm9272, %v9271, %v8727
      %vm9305 = vcmask 588800
      %v9306 = vsel %vm9305, %v9273, %v8793
      %v9307 = vsel %vm9305, %v9274, %v8795
      %v9308 = vsel %vm9305, %v9275, %v8797
      %v9309 = vsel %vm9305, %v9276, %v8799
      %v9310 = vsel %vm9305, %v9277, %v8801
      %v9311 = vsel %vm9305, %v9278, %v8803
      %v9312 = vsel %vm9305, %v9279, %v8805
      %v9313 = vsel %vm9305, %v9280, %v8807
      %v9314 = vsel %vm9305, %v9281, %v8809
      %v9315 = vsel %vm9305, %v9282, %v8811
      %v9316 = vsel %vm9305, %v9283, %v8813
      %v9317 = vsel %vm9305, %v9284, %v8815
      %v9318 = vsel %vm9305, %v9285, %v8817
      %v9319 = vsel %vm9305, %v9286, %v8819
      %v9320 = vsel %vm9305, %v9287, %v8821
      %v9321 = vsel %vm9305, %v9288, %v8823
      %v9322 = vsel %vm9305, %v9289, %v8825
      %v9323 = vsel %vm9305, %v9290, %v8827
      %v9324 = vsel %vm9305, %v9291, %v8829
      %v9325 = vsel %vm9305, %v9292, %v8831
      %v9326 = vsel %vm9305, %v9293, %v8833
      %v9327 = vsel %vm9305, %v9294, %v8835
      %v9328 = vsel %vm9305, %v9295, %v8837
      %v9329 = vsel %vm9305, %v9296, %v8839
      %v9330 = vsel %vm9305, %v9297, %v8841
      %v9331 = vsel %vm9305, %v9298, %v8843
      %v9332 = vsel %vm9305, %v9299, %v8845
      %v9333 = vsel %vm9305, %v9300, %v8847
      %v9334 = vsel %vm9305, %v9301, %v8849
      %v9335 = vsel %vm9305, %v9302, %v8851
      %v9336 = vsel %vm9305, %v9303, %v8853
      %v9337 = vsel %vm9305, %v9304, %v8855
      %vm9338 = vcmask 687104
      %v9339 = vsel %vm9338, %v9306, %v8921
      %v9340 = vsel %vm9338, %v9307, %v8923
      %v9341 = vsel %vm9338, %v9308, %v8925
      %v9342 = vsel %vm9338, %v9309, %v8927
      %v9343 = vsel %vm9338, %v9310, %v8929
      %v9344 = vsel %vm9338, %v9311, %v8931
      %v9345 = vsel %vm9338, %v9312, %v8933
      %v9346 = vsel %vm9338, %v9313, %v8935
      %v9347 = vsel %vm9338, %v9314, %v8937
      %v9348 = vsel %vm9338, %v9315, %v8939
      %v9349 = vsel %vm9338, %v9316, %v8941
      %v9350 = vsel %vm9338, %v9317, %v8943
      %v9351 = vsel %vm9338, %v9318, %v8945
      %v9352 = vsel %vm9338, %v9319, %v8947
      %v9353 = vsel %vm9338, %v9320, %v8949
      %v9354 = vsel %vm9338, %v9321, %v8951
      %v9355 = vsel %vm9338, %v9322, %v8953
      %v9356 = vsel %vm9338, %v9323, %v8955
      %v9357 = vsel %vm9338, %v9324, %v8957
      %v9358 = vsel %vm9338, %v9325, %v8959
      %v9359 = vsel %vm9338, %v9326, %v8961
      %v9360 = vsel %vm9338, %v9327, %v8963
      %v9361 = vsel %vm9338, %v9328, %v8965
      %v9362 = vsel %vm9338, %v9329, %v8967
      %v9363 = vsel %vm9338, %v9330, %v8969
      %v9364 = vsel %vm9338, %v9331, %v8971
      %v9365 = vsel %vm9338, %v9332, %v8973
      %v9366 = vsel %vm9338, %v9333, %v8975
      %v9367 = vsel %vm9338, %v9334, %v8977
      %v9368 = vsel %vm9338, %v9335, %v8979
      %v9369 = vsel %vm9338, %v9336, %v8981
      %v9370 = vsel %vm9338, %v9337, %v8983
      %vm9371 = vcmask 785408
      %v9372 = vsel %vm9371, %v9339, %v9049
      %v9373 = vsel %vm9371, %v9340, %v9051
      %v9374 = vsel %vm9371, %v9341, %v9053
      %v9375 = vsel %vm9371, %v9342, %v9055
      %v9376 = vsel %vm9371, %v9343, %v9057
      %v9377 = vsel %vm9371, %v9344, %v9059
      %v9378 = vsel %vm9371, %v9345, %v9061
      %v9379 = vsel %vm9371, %v9346, %v9063
      %v9380 = vsel %vm9371, %v9347, %v9065
      %v9381 = vsel %vm9371, %v9348, %v9067
      %v9382 = vsel %vm9371, %v9349, %v9069
      %v9383 = vsel %vm9371, %v9350, %v9071
      %v9384 = vsel %vm9371, %v9351, %v9073
      %v9385 = vsel %vm9371, %v9352, %v9075
      %v9386 = vsel %vm9371, %v9353, %v9077
      %v9387 = vsel %vm9371, %v9354, %v9079
      %v9388 = vsel %vm9371, %v9355, %v9081
      %v9389 = vsel %vm9371, %v9356, %v9083
      %v9390 = vsel %vm9371, %v9357, %v9085
      %v9391 = vsel %vm9371, %v9358, %v9087
      %v9392 = vsel %vm9371, %v9359, %v9089
      %v9393 = vsel %vm9371, %v9360, %v9091
      %v9394 = vsel %vm9371, %v9361, %v9093
      %v9395 = vsel %vm9371, %v9362, %v9095
      %v9396 = vsel %vm9371, %v9363, %v9097
      %v9397 = vsel %vm9371, %v9364, %v9099
      %v9398 = vsel %vm9371, %v9365, %v9101
      %v9399 = vsel %vm9371, %v9366, %v9103
      %v9400 = vsel %vm9371, %v9367, %v9105
      %v9401 = vsel %vm9371, %v9368, %v9107
      %v9402 = vsel %vm9371, %v9369, %v9109
      %v9403 = vsel %vm9371, %v9370, %v9111
      %v9404 = vpack.c.bf16 %v9373, %v9372
      %v9405 = vpack.c.bf16 %v9375, %v9374
      %v9406 = vpack.c.bf16 %v9377, %v9376
      %v9407 = vpack.c.bf16 %v9379, %v9378
      %v9408 = vpack.c.bf16 %v9381, %v9380
      %v9409 = vpack.c.bf16 %v9383, %v9382
      %v9410 = vpack.c.bf16 %v9385, %v9384
      %v9411 = vpack.c.bf16 %v9387, %v9386
      %v9412 = vpack.c.bf16 %v9389, %v9388
      %v9413 = vpack.c.bf16 %v9391, %v9390
      %v9414 = vpack.c.bf16 %v9393, %v9392
      %v9415 = vpack.c.bf16 %v9395, %v9394
      %v9416 = vpack.c.bf16 %v9397, %v9396
      %v9417 = vpack.c.bf16 %v9399, %v9398
      %v9418 = vpack.c.bf16 %v9401, %v9400
      %v9419 = vpack.c.bf16 %v9403, %v9402
      %v9434 = vunpack.c.l.b16 %v7817
      %v9435 = vunpack.c.l.b16 %v7818
      %v9436 = vunpack.c.l.b16 %v7819
      %v9437 = vunpack.c.l.b16 %v7820
      %v9438 = vunpack.c.l.b16 %v7821
      %v9439 = vunpack.c.l.b16 %v7822
      %v9440 = vunpack.c.l.b16 %v7823
      %v9441 = vunpack.c.l.b16 %v7824
      %v9442 = vunpack.c.l.b16 %v7825
      %v9443 = vunpack.c.l.b16 %v7826
      %v9444 = vunpack.c.l.b16 %v7827
      %v9445 = vunpack.c.l.b16 %v7828
      %v9446 = vunpack.c.l.b16 %v7829
      %v9447 = vunpack.c.l.b16 %v7830
      %v9448 = vpack.c.b16 %v9435, %v9434
      %v9449 = vpack.c.b16 %v9437, %v9436
      %v9450 = vpack.c.b16 %v9439, %v9438
      %v9451 = vpack.c.b16 %v9441, %v9440
      %v9452 = vpack.c.b16 %v9443, %v9442
      %v9453 = vpack.c.b16 %v9445, %v9444
      %v9454 = vpack.c.b16 %v9447, %v9446
      %vm9461 = vcmask 883712
      %v9463 = vsel %vm9461, %v9404, 0
      %v9466 = vsel %vm9461, %v9405, 0
      %v9469 = vsel %vm9461, %v9406, 0
      %v9472 = vsel %vm9461, %v9407, 0
      %v9475 = vsel %vm9461, %v9408, 0
      %v9478 = vsel %vm9461, %v9409, 0
      %v9481 = vsel %vm9461, %v9410, 0
      %v9484 = vsel %vm9461, %v9411, 0
      %v9487 = vsel %vm9461, %v9412, 0
      %v9490 = vsel %vm9461, %v9413, 0
      %v9493 = vsel %vm9461, %v9414, 0
      %v9496 = vsel %vm9461, %v9415, 0
      %v9499 = vsel %vm9461, %v9416, 0
      %v9502 = vsel %vm9461, %v9417, 0
      %v9505 = vsel %vm9461, %v9418, 0
      %v9508 = vsel %vm9461, %v9419, 0
      %vm9510 = vcmask 1045504
      %v9512 = vsel %vm9510, %v9454, 0
      %9514 = vmatprep.subr.bf16.mxu0 0
      %9515 = vmatpush1.bf16.msra.mxu0 %v9448
      %9516 = vmatprep.subr.bf16.mxu0 0
      %9517 = vmatpush1.bf16.msra.mxu0 %v9449
      %9518 = vmatprep.subr.bf16.mxu0 0
      %9519 = vmatpush1.bf16.msra.mxu0 %v9450
      %9520 = vmatprep.subr.bf16.mxu0 0
      %9521 = vmatpush1.bf16.msra.mxu0 %v9451
      %9522 = vmatprep.subr.bf16.mxu0 0
      %9523 = vmatpush1.bf16.msra.mxu0 %v9452
      %9524 = vmatprep.subr.bf16.mxu0 0
      %9525 = vmatpush1.bf16.msra.mxu0 %v9453
      %9526 = vmatprep.subr.bf16.mxu0 0
      %9527 = vmatpush1.bf16.msra.mxu0 %v9512
      %9528 = vmatprep.subr.bf16.mxu0 0
      %9529 = vmatpush1.bf16.msra.mxu0 0
      %9530 = vmatprep.subr.bf16.mxu0 0
      %9531 = vmatpush1.bf16.msra.mxu0 0
      %9532 = vmatprep.subr.bf16.mxu0 0
      %9533 = vmatpush1.bf16.msra.mxu0 0
      %9534 = vmatprep.subr.bf16.mxu0 0
      %9535 = vmatpush1.bf16.msra.mxu0 0
      %9536 = vmatprep.subr.bf16.mxu0 0
      %9537 = vmatpush1.bf16.msra.mxu0 0
      %9538 = vmatprep.subr.bf16.mxu0 0
      %9539 = vmatpush1.bf16.msra.mxu0 0
      %9540 = vmatprep.subr.bf16.mxu0 0
      %9541 = vmatpush1.bf16.msra.mxu0 0
      %9542 = vmatprep.subr.bf16.mxu0 0
      %9543 = vmatpush1.bf16.msra.mxu0 0
      %9544 = vmatprep.subr.bf16.mxu0 0
      %9545 = vmatpush1.bf16.msra.mxu0 0
      %9546 = vmatprep.mubr.bf16.mxu0 0
      %9547 = vmatmul.mubr.bf16.gmra.mrb[0].mxu0 %v9463
      %v9548 = vpop.f32.mrb[0].mxu0
      %v9549 = vadd.f32 0.0, %v9548
      %v9550 = vpop.f32.mrb[0].mxu0
      %v9551 = vpop.f32.mrb[0].mxu0
      %v9552 = vadd.f32 0.0, %v9551
      %v9553 = vpop.f32.mrb[0].mxu0
      %9554 = vmatprep.mubr.bf16.mxu0 0
      %9555 = vmatmul.mubr.bf16.gmra.mrb[0].mxu0 %v9466
      %v9556 = vpop.f32.mrb[0].mxu0
      %v9557 = vadd.f32 0.0, %v9556
      %v9558 = vpop.f32.mrb[0].mxu0
      %v9559 = vpop.f32.mrb[0].mxu0
      %v9560 = vadd.f32 0.0, %v9559
      %v9561 = vpop.f32.mrb[0].mxu0
      %9562 = vmatprep.mubr.bf16.mxu0 0
      %9563 = vmatmul.mubr.bf16.gmra.mrb[0].mxu0 %v9469
      %v9564 = vpop.f32.mrb[0].mxu0
      %v9565 = vadd.f32 0.0, %v9564
      %v9566 = vpop.f32.mrb[0].mxu0
      %v9567 = vpop.f32.mrb[0].mxu0
      %v9568 = vadd.f32 0.0, %v9567
      %v9569 = vpop.f32.mrb[0].mxu0
      %9570 = vmatprep.mubr.bf16.mxu0 0
      %9571 = vmatmul.mubr.bf16.gmra.mrb[0].mxu0 %v9472
      %v9572 = vpop.f32.mrb[0].mxu0
      %v9573 = vadd.f32 0.0, %v9572
      %v9574 = vpop.f32.mrb[0].mxu0
      %v9575 = vpop.f32.mrb[0].mxu0
      %v9576 = vadd.f32 0.0, %v9575
      %v9577 = vpop.f32.mrb[0].mxu0
      %9578 = vmatprep.mubr.bf16.mxu0 0
      %9579 = vmatmul.mubr.bf16.gmra.mrb[0].mxu0 %v9475
      %v9580 = vpop.f32.mrb[0].mxu0
      %v9581 = vadd.f32 0.0, %v9580
      %v9582 = vpop.f32.mrb[0].mxu0
      %v9583 = vpop.f32.mrb[0].mxu0
      %v9584 = vadd.f32 0.0, %v9583
      %v9585 = vpop.f32.mrb[0].mxu0
      %9586 = vmatprep.mubr.bf16.mxu0 0
      %9587 = vmatmul.mubr.bf16.gmra.mrb[0].mxu0 %v9478
      %v9588 = vpop.f32.mrb[0].mxu0
      %v9589 = vadd.f32 0.0, %v9588
      %v9590 = vpop.f32.mrb[0].mxu0
      %v9591 = vpop.f32.mrb[0].mxu0
      %v9592 = vadd.f32 0.0, %v9591
      %v9593 = vpop.f32.mrb[0].mxu0
      %9594 = vmatprep.mubr.bf16.mxu0 0
      %9595 = vmatmul.mubr.bf16.gmra.mrb[0].mxu0 %v9481
      %v9596 = vpop.f32.mrb[0].mxu0
      %v9597 = vadd.f32 0.0, %v9596
      %v9598 = vpop.f32.mrb[0].mxu0
      %v9599 = vpop.f32.mrb[0].mxu0
      %v9600 = vadd.f32 0.0, %v9599
      %v9601 = vpop.f32.mrb[0].mxu0
      %9602 = vmatprep.mubr.bf16.mxu0 0
      %9603 = vmatmul.mubr.bf16.gmra.mrb[0].mxu0 %v9484
      %v9604 = vpop.f32.mrb[0].mxu0
      %v9605 = vadd.f32 0.0, %v9604
      %v9606 = vpop.f32.mrb[0].mxu0
      %v9607 = vpop.f32.mrb[0].mxu0
      %v9608 = vadd.f32 0.0, %v9607
      %v9609 = vpop.f32.mrb[0].mxu0
      %9610 = vmatprep.mubr.bf16.mxu0 0
      %9611 = vmatmul.mubr.bf16.gmra.mrb[0].mxu0 %v9487
      %v9612 = vpop.f32.mrb[0].mxu0
      %v9613 = vadd.f32 0.0, %v9612
      %v9614 = vpop.f32.mrb[0].mxu0
      %v9615 = vpop.f32.mrb[0].mxu0
      %v9616 = vadd.f32 0.0, %v9615
      %v9617 = vpop.f32.mrb[0].mxu0
      %9618 = vmatprep.mubr.bf16.mxu0 0
      %9619 = vmatmul.mubr.bf16.gmra.mrb[0].mxu0 %v9490
      %v9620 = vpop.f32.mrb[0].mxu0
      %v9621 = vadd.f32 0.0, %v9620
      %v9622 = vpop.f32.mrb[0].mxu0
      %v9623 = vpop.f32.mrb[0].mxu0
      %v9624 = vadd.f32 0.0, %v9623
      %v9625 = vpop.f32.mrb[0].mxu0
      %9626 = vmatprep.mubr.bf16.mxu0 0
      %9627 = vmatmul.mubr.bf16.gmra.mrb[0].mxu0 %v9493
      %v9628 = vpop.f32.mrb[0].mxu0
      %v9629 = vadd.f32 0.0, %v9628
      %v9630 = vpop.f32.mrb[0].mxu0
      %v9631 = vpop.f32.mrb[0].mxu0
      %v9632 = vadd.f32 0.0, %v9631
      %v9633 = vpop.f32.mrb[0].mxu0
      %9634 = vmatprep.mubr.bf16.mxu0 0
      %9635 = vmatmul.mubr.bf16.gmra.mrb[0].mxu0 %v9496
      %v9636 = vpop.f32.mrb[0].mxu0
      %v9637 = vadd.f32 0.0, %v9636
      %v9638 = vpop.f32.mrb[0].mxu0
      %v9639 = vpop.f32.mrb[0].mxu0
      %v9640 = vadd.f32 0.0, %v9639
      %v9641 = vpop.f32.mrb[0].mxu0
      %9642 = vmatprep.mubr.bf16.mxu0 0
      %9643 = vmatmul.mubr.bf16.gmra.mrb[0].mxu0 %v9499
      %v9644 = vpop.f32.mrb[0].mxu0
      %v9645 = vadd.f32 0.0, %v9644
      %v9646 = vpop.f32.mrb[0].mxu0
      %v9647 = vpop.f32.mrb[0].mxu0
      %v9648 = vadd.f32 0.0, %v9647
      %v9649 = vpop.f32.mrb[0].mxu0
      %9650 = vmatprep.mubr.bf16.mxu0 0
      %9651 = vmatmul.mubr.bf16.gmra.mrb[0].mxu0 %v9502
      %v9652 = vpop.f32.mrb[0].mxu0
      %v9653 = vadd.f32 0.0, %v9652
      %v9654 = vpop.f32.mrb[0].mxu0
      %v9655 = vpop.f32.mrb[0].mxu0
      %v9656 = vadd.f32 0.0, %v9655
      %v9657 = vpop.f32.mrb[0].mxu0
      %9658 = vmatprep.mubr.bf16.mxu0 0
      %9659 = vmatmul.mubr.bf16.gmra.mrb[0].mxu0 %v9505
      %v9660 = vpop.f32.mrb[0].mxu0
      %v9661 = vadd.f32 0.0, %v9660
      %v9662 = vpop.f32.mrb[0].mxu0
      %v9663 = vpop.f32.mrb[0].mxu0
      %v9664 = vadd.f32 0.0, %v9663
      %v9665 = vpop.f32.mrb[0].mxu0
      %9666 = vmatprep.mubr.bf16.mxu0 0
      %9667 = vmatmul.mubr.bf16.gmra.mrb[0].mxu0 %v9508
      %v9668 = vpop.f32.mrb[0].mxu0
      %v9669 = vadd.f32 0.0, %v9668
      %v9670 = vpop.f32.mrb[0].mxu0
      %v9671 = vpop.f32.mrb[0].mxu0
      %v9672 = vadd.f32 0.0, %v9671
      %v9673 = vpop.f32.mrb[0].mxu0
      %9674 = vdwg.mxu0
      %9675 = vst.msk [vmem:[%s285] sm:$0xff] %vm2330, %v9549
      %9676 = vst.msk [vmem:[%s285 + $0x8] sm:$0xff] %vm2330, %v9552
      %9677 = vst.msk [vmem:[%s285 + $0x10] sm:$0xff] %vm2330, %v9557
      %9678 = vst.msk [vmem:[%s285 + $0x18] sm:$0xff] %vm2330, %v9560
      %9679 = vst.msk [vmem:[%s285 + $0x20] sm:$0xff] %vm2330, %v9565
      %9680 = vst.msk [vmem:[%s285 + $0x28] sm:$0xff] %vm2330, %v9568
      %9681 = vst.msk [vmem:[%s285 + $0x30] sm:$0xff] %vm2330, %v9573
      %9682 = vst.msk [vmem:[%s285 + $0x38] sm:$0xff] %vm2330, %v9576
      %9683 = vst.msk [vmem:[%s285 + $0x40] sm:$0xff] %vm2330, %v9581
      %9684 = vst.msk [vmem:[%s285 + $0x48] sm:$0xff] %vm2330, %v9584
      %9685 = vst.msk [vmem:[%s285 + $0x50] sm:$0xff] %vm2330, %v9589
      %9686 = vst.msk [vmem:[%s285 + $0x58] sm:$0xff] %vm2330, %v9592
      %9687 = vst.msk [vmem:[%s285 + $0x60] sm:$0xff] %vm2330, %v9597
      %9688 = vst.msk [vmem:[%s285 + $0x68] sm:$0xff] %vm2330, %v9600
      %9689 = vst.msk [vmem:[%s285 + $0x70] sm:$0xff] %vm2330, %v9605
      %9690 = vst.msk [vmem:[%s285 + $0x78] sm:$0xff] %vm2330, %v9608
      %9691 = vst.msk [vmem:[%s285 + $0x80] sm:$0xff] %vm2330, %v9613
      %9692 = vst.msk [vmem:[%s285 + $0x88] sm:$0xff] %vm2330, %v9616
      %9693 = vst.msk [vmem:[%s285 + $0x90] sm:$0xff] %vm2330, %v9621
      %9694 = vst.msk [vmem:[%s285 + $0x98] sm:$0xff] %vm2330, %v9624
      %9695 = vst.msk [vmem:[%s285 + $0xa0] sm:$0xff] %vm2330, %v9629
      %9696 = vst.msk [vmem:[%s285 + $0xa8] sm:$0xff] %vm2330, %v9632
      %9697 = vst.msk [vmem:[%s285 + $0xb0] sm:$0xff] %vm2330, %v9637
      %9698 = vst.msk [vmem:[%s285 + $0xb8] sm:$0xff] %vm2330, %v9640
      %9699 = vst.msk [vmem:[%s285 + $0xc0] sm:$0xff] %vm2330, %v9645
      %9700 = vst.msk [vmem:[%s285 + $0xc8] sm:$0xff] %vm2330, %v9648
      %9701 = vst.msk [vmem:[%s285 + $0xd0] sm:$0xff] %vm2330, %v9653
      %9702 = vst.msk [vmem:[%s285 + $0xd8] sm:$0xff] %vm2330, %v9656
      %9703 = vst.msk [vmem:[%s285 + $0xe0] sm:$0xff] %vm2330, %v9661
      %9704 = vst.msk [vmem:[%s285 + $0xe8] sm:$0xff] %vm2330, %v9664
      %9705 = vst.msk [vmem:[%s285 + $0xf0] sm:$0xff] %vm2330, %v9669
      %9706 = vst.msk [vmem:[%s285 + $0xf8] sm:$0xff] %vm2330, %v9672
      %v9707 = vsel %vm2330, %v9549, 0.0
      %v9708 = vsel %vm2330, %v9552, 0.0
      %v9709 = vadd.f32 %v9707, %v9708
      %v9710 = vsel %vm2330, %v9557, 0.0
      %v9711 = vadd.f32 %v9709, %v9710
      %v9712 = vsel %vm2330, %v9560, 0.0
      %v9713 = vadd.f32 %v9711, %v9712
      %v9714 = vsel %vm2330, %v9565, 0.0
      %v9715 = vadd.f32 %v9713, %v9714
      %v9716 = vsel %vm2330, %v9568, 0.0
      %v9717 = vadd.f32 %v9715, %v9716
      %v9718 = vsel %vm2330, %v9573, 0.0
      %v9719 = vadd.f32 %v9717, %v9718
      %v9720 = vsel %vm2330, %v9576, 0.0
      %v9721 = vadd.f32 %v9719, %v9720
      %v9722 = vsel %vm2330, %v9581, 0.0
      %v9723 = vadd.f32 %v9721, %v9722
      %v9724 = vsel %vm2330, %v9584, 0.0
      %v9725 = vadd.f32 %v9723, %v9724
      %v9726 = vsel %vm2330, %v9589, 0.0
      %v9727 = vadd.f32 %v9725, %v9726
      %v9728 = vsel %vm2330, %v9592, 0.0
      %v9729 = vadd.f32 %v9727, %v9728
      %v9730 = vsel %vm2330, %v9597, 0.0
      %v9731 = vadd.f32 %v9729, %v9730
      %v9732 = vsel %vm2330, %v9600, 0.0
      %v9733 = vadd.f32 %v9731, %v9732
      %v9734 = vsel %vm2330, %v9605, 0.0
      %v9735 = vadd.f32 %v9733, %v9734
      %v9736 = vsel %vm2330, %v9608, 0.0
      %v9737 = vadd.f32 %v9735, %v9736
      %v9738 = vsel %vm2330, %v9613, 0.0
      %v9739 = vadd.f32 %v9737, %v9738
      %v9740 = vsel %vm2330, %v9616, 0.0
      %v9741 = vadd.f32 %v9739, %v9740
      %v9742 = vsel %vm2330, %v9621, 0.0
      %v9743 = vadd.f32 %v9741, %v9742
      %v9744 = vsel %vm2330, %v9624, 0.0
      %v9745 = vadd.f32 %v9743, %v9744
      %v9746 = vsel %vm2330, %v9629, 0.0
      %v9747 = vadd.f32 %v9745, %v9746
      %v9748 = vsel %vm2330, %v9632, 0.0
      %v9749 = vadd.f32 %v9747, %v9748
      %v9750 = vsel %vm2330, %v9637, 0.0
      %v9751 = vadd.f32 %v9749, %v9750
      %v9752 = vsel %vm2330, %v9640, 0.0
      %v9753 = vadd.f32 %v9751, %v9752
      %v9754 = vsel %vm2330, %v9645, 0.0
      %v9755 = vadd.f32 %v9753, %v9754
      %v9756 = vsel %vm2330, %v9648, 0.0
      %v9757 = vadd.f32 %v9755, %v9756
      %v9758 = vsel %vm2330, %v9653, 0.0
      %v9759 = vadd.f32 %v9757, %v9758
      %v9760 = vsel %vm2330, %v9656, 0.0
      %v9761 = vadd.f32 %v9759, %v9760
      %v9762 = vsel %vm2330, %v9661, 0.0
      %v9763 = vadd.f32 %v9761, %v9762
      %v9764 = vsel %vm2330, %v9664, 0.0
      %v9765 = vadd.f32 %v9763, %v9764
      %v9766 = vsel %vm2330, %v9669, 0.0
      %v9767 = vadd.f32 %v9765, %v9766
      %v9768 = vsel %vm2330, %v9672, 0.0
      %v9769 = vadd.f32 %v9767, %v9768
      %v9770 = vrot.slane %v9769, 4
      %v9771 = vadd.f32 %v9769, %v9770
      %v9772 = vrot.slane %v9771, 2
      %v9773 = vadd.f32 %v9771, %v9772
      %v9774 = vrot.slane %v9773, 1
      %v9775 = vadd.f32 %v9773, %v9774
      %vm9776 = vcmask 57344
      %9777 = vst.msk [vmem:[%s289] sm:$0x1] %vm9776, %v9775
      %v9778 = vmul.f32 %v9549, %v9549
      %v9779 = vmul.f32 %v9552, %v9552
      %v9780 = vmul.f32 %v9557, %v9557
      %v9781 = vmul.f32 %v9560, %v9560
      %v9782 = vmul.f32 %v9565, %v9565
      %v9783 = vmul.f32 %v9568, %v9568
      %v9784 = vmul.f32 %v9573, %v9573
      %v9785 = vmul.f32 %v9576, %v9576
      %v9786 = vmul.f32 %v9581, %v9581
      %v9787 = vmul.f32 %v9584, %v9584
      %v9788 = vmul.f32 %v9589, %v9589
      %v9789 = vmul.f32 %v9592, %v9592
      %v9790 = vmul.f32 %v9597, %v9597
      %v9791 = vmul.f32 %v9600, %v9600
      %v9792 = vmul.f32 %v9605, %v9605
      %v9793 = vmul.f32 %v9608, %v9608
      %v9794 = vmul.f32 %v9613, %v9613
      %v9795 = vmul.f32 %v9616, %v9616
      %v9796 = vmul.f32 %v9621, %v9621
      %v9797 = vmul.f32 %v9624, %v9624
      %v9798 = vmul.f32 %v9629, %v9629
      %v9799 = vmul.f32 %v9632, %v9632
      %v9800 = vmul.f32 %v9637, %v9637
      %v9801 = vmul.f32 %v9640, %v9640
      %v9802 = vmul.f32 %v9645, %v9645
      %v9803 = vmul.f32 %v9648, %v9648
      %v9804 = vmul.f32 %v9653, %v9653
      %v9805 = vmul.f32 %v9656, %v9656
      %v9806 = vmul.f32 %v9661, %v9661
      %v9807 = vmul.f32 %v9664, %v9664
      %v9808 = vmul.f32 %v9669, %v9669
      %v9809 = vmul.f32 %v9672, %v9672
      %v9810 = vsel %vm2330, %v9778, 0.0
      %v9811 = vsel %vm2330, %v9779, 0.0
      %v9812 = vadd.f32 %v9810, %v9811
      %v9813 = vsel %vm2330, %v9780, 0.0
      %v9814 = vadd.f32 %v9812, %v9813
      %v9815 = vsel %vm2330, %v9781, 0.0
      %v9816 = vadd.f32 %v9814, %v9815
      %v9817 = vsel %vm2330, %v9782, 0.0
      %v9818 = vadd.f32 %v9816, %v9817
      %v9819 = vsel %vm2330, %v9783, 0.0
      %v9820 = vadd.f32 %v9818, %v9819
      %v9821 = vsel %vm2330, %v9784, 0.0
      %v9822 = vadd.f32 %v9820, %v9821
      %v9823 = vsel %vm2330, %v9785, 0.0
      %v9824 = vadd.f32 %v9822, %v9823
      %v9825 = vsel %vm2330, %v9786, 0.0
      %v9826 = vadd.f32 %v9824, %v9825
      %v9827 = vsel %vm2330, %v9787, 0.0
      %v9828 = vadd.f32 %v9826, %v9827
      %v9829 = vsel %vm2330, %v9788, 0.0
      %v9830 = vadd.f32 %v9828, %v9829
      %v9831 = vsel %vm2330, %v9789, 0.0
      %v9832 = vadd.f32 %v9830, %v9831
      %v9833 = vsel %vm2330, %v9790, 0.0
      %v9834 = vadd.f32 %v9832, %v9833
      %v9835 = vsel %vm2330, %v9791, 0.0
      %v9836 = vadd.f32 %v9834, %v9835
      %v9837 = vsel %vm2330, %v9792, 0.0
      %v9838 = vadd.f32 %v9836, %v9837
      %v9839 = vsel %vm2330, %v9793, 0.0
      %v9840 = vadd.f32 %v9838, %v9839
      %v9841 = vsel %vm2330, %v9794, 0.0
      %v9842 = vadd.f32 %v9840, %v9841
      %v9843 = vsel %vm2330, %v9795, 0.0
      %v9844 = vadd.f32 %v9842, %v9843
      %v9845 = vsel %vm2330, %v9796, 0.0
      %v9846 = vadd.f32 %v9844, %v9845
      %v9847 = vsel %vm2330, %v9797, 0.0
      %v9848 = vadd.f32 %v9846, %v9847
      %v9849 = vsel %vm2330, %v9798, 0.0
      %v9850 = vadd.f32 %v9848, %v9849
      %v9851 = vsel %vm2330, %v9799, 0.0
      %v9852 = vadd.f32 %v9850, %v9851
      %v9853 = vsel %vm2330, %v9800, 0.0
      %v9854 = vadd.f32 %v9852, %v9853
      %v9855 = vsel %vm2330, %v9801, 0.0
      %v9856 = vadd.f32 %v9854, %v9855
      %v9857 = vsel %vm2330, %v9802, 0.0
      %v9858 = vadd.f32 %v9856, %v9857
      %v9859 = vsel %vm2330, %v9803, 0.0
      %v9860 = vadd.f32 %v9858, %v9859
      %v9861 = vsel %vm2330, %v9804, 0.0
      %v9862 = vadd.f32 %v9860, %v9861
      %v9863 = vsel %vm2330, %v9805, 0.0
      %v9864 = vadd.f32 %v9862, %v9863
      %v9865 = vsel %vm2330, %v9806, 0.0
      %v9866 = vadd.f32 %v9864, %v9865
      %v9867 = vsel %vm2330, %v9807, 0.0
      %v9868 = vadd.f32 %v9866, %v9867
      %v9869 = vsel %vm2330, %v9808, 0.0
      %v9870 = vadd.f32 %v9868, %v9869
      %v9871 = vsel %vm2330, %v9809, 0.0
      %v9872 = vadd.f32 %v9870, %v9871
      %v9873 = vrot.slane %v9872, 4
      %v9874 = vadd.f32 %v9872, %v9873
      %v9875 = vrot.slane %v9874, 2
      %v9876 = vadd.f32 %v9874, %v9875
      %v9877 = vrot.slane %v9876, 1
      %v9878 = vadd.f32 %v9876, %v9877
      %9879 = vst.msk [vmem:[%s289 + $0x1] sm:$0x1] %vm9776, %v9878
      %p9880 = scmp.lt.s32.totalorder %s19, 1
      %s9881 = scalar_select %p9880, %s19, 1
      %s9882 = smul.addr %s9881, 32
      %s9883 = smul.addr %s9882, 8
      %s9884 = scalar_lea.vmem %s6, %s9883
      %p9885 = scmp.lt.s32.totalorder %s19, 1
      %s9886 = scalar_select %p9885, %s19, 1
      %s9887 = smul.addr %s9886, 2
      %s9888 = scalar_lea.vmem %s7, %s9887
      // Predicated region
      $region45: #{inception_forward.2} parent=43 // pred_check
        %p9889 = pneg %p168
      $region46: #{inception_forward.2} parent=43 // pred_check_branch
        %9891 = sbr.rel (%p9889) target = $region48
      $region47: #{inception_forward.2} parent=43 // pred_region
        _
      $region48: #{inception_forward.2} parent=43 // pred_fallthru
        _
      // Predicated region
      $region49: #{inception_forward.2} parent=43 // pred_check
        %p9892 = pneg %p194
      $region50: #{inception_forward.2} parent=43 // pred_check_branch
        %9894 = sbr.rel (%p9892) target = $region52
      $region51: #{inception_forward.2} parent=43 // pred_region
        _
      $region52: #{inception_forward.2} parent=43 // pred_fallthru
        _
    $region44: #{inception_forward.2} parent=5 // pred_fallthru
      _
    %p9895 = scmp.le.s32.totalorder 2, %s14
    // Predicated region
    $region53: #{inception_forward.2} parent=5 // pred_check
      %p9896 = pneg %p9895
    $region54: #{inception_forward.2} parent=5 // pred_check_branch
      %9898 = sbr.rel (%p9896) target = $region56
    $region55: #{inception_forward.2} parent=5 // pred_region
      %s9899 = ssub.s32 %s14, 2
      // Predicated region
      $region57: #{inception_forward.2} parent=55 // pred_check
        %p9900 = pneg %p174
      $region58: #{inception_forward.2} parent=55 // pred_check_branch
        %9902 = sbr.rel (%p9900) target = $region60
      $region59: #{inception_forward.2} parent=55 // pred_region
        %p9903 = scmp.lt.s32.totalorder %s20, 1
        %s9904 = scalar_select %p9903, %s20, 1
        %s9905 = smul.addr %s9904, 32
        %s9906 = smul.addr %s9905, 8
        %s9907 = scalar_lea.vmem %s6, %s9906
      $region60: #{inception_forward.2} parent=55 // pred_fallthru
        _
      // Predicated region
      $region61: #{inception_forward.2} parent=55 // pred_check
        %p9908 = pneg %p200
      $region62: #{inception_forward.2} parent=55 // pred_check_branch
        %9910 = sbr.rel (%p9908) target = $region64
      $region63: #{inception_forward.2} parent=55 // pred_region
        %p9911 = scmp.lt.s32.totalorder %s20, 1
        %s9912 = scalar_select %p9911, %s20, 1
        %s9913 = smul.addr %s9912, 2
        %s9914 = scalar_lea.vmem %s7, %s9913
      $region64: #{inception_forward.2} parent=55 // pred_fallthru
        _
    $region56: #{inception_forward.2} parent=5 // pred_fallthru
      _
  $region6: #{inception_forward.2} parent=0 // loop_footer
    %s18 = sadd.s32 1, %s14
  $region7: #{inception_forward.2} parent=0 // loop_footer_branch
    %13 = sbr.rel target = $region3
  $region8: #{inception_forward.2} parent=0 // loop_exit
    _

</llo_original>
